<compile_context>
chip_gen: v5e
topology: v5e:2x2
jax: 0.10.0
libtpu: 0.0.40
codegen_flags: <defaults>
</compile_context>

<pallas_src>
import jax
import jax.numpy as jnp
from jax import lax
from jax.experimental import pallas as pl
from jax.experimental.pallas import tpu as pltpu

FEATURE_DIM = 512   # resnet18 -> backbone.fc.in_features == 512
HIDDEN_DIM = 512    # projection head hidden
PROJ_DIM = 128      # projection_dim
EPS = 1e-12         # F.normalize default eps


def _round_up(x, m):
    return ((x + m - 1) // m) * m


def _pick_batch_tile(b_pad):
    """Largest multiple-of-16 divisor of b_pad, capped at 64, preferring >= 2
    batch blocks so the 'parallel' grid axis can shard across v7x's 2 cores."""
    cap = b_pad if b_pad < 32 else b_pad // 2
    cap = max(16, min(64, (cap // 16) * 16))
    for t in range(cap, 15, -16):
        if b_pad % t == 0:
            return t
    return 16


def _pick_spatial_tile(hw, tile_b, target_rows=2048):
    """Spatial rows per grid step so tile_s * tile_b ~= target matmul rows."""
    t = max(8, min(256, target_rows // tile_b))
    t = (t // 8) * 8
    return min(t, _round_up(hw, 8))


# ----------------------------------------------------------------------------
# Fused Pallas kernel (built per static shape configuration)
# ----------------------------------------------------------------------------
def _build_simclr_call(b_pad, hw, hw_pad, k_pad, tile_b, tile_s):
    num_b = b_pad // tile_b
    num_s = hw_pad // tile_s
    pad_rows = hw_pad - hw
    inv_hw = 1.0 / float(hw)

    def kernel(patches_ref, wc_ref, bc_ref, w1_ref, b1_ref, w2_ref, b2_ref,
               hn_ref, zn_ref, acc_ref):
        s = pl.program_id(1)

        @pl.when(s == 0)
        def _():
            acc_ref[...] = jnp.zeros_like(acc_ref)

        # conv-as-matmul (bf16 operands, f32 accumulate) + bias + ReLU.
        # (tile_s, tile_b, k_pad) -> (tile_s*tile_b, k_pad): tile_b is a full
        # bf16 packed sublane tile (16), so the leading-dim merge is layout
        # preserving.
        p = patches_ref[...].reshape(tile_s * tile_b, k_pad)
        feat = jnp.dot(p, wc_ref[...], preferred_element_type=jnp.float32)
        # TODO(synk): on v6e/v7x this epilogue could run in bf16 to halve VALU
        #   passes; kept f32 (v5e has no bf16 VPU and it tracks the f32 ref).
        feat = jnp.maximum(feat + bc_ref[...], 0.0)

        # Partial global average pool: running f32 sum over spatial rows.
        acc_ref[...] += jnp.sum(feat.reshape(tile_s, tile_b, FEATURE_DIM), axis=0)

        @pl.when(s == num_s - 1)
        def _():
            acc = acc_ref[...]
            if pad_rows:
                # Zero-padded spatial rows each contributed exactly relu(bias);
                # subtract that once instead of masking every step.
                acc = acc - float(pad_rows) * jnp.maximum(bc_ref[...], 0.0)
            h = acc * inv_hw                                   # (tile_b, 512) f32

            # projection head: Linear -> ReLU -> Linear (bf16 MXU, f32 accum)
            a = jnp.dot(h.astype(jnp.bfloat16), w1_ref[...],
                        preferred_element_type=jnp.float32) + b1_ref[...]
            a = jnp.maximum(a, 0.0)
            z = jnp.dot(a.astype(jnp.bfloat16), w2_ref[...],
                        preferred_element_type=jnp.float32) + b2_ref[...]

            # F.normalize(v) = v / max(||v||, eps) == v * rsqrt(max(||v||^2, eps^2))
            h_ss = jnp.sum(h * h, axis=-1, keepdims=True)
            z_ss = jnp.sum(z * z, axis=-1, keepdims=True)
            hn_ref[...] = h * lax.rsqrt(jnp.maximum(h_ss, EPS * EPS))
            zn_ref[...] = z * lax.rsqrt(jnp.maximum(z_ss, EPS * EPS))

    def const_spec(shape):
        return pl.BlockSpec(shape, lambda b, s: (0,) * len(shape))

    return pl.pallas_call(
        kernel,
        out_shape=(jax.ShapeDtypeStruct((b_pad, FEATURE_DIM), jnp.float32),
                   jax.ShapeDtypeStruct((b_pad, PROJ_DIM), jnp.float32)),
        grid_spec=pltpu.PrefetchScalarGridSpec(
            num_scalar_prefetch=0,
            grid=(num_b, num_s),
            in_specs=[
                # patches: spatial-major (HW_pad, B_pad, K_pad=32), both outer
                # axes tiled; K stays unpadded-to-lanes in HBM (DMA saver).
                pl.BlockSpec((tile_s, tile_b, k_pad), lambda b, s: (s, b, 0)),
                # weights / biases: full blocks, constant index map (resident)
                const_spec((k_pad, FEATURE_DIM)),       # wc   (bf16)
                const_spec((1, FEATURE_DIM)),           # bc   (f32)
                const_spec((FEATURE_DIM, HIDDEN_DIM)),  # w1.T (bf16)
                const_spec((1, HIDDEN_DIM)),            # b1   (f32)
                const_spec((HIDDEN_DIM, PROJ_DIM)),     # w2.T (bf16)
                const_spec((1, PROJ_DIM)),              # b2   (f32)
            ],
            out_specs=(pl.BlockSpec((tile_b, FEATURE_DIM), lambda b, s: (b, 0)),
                       pl.BlockSpec((tile_b, PROJ_DIM), lambda b, s: (b, 0))),
            scratch_shapes=[pltpu.VMEM((tile_b, FEATURE_DIM), jnp.float32)],
        ),
        compiler_params=pltpu.CompilerParams(
            dimension_semantics=("parallel", "arbitrary"),
            vmem_limit_bytes=32 * 1024 * 1024,   # <= physical on v5e/v6e/v7x
        ),
    )


# ----------------------------------------------------------------------------
# XLA-side glue: im2col (spatial-major, bf16, unpadded K) + parameter prep
# ----------------------------------------------------------------------------
def _im2col_spatial_major(x_nchw, kh=3, kw=3):
    """3x3, stride 1, pad 1 im2col -> (H*W, B, C*kh*kw), spatial-major."""
    B, C, H, W = x_nchw.shape
    xp = jnp.pad(x_nchw, ((0, 0), (0, 0), (1, 1), (1, 1)))
    cols = [xp[:, :, di:di + H, dj:dj + W] for di in range(kh) for dj in range(kw)]
    p = jnp.stack(cols, axis=2)                               # (B, C, 9, H, W)
    p = p.transpose(3, 4, 0, 1, 2)                            # (H, W, B, C, 9)
    return p.reshape(H * W, B, C * kh * kw)


def prepare_params(w_conv, b_conv, w1, b1, w2, b2):
    """One-time (outside the jitted hot path) reshape/transpose/cast/pad."""
    cout, cin, kh, kw = w_conv.shape
    k = cin * kh * kw
    k_pad = _round_up(k, 8)                                   # 27 -> 32, NOT 128
    wc = w_conv.reshape(cout, k).T                            # (K, 512)
    wc = jnp.pad(wc, ((0, k_pad - k), (0, 0))).astype(jnp.bfloat16)
    return (wc,
            b_conv.reshape(1, -1).astype(jnp.float32),
            w1.T.astype(jnp.bfloat16), b1.reshape(1, -1).astype(jnp.float32),
            w2.T.astype(jnp.bfloat16), b2.reshape(1, -1).astype(jnp.float32))


@jax.jit
def simclr_forward(x, wc, bc, w1t, b1, w2t, b2):
    """Returns (F.normalize(h, dim=-1), F.normalize(z, dim=-1))."""
    B, C, H, W = x.shape
    hw = H * W
    k = C * 9
    k_pad = wc.shape[0]
    b_pad = _round_up(B, 16)
    tile_b = _pick_batch_tile(b_pad)
    tile_s = _pick_spatial_tile(hw, tile_b)
    hw_pad = (-(-hw // tile_s)) * tile_s                      # cdiv padding

    # TODO(synk): im2col is still produced XLA-side (bf16, unpadded K). Fully
    #   in-kernel tap generation would remove the remaining ~9x expansion but
    #   only pays off once the kernel is HBM-bound again (it is MXU-bound at
    #   K<=128 on v5e/v6e/v7x with the unpadded layout).
    patches = _im2col_spatial_major(x.astype(jnp.bfloat16))   # (HW, B, 27) bf16
    patches = jnp.pad(patches,
                      ((0, hw_pad - hw), (0, b_pad - B), (0, k_pad - k)))

    call = _build_simclr_call(b_pad, hw, hw_pad, k_pad, tile_b, tile_s)
    hn, zn = call(patches, wc, bc, w1t, b1, w2t, b2)
    return hn[:B], zn[:B]


# ----------------------------------------------------------------------------
# Pure-JAX f32 reference of the same approximation (for correctness checks)
# ----------------------------------------------------------------------------
def _reference_forward(x, w_conv, b_conv, w1, b1, w2, b2):
    B, C, H, W = x.shape
    xp = jnp.pad(x, ((0, 0), (0, 0), (1, 1), (1, 1)))
    cols = [xp[:, :, di:di + H, dj:dj + W] for di in range(3) for dj in range(3)]
    p = jnp.stack(cols, axis=2).reshape(B, C * 9, H * W)      # (B, 27, HW)
    wcf = w_conv.reshape(w_conv.shape[0], C * 9)              # (512, 27)
    feat = jnp.maximum(jnp.einsum('ok,bkp->bpo', wcf, p) + b_conv, 0.0)
    h = feat.mean(axis=1)                                     # (B, 512)
    a = jnp.maximum(h @ w1.T + b1, 0.0)
    z = a @ w2.T + b2
    hn = h / jnp.maximum(jnp.linalg.norm(h, axis=-1, keepdims=True), EPS)
    zn = z / jnp.maximum(jnp.linalg.norm(z, axis=-1, keepdims=True), EPS)
    return hn, zn


# ----------------------------------------------------------------------------
# Main
# ----------------------------------------------------------------------------
if __name__ == "__main__":
    key = jax.random.PRNGKey(0)
    k_x, k_wc, k_bc, k_w1, k_b1, k_w2, k_b2 = jax.random.split(key, 7)

    C = 3
    # Deterministic synthetic parameters (shapes follow the module's layers).
    w_conv = jax.random.normal(k_wc, (FEATURE_DIM, C, 3, 3), jnp.float32) * 0.05
    b_conv = jax.random.normal(k_bc, (FEATURE_DIM,), jnp.float32) * 0.05
    # nn.Linear weights are (out, in) like PyTorch; transposed once here.
    w1 = jax.random.normal(k_w1, (HIDDEN_DIM, FEATURE_DIM), jnp.float32) * 0.02
    b1 = jax.random.normal(k_b1, (HIDDEN_DIM,), jnp.float32) * 0.02
    w2 = jax.random.normal(k_w2, (PROJ_DIM, HIDDEN_DIM), jnp.float32) * 0.02
    b2 = jax.random.normal(k_b2, (PROJ_DIM,), jnp.float32) * 0.02
    params = prepare_params(w_conv, b_conv, w1, b1, w2, b2)

    # (2,3,16,16): multi-step spatial accumulation; (2,3,10,10): exercises the
    # cdiv-padded spatial tail + relu(bias) correction.
    for (B, H, W) in [(2, 16, 16), (2, 10, 10)]:
        x = jax.random.normal(k_x, (B, C, H, W), dtype=jnp.float32)

        h_norm, z_norm = simclr_forward(x, *params)
        jax.block_until_ready((h_norm, z_norm))

        assert h_norm.shape == (B, FEATURE_DIM) and z_norm.shape == (B, PROJ_DIM)
        assert bool(jnp.all(jnp.isfinite(h_norm))) and bool(jnp.all(jnp.isfinite(z_norm)))
        # F.normalize outputs must be unit-norm rows.
        assert bool(jnp.allclose(jnp.linalg.norm(h_norm, axis=-1), 1.0, atol=1e-3))
        assert bool(jnp.allclose(jnp.linalg.norm(z_norm, axis=-1), 1.0, atol=1e-3))

        # Match the pure-JAX f32 reference of the same math (bf16 MXU tolerance).
        h_ref, z_ref = _reference_forward(x, w_conv, b_conv, w1, b1, w2, b2)
        assert bool(jnp.allclose(h_norm, h_ref, atol=3e-2, rtol=3e-2))
        assert bool(jnp.allclose(z_norm, z_ref, atol=3e-2, rtol=3e-2))

    print("KERNEL_OK")
</pallas_src>

<mosaic_0001>
module attributes {stable_mosaic.version = 11 : i64} {
  func.func @kernel(%arg0: i32, %arg1: i32, %arg2: memref<128x16x32xbf16, #tpu.memory_space<vmem>>, %arg3: memref<32x512xbf16, #tpu.memory_space<vmem>>, %arg4: memref<1x512xf32, #tpu.memory_space<vmem>>, %arg5: memref<512x512xbf16, #tpu.memory_space<vmem>>, %arg6: memref<1x512xf32, #tpu.memory_space<vmem>>, %arg7: memref<512x128xbf16, #tpu.memory_space<vmem>>, %arg8: memref<1x128xf32, #tpu.memory_space<vmem>>, %arg9: memref<16x512xf32, #tpu.memory_space<vmem>>, %arg10: memref<16x128xf32, #tpu.memory_space<vmem>>, %arg11: memref<16x512xf32, #tpu.memory_space<vmem>>) attributes {dimension_semantics = [#tpu.dimension_semantics<parallel>, #tpu.dimension_semantics<arbitrary>], iteration_bounds = array<i64: 1, 2>, scalar_prefetch = 0 : i64, scratch_operands = 1 : i64, tpu.core_type = #tpu.core_type<tc>, window_params = [{transform_indices = @transform_0, window_bounds = array<i64: 128, 16, 32>}, {pipeline_mode = #tpu.pipeline_mode<synchronous>, transform_indices = @transform_1, window_bounds = array<i64: 32, 512>}, {pipeline_mode = #tpu.pipeline_mode<synchronous>, transform_indices = @transform_2, window_bounds = array<i64: 1, 512>}, {pipeline_mode = #tpu.pipeline_mode<synchronous>, transform_indices = @transform_3, window_bounds = array<i64: 512, 512>}, {pipeline_mode = #tpu.pipeline_mode<synchronous>, transform_indices = @transform_4, window_bounds = array<i64: 1, 512>}, {pipeline_mode = #tpu.pipeline_mode<synchronous>, transform_indices = @transform_5, window_bounds = array<i64: 512, 128>}, {pipeline_mode = #tpu.pipeline_mode<synchronous>, transform_indices = @transform_6, window_bounds = array<i64: 1, 128>}, {transform_indices = @transform_7, window_bounds = array<i64: 16, 512>}, {transform_indices = @transform_8, window_bounds = array<i64: 16, 128>}]} {
    %c0_i32 = arith.constant 0 : i32
    %0 = arith.cmpi eq, %arg1, %c0_i32 : i32
    %1 = arith.extui %0 : i1 to i32
    %c0_i32_0 = arith.constant 0 : i32
    %2 = arith.cmpi ne, %1, %c0_i32_0 : i32
    scf.if %2 {
      %cst_14 = arith.constant 0.000000e+00 : f32
      %20 = vector.broadcast %cst_14 : f32 to vector<16x512xf32>
      %c0_15 = arith.constant 0 : index
      %c0_16 = arith.constant 0 : index
      %21 = vector.load %arg11[%c0_15, %c0_16] : memref<16x512xf32, #tpu.memory_space<vmem>>, vector<16x512xf32>
      tpu.vector_store %arg11[%c0_15, %c0_16], %20 {strides = array<i32>} : memref<16x512xf32, #tpu.memory_space<vmem>>, vector<16x512xf32>,
    } else {
    }
    %c0 = arith.constant 0 : index
    %c0_1 = arith.constant 0 : index
    %c0_2 = arith.constant 0 : index
    %3 = vector.load %arg2[%c0, %c0_1, %c0_2] : memref<128x16x32xbf16, #tpu.memory_space<vmem>>, vector<128x16x32xbf16>
    %4 = vector.shape_cast %3 : vector<128x16x32xbf16> to vector<2048x32xbf16>
    %c0_3 = arith.constant 0 : index
    %c0_4 = arith.constant 0 : index
    %5 = vector.load %arg3[%c0_3, %c0_4] : memref<32x512xbf16, #tpu.memory_space<vmem>>, vector<32x512xbf16>
    %cst = arith.constant dense<0.000000e+00> : vector<2048x512xf32>
    %6 = tpu.matmul %4, %5, %cst {dimension_numbers = #tpu.dot_dimension_numbers<[1], [0], [0], [1], [0, 0, 1, 1], [], []>} : vector<2048x32xbf16>, vector<32x512xbf16>, vector<2048x512xf32> -> vector<2048x512xf32>
    %c0_5 = arith.constant 0 : index
    %c0_6 = arith.constant 0 : index
    %7 = vector.load %arg4[%c0_5, %c0_6] : memref<1x512xf32, #tpu.memory_space<vmem>>, vector<1x512xf32>
    %8 = vector.broadcast %7 : vector<1x512xf32> to vector<2048x512xf32>
    %9 = arith.addf %6, %8 : vector<2048x512xf32>
    %cst_7 = arith.constant 0.000000e+00 : f32
    %10 = vector.broadcast %cst_7 : f32 to vector<2048x512xf32>
    %11 = arith.maximumf %9, %10 : vector<2048x512xf32>
    %c0_8 = arith.constant 0 : index
    %c0_9 = arith.constant 0 : index
    %12 = vector.load %arg11[%c0_8, %c0_9] : memref<16x512xf32, #tpu.memory_space<vmem>>, vector<16x512xf32>
    %13 = vector.shape_cast %11 : vector<2048x512xf32> to vector<128x16x512xf32>
    %cst_10 = arith.constant dense<0.000000e+00> : vector<16x512xf32>
    %14 = vector.multi_reduction <add>, %13, %cst_10 [0] : vector<128x16x512xf32> to vector<16x512xf32>
    %15 = arith.addf %12, %14 : vector<16x512xf32>
    %c0_11 = arith.constant 0 : index
    %c0_12 = arith.constant 0 : index
    %16 = vector.load %arg11[%c0_11, %c0_12] : memref<16x512xf32, #tpu.memory_space<vmem>>, vector<16x512xf32>
    tpu.vector_store %arg11[%c0_11, %c0_12], %15 {strides = array<i32>} : memref<16x512xf32, #tpu.memory_space<vmem>>, vector<16x512xf32>,
    %c1_i32 = arith.constant 1 : i32
    %17 = arith.cmpi eq, %arg1, %c1_i32 : i32
    %18 = arith.extui %17 : i1 to i32
    %c0_i32_13 = arith.constant 0 : i32
    %19 = arith.cmpi ne, %18, %c0_i32_13 : i32
    scf.if %19 {
      %c0_14 = arith.constant 0 : index
      %c0_15 = arith.constant 0 : index
      %20 = vector.load %arg11[%c0_14, %c0_15] : memref<16x512xf32, #tpu.memory_space<vmem>>, vector<16x512xf32>
      %cst_16 = arith.constant 3.906250e-03 : f32
      %21 = vector.broadcast %cst_16 : f32 to vector<16x512xf32>
      %22 = arith.mulf %20, %21 : vector<16x512xf32>
      %23 = arith.truncf %22 : vector<16x512xf32> to vector<16x512xbf16>
      %c0_17 = arith.constant 0 : index
      %c0_18 = arith.constant 0 : index
      %24 = vector.load %arg5[%c0_17, %c0_18] : memref<512x512xbf16, #tpu.memory_space<vmem>>, vector<512x512xbf16>
      %cst_19 = arith.constant dense<0.000000e+00> : vector<16x512xf32>
      %25 = tpu.matmul %23, %24, %cst_19 {dimension_numbers = #tpu.dot_dimension_numbers<[1], [0], [0], [1], [0, 0, 1, 1], [], []>} : vector<16x512xbf16>, vector<512x512xbf16>, vector<16x512xf32> -> vector<16x512xf32>
      %c0_20 = arith.constant 0 : index
      %c0_21 = arith.constant 0 : index
      %26 = vector.load %arg6[%c0_20, %c0_21] : memref<1x512xf32, #tpu.memory_space<vmem>>, vector<1x512xf32>
      %27 = vector.broadcast %26 : vector<1x512xf32> to vector<16x512xf32>
      %28 = arith.addf %25, %27 : vector<16x512xf32>
      %cst_22 = arith.constant 0.000000e+00 : f32
      %29 = vector.broadcast %cst_22 : f32 to vector<16x512xf32>
      %30 = arith.maximumf %28, %29 : vector<16x512xf32>
      %31 = arith.truncf %30 : vector<16x512xf32> to vector<16x512xbf16>
      %c0_23 = arith.constant 0 : index
      %c0_24 = arith.constant 0 : index
      %32 = vector.load %arg7[%c0_23, %c0_24] : memref<512x128xbf16, #tpu.memory_space<vmem>>, vector<512x128xbf16>
      %cst_25 = arith.constant dense<0.000000e+00> : vector<16x128xf32>
      %33 = tpu.matmul %31, %32, %cst_25 {dimension_numbers = #tpu.dot_dimension_numbers<[1], [0], [0], [1], [0, 0, 1, 1], [], []>} : vector<16x512xbf16>, vector<512x128xbf16>, vector<16x128xf32> -> vector<16x128xf32>
      %c0_26 = arith.constant 0 : index
      %c0_27 = arith.constant 0 : index
      %34 = vector.load %arg8[%c0_26, %c0_27] : memref<1x128xf32, #tpu.memory_space<vmem>>, vector<1x128xf32>
      %35 = vector.broadcast %34 : vector<1x128xf32> to vector<16x128xf32>
      %36 = arith.addf %33, %35 : vector<16x128xf32>
      %37 = arith.mulf %22, %22 : vector<16x512xf32>
      %cst_28 = arith.constant dense<0.000000e+00> : vector<16xf32>
      %38 = vector.multi_reduction <add>, %37, %cst_28 [1] : vector<16x512xf32> to vector<16xf32>
      %39 = vector.shape_cast %38 : vector<16xf32> to vector<16x1xf32>
      %40 = arith.mulf %36, %36 : vector<16x128xf32>
      %cst_29 = arith.constant dense<0.000000e+00> : vector<16xf32>
      %41 = vector.multi_reduction <add>, %40, %cst_29 [1] : vector<16x128xf32> to vector<16xf32>
      %42 = vector.shape_cast %41 : vector<16xf32> to vector<16x1xf32>
      %cst_30 = arith.constant 1.000000e-24 : f32
      %43 = vector.broadcast %cst_30 : f32 to vector<16x1xf32>
      %44 = arith.maximumf %39, %43 : vector<16x1xf32>
      %45 = math.rsqrt %44 : vector<16x1xf32>
      %46 = vector.broadcast %45 : vector<16x1xf32> to vector<16x512xf32>
      %47 = arith.mulf %22, %46 : vector<16x512xf32>
      %c0_31 = arith.constant 0 : index
      %c0_32 = arith.constant 0 : index
      %48 = vector.load %arg9[%c0_31, %c0_32] : memref<16x512xf32, #tpu.memory_space<vmem>>, vector<16x512xf32>
      tpu.vector_store %arg9[%c0_31, %c0_32], %47 {strides = array<i32>} : memref<16x512xf32, #tpu.memory_space<vmem>>, vector<16x512xf32>,
      %cst_33 = arith.constant 1.000000e-24 : f32
      %49 = vector.broadcast %cst_33 : f32 to vector<16x1xf32>
      %50 = arith.maximumf %42, %49 : vector<16x1xf32>
      %51 = math.rsqrt %50 : vector<16x1xf32>
      %52 = vector.broadcast %51 : vector<16x1xf32> to vector<16x128xf32>
      %53 = arith.mulf %36, %52 : vector<16x128xf32>
      %c0_34 = arith.constant 0 : index
      %c0_35 = arith.constant 0 : index
      %54 = vector.load %arg10[%c0_34, %c0_35] : memref<16x128xf32, #tpu.memory_space<vmem>>, vector<16x128xf32>
      tpu.vector_store %arg10[%c0_34, %c0_35], %53 {strides = array<i32>} : memref<16x128xf32, #tpu.memory_space<vmem>>, vector<16x128xf32>,
    } else {
    }
    return
  }
  func.func @transform_0(%arg0: i32, %arg1: i32) -> (i32, i32, i32) {
    %c0_i32 = arith.constant 0 : i32
    %c0_i32_0 = arith.constant 0 : i32
    return %arg1, %arg0, %c0_i32 : i32, i32, i32
  }
  func.func @transform_1(%arg0: i32, %arg1: i32) -> (i32, i32) {
    %c0_i32 = arith.constant 0 : i32
    %c0_i32_0 = arith.constant 0 : i32
    %c0_i32_1 = arith.constant 0 : i32
    return %c0_i32, %c0_i32_0 : i32, i32
  }
  func.func @transform_2(%arg0: i32, %arg1: i32) -> (i32, i32) {
    %c0_i32 = arith.constant 0 : i32
    %c0_i32_0 = arith.constant 0 : i32
    %c0_i32_1 = arith.constant 0 : i32
    return %c0_i32, %c0_i32_0 : i32, i32
  }
  func.func @transform_3(%arg0: i32, %arg1: i32) -> (i32, i32) {
    %c0_i32 = arith.constant 0 : i32
    %c0_i32_0 = arith.constant 0 : i32
    %c0_i32_1 = arith.constant 0 : i32
    return %c0_i32, %c0_i32_0 : i32, i32
  }
  func.func @transform_4(%arg0: i32, %arg1: i32) -> (i32, i32) {
    %c0_i32 = arith.constant 0 : i32
    %c0_i32_0 = arith.constant 0 : i32
    %c0_i32_1 = arith.constant 0 : i32
    return %c0_i32, %c0_i32_0 : i32, i32
  }
  func.func @transform_5(%arg0: i32, %arg1: i32) -> (i32, i32) {
    %c0_i32 = arith.constant 0 : i32
    %c0_i32_0 = arith.constant 0 : i32
    %c0_i32_1 = arith.constant 0 : i32
    return %c0_i32, %c0_i32_0 : i32, i32
  }
  func.func @transform_6(%arg0: i32, %arg1: i32) -> (i32, i32) {
    %c0_i32 = arith.constant 0 : i32
    %c0_i32_0 = arith.constant 0 : i32
    %c0_i32_1 = arith.constant 0 : i32
    return %c0_i32, %c0_i32_0 : i32, i32
  }
  func.func @transform_7(%arg0: i32, %arg1: i32) -> (i32, i32) {
    %c0_i32 = arith.constant 0 : i32
    %c0_i32_0 = arith.constant 0 : i32
    return %arg0, %c0_i32 : i32, i32
  }
  func.func @transform_8(%arg0: i32, %arg1: i32) -> (i32, i32) {
    %c0_i32 = arith.constant 0 : i32
    %c0_i32_0 = arith.constant 0 : i32
    return %arg0, %c0_i32 : i32, i32
  }
}

</mosaic_0001>

<llo_original>
// kernel: simclr_forward.1
$region0: #{simclr_forward.1}
  #allocation0 [shape = 'u32[]', space=smem, size = 0x4, offset = 0x4, fixed_abs, tag = 'smem constant byte address 0x4 - core index']
  #allocation1 [shape = 'u32[72,128]{1,0:T(1,128)}', space=vmem, size = 0x9000, scoped, tag = 'internal scratch']
  #allocation2 [shape = 'f32[16,512]{1,0:T(8,128)}', space=vmem, size = 0x8000, scoped, tag = 'scratch operand']
  %s0 = inlined_call_operand.vmem [shape: bf16[256,16,32], index: 0, kind: input, shape index: {}]
  %s1 = inlined_call_operand.vmem [shape: bf16[32,512], index: 1, kind: input, shape index: {}]
  %s2 = inlined_call_operand.vmem [shape: f32[1,512], index: 2, kind: input, shape index: {}]
  %s3 = inlined_call_operand.vmem [shape: bf16[512,512], index: 3, kind: input, shape index: {}]
  %s4 = inlined_call_operand.vmem [shape: f32[1,512], index: 4, kind: input, shape index: {}]
  %s5 = inlined_call_operand.vmem [shape: bf16[512,128], index: 5, kind: input, shape index: {}]
  %s6 = inlined_call_operand.vmem [shape: f32[1,128], index: 6, kind: input, shape index: {}]
  %s7 = inlined_call_operand.vmem [shape: f32[16,512], index: 7, kind: output, shape index: {0}]
  %s8 = inlined_call_operand.vmem [shape: f32[16,128], index: 8, kind: output, shape index: {1}]
  %9 = xla_tuple %s7, %s8
  %s10 = sld [smem:[#allocation0]]
  $region77: #{simclr_forward.1} parent=0
    _
  %s12 = ssub.s32 1, %s10
  %s13 = scalar_select 0, %s12, %s10
  loop: start=0, step=1, limit=4
  $region2: #{simclr_forward.1} parent=0 // loop_pre_header
    _
  $region3: #{simclr_forward.1} parent=0 // loop_header
    %s15 = sphi 0, %s19
    %p16 = scmp.ge.s32.totalorder %s15, 4
    %s22 = sphi 0, %s34
    %s23 = sphi 0, %s30
    %s24 = sphi 0, %s22
    %s25 = sphi 0, %s23
    %s26 = sphi 0, %s24
    %s27 = sphi 0, %s25
    %s39 = sphi 0, %s41
    %s42 = sphi 0, %s39
    %s43 = sphi 0, %s42
    %s59 = sphi 0, %s43
    %s63 = sphi 0, %s63
    %s65 = sphi 0, %s63
    %s66 = sphi 0, %s65
    %s80 = sphi 0, %s66
    %s84 = sphi 0, %s84
    %s86 = sphi 0, %s84
    %s87 = sphi 0, %s86
    %s101 = sphi 0, %s87
    %s105 = sphi 0, %s105
    %s107 = sphi 0, %s105
    %s108 = sphi 0, %s107
    %s122 = sphi 0, %s108
    %s126 = sphi 0, %s126
    %s128 = sphi 0, %s126
    %s129 = sphi 0, %s128
    %s143 = sphi 0, %s129
    %s147 = sphi 0, %s147
    %s149 = sphi 0, %s147
    %s150 = sphi 0, %s149
    %s164 = sphi 0, %s150
    %s168 = sphi 0, %s168
    %s170 = sphi 0, %s168
    %s171 = sphi 0, %s170
    %s185 = sphi 0, %s171
    %s191 = sphi 0, %s193
    %s194 = sphi 0, %s191
    %s195 = sphi 0, %s194
    %s211 = sphi 0, %s195
    %s217 = sphi 0, %s219
    %s220 = sphi 0, %s217
    %s221 = sphi 0, %s220
    %s237 = sphi 0, %s221
  $region4: #{simclr_forward.1} parent=0 // loop_header_branch
    %18 = sbr.rel (%p16) target = $region8
  $region5: #{simclr_forward.1} parent=0 // loop_body
    %s20 = ssub.s32 %s15, 1
    %s21 = ssub.s32 %s15, 2
    %s28 = sadd.s32 1, %s23
    %p29 = scmp.ge.s32.totalorder %s28, 2
    %s30 = scalar_select %p29, 0, %s28
    %s31 = sadd.s32 1, %s22
    %s32 = scalar_select %p29, %s31, %s22
    %p33 = scmp.ge.s32.totalorder %s32, 1
    %s34 = scalar_select %p33, 0, %s32
    %s35 = ssub.s32 %s23, %s30
    %s36 = ssub.s32 %s22, %s34
    %s37 = sor.u32 %s35, %s36
    %p38 = scmp.eq.s32.totalorder %s37, 0
    %s40 = sadd.s32 %s39, 1
    %s41 = scalar_select %p38, %s39, %s40
    %p44 = pneg %p38
    %p45 = scmp.eq.s32.totalorder %s15, 1
    %p46 = por %p44, %p45
    %p47 = scmp.ne.s32.totalorder %s39, %s42
    %p48 = scmp.eq.s32.totalorder %s15, 0
    %p49 = por %p47, %p48
    %p50 = scmp.ne.s32.totalorder %s39, %s42
    %p51 = scmp.eq.s32.totalorder %s20, 1
    %p52 = por %p50, %p51
    %p53 = scmp.ne.s32.totalorder %s42, %s43
    %p54 = scmp.eq.s32.totalorder %s20, 0
    %p55 = por %p53, %p54
    %p56 = scmp.ne.s32.totalorder %s42, %s43
    %p57 = scmp.eq.s32.totalorder %s21, 1
    %p58 = por %p56, %p57
    %p60 = scmp.ne.s32.totalorder %s43, %s59
    %p61 = scmp.eq.s32.totalorder %s21, 0
    %p62 = por %p60, %p61
    %s64 = sadd.s32 %s63, 1
    %p67 = scmp.eq.s32.totalorder %s15, 1
    %p68 = scmp.ne.s32.totalorder %s63, %s65
    %p69 = scmp.eq.s32.totalorder %s15, 0
    %p70 = por %p68, %p69
    %p71 = scmp.ne.s32.totalorder %s63, %s65
    %p72 = scmp.eq.s32.totalorder %s20, 1
    %p73 = por %p71, %p72
    %p74 = scmp.ne.s32.totalorder %s65, %s66
    %p75 = scmp.eq.s32.totalorder %s20, 0
    %p76 = por %p74, %p75
    %p77 = scmp.ne.s32.totalorder %s65, %s66
    %p78 = scmp.eq.s32.totalorder %s21, 1
    %p79 = por %p77, %p78
    %p81 = scmp.ne.s32.totalorder %s66, %s80
    %p82 = scmp.eq.s32.totalorder %s21, 0
    %p83 = por %p81, %p82
    %s85 = sadd.s32 %s84, 1
    %p88 = scmp.eq.s32.totalorder %s15, 1
    %p89 = scmp.ne.s32.totalorder %s84, %s86
    %p90 = scmp.eq.s32.totalorder %s15, 0
    %p91 = por %p89, %p90
    %p92 = scmp.ne.s32.totalorder %s84, %s86
    %p93 = scmp.eq.s32.totalorder %s20, 1
    %p94 = por %p92, %p93
    %p95 = scmp.ne.s32.totalorder %s86, %s87
    %p96 = scmp.eq.s32.totalorder %s20, 0
    %p97 = por %p95, %p96
    %p98 = scmp.ne.s32.totalorder %s86, %s87
    %p99 = scmp.eq.s32.totalorder %s21, 1
    %p100 = por %p98, %p99
    %p102 = scmp.ne.s32.totalorder %s87, %s101
    %p103 = scmp.eq.s32.totalorder %s21, 0
    %p104 = por %p102, %p103
    %s106 = sadd.s32 %s105, 1
    %p109 = scmp.eq.s32.totalorder %s15, 1
    %p110 = scmp.ne.s32.totalorder %s105, %s107
    %p111 = scmp.eq.s32.totalorder %s15, 0
    %p112 = por %p110, %p111
    %p113 = scmp.ne.s32.totalorder %s105, %s107
    %p114 = scmp.eq.s32.totalorder %s20, 1
    %p115 = por %p113, %p114
    %p116 = scmp.ne.s32.totalorder %s107, %s108
    %p117 = scmp.eq.s32.totalorder %s20, 0
    %p118 = por %p116, %p117
    %p119 = scmp.ne.s32.totalorder %s107, %s108
    %p120 = scmp.eq.s32.totalorder %s21, 1
    %p121 = por %p119, %p120
    %p123 = scmp.ne.s32.totalorder %s108, %s122
    %p124 = scmp.eq.s32.totalorder %s21, 0
    %p125 = por %p123, %p124
    %s127 = sadd.s32 %s126, 1
    %p130 = scmp.eq.s32.totalorder %s15, 1
    %p131 = scmp.ne.s32.totalorder %s126, %s128
    %p132 = scmp.eq.s32.totalorder %s15, 0
    %p133 = por %p131, %p132
    %p134 = scmp.ne.s32.totalorder %s126, %s128
    %p135 = scmp.eq.s32.totalorder %s20, 1
    %p136 = por %p134, %p135
    %p137 = scmp.ne.s32.totalorder %s128, %s129
    %p138 = scmp.eq.s32.totalorder %s20, 0
    %p139 = por %p137, %p138
    %p140 = scmp.ne.s32.totalorder %s128, %s129
    %p141 = scmp.eq.s32.totalorder %s21, 1
    %p142 = por %p140, %p141
    %p144 = scmp.ne.s32.totalorder %s129, %s143
    %p145 = scmp.eq.s32.totalorder %s21, 0
    %p146 = por %p144, %p145
    %s148 = sadd.s32 %s147, 1
    %p151 = scmp.eq.s32.totalorder %s15, 1
    %p152 = scmp.ne.s32.totalorder %s147, %s149
    %p153 = scmp.eq.s32.totalorder %s15, 0
    %p154 = por %p152, %p153
    %p155 = scmp.ne.s32.totalorder %s147, %s149
    %p156 = scmp.eq.s32.totalorder %s20, 1
    %p157 = por %p155, %p156
    %p158 = scmp.ne.s32.totalorder %s149, %s150
    %p159 = scmp.eq.s32.totalorder %s20, 0
    %p160 = por %p158, %p159
    %p161 = scmp.ne.s32.totalorder %s149, %s150
    %p162 = scmp.eq.s32.totalorder %s21, 1
    %p163 = por %p161, %p162
    %p165 = scmp.ne.s32.totalorder %s150, %s164
    %p166 = scmp.eq.s32.totalorder %s21, 0
    %p167 = por %p165, %p166
    %s169 = sadd.s32 %s168, 1
    %p172 = scmp.eq.s32.totalorder %s15, 1
    %p173 = scmp.ne.s32.totalorder %s168, %s170
    %p174 = scmp.eq.s32.totalorder %s15, 0
    %p175 = por %p173, %p174
    %p176 = scmp.ne.s32.totalorder %s168, %s170
    %p177 = scmp.eq.s32.totalorder %s20, 1
    %p178 = por %p176, %p177
    %p179 = scmp.ne.s32.totalorder %s170, %s171
    %p180 = scmp.eq.s32.totalorder %s20, 0
    %p181 = por %p179, %p180
    %p182 = scmp.ne.s32.totalorder %s170, %s171
    %p183 = scmp.eq.s32.totalorder %s21, 1
    %p184 = por %p182, %p183
    %p186 = scmp.ne.s32.totalorder %s171, %s185
    %p187 = scmp.eq.s32.totalorder %s21, 0
    %p188 = por %p186, %p187
    %s189 = ssub.s32 %s22, %s34
    %p190 = scmp.eq.s32.totalorder %s189, 0
    %s192 = sadd.s32 %s191, 1
    %s193 = scalar_select %p190, %s191, %s192
    %p196 = pneg %p190
    %p197 = scmp.eq.s32.totalorder %s15, 1
    %p198 = por %p196, %p197
    %p199 = scmp.ne.s32.totalorder %s191, %s194
    %p200 = scmp.eq.s32.totalorder %s15, 0
    %p201 = por %p199, %p200
    %p202 = scmp.ne.s32.totalorder %s191, %s194
    %p203 = scmp.eq.s32.totalorder %s20, 1
    %p204 = por %p202, %p203
    %p205 = scmp.ne.s32.totalorder %s194, %s195
    %p206 = scmp.eq.s32.totalorder %s20, 0
    %p207 = por %p205, %p206
    %p208 = scmp.ne.s32.totalorder %s194, %s195
    %p209 = scmp.eq.s32.totalorder %s21, 1
    %p210 = por %p208, %p209
    %p212 = scmp.ne.s32.totalorder %s195, %s211
    %p213 = scmp.eq.s32.totalorder %s21, 0
    %p214 = por %p212, %p213
    %s215 = ssub.s32 %s22, %s34
    %p216 = scmp.eq.s32.totalorder %s215, 0
    %s218 = sadd.s32 %s217, 1
    %s219 = scalar_select %p216, %s217, %s218
    %p222 = pneg %p216
    %p223 = scmp.eq.s32.totalorder %s15, 1
    %p224 = por %p222, %p223
    %p225 = scmp.ne.s32.totalorder %s217, %s220
    %p226 = scmp.eq.s32.totalorder %s15, 0
    %p227 = por %p225, %p226
    %p228 = scmp.ne.s32.totalorder %s217, %s220
    %p229 = scmp.eq.s32.totalorder %s20, 1
    %p230 = por %p228, %p229
    %p231 = scmp.ne.s32.totalorder %s220, %s221
    %p232 = scmp.eq.s32.totalorder %s20, 0
    %p233 = por %p231, %p232
    %p234 = scmp.ne.s32.totalorder %s220, %s221
    %p235 = scmp.eq.s32.totalorder %s21, 1
    %p236 = por %p234, %p235
    %p238 = scmp.ne.s32.totalorder %s221, %s237
    %p239 = scmp.eq.s32.totalorder %s21, 0
    %p240 = por %p238, %p239
    %p241 = scmp.le.s32.totalorder 1, %s15
    %p242 = scmp.lt.s32.totalorder %s15, 3
    %p243 = pnand %p241, %p242
    %p244 = pneg %p243
    // Predicated region
    $region9: #{simclr_forward.1} parent=5 // pred_check
      _
    $region10: #{simclr_forward.1} parent=5 // pred_check_branch
      %246 = sbr.rel (%p243) target = $region12
    $region11: #{simclr_forward.1} parent=5 // pred_region
      %s247 = ssub.s32 %s15, 1
      // Predicated region
      $region13: #{simclr_forward.1} parent=11 // pred_check
        %p248 = pneg %p76
      $region14: #{simclr_forward.1} parent=11 // pred_check_branch
        %250 = sbr.rel (%p248) target = $region16
      $region15: #{simclr_forward.1} parent=11 // pred_region
        _
      $region16: #{simclr_forward.1} parent=11 // pred_fallthru
        _
      // Predicated region
      $region17: #{simclr_forward.1} parent=11 // pred_check
        %p251 = pneg %p97
      $region18: #{simclr_forward.1} parent=11 // pred_check_branch
        %253 = sbr.rel (%p251) target = $region20
      $region19: #{simclr_forward.1} parent=11 // pred_region
        _
      $region20: #{simclr_forward.1} parent=11 // pred_fallthru
        _
      // Predicated region
      $region21: #{simclr_forward.1} parent=11 // pred_check
        %p254 = pneg %p118
      $region22: #{simclr_forward.1} parent=11 // pred_check_branch
        %256 = sbr.rel (%p254) target = $region24
      $region23: #{simclr_forward.1} parent=11 // pred_region
        _
      $region24: #{simclr_forward.1} parent=11 // pred_fallthru
        _
      // Predicated region
      $region25: #{simclr_forward.1} parent=11 // pred_check
        %p257 = pneg %p139
      $region26: #{simclr_forward.1} parent=11 // pred_check_branch
        %259 = sbr.rel (%p257) target = $region28
      $region27: #{simclr_forward.1} parent=11 // pred_region
        _
      $region28: #{simclr_forward.1} parent=11 // pred_fallthru
        _
      // Predicated region
      $region29: #{simclr_forward.1} parent=11 // pred_check
        %p260 = pneg %p160
      $region30: #{simclr_forward.1} parent=11 // pred_check_branch
        %262 = sbr.rel (%p260) target = $region32
      $region31: #{simclr_forward.1} parent=11 // pred_region
        _
      $region32: #{simclr_forward.1} parent=11 // pred_fallthru
        _
      // Predicated region
      $region33: #{simclr_forward.1} parent=11 // pred_check
        %p263 = pneg %p181
      $region34: #{simclr_forward.1} parent=11 // pred_check_branch
        %265 = sbr.rel (%p263) target = $region36
      $region35: #{simclr_forward.1} parent=11 // pred_region
        _
      $region36: #{simclr_forward.1} parent=11 // pred_fallthru
        _
    $region12: #{simclr_forward.1} parent=5 // pred_fallthru
      _
    %p266 = scmp.lt.s32.totalorder %s15, 2
    // Predicated region
    $region37: #{simclr_forward.1} parent=5 // pred_check
      %p267 = pneg %p266
    $region38: #{simclr_forward.1} parent=5 // pred_check_branch
      %269 = sbr.rel (%p267) target = $region40
    $region39: #{simclr_forward.1} parent=5 // pred_region
      // Predicated region
      $region41: #{simclr_forward.1} parent=39 // pred_check
        %p270 = pneg %p49
      $region42: #{simclr_forward.1} parent=39 // pred_check_branch
        %272 = sbr.rel (%p270) target = $region44
      $region43: #{simclr_forward.1} parent=39 // pred_region
        %s273 = smul.u32 128, %s23
        %s274 = smul.u32 2, %s22
        %p275 = scmp.lt.s32.totalorder %s273, 255
        %s276 = scalar_select %p275, %s273, 255
        %p277 = scmp.lt.s32.totalorder %s274, 1
        %s278 = scalar_select %p277, %s274, 1
        %s279 = smul.addr %s276, 2
        %s280 = sadd.s32 %s278, %s279
        %s281 = smul.addr %s280, 4
        %s282 = scalar_lea.vmem %s0, %s281
        %s283 = smul.u32 128, %s23
        %s284 = smul.u32 2, %s22
      $region44: #{simclr_forward.1} parent=39 // pred_fallthru
        _
    $region40: #{simclr_forward.1} parent=5 // pred_fallthru
      _
    %p285 = scmp.le.s32.totalorder 1, %s15
    %p286 = scmp.lt.s32.totalorder %s15, 3
    %p287 = pnand %p285, %p286
    %p288 = pneg %p287
    // Predicated region
    $region45: #{simclr_forward.1} parent=5 // pred_check
      _
    $region46: #{simclr_forward.1} parent=5 // pred_check_branch
      %290 = sbr.rel (%p287) target = $region48
    $region47: #{simclr_forward.1} parent=5 // pred_region
      %s291 = ssub.s32 %s15, 1
      %s292 = smul.u32 128, %s25
      %s293 = smul.u32 2, %s24
      %p294 = scmp.lt.s32.totalorder %s292, 255
      %s295 = scalar_select %p294, %s292, 255
      %p296 = scmp.lt.s32.totalorder %s293, 1
      %s297 = scalar_select %p296, %s293, 1
      %s298 = smul.addr %s295, 2
      %s299 = sadd.s32 %s297, %s298
      %s300 = smul.addr %s299, 4
      %s301 = scalar_lea.vmem %s0, %s300
      %p302 = pneg %p55
      %p303 = pneg %p52
      %p304 = pneg %p76
      %p305 = pneg %p73
      %p306 = pneg %p97
      %p307 = pneg %p94
      %p308 = pneg %p118
      %p309 = pneg %p115
      %p310 = pneg %p139
      %p311 = pneg %p136
      %p312 = pneg %p160
      %p313 = pneg %p157
      %p314 = pneg %p181
      %p315 = pneg %p178
      %p316 = pneg %p207
      %p317 = pneg %p204
      %s318 = smul.u32 2, %s24
      %p319 = scmp.lt.s32.totalorder %s318, 1
      %s320 = scalar_select %p319, %s318, 1
      %s321 = smul.addr %s320, 4
      %s322 = smul.addr %s321, 8
      %s323 = scalar_lea.vmem %s7, %s322
      %p324 = pneg %p233
      %p325 = pneg %p230
      %s326 = smul.u32 2, %s24
      %p327 = scmp.lt.s32.totalorder %s326, 1
      %s328 = scalar_select %p327, %s326, 1
      %s329 = smul.addr %s328, 8
      %s330 = scalar_lea.vmem %s8, %s329
      %s331 = smul.u32 128, %s25
      %s332 = smul.u32 2, %s24
      %p333 = scmp.lt.s32.totalorder %s331, 255
      %s334 = scalar_select %p333, %s331, 255
      %p335 = scmp.lt.s32.totalorder %s332, 1
      %s336 = scalar_select %p335, %s332, 1
      %s337 = smul.addr %s334, 2
      %s338 = sadd.s32 %s336, %s337
      %s339 = smul.addr %s338, 4
      %s340 = scalar_lea.vmem %s0, %s339
      %s341 = smul.u32 128, %s25
      %s342 = smul.u32 2, %s24
      %s343 = smul.u32 2, %s24
      %p344 = scmp.lt.s32.totalorder %s343, 1
      %s345 = scalar_select %p344, %s343, 1
      %s346 = smul.addr %s345, 4
      %s347 = smul.addr %s346, 8
      %s348 = scalar_lea.vmem %s7, %s347
      %s349 = smul.u32 2, %s24
      %s350 = smul.u32 2, %s24
      %p351 = scmp.lt.s32.totalorder %s350, 1
      %s352 = scalar_select %p351, %s350, 1
      %s353 = smul.addr %s352, 8
      %s354 = scalar_lea.vmem %s8, %s353
      %s355 = smul.u32 2, %s24
      %p357 = scmp.eq.s32.totalorder %s25, 0
      // Predicated region
      $region49: #{simclr_forward.1} parent=47 // pred_check
        %p358 = pneg %p357
      $region50: #{simclr_forward.1} parent=47 // pred_check_branch
        %360 = sbr.rel (%p358) target = $region52
      $region51: #{simclr_forward.1} parent=47 // pred_region
        %361 = vst [vmem:[#allocation2] sm:$0xff] 0.0
        %362 = vst [vmem:[#allocation2 + $0x8] sm:$0xff] 0.0
        %363 = vst [vmem:[#allocation2 + $0x10] sm:$0xff] 0.0
        %364 = vst [vmem:[#allocation2 + $0x18] sm:$0xff] 0.0
        %365 = vst [vmem:[#allocation2 + $0x20] sm:$0xff] 0.0
        %366 = vst [vmem:[#allocation2 + $0x28] sm:$0xff] 0.0
        %367 = vst [vmem:[#allocation2 + $0x30] sm:$0xff] 0.0
        %368 = vst [vmem:[#allocation2 + $0x38] sm:$0xff] 0.0
      $region52: #{simclr_forward.1} parent=47 // pred_fallthru
        _
      %v369 = vld [vmem:[%s340] sm:$0xf]
      %v370 = vld [vmem:[%s340 + $0x4] sm:$0xf]
      %v371 = vld [vmem:[%s340 + $0x8] sm:$0xf]
      %v372 = vld [vmem:[%s340 + $0xc] sm:$0xf]
      %v373 = vld [vmem:[%s340 + $0x10] sm:$0xf]
      %v374 = vld [vmem:[%s340 + $0x14] sm:$0xf]
      %v375 = vld [vmem:[%s340 + $0x18] sm:$0xf]
      %v376 = vld [vmem:[%s340 + $0x1c] sm:$0xf]
      %v377 = vld [vmem:[%s340 + $0x20] sm:$0xf]
      %v378 = vld [vmem:[%s340 + $0x24] sm:$0xf]
      %v379 = vld [vmem:[%s340 + $0x28] sm:$0xf]
      %v380 = vld [vmem:[%s340 + $0x2c] sm:$0xf]
      %v381 = vld [vmem:[%s340 + $0x30] sm:$0xf]
      %v382 = vld [vmem:[%s340 + $0x34] sm:$0xf]
      %v383 = vld [vmem:[%s340 + $0x38] sm:$0xf]
      %v384 = vld [vmem:[%s340 + $0x3c] sm:$0xf]
      %v385 = vld [vmem:[%s340 + $0x40] sm:$0xf]
      %v386 = vld [vmem:[%s340 + $0x44] sm:$0xf]
      %v387 = vld [vmem:[%s340 + $0x48] sm:$0xf]
      %v388 = vld [vmem:[%s340 + $0x4c] sm:$0xf]
      %v389 = vld [vmem:[%s340 + $0x50] sm:$0xf]
      %v390 = vld [vmem:[%s340 + $0x54] sm:$0xf]
      %v391 = vld [vmem:[%s340 + $0x58] sm:$0xf]
      %v392 = vld [vmem:[%s340 + $0x5c] sm:$0xf]
      %v393 = vld [vmem:[%s340 + $0x60] sm:$0xf]
      %v394 = vld [vmem:[%s340 + $0x64] sm:$0xf]
      %v395 = vld [vmem:[%s340 + $0x68] sm:$0xf]
      %v396 = vld [vmem:[%s340 + $0x6c] sm:$0xf]
      %v397 = vld [vmem:[%s340 + $0x70] sm:$0xf]
      %v398 = vld [vmem:[%s340 + $0x74] sm:$0xf]
      %v399 = vld [vmem:[%s340 + $0x78] sm:$0xf]
      %v400 = vld [vmem:[%s340 + $0x7c] sm:$0xf]
      %v401 = vld [vmem:[%s340 + $0x80] sm:$0xf]
      %v402 = vld [vmem:[%s340 + $0x84] sm:$0xf]
      %v403 = vld [vmem:[%s340 + $0x88] sm:$0xf]
      %v404 = vld [vmem:[%s340 + $0x8c] sm:$0xf]
      %v405 = vld [vmem:[%s340 + $0x90] sm:$0xf]
      %v406 = vld [vmem:[%s340 + $0x94] sm:$0xf]
      %v407 = vld [vmem:[%s340 + $0x98] sm:$0xf]
      %v408 = vld [vmem:[%s340 + $0x9c] sm:$0xf]
      %v409 = vld [vmem:[%s340 + $0xa0] sm:$0xf]
      %v410 = vld [vmem:[%s340 + $0xa4] sm:$0xf]
      %v411 = vld [vmem:[%s340 + $0xa8] sm:$0xf]
      %v412 = vld [vmem:[%s340 + $0xac] sm:$0xf]
      %v413 = vld [vmem:[%s340 + $0xb0] sm:$0xf]
      %v414 = vld [vmem:[%s340 + $0xb4] sm:$0xf]
      %v415 = vld [vmem:[%s340 + $0xb8] sm:$0xf]
      %v416 = vld [vmem:[%s340 + $0xbc] sm:$0xf]
      %v417 = vld [vmem:[%s340 + $0xc0] sm:$0xf]
      %v418 = vld [vmem:[%s340 + $0xc4] sm:$0xf]
      %v419 = vld [vmem:[%s340 + $0xc8] sm:$0xf]
      %v420 = vld [vmem:[%s340 + $0xcc] sm:$0xf]
      %v421 = vld [vmem:[%s340 + $0xd0] sm:$0xf]
      %v422 = vld [vmem:[%s340 + $0xd4] sm:$0xf]
      %v423 = vld [vmem:[%s340 + $0xd8] sm:$0xf]
      %v424 = vld [vmem:[%s340 + $0xdc] sm:$0xf]
      %v425 = vld [vmem:[%s340 + $0xe0] sm:$0xf]
      %v426 = vld [vmem:[%s340 + $0xe4] sm:$0xf]
      %v427 = vld [vmem:[%s340 + $0xe8] sm:$0xf]
      %v428 = vld [vmem:[%s340 + $0xec] sm:$0xf]
      %v429 = vld [vmem:[%s340 + $0xf0] sm:$0xf]
      %v430 = vld [vmem:[%s340 + $0xf4] sm:$0xf]
      %v431 = vld [vmem:[%s340 + $0xf8] sm:$0xf]
      %v432 = vld [vmem:[%s340 + $0xfc] sm:$0xf]
      %v433 = vld [vmem:[%s340 + $0x100] sm:$0xf]
      %v434 = vld [vmem:[%s340 + $0x104] sm:$0xf]
      %v435 = vld [vmem:[%s340 + $0x108] sm:$0xf]
      %v436 = vld [vmem:[%s340 + $0x10c] sm:$0xf]
      %v437 = vld [vmem:[%s340 + $0x110] sm:$0xf]
      %v438 = vld [vmem:[%s340 + $0x114] sm:$0xf]
      %v439 = vld [vmem:[%s340 + $0x118] sm:$0xf]
      %v440 = vld [vmem:[%s340 + $0x11c] sm:$0xf]
      %v441 = vld [vmem:[%s340 + $0x120] sm:$0xf]
      %v442 = vld [vmem:[%s340 + $0x124] sm:$0xf]
      %v443 = vld [vmem:[%s340 + $0x128] sm:$0xf]
      %v444 = vld [vmem:[%s340 + $0x12c] sm:$0xf]
      %v445 = vld [vmem:[%s340 + $0x130] sm:$0xf]
      %v446 = vld [vmem:[%s340 + $0x134] sm:$0xf]
      %v447 = vld [vmem:[%s340 + $0x138] sm:$0xf]
      %v448 = vld [vmem:[%s340 + $0x13c] sm:$0xf]
      %v449 = vld [vmem:[%s340 + $0x140] sm:$0xf]
      %v450 = vld [vmem:[%s340 + $0x144] sm:$0xf]
      %v451 = vld [vmem:[%s340 + $0x148] sm:$0xf]
      %v452 = vld [vmem:[%s340 + $0x14c] sm:$0xf]
      %v453 = vld [vmem:[%s340 + $0x150] sm:$0xf]
      %v454 = vld [vmem:[%s340 + $0x154] sm:$0xf]
      %v455 = vld [vmem:[%s340 + $0x158] sm:$0xf]
      %v456 = vld [vmem:[%s340 + $0x15c] sm:$0xf]
      %v457 = vld [vmem:[%s340 + $0x160] sm:$0xf]
      %v458 = vld [vmem:[%s340 + $0x164] sm:$0xf]
      %v459 = vld [vmem:[%s340 + $0x168] sm:$0xf]
      %v460 = vld [vmem:[%s340 + $0x16c] sm:$0xf]
      %v461 = vld [vmem:[%s340 + $0x170] sm:$0xf]
      %v462 = vld [vmem:[%s340 + $0x174] sm:$0xf]
      %v463 = vld [vmem:[%s340 + $0x178] sm:$0xf]
      %v464 = vld [vmem:[%s340 + $0x17c] sm:$0xf]
      %v465 = vld [vmem:[%s340 + $0x180] sm:$0xf]
      %v466 = vld [vmem:[%s340 + $0x184] sm:$0xf]
      %v467 = vld [vmem:[%s340 + $0x188] sm:$0xf]
      %v468 = vld [vmem:[%s340 + $0x18c] sm:$0xf]
      %v469 = vld [vmem:[%s340 + $0x190] sm:$0xf]
      %v470 = vld [vmem:[%s340 + $0x194] sm:$0xf]
      %v471 = vld [vmem:[%s340 + $0x198] sm:$0xf]
      %v472 = vld [vmem:[%s340 + $0x19c] sm:$0xf]
      %v473 = vld [vmem:[%s340 + $0x1a0] sm:$0xf]
      %v474 = vld [vmem:[%s340 + $0x1a4] sm:$0xf]
      %v475 = vld [vmem:[%s340 + $0x1a8] sm:$0xf]
      %v476 = vld [vmem:[%s340 + $0x1ac] sm:$0xf]
      %v477 = vld [vmem:[%s340 + $0x1b0] sm:$0xf]
      %v478 = vld [vmem:[%s340 + $0x1b4] sm:$0xf]
      %v479 = vld [vmem:[%s340 + $0x1b8] sm:$0xf]
      %v480 = vld [vmem:[%s340 + $0x1bc] sm:$0xf]
      %v481 = vld [vmem:[%s340 + $0x1c0] sm:$0xf]
      %v482 = vld [vmem:[%s340 + $0x1c4] sm:$0xf]
      %v483 = vld [vmem:[%s340 + $0x1c8] sm:$0xf]
      %v484 = vld [vmem:[%s340 + $0x1cc] sm:$0xf]
      %v485 = vld [vmem:[%s340 + $0x1d0] sm:$0xf]
      %v486 = vld [vmem:[%s340 + $0x1d4] sm:$0xf]
      %v487 = vld [vmem:[%s340 + $0x1d8] sm:$0xf]
      %v488 = vld [vmem:[%s340 + $0x1dc] sm:$0xf]
      %v489 = vld [vmem:[%s340 + $0x1e0] sm:$0xf]
      %v490 = vld [vmem:[%s340 + $0x1e4] sm:$0xf]
      %v491 = vld [vmem:[%s340 + $0x1e8] sm:$0xf]
      %v492 = vld [vmem:[%s340 + $0x1ec] sm:$0xf]
      %v493 = vld [vmem:[%s340 + $0x1f0] sm:$0xf]
      %v494 = vld [vmem:[%s340 + $0x1f4] sm:$0xf]
      %v495 = vld [vmem:[%s340 + $0x1f8] sm:$0xf]
      %v496 = vld [vmem:[%s340 + $0x1fc] sm:$0xf]
      %v497 = vld [vmem:[%s340 + $0x200] sm:$0xf]
      %v498 = vld [vmem:[%s340 + $0x204] sm:$0xf]
      %v499 = vld [vmem:[%s340 + $0x208] sm:$0xf]
      %v500 = vld [vmem:[%s340 + $0x20c] sm:$0xf]
      %v501 = vld [vmem:[%s340 + $0x210] sm:$0xf]
      %v502 = vld [vmem:[%s340 + $0x214] sm:$0xf]
      %v503 = vld [vmem:[%s340 + $0x218] sm:$0xf]
      %v504 = vld [vmem:[%s340 + $0x21c] sm:$0xf]
      %v505 = vld [vmem:[%s340 + $0x220] sm:$0xf]
      %v506 = vld [vmem:[%s340 + $0x224] sm:$0xf]
      %v507 = vld [vmem:[%s340 + $0x228] sm:$0xf]
      %v508 = vld [vmem:[%s340 + $0x22c] sm:$0xf]
      %v509 = vld [vmem:[%s340 + $0x230] sm:$0xf]
      %v510 = vld [vmem:[%s340 + $0x234] sm:$0xf]
      %v511 = vld [vmem:[%s340 + $0x238] sm:$0xf]
      %v512 = vld [vmem:[%s340 + $0x23c] sm:$0xf]
      %v513 = vld [vmem:[%s340 + $0x240] sm:$0xf]
      %v514 = vld [vmem:[%s340 + $0x244] sm:$0xf]
      %v515 = vld [vmem:[%s340 + $0x248] sm:$0xf]
      %v516 = vld [vmem:[%s340 + $0x24c] sm:$0xf]
      %v517 = vld [vmem:[%s340 + $0x250] sm:$0xf]
      %v518 = vld [vmem:[%s340 + $0x254] sm:$0xf]
      %v519 = vld [vmem:[%s340 + $0x258] sm:$0xf]
      %v520 = vld [vmem:[%s340 + $0x25c] sm:$0xf]
      %v521 = vld [vmem:[%s340 + $0x260] sm:$0xf]
      %v522 = vld [vmem:[%s340 + $0x264] sm:$0xf]
      %v523 = vld [vmem:[%s340 + $0x268] sm:$0xf]
      %v524 = vld [vmem:[%s340 + $0x26c] sm:$0xf]
      %v525 = vld [vmem:[%s340 + $0x270] sm:$0xf]
      %v526 = vld [vmem:[%s340 + $0x274] sm:$0xf]
      %v527 = vld [vmem:[%s340 + $0x278] sm:$0xf]
      %v528 = vld [vmem:[%s340 + $0x27c] sm:$0xf]
      %v529 = vld [vmem:[%s340 + $0x280] sm:$0xf]
      %v530 = vld [vmem:[%s340 + $0x284] sm:$0xf]
      %v531 = vld [vmem:[%s340 + $0x288] sm:$0xf]
      %v532 = vld [vmem:[%s340 + $0x28c] sm:$0xf]
      %v533 = vld [vmem:[%s340 + $0x290] sm:$0xf]
      %v534 = vld [vmem:[%s340 + $0x294] sm:$0xf]
      %v535 = vld [vmem:[%s340 + $0x298] sm:$0xf]
      %v536 = vld [vmem:[%s340 + $0x29c] sm:$0xf]
      %v537 = vld [vmem:[%s340 + $0x2a0] sm:$0xf]
      %v538 = vld [vmem:[%s340 + $0x2a4] sm:$0xf]
      %v539 = vld [vmem:[%s340 + $0x2a8] sm:$0xf]
      %v540 = vld [vmem:[%s340 + $0x2ac] sm:$0xf]
      %v541 = vld [vmem:[%s340 + $0x2b0] sm:$0xf]
      %v542 = vld [vmem:[%s340 + $0x2b4] sm:$0xf]
      %v543 = vld [vmem:[%s340 + $0x2b8] sm:$0xf]
      %v544 = vld [vmem:[%s340 + $0x2bc] sm:$0xf]
      %v545 = vld [vmem:[%s340 + $0x2c0] sm:$0xf]
      %v546 = vld [vmem:[%s340 + $0x2c4] sm:$0xf]
      %v547 = vld [vmem:[%s340 + $0x2c8] sm:$0xf]
      %v548 = vld [vmem:[%s340 + $0x2cc] sm:$0xf]
      %v549 = vld [vmem:[%s340 + $0x2d0] sm:$0xf]
      %v550 = vld [vmem:[%s340 + $0x2d4] sm:$0xf]
      %v551 = vld [vmem:[%s340 + $0x2d8] sm:$0xf]
      %v552 = vld [vmem:[%s340 + $0x2dc] sm:$0xf]
      %v553 = vld [vmem:[%s340 + $0x2e0] sm:$0xf]
      %v554 = vld [vmem:[%s340 + $0x2e4] sm:$0xf]
      %v555 = vld [vmem:[%s340 + $0x2e8] sm:$0xf]
      %v556 = vld [vmem:[%s340 + $0x2ec] sm:$0xf]
      %v557 = vld [vmem:[%s340 + $0x2f0] sm:$0xf]
      %v558 = vld [vmem:[%s340 + $0x2f4] sm:$0xf]
      %v559 = vld [vmem:[%s340 + $0x2f8] sm:$0xf]
      %v560 = vld [vmem:[%s340 + $0x2fc] sm:$0xf]
      %v561 = vld [vmem:[%s340 + $0x300] sm:$0xf]
      %v562 = vld [vmem:[%s340 + $0x304] sm:$0xf]
      %v563 = vld [vmem:[%s340 + $0x308] sm:$0xf]
      %v564 = vld [vmem:[%s340 + $0x30c] sm:$0xf]
      %v565 = vld [vmem:[%s340 + $0x310] sm:$0xf]
      %v566 = vld [vmem:[%s340 + $0x314] sm:$0xf]
      %v567 = vld [vmem:[%s340 + $0x318] sm:$0xf]
      %v568 = vld [vmem:[%s340 + $0x31c] sm:$0xf]
      %v569 = vld [vmem:[%s340 + $0x320] sm:$0xf]
      %v570 = vld [vmem:[%s340 + $0x324] sm:$0xf]
      %v571 = vld [vmem:[%s340 + $0x328] sm:$0xf]
      %v572 = vld [vmem:[%s340 + $0x32c] sm:$0xf]
      %v573 = vld [vmem:[%s340 + $0x330] sm:$0xf]
      %v574 = vld [vmem:[%s340 + $0x334] sm:$0xf]
      %v575 = vld [vmem:[%s340 + $0x338] sm:$0xf]
      %v576 = vld [vmem:[%s340 + $0x33c] sm:$0xf]
      %v577 = vld [vmem:[%s340 + $0x340] sm:$0xf]
      %v578 = vld [vmem:[%s340 + $0x344] sm:$0xf]
      %v579 = vld [vmem:[%s340 + $0x348] sm:$0xf]
      %v580 = vld [vmem:[%s340 + $0x34c] sm:$0xf]
      %v581 = vld [vmem:[%s340 + $0x350] sm:$0xf]
      %v582 = vld [vmem:[%s340 + $0x354] sm:$0xf]
      %v583 = vld [vmem:[%s340 + $0x358] sm:$0xf]
      %v584 = vld [vmem:[%s340 + $0x35c] sm:$0xf]
      %v585 = vld [vmem:[%s340 + $0x360] sm:$0xf]
      %v586 = vld [vmem:[%s340 + $0x364] sm:$0xf]
      %v587 = vld [vmem:[%s340 + $0x368] sm:$0xf]
      %v588 = vld [vmem:[%s340 + $0x36c] sm:$0xf]
      %v589 = vld [vmem:[%s340 + $0x370] sm:$0xf]
      %v590 = vld [vmem:[%s340 + $0x374] sm:$0xf]
      %v591 = vld [vmem:[%s340 + $0x378] sm:$0xf]
      %v592 = vld [vmem:[%s340 + $0x37c] sm:$0xf]
      %v593 = vld [vmem:[%s340 + $0x380] sm:$0xf]
      %v594 = vld [vmem:[%s340 + $0x384] sm:$0xf]
      %v595 = vld [vmem:[%s340 + $0x388] sm:$0xf]
      %v596 = vld [vmem:[%s340 + $0x38c] sm:$0xf]
      %v597 = vld [vmem:[%s340 + $0x390] sm:$0xf]
      %v598 = vld [vmem:[%s340 + $0x394] sm:$0xf]
      %v599 = vld [vmem:[%s340 + $0x398] sm:$0xf]
      %v600 = vld [vmem:[%s340 + $0x39c] sm:$0xf]
      %v601 = vld [vmem:[%s340 + $0x3a0] sm:$0xf]
      %v602 = vld [vmem:[%s340 + $0x3a4] sm:$0xf]
      %v603 = vld [vmem:[%s340 + $0x3a8] sm:$0xf]
      %v604 = vld [vmem:[%s340 + $0x3ac] sm:$0xf]
      %v605 = vld [vmem:[%s340 + $0x3b0] sm:$0xf]
      %v606 = vld [vmem:[%s340 + $0x3b4] sm:$0xf]
      %v607 = vld [vmem:[%s340 + $0x3b8] sm:$0xf]
      %v608 = vld [vmem:[%s340 + $0x3bc] sm:$0xf]
      %v609 = vld [vmem:[%s340 + $0x3c0] sm:$0xf]
      %v610 = vld [vmem:[%s340 + $0x3c4] sm:$0xf]
      %v611 = vld [vmem:[%s340 + $0x3c8] sm:$0xf]
      %v612 = vld [vmem:[%s340 + $0x3cc] sm:$0xf]
      %v613 = vld [vmem:[%s340 + $0x3d0] sm:$0xf]
      %v614 = vld [vmem:[%s340 + $0x3d4] sm:$0xf]
      %v615 = vld [vmem:[%s340 + $0x3d8] sm:$0xf]
      %v616 = vld [vmem:[%s340 + $0x3dc] sm:$0xf]
      %v617 = vld [vmem:[%s340 + $0x3e0] sm:$0xf]
      %v618 = vld [vmem:[%s340 + $0x3e4] sm:$0xf]
      %v619 = vld [vmem:[%s340 + $0x3e8] sm:$0xf]
      %v620 = vld [vmem:[%s340 + $0x3ec] sm:$0xf]
      %v621 = vld [vmem:[%s340 + $0x3f0] sm:$0xf]
      %v622 = vld [vmem:[%s340 + $0x3f4] sm:$0xf]
      %v623 = vld [vmem:[%s340 + $0x3f8] sm:$0xf]
      %v624 = vld [vmem:[%s340 + $0x3fc] sm:$0xf]
      %v625 = vld [vmem:[%s1] sm:$0xff]
      %v626 = vld [vmem:[%s1 + $0x8] sm:$0xff]
      %v627 = vld [vmem:[%s1 + $0x10] sm:$0xff]
      %v628 = vld [vmem:[%s1 + $0x18] sm:$0xff]
      %v629 = vld [vmem:[%s1 + $0x20] sm:$0xff]
      %v630 = vld [vmem:[%s1 + $0x28] sm:$0xff]
      %v631 = vld [vmem:[%s1 + $0x30] sm:$0xff]
      %v632 = vld [vmem:[%s1 + $0x38] sm:$0xff]
      %v633 = vld [vmem:[%s2] sm:$0xf]
      %v635 = vperm.slane %v633, 0
      %v636 = vperm.slane %v633, 1
      %v637 = vperm.slane %v633, 2
      %v638 = vperm.slane %v633, 3
      %v899 = vunpack.c.l.b16 %v369
      %v900 = vunpack.c.l.b16 %v370
      %v901 = vunpack.c.l.b16 %v371
      %v902 = vunpack.c.l.b16 %v372
      %v903 = vunpack.c.l.b16 %v373
      %v904 = vunpack.c.l.b16 %v374
      %v905 = vunpack.c.l.b16 %v375
      %v906 = vunpack.c.l.b16 %v376
      %v907 = vunpack.c.l.b16 %v377
      %v908 = vunpack.c.l.b16 %v378
      %v909 = vunpack.c.l.b16 %v379
      %v910 = vunpack.c.l.b16 %v380
      %v911 = vunpack.c.l.b16 %v381
      %v912 = vunpack.c.l.b16 %v382
      %v913 = vunpack.c.l.b16 %v383
      %v914 = vunpack.c.l.b16 %v384
      %v915 = vunpack.c.l.b16 %v385
      %v916 = vunpack.c.l.b16 %v386
      %v917 = vunpack.c.l.b16 %v387
      %v918 = vunpack.c.l.b16 %v388
      %v919 = vunpack.c.l.b16 %v389
      %v920 = vunpack.c.l.b16 %v390
      %v921 = vunpack.c.l.b16 %v391
      %v922 = vunpack.c.l.b16 %v392
      %v923 = vunpack.c.l.b16 %v393
      %v924 = vunpack.c.l.b16 %v394
      %v925 = vunpack.c.l.b16 %v395
      %v926 = vunpack.c.l.b16 %v396
      %v927 = vunpack.c.l.b16 %v397
      %v928 = vunpack.c.l.b16 %v398
      %v929 = vunpack.c.l.b16 %v399
      %v930 = vunpack.c.l.b16 %v400
      %v931 = vunpack.c.l.b16 %v401
      %v932 = vunpack.c.l.b16 %v402
      %v933 = vunpack.c.l.b16 %v403
      %v934 = vunpack.c.l.b16 %v404
      %v935 = vunpack.c.l.b16 %v405
      %v936 = vunpack.c.l.b16 %v406
      %v937 = vunpack.c.l.b16 %v407
      %v938 = vunpack.c.l.b16 %v408
      %v939 = vunpack.c.l.b16 %v409
      %v940 = vunpack.c.l.b16 %v410
      %v941 = vunpack.c.l.b16 %v411
      %v942 = vunpack.c.l.b16 %v412
      %v943 = vunpack.c.l.b16 %v413
      %v944 = vunpack.c.l.b16 %v414
      %v945 = vunpack.c.l.b16 %v415
      %v946 = vunpack.c.l.b16 %v416
      %v947 = vunpack.c.l.b16 %v417
      %v948 = vunpack.c.l.b16 %v418
      %v949 = vunpack.c.l.b16 %v419
      %v950 = vunpack.c.l.b16 %v420
      %v951 = vunpack.c.l.b16 %v421
      %v952 = vunpack.c.l.b16 %v422
      %v953 = vunpack.c.l.b16 %v423
      %v954 = vunpack.c.l.b16 %v424
      %v955 = vunpack.c.l.b16 %v425
      %v956 = vunpack.c.l.b16 %v426
      %v957 = vunpack.c.l.b16 %v427
      %v958 = vunpack.c.l.b16 %v428
      %v959 = vunpack.c.l.b16 %v429
      %v960 = vunpack.c.l.b16 %v430
      %v961 = vunpack.c.l.b16 %v431
      %v962 = vunpack.c.l.b16 %v432
      %v963 = vunpack.c.l.b16 %v433
      %v964 = vunpack.c.l.b16 %v434
      %v965 = vunpack.c.l.b16 %v435
      %v966 = vunpack.c.l.b16 %v436
      %v967 = vunpack.c.l.b16 %v437
      %v968 = vunpack.c.l.b16 %v438
      %v969 = vunpack.c.l.b16 %v439
      %v970 = vunpack.c.l.b16 %v440
      %v971 = vunpack.c.l.b16 %v441
      %v972 = vunpack.c.l.b16 %v442
      %v973 = vunpack.c.l.b16 %v443
      %v974 = vunpack.c.l.b16 %v444
      %v975 = vunpack.c.l.b16 %v445
      %v976 = vunpack.c.l.b16 %v446
      %v977 = vunpack.c.l.b16 %v447
      %v978 = vunpack.c.l.b16 %v448
      %v979 = vunpack.c.l.b16 %v449
      %v980 = vunpack.c.l.b16 %v450
      %v981 = vunpack.c.l.b16 %v451
      %v982 = vunpack.c.l.b16 %v452
      %v983 = vunpack.c.l.b16 %v453
      %v984 = vunpack.c.l.b16 %v454
      %v985 = vunpack.c.l.b16 %v455
      %v986 = vunpack.c.l.b16 %v456
      %v987 = vunpack.c.l.b16 %v457
      %v988 = vunpack.c.l.b16 %v458
      %v989 = vunpack.c.l.b16 %v459
      %v990 = vunpack.c.l.b16 %v460
      %v991 = vunpack.c.l.b16 %v461
      %v992 = vunpack.c.l.b16 %v462
      %v993 = vunpack.c.l.b16 %v463
      %v994 = vunpack.c.l.b16 %v464
      %v995 = vunpack.c.l.b16 %v465
      %v996 = vunpack.c.l.b16 %v466
      %v997 = vunpack.c.l.b16 %v467
      %v998 = vunpack.c.l.b16 %v468
      %v999 = vunpack.c.l.b16 %v469
      %v1000 = vunpack.c.l.b16 %v470
      %v1001 = vunpack.c.l.b16 %v471
      %v1002 = vunpack.c.l.b16 %v472
      %v1003 = vunpack.c.l.b16 %v473
      %v1004 = vunpack.c.l.b16 %v474
      %v1005 = vunpack.c.l.b16 %v475
      %v1006 = vunpack.c.l.b16 %v476
      %v1007 = vunpack.c.l.b16 %v477
      %v1008 = vunpack.c.l.b16 %v478
      %v1009 = vunpack.c.l.b16 %v479
      %v1010 = vunpack.c.l.b16 %v480
      %v1011 = vunpack.c.l.b16 %v481
      %v1012 = vunpack.c.l.b16 %v482
      %v1013 = vunpack.c.l.b16 %v483
      %v1014 = vunpack.c.l.b16 %v484
      %v1015 = vunpack.c.l.b16 %v485
      %v1016 = vunpack.c.l.b16 %v486
      %v1017 = vunpack.c.l.b16 %v487
      %v1018 = vunpack.c.l.b16 %v488
      %v1019 = vunpack.c.l.b16 %v489
      %v1020 = vunpack.c.l.b16 %v490
      %v1021 = vunpack.c.l.b16 %v491
      %v1022 = vunpack.c.l.b16 %v492
      %v1023 = vunpack.c.l.b16 %v493
      %v1024 = vunpack.c.l.b16 %v494
      %v1025 = vunpack.c.l.b16 %v495
      %v1026 = vunpack.c.l.b16 %v496
      %v1027 = vunpack.c.l.b16 %v497
      %v1028 = vunpack.c.l.b16 %v498
      %v1029 = vunpack.c.l.b16 %v499
      %v1030 = vunpack.c.l.b16 %v500
      %v1031 = vunpack.c.l.b16 %v501
      %v1032 = vunpack.c.l.b16 %v502
      %v1033 = vunpack.c.l.b16 %v503
      %v1034 = vunpack.c.l.b16 %v504
      %v1035 = vunpack.c.l.b16 %v505
      %v1036 = vunpack.c.l.b16 %v506
      %v1037 = vunpack.c.l.b16 %v507
      %v1038 = vunpack.c.l.b16 %v508
      %v1039 = vunpack.c.l.b16 %v509
      %v1040 = vunpack.c.l.b16 %v510
      %v1041 = vunpack.c.l.b16 %v511
      %v1042 = vunpack.c.l.b16 %v512
      %v1043 = vunpack.c.l.b16 %v513
      %v1044 = vunpack.c.l.b16 %v514
      %v1045 = vunpack.c.l.b16 %v515
      %v1046 = vunpack.c.l.b16 %v516
      %v1047 = vunpack.c.l.b16 %v517
      %v1048 = vunpack.c.l.b16 %v518
      %v1049 = vunpack.c.l.b16 %v519
      %v1050 = vunpack.c.l.b16 %v520
      %v1051 = vunpack.c.l.b16 %v521
      %v1052 = vunpack.c.l.b16 %v522
      %v1053 = vunpack.c.l.b16 %v523
      %v1054 = vunpack.c.l.b16 %v524
      %v1055 = vunpack.c.l.b16 %v525
      %v1056 = vunpack.c.l.b16 %v526
      %v1057 = vunpack.c.l.b16 %v527
      %v1058 = vunpack.c.l.b16 %v528
      %v1059 = vunpack.c.l.b16 %v529
      %v1060 = vunpack.c.l.b16 %v530
      %v1061 = vunpack.c.l.b16 %v531
      %v1062 = vunpack.c.l.b16 %v532
      %v1063 = vunpack.c.l.b16 %v533
      %v1064 = vunpack.c.l.b16 %v534
      %v1065 = vunpack.c.l.b16 %v535
      %v1066 = vunpack.c.l.b16 %v536
      %v1067 = vunpack.c.l.b16 %v537
      %v1068 = vunpack.c.l.b16 %v538
      %v1069 = vunpack.c.l.b16 %v539
      %v1070 = vunpack.c.l.b16 %v540
      %v1071 = vunpack.c.l.b16 %v541
      %v1072 = vunpack.c.l.b16 %v542
      %v1073 = vunpack.c.l.b16 %v543
      %v1074 = vunpack.c.l.b16 %v544
      %v1075 = vunpack.c.l.b16 %v545
      %v1076 = vunpack.c.l.b16 %v546
      %v1077 = vunpack.c.l.b16 %v547
      %v1078 = vunpack.c.l.b16 %v548
      %v1079 = vunpack.c.l.b16 %v549
      %v1080 = vunpack.c.l.b16 %v550
      %v1081 = vunpack.c.l.b16 %v551
      %v1082 = vunpack.c.l.b16 %v552
      %v1083 = vunpack.c.l.b16 %v553
      %v1084 = vunpack.c.l.b16 %v554
      %v1085 = vunpack.c.l.b16 %v555
      %v1086 = vunpack.c.l.b16 %v556
      %v1087 = vunpack.c.l.b16 %v557
      %v1088 = vunpack.c.l.b16 %v558
      %v1089 = vunpack.c.l.b16 %v559
      %v1090 = vunpack.c.l.b16 %v560
      %v1091 = vunpack.c.l.b16 %v561
      %v1092 = vunpack.c.l.b16 %v562
      %v1093 = vunpack.c.l.b16 %v563
      %v1094 = vunpack.c.l.b16 %v564
      %v1095 = vunpack.c.l.b16 %v565
      %v1096 = vunpack.c.l.b16 %v566
      %v1097 = vunpack.c.l.b16 %v567
      %v1098 = vunpack.c.l.b16 %v568
      %v1099 = vunpack.c.l.b16 %v569
      %v1100 = vunpack.c.l.b16 %v570
      %v1101 = vunpack.c.l.b16 %v571
      %v1102 = vunpack.c.l.b16 %v572
      %v1103 = vunpack.c.l.b16 %v573
      %v1104 = vunpack.c.l.b16 %v574
      %v1105 = vunpack.c.l.b16 %v575
      %v1106 = vunpack.c.l.b16 %v576
      %v1107 = vunpack.c.l.b16 %v577
      %v1108 = vunpack.c.l.b16 %v578
      %v1109 = vunpack.c.l.b16 %v579
      %v1110 = vunpack.c.l.b16 %v580
      %v1111 = vunpack.c.l.b16 %v581
      %v1112 = vunpack.c.l.b16 %v582
      %v1113 = vunpack.c.l.b16 %v583
      %v1114 = vunpack.c.l.b16 %v584
      %v1115 = vunpack.c.l.b16 %v585
      %v1116 = vunpack.c.l.b16 %v586
      %v1117 = vunpack.c.l.b16 %v587
      %v1118 = vunpack.c.l.b16 %v588
      %v1119 = vunpack.c.l.b16 %v589
      %v1120 = vunpack.c.l.b16 %v590
      %v1121 = vunpack.c.l.b16 %v591
      %v1122 = vunpack.c.l.b16 %v592
      %v1123 = vunpack.c.l.b16 %v593
      %v1124 = vunpack.c.l.b16 %v594
      %v1125 = vunpack.c.l.b16 %v595
      %v1126 = vunpack.c.l.b16 %v596
      %v1127 = vunpack.c.l.b16 %v597
      %v1128 = vunpack.c.l.b16 %v598
      %v1129 = vunpack.c.l.b16 %v599
      %v1130 = vunpack.c.l.b16 %v600
      %v1131 = vunpack.c.l.b16 %v601
      %v1132 = vunpack.c.l.b16 %v602
      %v1133 = vunpack.c.l.b16 %v603
      %v1134 = vunpack.c.l.b16 %v604
      %v1135 = vunpack.c.l.b16 %v605
      %v1136 = vunpack.c.l.b16 %v606
      %v1137 = vunpack.c.l.b16 %v607
      %v1138 = vunpack.c.l.b16 %v608
      %v1139 = vunpack.c.l.b16 %v609
      %v1140 = vunpack.c.l.b16 %v610
      %v1141 = vunpack.c.l.b16 %v611
      %v1142 = vunpack.c.l.b16 %v612
      %v1143 = vunpack.c.l.b16 %v613
      %v1144 = vunpack.c.l.b16 %v614
      %v1145 = vunpack.c.l.b16 %v615
      %v1146 = vunpack.c.l.b16 %v616
      %v1147 = vunpack.c.l.b16 %v617
      %v1148 = vunpack.c.l.b16 %v618
      %v1149 = vunpack.c.l.b16 %v619
      %v1150 = vunpack.c.l.b16 %v620
      %v1151 = vunpack.c.l.b16 %v621
      %v1152 = vunpack.c.l.b16 %v622
      %v1153 = vunpack.c.l.b16 %v623
      %v1154 = vunpack.c.l.b16 %v624
      %v1155 = vpack.c.b16 %v900, %v899
      %v1156 = vpack.c.b16 %v902, %v901
      %v1157 = vpack.c.b16 %v904, %v903
      %v1158 = vpack.c.b16 %v906, %v905
      %v1159 = vpack.c.b16 %v908, %v907
      %v1160 = vpack.c.b16 %v910, %v909
      %v1161 = vpack.c.b16 %v912, %v911
      %v1162 = vpack.c.b16 %v914, %v913
      %v1163 = vpack.c.b16 %v916, %v915
      %v1164 = vpack.c.b16 %v918, %v917
      %v1165 = vpack.c.b16 %v920, %v919
      %v1166 = vpack.c.b16 %v922, %v921
      %v1167 = vpack.c.b16 %v924, %v923
      %v1168 = vpack.c.b16 %v926, %v925
      %v1169 = vpack.c.b16 %v928, %v927
      %v1170 = vpack.c.b16 %v930, %v929
      %v1171 = vpack.c.b16 %v932, %v931
      %v1172 = vpack.c.b16 %v934, %v933
      %v1173 = vpack.c.b16 %v936, %v935
      %v1174 = vpack.c.b16 %v938, %v937
      %v1175 = vpack.c.b16 %v940, %v939
      %v1176 = vpack.c.b16 %v942, %v941
      %v1177 = vpack.c.b16 %v944, %v943
      %v1178 = vpack.c.b16 %v946, %v945
      %v1179 = vpack.c.b16 %v948, %v947
      %v1180 = vpack.c.b16 %v950, %v949
      %v1181 = vpack.c.b16 %v952, %v951
      %v1182 = vpack.c.b16 %v954, %v953
      %v1183 = vpack.c.b16 %v956, %v955
      %v1184 = vpack.c.b16 %v958, %v957
      %v1185 = vpack.c.b16 %v960, %v959
      %v1186 = vpack.c.b16 %v962, %v961
      %v1187 = vpack.c.b16 %v964, %v963
      %v1188 = vpack.c.b16 %v966, %v965
      %v1189 = vpack.c.b16 %v968, %v967
      %v1190 = vpack.c.b16 %v970, %v969
      %v1191 = vpack.c.b16 %v972, %v971
      %v1192 = vpack.c.b16 %v974, %v973
      %v1193 = vpack.c.b16 %v976, %v975
      %v1194 = vpack.c.b16 %v978, %v977
      %v1195 = vpack.c.b16 %v980, %v979
      %v1196 = vpack.c.b16 %v982, %v981
      %v1197 = vpack.c.b16 %v984, %v983
      %v1198 = vpack.c.b16 %v986, %v985
      %v1199 = vpack.c.b16 %v988, %v987
      %v1200 = vpack.c.b16 %v990, %v989
      %v1201 = vpack.c.b16 %v992, %v991
      %v1202 = vpack.c.b16 %v994, %v993
      %v1203 = vpack.c.b16 %v996, %v995
      %v1204 = vpack.c.b16 %v998, %v997
      %v1205 = vpack.c.b16 %v1000, %v999
      %v1206 = vpack.c.b16 %v1002, %v1001
      %v1207 = vpack.c.b16 %v1004, %v1003
      %v1208 = vpack.c.b16 %v1006, %v1005
      %v1209 = vpack.c.b16 %v1008, %v1007
      %v1210 = vpack.c.b16 %v1010, %v1009
      %v1211 = vpack.c.b16 %v1012, %v1011
      %v1212 = vpack.c.b16 %v1014, %v1013
      %v1213 = vpack.c.b16 %v1016, %v1015
      %v1214 = vpack.c.b16 %v1018, %v1017
      %v1215 = vpack.c.b16 %v1020, %v1019
      %v1216 = vpack.c.b16 %v1022, %v1021
      %v1217 = vpack.c.b16 %v1024, %v1023
      %v1218 = vpack.c.b16 %v1026, %v1025
      %v1219 = vpack.c.b16 %v1028, %v1027
      %v1220 = vpack.c.b16 %v1030, %v1029
      %v1221 = vpack.c.b16 %v1032, %v1031
      %v1222 = vpack.c.b16 %v1034, %v1033
      %v1223 = vpack.c.b16 %v1036, %v1035
      %v1224 = vpack.c.b16 %v1038, %v1037
      %v1225 = vpack.c.b16 %v1040, %v1039
      %v1226 = vpack.c.b16 %v1042, %v1041
      %v1227 = vpack.c.b16 %v1044, %v1043
      %v1228 = vpack.c.b16 %v1046, %v1045
      %v1229 = vpack.c.b16 %v1048, %v1047
      %v1230 = vpack.c.b16 %v1050, %v1049
      %v1231 = vpack.c.b16 %v1052, %v1051
      %v1232 = vpack.c.b16 %v1054, %v1053
      %v1233 = vpack.c.b16 %v1056, %v1055
      %v1234 = vpack.c.b16 %v1058, %v1057
      %v1235 = vpack.c.b16 %v1060, %v1059
      %v1236 = vpack.c.b16 %v1062, %v1061
      %v1237 = vpack.c.b16 %v1064, %v1063
      %v1238 = vpack.c.b16 %v1066, %v1065
      %v1239 = vpack.c.b16 %v1068, %v1067
      %v1240 = vpack.c.b16 %v1070, %v1069
      %v1241 = vpack.c.b16 %v1072, %v1071
      %v1242 = vpack.c.b16 %v1074, %v1073
      %v1243 = vpack.c.b16 %v1076, %v1075
      %v1244 = vpack.c.b16 %v1078, %v1077
      %v1245 = vpack.c.b16 %v1080, %v1079
      %v1246 = vpack.c.b16 %v1082, %v1081
      %v1247 = vpack.c.b16 %v1084, %v1083
      %v1248 = vpack.c.b16 %v1086, %v1085
      %v1249 = vpack.c.b16 %v1088, %v1087
      %v1250 = vpack.c.b16 %v1090, %v1089
      %v1251 = vpack.c.b16 %v1092, %v1091
      %v1252 = vpack.c.b16 %v1094, %v1093
      %v1253 = vpack.c.b16 %v1096, %v1095
      %v1254 = vpack.c.b16 %v1098, %v1097
      %v1255 = vpack.c.b16 %v1100, %v1099
      %v1256 = vpack.c.b16 %v1102, %v1101
      %v1257 = vpack.c.b16 %v1104, %v1103
      %v1258 = vpack.c.b16 %v1106, %v1105
      %v1259 = vpack.c.b16 %v1108, %v1107
      %v1260 = vpack.c.b16 %v1110, %v1109
      %v1261 = vpack.c.b16 %v1112, %v1111
      %v1262 = vpack.c.b16 %v1114, %v1113
      %v1263 = vpack.c.b16 %v1116, %v1115
      %v1264 = vpack.c.b16 %v1118, %v1117
      %v1265 = vpack.c.b16 %v1120, %v1119
      %v1266 = vpack.c.b16 %v1122, %v1121
      %v1267 = vpack.c.b16 %v1124, %v1123
      %v1268 = vpack.c.b16 %v1126, %v1125
      %v1269 = vpack.c.b16 %v1128, %v1127
      %v1270 = vpack.c.b16 %v1130, %v1129
      %v1271 = vpack.c.b16 %v1132, %v1131
      %v1272 = vpack.c.b16 %v1134, %v1133
      %v1273 = vpack.c.b16 %v1136, %v1135
      %v1274 = vpack.c.b16 %v1138, %v1137
      %v1275 = vpack.c.b16 %v1140, %v1139
      %v1276 = vpack.c.b16 %v1142, %v1141
      %v1277 = vpack.c.b16 %v1144, %v1143
      %v1278 = vpack.c.b16 %v1146, %v1145
      %v1279 = vpack.c.b16 %v1148, %v1147
      %v1280 = vpack.c.b16 %v1150, %v1149
      %v1281 = vpack.c.b16 %v1152, %v1151
      %v1282 = vpack.c.b16 %v1154, %v1153
      %v1291 = vunpack.c.l.b16 %v625
      %v1292 = vunpack.c.h.b16 %v625
      %v1293 = vunpack.c.l.b16 %v626
      %v1294 = vunpack.c.h.b16 %v626
      %v1295 = vunpack.c.l.b16 %v627
      %v1296 = vunpack.c.h.b16 %v627
      %v1297 = vunpack.c.l.b16 %v628
      %v1298 = vunpack.c.h.b16 %v628
      %v1299 = vunpack.c.l.b16 %v629
      %v1300 = vunpack.c.h.b16 %v629
      %v1301 = vunpack.c.l.b16 %v630
      %v1302 = vunpack.c.h.b16 %v630
      %v1303 = vunpack.c.l.b16 %v631
      %v1304 = vunpack.c.h.b16 %v631
      %v1305 = vunpack.c.l.b16 %v632
      %v1306 = vunpack.c.h.b16 %v632
      %v1307 = vpack.c.b16 %v1295, %v1291
      %v1308 = vpack.c.b16 %v1296, %v1292
      %v1309 = vpack.c.b16 %v1297, %v1293
      %v1310 = vpack.c.b16 %v1298, %v1294
      %v1311 = vpack.c.b16 %v1303, %v1299
      %v1312 = vpack.c.b16 %v1304, %v1300
      %v1313 = vpack.c.b16 %v1305, %v1301
      %v1314 = vpack.c.b16 %v1306, %v1302
      %vm1323 = vcmask 261120
      %v1325 = vsel %vm1323, %v1155, 0
      %v1328 = vsel %vm1323, %v1156, 0
      %v1331 = vsel %vm1323, %v1157, 0
      %v1334 = vsel %vm1323, %v1158, 0
      %v1337 = vsel %vm1323, %v1159, 0
      %v1340 = vsel %vm1323, %v1160, 0
      %v1343 = vsel %vm1323, %v1161, 0
      %v1346 = vsel %vm1323, %v1162, 0
      %v1349 = vsel %vm1323, %v1163, 0
      %v1352 = vsel %vm1323, %v1164, 0
      %v1355 = vsel %vm1323, %v1165, 0
      %v1358 = vsel %vm1323, %v1166, 0
      %v1361 = vsel %vm1323, %v1167, 0
      %v1364 = vsel %vm1323, %v1168, 0
      %v1367 = vsel %vm1323, %v1169, 0
      %v1370 = vsel %vm1323, %v1170, 0
      %v1373 = vsel %vm1323, %v1171, 0
      %v1376 = vsel %vm1323, %v1172, 0
      %v1379 = vsel %vm1323, %v1173, 0
      %v1382 = vsel %vm1323, %v1174, 0
      %v1385 = vsel %vm1323, %v1175, 0
      %v1388 = vsel %vm1323, %v1176, 0
      %v1391 = vsel %vm1323, %v1177, 0
      %v1394 = vsel %vm1323, %v1178, 0
      %v1397 = vsel %vm1323, %v1179, 0
      %v1400 = vsel %vm1323, %v1180, 0
      %v1403 = vsel %vm1323, %v1181, 0
      %v1406 = vsel %vm1323, %v1182, 0
      %v1409 = vsel %vm1323, %v1183, 0
      %v1412 = vsel %vm1323, %v1184, 0
      %v1415 = vsel %vm1323, %v1185, 0
      %v1418 = vsel %vm1323, %v1186, 0
      %v1421 = vsel %vm1323, %v1187, 0
      %v1424 = vsel %vm1323, %v1188, 0
      %v1427 = vsel %vm1323, %v1189, 0
      %v1430 = vsel %vm1323, %v1190, 0
      %v1433 = vsel %vm1323, %v1191, 0
      %v1436 = vsel %vm1323, %v1192, 0
      %v1439 = vsel %vm1323, %v1193, 0
      %v1442 = vsel %vm1323, %v1194, 0
      %v1445 = vsel %vm1323, %v1195, 0
      %v1448 = vsel %vm1323, %v1196, 0
      %v1451 = vsel %vm1323, %v1197, 0
      %v1454 = vsel %vm1323, %v1198, 0
      %v1457 = vsel %vm1323, %v1199, 0
      %v1460 = vsel %vm1323, %v1200, 0
      %v1463 = vsel %vm1323, %v1201, 0
      %v1466 = vsel %vm1323, %v1202, 0
      %v1469 = vsel %vm1323, %v1203, 0
      %v1472 = vsel %vm1323, %v1204, 0
      %v1475 = vsel %vm1323, %v1205, 0
      %v1478 = vsel %vm1323, %v1206, 0
      %v1481 = vsel %vm1323, %v1207, 0
      %v1484 = vsel %vm1323, %v1208, 0
      %v1487 = vsel %vm1323, %v1209, 0
      %v1490 = vsel %vm1323, %v1210, 0
      %v1493 = vsel %vm1323, %v1211, 0
      %v1496 = vsel %vm1323, %v1212, 0
      %v1499 = vsel %vm1323, %v1213, 0
      %v1502 = vsel %vm1323, %v1214, 0
      %v1505 = vsel %vm1323, %v1215, 0
      %v1508 = vsel %vm1323, %v1216, 0
      %v1511 = vsel %vm1323, %v1217, 0
      %v1514 = vsel %vm1323, %v1218, 0
      %v1517 = vsel %vm1323, %v1219, 0
      %v1520 = vsel %vm1323, %v1220, 0
      %v1523 = vsel %vm1323, %v1221, 0
      %v1526 = vsel %vm1323, %v1222, 0
      %v1529 = vsel %vm1323, %v1223, 0
      %v1532 = vsel %vm1323, %v1224, 0
      %v1535 = vsel %vm1323, %v1225, 0
      %v1538 = vsel %vm1323, %v1226, 0
      %v1541 = vsel %vm1323, %v1227, 0
      %v1544 = vsel %vm1323, %v1228, 0
      %v1547 = vsel %vm1323, %v1229, 0
      %v1550 = vsel %vm1323, %v1230, 0
      %v1553 = vsel %vm1323, %v1231, 0
      %v1556 = vsel %vm1323, %v1232, 0
      %v1559 = vsel %vm1323, %v1233, 0
      %v1562 = vsel %vm1323, %v1234, 0
      %v1565 = vsel %vm1323, %v1235, 0
      %v1568 = vsel %vm1323, %v1236, 0
      %v1571 = vsel %vm1323, %v1237, 0
      %v1574 = vsel %vm1323, %v1238, 0
      %v1577 = vsel %vm1323, %v1239, 0
      %v1580 = vsel %vm1323, %v1240, 0
      %v1583 = vsel %vm1323, %v1241, 0
      %v1586 = vsel %vm1323, %v1242, 0
      %v1589 = vsel %vm1323, %v1243, 0
      %v1592 = vsel %vm1323, %v1244, 0
      %v1595 = vsel %vm1323, %v1245, 0
      %v1598 = vsel %vm1323, %v1246, 0
      %v1601 = vsel %vm1323, %v1247, 0
      %v1604 = vsel %vm1323, %v1248, 0
      %v1607 = vsel %vm1323, %v1249, 0
      %v1610 = vsel %vm1323, %v1250, 0
      %v1613 = vsel %vm1323, %v1251, 0
      %v1616 = vsel %vm1323, %v1252, 0
      %v1619 = vsel %vm1323, %v1253, 0
      %v1622 = vsel %vm1323, %v1254, 0
      %v1625 = vsel %vm1323, %v1255, 0
      %v1628 = vsel %vm1323, %v1256, 0
      %v1631 = vsel %vm1323, %v1257, 0
      %v1634 = vsel %vm1323, %v1258, 0
      %v1637 = vsel %vm1323, %v1259, 0
      %v1640 = vsel %vm1323, %v1260, 0
      %v1643 = vsel %vm1323, %v1261, 0
      %v1646 = vsel %vm1323, %v1262, 0
      %v1649 = vsel %vm1323, %v1263, 0
      %v1652 = vsel %vm1323, %v1264, 0
      %v1655 = vsel %vm1323, %v1265, 0
      %v1658 = vsel %vm1323, %v1266, 0
      %v1661 = vsel %vm1323, %v1267, 0
      %v1664 = vsel %vm1323, %v1268, 0
      %v1667 = vsel %vm1323, %v1269, 0
      %v1670 = vsel %vm1323, %v1270, 0
      %v1673 = vsel %vm1323, %v1271, 0
      %v1676 = vsel %vm1323, %v1272, 0
      %v1679 = vsel %vm1323, %v1273, 0
      %v1682 = vsel %vm1323, %v1274, 0
      %v1685 = vsel %vm1323, %v1275, 0
      %v1688 = vsel %vm1323, %v1276, 0
      %v1691 = vsel %vm1323, %v1277, 0
      %v1694 = vsel %vm1323, %v1278, 0
      %v1697 = vsel %vm1323, %v1279, 0
      %v1700 = vsel %vm1323, %v1280, 0
      %v1703 = vsel %vm1323, %v1281, 0
      %v1706 = vsel %vm1323, %v1282, 0
      %1708 = vmatpush.bf16.msra.mxu0 0
      %1709 = vmatpush.bf16.msra.mxu0 0
      %1710 = vmatpush.bf16.msra.mxu0 0
      %1711 = vmatpush.bf16.msra.mxu0 0
      %1712 = vmatpush.bf16.msra.mxu0 0
      %1713 = vmatpush.bf16.msra.mxu0 0
      %1714 = vmatpush.bf16.msra.mxu0 %v1311
      %1715 = vmatpush.bf16.msra.mxu0 %v1307
      %1716 = vmatmul.bf16.gmra.mxu0 %v1325
      %v1717 = vpop.f32.mrf.mxu0
      %v1718 = vadd.f32 %v635, %v1717
      %v1719 = vpop.f32.mrf.mxu0
      %v1720 = vadd.f32 %v635, %v1719
      %1721 = vmatmul.bf16.gmra.mxu0 %v1328
      %v1722 = vpop.f32.mrf.mxu0
      %v1723 = vadd.f32 %v635, %v1722
      %v1724 = vpop.f32.mrf.mxu0
      %v1725 = vadd.f32 %v635, %v1724
      %1726 = vmatmul.bf16.gmra.mxu0 %v1331
      %v1727 = vpop.f32.mrf.mxu0
      %v1728 = vadd.f32 %v635, %v1727
      %v1729 = vpop.f32.mrf.mxu0
      %v1730 = vadd.f32 %v635, %v1729
      %1731 = vmatmul.bf16.gmra.mxu0 %v1334
      %v1732 = vpop.f32.mrf.mxu0
      %v1733 = vadd.f32 %v635, %v1732
      %v1734 = vpop.f32.mrf.mxu0
      %v1735 = vadd.f32 %v635, %v1734
      %1736 = vmatmul.bf16.gmra.mxu0 %v1337
      %v1737 = vpop.f32.mrf.mxu0
      %v1738 = vadd.f32 %v635, %v1737
      %v1739 = vpop.f32.mrf.mxu0
      %v1740 = vadd.f32 %v635, %v1739
      %1741 = vmatmul.bf16.gmra.mxu0 %v1340
      %v1742 = vpop.f32.mrf.mxu0
      %v1743 = vadd.f32 %v635, %v1742
      %v1744 = vpop.f32.mrf.mxu0
      %v1745 = vadd.f32 %v635, %v1744
      %1746 = vmatmul.bf16.gmra.mxu0 %v1343
      %v1747 = vpop.f32.mrf.mxu0
      %v1748 = vadd.f32 %v635, %v1747
      %v1749 = vpop.f32.mrf.mxu0
      %v1750 = vadd.f32 %v635, %v1749
      %1751 = vmatmul.bf16.gmra.mxu0 %v1346
      %v1752 = vpop.f32.mrf.mxu0
      %v1753 = vadd.f32 %v635, %v1752
      %v1754 = vpop.f32.mrf.mxu0
      %v1755 = vadd.f32 %v635, %v1754
      %1756 = vmatmul.bf16.gmra.mxu0 %v1349
      %v1757 = vpop.f32.mrf.mxu0
      %v1758 = vadd.f32 %v635, %v1757
      %v1759 = vpop.f32.mrf.mxu0
      %v1760 = vadd.f32 %v635, %v1759
      %1761 = vmatmul.bf16.gmra.mxu0 %v1352
      %v1762 = vpop.f32.mrf.mxu0
      %v1763 = vadd.f32 %v635, %v1762
      %v1764 = vpop.f32.mrf.mxu0
      %v1765 = vadd.f32 %v635, %v1764
      %1766 = vmatmul.bf16.gmra.mxu0 %v1355
      %v1767 = vpop.f32.mrf.mxu0
      %v1768 = vadd.f32 %v635, %v1767
      %v1769 = vpop.f32.mrf.mxu0
      %v1770 = vadd.f32 %v635, %v1769
      %1771 = vmatmul.bf16.gmra.mxu0 %v1358
      %v1772 = vpop.f32.mrf.mxu0
      %v1773 = vadd.f32 %v635, %v1772
      %v1774 = vpop.f32.mrf.mxu0
      %v1775 = vadd.f32 %v635, %v1774
      %1776 = vmatmul.bf16.gmra.mxu0 %v1361
      %v1777 = vpop.f32.mrf.mxu0
      %v1778 = vadd.f32 %v635, %v1777
      %v1779 = vpop.f32.mrf.mxu0
      %v1780 = vadd.f32 %v635, %v1779
      %1781 = vmatmul.bf16.gmra.mxu0 %v1364
      %v1782 = vpop.f32.mrf.mxu0
      %v1783 = vadd.f32 %v635, %v1782
      %v1784 = vpop.f32.mrf.mxu0
      %v1785 = vadd.f32 %v635, %v1784
      %1786 = vmatmul.bf16.gmra.mxu0 %v1367
      %v1787 = vpop.f32.mrf.mxu0
      %v1788 = vadd.f32 %v635, %v1787
      %v1789 = vpop.f32.mrf.mxu0
      %v1790 = vadd.f32 %v635, %v1789
      %1791 = vmatmul.bf16.gmra.mxu0 %v1370
      %v1792 = vpop.f32.mrf.mxu0
      %v1793 = vadd.f32 %v635, %v1792
      %v1794 = vpop.f32.mrf.mxu0
      %v1795 = vadd.f32 %v635, %v1794
      %1796 = vmatmul.bf16.gmra.mxu0 %v1373
      %v1797 = vpop.f32.mrf.mxu0
      %v1798 = vadd.f32 %v635, %v1797
      %v1799 = vpop.f32.mrf.mxu0
      %v1800 = vadd.f32 %v635, %v1799
      %1801 = vmatmul.bf16.gmra.mxu0 %v1376
      %v1802 = vpop.f32.mrf.mxu0
      %v1803 = vadd.f32 %v635, %v1802
      %v1804 = vpop.f32.mrf.mxu0
      %v1805 = vadd.f32 %v635, %v1804
      %1806 = vmatmul.bf16.gmra.mxu0 %v1379
      %v1807 = vpop.f32.mrf.mxu0
      %v1808 = vadd.f32 %v635, %v1807
      %v1809 = vpop.f32.mrf.mxu0
      %v1810 = vadd.f32 %v635, %v1809
      %1811 = vmatmul.bf16.gmra.mxu0 %v1382
      %v1812 = vpop.f32.mrf.mxu0
      %v1813 = vadd.f32 %v635, %v1812
      %v1814 = vpop.f32.mrf.mxu0
      %v1815 = vadd.f32 %v635, %v1814
      %1816 = vmatmul.bf16.gmra.mxu0 %v1385
      %v1817 = vpop.f32.mrf.mxu0
      %v1818 = vadd.f32 %v635, %v1817
      %v1819 = vpop.f32.mrf.mxu0
      %v1820 = vadd.f32 %v635, %v1819
      %1821 = vmatmul.bf16.gmra.mxu0 %v1388
      %v1822 = vpop.f32.mrf.mxu0
      %v1823 = vadd.f32 %v635, %v1822
      %v1824 = vpop.f32.mrf.mxu0
      %v1825 = vadd.f32 %v635, %v1824
      %1826 = vmatmul.bf16.gmra.mxu0 %v1391
      %v1827 = vpop.f32.mrf.mxu0
      %v1828 = vadd.f32 %v635, %v1827
      %v1829 = vpop.f32.mrf.mxu0
      %v1830 = vadd.f32 %v635, %v1829
      %1831 = vmatmul.bf16.gmra.mxu0 %v1394
      %v1832 = vpop.f32.mrf.mxu0
      %v1833 = vadd.f32 %v635, %v1832
      %v1834 = vpop.f32.mrf.mxu0
      %v1835 = vadd.f32 %v635, %v1834
      %1836 = vmatmul.bf16.gmra.mxu0 %v1397
      %v1837 = vpop.f32.mrf.mxu0
      %v1838 = vadd.f32 %v635, %v1837
      %v1839 = vpop.f32.mrf.mxu0
      %v1840 = vadd.f32 %v635, %v1839
      %1841 = vmatmul.bf16.gmra.mxu0 %v1400
      %v1842 = vpop.f32.mrf.mxu0
      %v1843 = vadd.f32 %v635, %v1842
      %v1844 = vpop.f32.mrf.mxu0
      %v1845 = vadd.f32 %v635, %v1844
      %1846 = vmatmul.bf16.gmra.mxu0 %v1403
      %v1847 = vpop.f32.mrf.mxu0
      %v1848 = vadd.f32 %v635, %v1847
      %v1849 = vpop.f32.mrf.mxu0
      %v1850 = vadd.f32 %v635, %v1849
      %1851 = vmatmul.bf16.gmra.mxu0 %v1406
      %v1852 = vpop.f32.mrf.mxu0
      %v1853 = vadd.f32 %v635, %v1852
      %v1854 = vpop.f32.mrf.mxu0
      %v1855 = vadd.f32 %v635, %v1854
      %1856 = vmatmul.bf16.gmra.mxu0 %v1409
      %v1857 = vpop.f32.mrf.mxu0
      %v1858 = vadd.f32 %v635, %v1857
      %v1859 = vpop.f32.mrf.mxu0
      %v1860 = vadd.f32 %v635, %v1859
      %1861 = vmatmul.bf16.gmra.mxu0 %v1412
      %v1862 = vpop.f32.mrf.mxu0
      %v1863 = vadd.f32 %v635, %v1862
      %v1864 = vpop.f32.mrf.mxu0
      %v1865 = vadd.f32 %v635, %v1864
      %1866 = vmatmul.bf16.gmra.mxu0 %v1415
      %v1867 = vpop.f32.mrf.mxu0
      %v1868 = vadd.f32 %v635, %v1867
      %v1869 = vpop.f32.mrf.mxu0
      %v1870 = vadd.f32 %v635, %v1869
      %1871 = vmatmul.bf16.gmra.mxu0 %v1418
      %v1872 = vpop.f32.mrf.mxu0
      %v1873 = vadd.f32 %v635, %v1872
      %v1874 = vpop.f32.mrf.mxu0
      %v1875 = vadd.f32 %v635, %v1874
      %1876 = vmatmul.bf16.gmra.mxu0 %v1421
      %v1877 = vpop.f32.mrf.mxu0
      %v1878 = vadd.f32 %v635, %v1877
      %v1879 = vpop.f32.mrf.mxu0
      %v1880 = vadd.f32 %v635, %v1879
      %1881 = vmatmul.bf16.gmra.mxu0 %v1424
      %v1882 = vpop.f32.mrf.mxu0
      %v1883 = vadd.f32 %v635, %v1882
      %v1884 = vpop.f32.mrf.mxu0
      %v1885 = vadd.f32 %v635, %v1884
      %1886 = vmatmul.bf16.gmra.mxu0 %v1427
      %v1887 = vpop.f32.mrf.mxu0
      %v1888 = vadd.f32 %v635, %v1887
      %v1889 = vpop.f32.mrf.mxu0
      %v1890 = vadd.f32 %v635, %v1889
      %1891 = vmatmul.bf16.gmra.mxu0 %v1430
      %v1892 = vpop.f32.mrf.mxu0
      %v1893 = vadd.f32 %v635, %v1892
      %v1894 = vpop.f32.mrf.mxu0
      %v1895 = vadd.f32 %v635, %v1894
      %1896 = vmatmul.bf16.gmra.mxu0 %v1433
      %v1897 = vpop.f32.mrf.mxu0
      %v1898 = vadd.f32 %v635, %v1897
      %v1899 = vpop.f32.mrf.mxu0
      %v1900 = vadd.f32 %v635, %v1899
      %1901 = vmatmul.bf16.gmra.mxu0 %v1436
      %v1902 = vpop.f32.mrf.mxu0
      %v1903 = vadd.f32 %v635, %v1902
      %v1904 = vpop.f32.mrf.mxu0
      %v1905 = vadd.f32 %v635, %v1904
      %1906 = vmatmul.bf16.gmra.mxu0 %v1439
      %v1907 = vpop.f32.mrf.mxu0
      %v1908 = vadd.f32 %v635, %v1907
      %v1909 = vpop.f32.mrf.mxu0
      %v1910 = vadd.f32 %v635, %v1909
      %1911 = vmatmul.bf16.gmra.mxu0 %v1442
      %v1912 = vpop.f32.mrf.mxu0
      %v1913 = vadd.f32 %v635, %v1912
      %v1914 = vpop.f32.mrf.mxu0
      %v1915 = vadd.f32 %v635, %v1914
      %1916 = vmatmul.bf16.gmra.mxu0 %v1445
      %v1917 = vpop.f32.mrf.mxu0
      %v1918 = vadd.f32 %v635, %v1917
      %v1919 = vpop.f32.mrf.mxu0
      %v1920 = vadd.f32 %v635, %v1919
      %1921 = vmatmul.bf16.gmra.mxu0 %v1448
      %v1922 = vpop.f32.mrf.mxu0
      %v1923 = vadd.f32 %v635, %v1922
      %v1924 = vpop.f32.mrf.mxu0
      %v1925 = vadd.f32 %v635, %v1924
      %1926 = vmatmul.bf16.gmra.mxu0 %v1451
      %v1927 = vpop.f32.mrf.mxu0
      %v1928 = vadd.f32 %v635, %v1927
      %v1929 = vpop.f32.mrf.mxu0
      %v1930 = vadd.f32 %v635, %v1929
      %1931 = vmatmul.bf16.gmra.mxu0 %v1454
      %v1932 = vpop.f32.mrf.mxu0
      %v1933 = vadd.f32 %v635, %v1932
      %v1934 = vpop.f32.mrf.mxu0
      %v1935 = vadd.f32 %v635, %v1934
      %1936 = vmatmul.bf16.gmra.mxu0 %v1457
      %v1937 = vpop.f32.mrf.mxu0
      %v1938 = vadd.f32 %v635, %v1937
      %v1939 = vpop.f32.mrf.mxu0
      %v1940 = vadd.f32 %v635, %v1939
      %1941 = vmatmul.bf16.gmra.mxu0 %v1460
      %v1942 = vpop.f32.mrf.mxu0
      %v1943 = vadd.f32 %v635, %v1942
      %v1944 = vpop.f32.mrf.mxu0
      %v1945 = vadd.f32 %v635, %v1944
      %1946 = vmatmul.bf16.gmra.mxu0 %v1463
      %v1947 = vpop.f32.mrf.mxu0
      %v1948 = vadd.f32 %v635, %v1947
      %v1949 = vpop.f32.mrf.mxu0
      %v1950 = vadd.f32 %v635, %v1949
      %1951 = vmatmul.bf16.gmra.mxu0 %v1466
      %v1952 = vpop.f32.mrf.mxu0
      %v1953 = vadd.f32 %v635, %v1952
      %v1954 = vpop.f32.mrf.mxu0
      %v1955 = vadd.f32 %v635, %v1954
      %1956 = vmatmul.bf16.gmra.mxu0 %v1469
      %v1957 = vpop.f32.mrf.mxu0
      %v1958 = vadd.f32 %v635, %v1957
      %v1959 = vpop.f32.mrf.mxu0
      %v1960 = vadd.f32 %v635, %v1959
      %1961 = vmatmul.bf16.gmra.mxu0 %v1472
      %v1962 = vpop.f32.mrf.mxu0
      %v1963 = vadd.f32 %v635, %v1962
      %v1964 = vpop.f32.mrf.mxu0
      %v1965 = vadd.f32 %v635, %v1964
      %1966 = vmatmul.bf16.gmra.mxu0 %v1475
      %v1967 = vpop.f32.mrf.mxu0
      %v1968 = vadd.f32 %v635, %v1967
      %v1969 = vpop.f32.mrf.mxu0
      %v1970 = vadd.f32 %v635, %v1969
      %1971 = vmatmul.bf16.gmra.mxu0 %v1478
      %v1972 = vpop.f32.mrf.mxu0
      %v1973 = vadd.f32 %v635, %v1972
      %v1974 = vpop.f32.mrf.mxu0
      %v1975 = vadd.f32 %v635, %v1974
      %1976 = vmatmul.bf16.gmra.mxu0 %v1481
      %v1977 = vpop.f32.mrf.mxu0
      %v1978 = vadd.f32 %v635, %v1977
      %v1979 = vpop.f32.mrf.mxu0
      %v1980 = vadd.f32 %v635, %v1979
      %1981 = vmatmul.bf16.gmra.mxu0 %v1484
      %v1982 = vpop.f32.mrf.mxu0
      %v1983 = vadd.f32 %v635, %v1982
      %v1984 = vpop.f32.mrf.mxu0
      %v1985 = vadd.f32 %v635, %v1984
      %1986 = vmatmul.bf16.gmra.mxu0 %v1487
      %v1987 = vpop.f32.mrf.mxu0
      %v1988 = vadd.f32 %v635, %v1987
      %v1989 = vpop.f32.mrf.mxu0
      %v1990 = vadd.f32 %v635, %v1989
      %1991 = vmatmul.bf16.gmra.mxu0 %v1490
      %v1992 = vpop.f32.mrf.mxu0
      %v1993 = vadd.f32 %v635, %v1992
      %v1994 = vpop.f32.mrf.mxu0
      %v1995 = vadd.f32 %v635, %v1994
      %1996 = vmatmul.bf16.gmra.mxu0 %v1493
      %v1997 = vpop.f32.mrf.mxu0
      %v1998 = vadd.f32 %v635, %v1997
      %v1999 = vpop.f32.mrf.mxu0
      %v2000 = vadd.f32 %v635, %v1999
      %2001 = vmatmul.bf16.gmra.mxu0 %v1496
      %v2002 = vpop.f32.mrf.mxu0
      %v2003 = vadd.f32 %v635, %v2002
      %v2004 = vpop.f32.mrf.mxu0
      %v2005 = vadd.f32 %v635, %v2004
      %2006 = vmatmul.bf16.gmra.mxu0 %v1499
      %v2007 = vpop.f32.mrf.mxu0
      %v2008 = vadd.f32 %v635, %v2007
      %v2009 = vpop.f32.mrf.mxu0
      %v2010 = vadd.f32 %v635, %v2009
      %2011 = vmatmul.bf16.gmra.mxu0 %v1502
      %v2012 = vpop.f32.mrf.mxu0
      %v2013 = vadd.f32 %v635, %v2012
      %v2014 = vpop.f32.mrf.mxu0
      %v2015 = vadd.f32 %v635, %v2014
      %2016 = vmatmul.bf16.gmra.mxu0 %v1505
      %v2017 = vpop.f32.mrf.mxu0
      %v2018 = vadd.f32 %v635, %v2017
      %v2019 = vpop.f32.mrf.mxu0
      %v2020 = vadd.f32 %v635, %v2019
      %2021 = vmatmul.bf16.gmra.mxu0 %v1508
      %v2022 = vpop.f32.mrf.mxu0
      %v2023 = vadd.f32 %v635, %v2022
      %v2024 = vpop.f32.mrf.mxu0
      %v2025 = vadd.f32 %v635, %v2024
      %2026 = vmatmul.bf16.gmra.mxu0 %v1511
      %v2027 = vpop.f32.mrf.mxu0
      %v2028 = vadd.f32 %v635, %v2027
      %v2029 = vpop.f32.mrf.mxu0
      %v2030 = vadd.f32 %v635, %v2029
      %2031 = vmatmul.bf16.gmra.mxu0 %v1514
      %v2032 = vpop.f32.mrf.mxu0
      %v2033 = vadd.f32 %v635, %v2032
      %v2034 = vpop.f32.mrf.mxu0
      %v2035 = vadd.f32 %v635, %v2034
      %2036 = vmatmul.bf16.gmra.mxu0 %v1517
      %v2037 = vpop.f32.mrf.mxu0
      %v2038 = vadd.f32 %v635, %v2037
      %v2039 = vpop.f32.mrf.mxu0
      %v2040 = vadd.f32 %v635, %v2039
      %2041 = vmatmul.bf16.gmra.mxu0 %v1520
      %v2042 = vpop.f32.mrf.mxu0
      %v2043 = vadd.f32 %v635, %v2042
      %v2044 = vpop.f32.mrf.mxu0
      %v2045 = vadd.f32 %v635, %v2044
      %2046 = vmatmul.bf16.gmra.mxu0 %v1523
      %v2047 = vpop.f32.mrf.mxu0
      %v2048 = vadd.f32 %v635, %v2047
      %v2049 = vpop.f32.mrf.mxu0
      %v2050 = vadd.f32 %v635, %v2049
      %2051 = vmatmul.bf16.gmra.mxu0 %v1526
      %v2052 = vpop.f32.mrf.mxu0
      %v2053 = vadd.f32 %v635, %v2052
      %v2054 = vpop.f32.mrf.mxu0
      %v2055 = vadd.f32 %v635, %v2054
      %2056 = vmatmul.bf16.gmra.mxu0 %v1529
      %v2057 = vpop.f32.mrf.mxu0
      %v2058 = vadd.f32 %v635, %v2057
      %v2059 = vpop.f32.mrf.mxu0
      %v2060 = vadd.f32 %v635, %v2059
      %2061 = vmatmul.bf16.gmra.mxu0 %v1532
      %v2062 = vpop.f32.mrf.mxu0
      %v2063 = vadd.f32 %v635, %v2062
      %v2064 = vpop.f32.mrf.mxu0
      %v2065 = vadd.f32 %v635, %v2064
      %2066 = vmatmul.bf16.gmra.mxu0 %v1535
      %v2067 = vpop.f32.mrf.mxu0
      %v2068 = vadd.f32 %v635, %v2067
      %v2069 = vpop.f32.mrf.mxu0
      %v2070 = vadd.f32 %v635, %v2069
      %2071 = vmatmul.bf16.gmra.mxu0 %v1538
      %v2072 = vpop.f32.mrf.mxu0
      %v2073 = vadd.f32 %v635, %v2072
      %v2074 = vpop.f32.mrf.mxu0
      %v2075 = vadd.f32 %v635, %v2074
      %2076 = vmatmul.bf16.gmra.mxu0 %v1541
      %v2077 = vpop.f32.mrf.mxu0
      %v2078 = vadd.f32 %v635, %v2077
      %v2079 = vpop.f32.mrf.mxu0
      %v2080 = vadd.f32 %v635, %v2079
      %2081 = vmatmul.bf16.gmra.mxu0 %v1544
      %v2082 = vpop.f32.mrf.mxu0
      %v2083 = vadd.f32 %v635, %v2082
      %v2084 = vpop.f32.mrf.mxu0
      %v2085 = vadd.f32 %v635, %v2084
      %2086 = vmatmul.bf16.gmra.mxu0 %v1547
      %v2087 = vpop.f32.mrf.mxu0
      %v2088 = vadd.f32 %v635, %v2087
      %v2089 = vpop.f32.mrf.mxu0
      %v2090 = vadd.f32 %v635, %v2089
      %2091 = vmatmul.bf16.gmra.mxu0 %v1550
      %v2092 = vpop.f32.mrf.mxu0
      %v2093 = vadd.f32 %v635, %v2092
      %v2094 = vpop.f32.mrf.mxu0
      %v2095 = vadd.f32 %v635, %v2094
      %2096 = vmatmul.bf16.gmra.mxu0 %v1553
      %v2097 = vpop.f32.mrf.mxu0
      %v2098 = vadd.f32 %v635, %v2097
      %v2099 = vpop.f32.mrf.mxu0
      %v2100 = vadd.f32 %v635, %v2099
      %2101 = vmatmul.bf16.gmra.mxu0 %v1556
      %v2102 = vpop.f32.mrf.mxu0
      %v2103 = vadd.f32 %v635, %v2102
      %v2104 = vpop.f32.mrf.mxu0
      %v2105 = vadd.f32 %v635, %v2104
      %2106 = vmatmul.bf16.gmra.mxu0 %v1559
      %v2107 = vpop.f32.mrf.mxu0
      %v2108 = vadd.f32 %v635, %v2107
      %v2109 = vpop.f32.mrf.mxu0
      %v2110 = vadd.f32 %v635, %v2109
      %2111 = vmatmul.bf16.gmra.mxu0 %v1562
      %v2112 = vpop.f32.mrf.mxu0
      %v2113 = vadd.f32 %v635, %v2112
      %v2114 = vpop.f32.mrf.mxu0
      %v2115 = vadd.f32 %v635, %v2114
      %2116 = vmatmul.bf16.gmra.mxu0 %v1565
      %v2117 = vpop.f32.mrf.mxu0
      %v2118 = vadd.f32 %v635, %v2117
      %v2119 = vpop.f32.mrf.mxu0
      %v2120 = vadd.f32 %v635, %v2119
      %2121 = vmatmul.bf16.gmra.mxu0 %v1568
      %v2122 = vpop.f32.mrf.mxu0
      %v2123 = vadd.f32 %v635, %v2122
      %v2124 = vpop.f32.mrf.mxu0
      %v2125 = vadd.f32 %v635, %v2124
      %2126 = vmatmul.bf16.gmra.mxu0 %v1571
      %v2127 = vpop.f32.mrf.mxu0
      %v2128 = vadd.f32 %v635, %v2127
      %v2129 = vpop.f32.mrf.mxu0
      %v2130 = vadd.f32 %v635, %v2129
      %2131 = vmatmul.bf16.gmra.mxu0 %v1574
      %v2132 = vpop.f32.mrf.mxu0
      %v2133 = vadd.f32 %v635, %v2132
      %v2134 = vpop.f32.mrf.mxu0
      %v2135 = vadd.f32 %v635, %v2134
      %2136 = vmatmul.bf16.gmra.mxu0 %v1577
      %v2137 = vpop.f32.mrf.mxu0
      %v2138 = vadd.f32 %v635, %v2137
      %v2139 = vpop.f32.mrf.mxu0
      %v2140 = vadd.f32 %v635, %v2139
      %2141 = vmatmul.bf16.gmra.mxu0 %v1580
      %v2142 = vpop.f32.mrf.mxu0
      %v2143 = vadd.f32 %v635, %v2142
      %v2144 = vpop.f32.mrf.mxu0
      %v2145 = vadd.f32 %v635, %v2144
      %2146 = vmatmul.bf16.gmra.mxu0 %v1583
      %v2147 = vpop.f32.mrf.mxu0
      %v2148 = vadd.f32 %v635, %v2147
      %v2149 = vpop.f32.mrf.mxu0
      %v2150 = vadd.f32 %v635, %v2149
      %2151 = vmatmul.bf16.gmra.mxu0 %v1586
      %v2152 = vpop.f32.mrf.mxu0
      %v2153 = vadd.f32 %v635, %v2152
      %v2154 = vpop.f32.mrf.mxu0
      %v2155 = vadd.f32 %v635, %v2154
      %2156 = vmatmul.bf16.gmra.mxu0 %v1589
      %v2157 = vpop.f32.mrf.mxu0
      %v2158 = vadd.f32 %v635, %v2157
      %v2159 = vpop.f32.mrf.mxu0
      %v2160 = vadd.f32 %v635, %v2159
      %2161 = vmatmul.bf16.gmra.mxu0 %v1592
      %v2162 = vpop.f32.mrf.mxu0
      %v2163 = vadd.f32 %v635, %v2162
      %v2164 = vpop.f32.mrf.mxu0
      %v2165 = vadd.f32 %v635, %v2164
      %2166 = vmatmul.bf16.gmra.mxu0 %v1595
      %v2167 = vpop.f32.mrf.mxu0
      %v2168 = vadd.f32 %v635, %v2167
      %v2169 = vpop.f32.mrf.mxu0
      %v2170 = vadd.f32 %v635, %v2169
      %2171 = vmatmul.bf16.gmra.mxu0 %v1598
      %v2172 = vpop.f32.mrf.mxu0
      %v2173 = vadd.f32 %v635, %v2172
      %v2174 = vpop.f32.mrf.mxu0
      %v2175 = vadd.f32 %v635, %v2174
      %2176 = vmatmul.bf16.gmra.mxu0 %v1601
      %v2177 = vpop.f32.mrf.mxu0
      %v2178 = vadd.f32 %v635, %v2177
      %v2179 = vpop.f32.mrf.mxu0
      %v2180 = vadd.f32 %v635, %v2179
      %2181 = vmatmul.bf16.gmra.mxu0 %v1604
      %v2182 = vpop.f32.mrf.mxu0
      %v2183 = vadd.f32 %v635, %v2182
      %v2184 = vpop.f32.mrf.mxu0
      %v2185 = vadd.f32 %v635, %v2184
      %2186 = vmatmul.bf16.gmra.mxu0 %v1607
      %v2187 = vpop.f32.mrf.mxu0
      %v2188 = vadd.f32 %v635, %v2187
      %v2189 = vpop.f32.mrf.mxu0
      %v2190 = vadd.f32 %v635, %v2189
      %2191 = vmatmul.bf16.gmra.mxu0 %v1610
      %v2192 = vpop.f32.mrf.mxu0
      %v2193 = vadd.f32 %v635, %v2192
      %v2194 = vpop.f32.mrf.mxu0
      %v2195 = vadd.f32 %v635, %v2194
      %2196 = vmatmul.bf16.gmra.mxu0 %v1613
      %v2197 = vpop.f32.mrf.mxu0
      %v2198 = vadd.f32 %v635, %v2197
      %v2199 = vpop.f32.mrf.mxu0
      %v2200 = vadd.f32 %v635, %v2199
      %2201 = vmatmul.bf16.gmra.mxu0 %v1616
      %v2202 = vpop.f32.mrf.mxu0
      %v2203 = vadd.f32 %v635, %v2202
      %v2204 = vpop.f32.mrf.mxu0
      %v2205 = vadd.f32 %v635, %v2204
      %2206 = vmatmul.bf16.gmra.mxu0 %v1619
      %v2207 = vpop.f32.mrf.mxu0
      %v2208 = vadd.f32 %v635, %v2207
      %v2209 = vpop.f32.mrf.mxu0
      %v2210 = vadd.f32 %v635, %v2209
      %2211 = vmatmul.bf16.gmra.mxu0 %v1622
      %v2212 = vpop.f32.mrf.mxu0
      %v2213 = vadd.f32 %v635, %v2212
      %v2214 = vpop.f32.mrf.mxu0
      %v2215 = vadd.f32 %v635, %v2214
      %2216 = vmatmul.bf16.gmra.mxu0 %v1625
      %v2217 = vpop.f32.mrf.mxu0
      %v2218 = vadd.f32 %v635, %v2217
      %v2219 = vpop.f32.mrf.mxu0
      %v2220 = vadd.f32 %v635, %v2219
      %2221 = vmatmul.bf16.gmra.mxu0 %v1628
      %v2222 = vpop.f32.mrf.mxu0
      %v2223 = vadd.f32 %v635, %v2222
      %v2224 = vpop.f32.mrf.mxu0
      %v2225 = vadd.f32 %v635, %v2224
      %2226 = vmatmul.bf16.gmra.mxu0 %v1631
      %v2227 = vpop.f32.mrf.mxu0
      %v2228 = vadd.f32 %v635, %v2227
      %v2229 = vpop.f32.mrf.mxu0
      %v2230 = vadd.f32 %v635, %v2229
      %2231 = vmatmul.bf16.gmra.mxu0 %v1634
      %v2232 = vpop.f32.mrf.mxu0
      %v2233 = vadd.f32 %v635, %v2232
      %v2234 = vpop.f32.mrf.mxu0
      %v2235 = vadd.f32 %v635, %v2234
      %2236 = vmatmul.bf16.gmra.mxu0 %v1637
      %v2237 = vpop.f32.mrf.mxu0
      %v2238 = vadd.f32 %v635, %v2237
      %v2239 = vpop.f32.mrf.mxu0
      %v2240 = vadd.f32 %v635, %v2239
      %2241 = vmatmul.bf16.gmra.mxu0 %v1640
      %v2242 = vpop.f32.mrf.mxu0
      %v2243 = vadd.f32 %v635, %v2242
      %v2244 = vpop.f32.mrf.mxu0
      %v2245 = vadd.f32 %v635, %v2244
      %2246 = vmatmul.bf16.gmra.mxu0 %v1643
      %v2247 = vpop.f32.mrf.mxu0
      %v2248 = vadd.f32 %v635, %v2247
      %v2249 = vpop.f32.mrf.mxu0
      %v2250 = vadd.f32 %v635, %v2249
      %2251 = vmatmul.bf16.gmra.mxu0 %v1646
      %v2252 = vpop.f32.mrf.mxu0
      %v2253 = vadd.f32 %v635, %v2252
      %v2254 = vpop.f32.mrf.mxu0
      %v2255 = vadd.f32 %v635, %v2254
      %2256 = vmatmul.bf16.gmra.mxu0 %v1649
      %v2257 = vpop.f32.mrf.mxu0
      %v2258 = vadd.f32 %v635, %v2257
      %v2259 = vpop.f32.mrf.mxu0
      %v2260 = vadd.f32 %v635, %v2259
      %2261 = vmatmul.bf16.gmra.mxu0 %v1652
      %v2262 = vpop.f32.mrf.mxu0
      %v2263 = vadd.f32 %v635, %v2262
      %v2264 = vpop.f32.mrf.mxu0
      %v2265 = vadd.f32 %v635, %v2264
      %2266 = vmatmul.bf16.gmra.mxu0 %v1655
      %v2267 = vpop.f32.mrf.mxu0
      %v2268 = vadd.f32 %v635, %v2267
      %v2269 = vpop.f32.mrf.mxu0
      %v2270 = vadd.f32 %v635, %v2269
      %2271 = vmatmul.bf16.gmra.mxu0 %v1658
      %v2272 = vpop.f32.mrf.mxu0
      %v2273 = vadd.f32 %v635, %v2272
      %v2274 = vpop.f32.mrf.mxu0
      %v2275 = vadd.f32 %v635, %v2274
      %2276 = vmatmul.bf16.gmra.mxu0 %v1661
      %v2277 = vpop.f32.mrf.mxu0
      %v2278 = vadd.f32 %v635, %v2277
      %v2279 = vpop.f32.mrf.mxu0
      %v2280 = vadd.f32 %v635, %v2279
      %2281 = vmatmul.bf16.gmra.mxu0 %v1664
      %v2282 = vpop.f32.mrf.mxu0
      %v2283 = vadd.f32 %v635, %v2282
      %v2284 = vpop.f32.mrf.mxu0
      %v2285 = vadd.f32 %v635, %v2284
      %2286 = vmatmul.bf16.gmra.mxu0 %v1667
      %v2287 = vpop.f32.mrf.mxu0
      %v2288 = vadd.f32 %v635, %v2287
      %v2289 = vpop.f32.mrf.mxu0
      %v2290 = vadd.f32 %v635, %v2289
      %2291 = vmatmul.bf16.gmra.mxu0 %v1670
      %v2292 = vpop.f32.mrf.mxu0
      %v2293 = vadd.f32 %v635, %v2292
      %v2294 = vpop.f32.mrf.mxu0
      %v2295 = vadd.f32 %v635, %v2294
      %2296 = vmatmul.bf16.gmra.mxu0 %v1673
      %v2297 = vpop.f32.mrf.mxu0
      %v2298 = vadd.f32 %v635, %v2297
      %v2299 = vpop.f32.mrf.mxu0
      %v2300 = vadd.f32 %v635, %v2299
      %2301 = vmatmul.bf16.gmra.mxu0 %v1676
      %v2302 = vpop.f32.mrf.mxu0
      %v2303 = vadd.f32 %v635, %v2302
      %v2304 = vpop.f32.mrf.mxu0
      %v2305 = vadd.f32 %v635, %v2304
      %2306 = vmatmul.bf16.gmra.mxu0 %v1679
      %v2307 = vpop.f32.mrf.mxu0
      %v2308 = vadd.f32 %v635, %v2307
      %v2309 = vpop.f32.mrf.mxu0
      %v2310 = vadd.f32 %v635, %v2309
      %2311 = vmatmul.bf16.gmra.mxu0 %v1682
      %v2312 = vpop.f32.mrf.mxu0
      %v2313 = vadd.f32 %v635, %v2312
      %v2314 = vpop.f32.mrf.mxu0
      %v2315 = vadd.f32 %v635, %v2314
      %2316 = vmatmul.bf16.gmra.mxu0 %v1685
      %v2317 = vpop.f32.mrf.mxu0
      %v2318 = vadd.f32 %v635, %v2317
      %v2319 = vpop.f32.mrf.mxu0
      %v2320 = vadd.f32 %v635, %v2319
      %2321 = vmatmul.bf16.gmra.mxu0 %v1688
      %v2322 = vpop.f32.mrf.mxu0
      %v2323 = vadd.f32 %v635, %v2322
      %v2324 = vpop.f32.mrf.mxu0
      %v2325 = vadd.f32 %v635, %v2324
      %2326 = vmatmul.bf16.gmra.mxu0 %v1691
      %v2327 = vpop.f32.mrf.mxu0
      %v2328 = vadd.f32 %v635, %v2327
      %v2329 = vpop.f32.mrf.mxu0
      %v2330 = vadd.f32 %v635, %v2329
      %2331 = vmatmul.bf16.gmra.mxu0 %v1694
      %v2332 = vpop.f32.mrf.mxu0
      %v2333 = vadd.f32 %v635, %v2332
      %v2334 = vpop.f32.mrf.mxu0
      %v2335 = vadd.f32 %v635, %v2334
      %2336 = vmatmul.bf16.gmra.mxu0 %v1697
      %v2337 = vpop.f32.mrf.mxu0
      %v2338 = vadd.f32 %v635, %v2337
      %v2339 = vpop.f32.mrf.mxu0
      %v2340 = vadd.f32 %v635, %v2339
      %2341 = vmatmul.bf16.gmra.mxu0 %v1700
      %v2342 = vpop.f32.mrf.mxu0
      %v2343 = vadd.f32 %v635, %v2342
      %v2344 = vpop.f32.mrf.mxu0
      %v2345 = vadd.f32 %v635, %v2344
      %2346 = vmatmul.bf16.gmra.mxu0 %v1703
      %v2347 = vpop.f32.mrf.mxu0
      %v2348 = vadd.f32 %v635, %v2347
      %v2349 = vpop.f32.mrf.mxu0
      %v2350 = vadd.f32 %v635, %v2349
      %2351 = vmatmul.bf16.gmra.mxu0 %v1706
      %v2352 = vpop.f32.mrf.mxu0
      %v2353 = vadd.f32 %v635, %v2352
      %v2354 = vpop.f32.mrf.mxu0
      %v2355 = vadd.f32 %v635, %v2354
      %2356 = vdwg.mxu0
      %2357 = vmatpush.bf16.msra.mxu0 0
      %2358 = vmatpush.bf16.msra.mxu0 0
      %2359 = vmatpush.bf16.msra.mxu0 0
      %2360 = vmatpush.bf16.msra.mxu0 0
      %2361 = vmatpush.bf16.msra.mxu0 0
      %2362 = vmatpush.bf16.msra.mxu0 0
      %2363 = vmatpush.bf16.msra.mxu0 %v1312
      %2364 = vmatpush.bf16.msra.mxu0 %v1308
      %2365 = vmatmul.bf16.gmra.mxu0 %v1325
      %v2366 = vpop.f32.mrf.mxu0
      %v2367 = vadd.f32 %v636, %v2366
      %v2368 = vpop.f32.mrf.mxu0
      %v2369 = vadd.f32 %v636, %v2368
      %2370 = vmatmul.bf16.gmra.mxu0 %v1328
      %v2371 = vpop.f32.mrf.mxu0
      %v2372 = vadd.f32 %v636, %v2371
      %v2373 = vpop.f32.mrf.mxu0
      %v2374 = vadd.f32 %v636, %v2373
      %2375 = vmatmul.bf16.gmra.mxu0 %v1331
      %v2376 = vpop.f32.mrf.mxu0
      %v2377 = vadd.f32 %v636, %v2376
      %v2378 = vpop.f32.mrf.mxu0
      %v2379 = vadd.f32 %v636, %v2378
      %2380 = vmatmul.bf16.gmra.mxu0 %v1334
      %v2381 = vpop.f32.mrf.mxu0
      %v2382 = vadd.f32 %v636, %v2381
      %v2383 = vpop.f32.mrf.mxu0
      %v2384 = vadd.f32 %v636, %v2383
      %2385 = vmatmul.bf16.gmra.mxu0 %v1337
      %v2386 = vpop.f32.mrf.mxu0
      %v2387 = vadd.f32 %v636, %v2386
      %v2388 = vpop.f32.mrf.mxu0
      %v2389 = vadd.f32 %v636, %v2388
      %2390 = vmatmul.bf16.gmra.mxu0 %v1340
      %v2391 = vpop.f32.mrf.mxu0
      %v2392 = vadd.f32 %v636, %v2391
      %v2393 = vpop.f32.mrf.mxu0
      %v2394 = vadd.f32 %v636, %v2393
      %2395 = vmatmul.bf16.gmra.mxu0 %v1343
      %v2396 = vpop.f32.mrf.mxu0
      %v2397 = vadd.f32 %v636, %v2396
      %v2398 = vpop.f32.mrf.mxu0
      %v2399 = vadd.f32 %v636, %v2398
      %2400 = vmatmul.bf16.gmra.mxu0 %v1346
      %v2401 = vpop.f32.mrf.mxu0
      %v2402 = vadd.f32 %v636, %v2401
      %v2403 = vpop.f32.mrf.mxu0
      %v2404 = vadd.f32 %v636, %v2403
      %2405 = vmatmul.bf16.gmra.mxu0 %v1349
      %v2406 = vpop.f32.mrf.mxu0
      %v2407 = vadd.f32 %v636, %v2406
      %v2408 = vpop.f32.mrf.mxu0
      %v2409 = vadd.f32 %v636, %v2408
      %2410 = vmatmul.bf16.gmra.mxu0 %v1352
      %v2411 = vpop.f32.mrf.mxu0
      %v2412 = vadd.f32 %v636, %v2411
      %v2413 = vpop.f32.mrf.mxu0
      %v2414 = vadd.f32 %v636, %v2413
      %2415 = vmatmul.bf16.gmra.mxu0 %v1355
      %v2416 = vpop.f32.mrf.mxu0
      %v2417 = vadd.f32 %v636, %v2416
      %v2418 = vpop.f32.mrf.mxu0
      %v2419 = vadd.f32 %v636, %v2418
      %2420 = vmatmul.bf16.gmra.mxu0 %v1358
      %v2421 = vpop.f32.mrf.mxu0
      %v2422 = vadd.f32 %v636, %v2421
      %v2423 = vpop.f32.mrf.mxu0
      %v2424 = vadd.f32 %v636, %v2423
      %2425 = vmatmul.bf16.gmra.mxu0 %v1361
      %v2426 = vpop.f32.mrf.mxu0
      %v2427 = vadd.f32 %v636, %v2426
      %v2428 = vpop.f32.mrf.mxu0
      %v2429 = vadd.f32 %v636, %v2428
      %2430 = vmatmul.bf16.gmra.mxu0 %v1364
      %v2431 = vpop.f32.mrf.mxu0
      %v2432 = vadd.f32 %v636, %v2431
      %v2433 = vpop.f32.mrf.mxu0
      %v2434 = vadd.f32 %v636, %v2433
      %2435 = vmatmul.bf16.gmra.mxu0 %v1367
      %v2436 = vpop.f32.mrf.mxu0
      %v2437 = vadd.f32 %v636, %v2436
      %v2438 = vpop.f32.mrf.mxu0
      %v2439 = vadd.f32 %v636, %v2438
      %2440 = vmatmul.bf16.gmra.mxu0 %v1370
      %v2441 = vpop.f32.mrf.mxu0
      %v2442 = vadd.f32 %v636, %v2441
      %v2443 = vpop.f32.mrf.mxu0
      %v2444 = vadd.f32 %v636, %v2443
      %2445 = vmatmul.bf16.gmra.mxu0 %v1373
      %v2446 = vpop.f32.mrf.mxu0
      %v2447 = vadd.f32 %v636, %v2446
      %v2448 = vpop.f32.mrf.mxu0
      %v2449 = vadd.f32 %v636, %v2448
      %2450 = vmatmul.bf16.gmra.mxu0 %v1376
      %v2451 = vpop.f32.mrf.mxu0
      %v2452 = vadd.f32 %v636, %v2451
      %v2453 = vpop.f32.mrf.mxu0
      %v2454 = vadd.f32 %v636, %v2453
      %2455 = vmatmul.bf16.gmra.mxu0 %v1379
      %v2456 = vpop.f32.mrf.mxu0
      %v2457 = vadd.f32 %v636, %v2456
      %v2458 = vpop.f32.mrf.mxu0
      %v2459 = vadd.f32 %v636, %v2458
      %2460 = vmatmul.bf16.gmra.mxu0 %v1382
      %v2461 = vpop.f32.mrf.mxu0
      %v2462 = vadd.f32 %v636, %v2461
      %v2463 = vpop.f32.mrf.mxu0
      %v2464 = vadd.f32 %v636, %v2463
      %2465 = vmatmul.bf16.gmra.mxu0 %v1385
      %v2466 = vpop.f32.mrf.mxu0
      %v2467 = vadd.f32 %v636, %v2466
      %v2468 = vpop.f32.mrf.mxu0
      %v2469 = vadd.f32 %v636, %v2468
      %2470 = vmatmul.bf16.gmra.mxu0 %v1388
      %v2471 = vpop.f32.mrf.mxu0
      %v2472 = vadd.f32 %v636, %v2471
      %v2473 = vpop.f32.mrf.mxu0
      %v2474 = vadd.f32 %v636, %v2473
      %2475 = vmatmul.bf16.gmra.mxu0 %v1391
      %v2476 = vpop.f32.mrf.mxu0
      %v2477 = vadd.f32 %v636, %v2476
      %v2478 = vpop.f32.mrf.mxu0
      %v2479 = vadd.f32 %v636, %v2478
      %2480 = vmatmul.bf16.gmra.mxu0 %v1394
      %v2481 = vpop.f32.mrf.mxu0
      %v2482 = vadd.f32 %v636, %v2481
      %v2483 = vpop.f32.mrf.mxu0
      %v2484 = vadd.f32 %v636, %v2483
      %2485 = vmatmul.bf16.gmra.mxu0 %v1397
      %v2486 = vpop.f32.mrf.mxu0
      %v2487 = vadd.f32 %v636, %v2486
      %v2488 = vpop.f32.mrf.mxu0
      %v2489 = vadd.f32 %v636, %v2488
      %2490 = vmatmul.bf16.gmra.mxu0 %v1400
      %v2491 = vpop.f32.mrf.mxu0
      %v2492 = vadd.f32 %v636, %v2491
      %v2493 = vpop.f32.mrf.mxu0
      %v2494 = vadd.f32 %v636, %v2493
      %2495 = vmatmul.bf16.gmra.mxu0 %v1403
      %v2496 = vpop.f32.mrf.mxu0
      %v2497 = vadd.f32 %v636, %v2496
      %v2498 = vpop.f32.mrf.mxu0
      %v2499 = vadd.f32 %v636, %v2498
      %2500 = vmatmul.bf16.gmra.mxu0 %v1406
      %v2501 = vpop.f32.mrf.mxu0
      %v2502 = vadd.f32 %v636, %v2501
      %v2503 = vpop.f32.mrf.mxu0
      %v2504 = vadd.f32 %v636, %v2503
      %2505 = vmatmul.bf16.gmra.mxu0 %v1409
      %v2506 = vpop.f32.mrf.mxu0
      %v2507 = vadd.f32 %v636, %v2506
      %v2508 = vpop.f32.mrf.mxu0
      %v2509 = vadd.f32 %v636, %v2508
      %2510 = vmatmul.bf16.gmra.mxu0 %v1412
      %v2511 = vpop.f32.mrf.mxu0
      %v2512 = vadd.f32 %v636, %v2511
      %v2513 = vpop.f32.mrf.mxu0
      %v2514 = vadd.f32 %v636, %v2513
      %2515 = vmatmul.bf16.gmra.mxu0 %v1415
      %v2516 = vpop.f32.mrf.mxu0
      %v2517 = vadd.f32 %v636, %v2516
      %v2518 = vpop.f32.mrf.mxu0
      %v2519 = vadd.f32 %v636, %v2518
      %2520 = vmatmul.bf16.gmra.mxu0 %v1418
      %v2521 = vpop.f32.mrf.mxu0
      %v2522 = vadd.f32 %v636, %v2521
      %v2523 = vpop.f32.mrf.mxu0
      %v2524 = vadd.f32 %v636, %v2523
      %2525 = vmatmul.bf16.gmra.mxu0 %v1421
      %v2526 = vpop.f32.mrf.mxu0
      %v2527 = vadd.f32 %v636, %v2526
      %v2528 = vpop.f32.mrf.mxu0
      %v2529 = vadd.f32 %v636, %v2528
      %2530 = vmatmul.bf16.gmra.mxu0 %v1424
      %v2531 = vpop.f32.mrf.mxu0
      %v2532 = vadd.f32 %v636, %v2531
      %v2533 = vpop.f32.mrf.mxu0
      %v2534 = vadd.f32 %v636, %v2533
      %2535 = vmatmul.bf16.gmra.mxu0 %v1427
      %v2536 = vpop.f32.mrf.mxu0
      %v2537 = vadd.f32 %v636, %v2536
      %v2538 = vpop.f32.mrf.mxu0
      %v2539 = vadd.f32 %v636, %v2538
      %2540 = vmatmul.bf16.gmra.mxu0 %v1430
      %v2541 = vpop.f32.mrf.mxu0
      %v2542 = vadd.f32 %v636, %v2541
      %v2543 = vpop.f32.mrf.mxu0
      %v2544 = vadd.f32 %v636, %v2543
      %2545 = vmatmul.bf16.gmra.mxu0 %v1433
      %v2546 = vpop.f32.mrf.mxu0
      %v2547 = vadd.f32 %v636, %v2546
      %v2548 = vpop.f32.mrf.mxu0
      %v2549 = vadd.f32 %v636, %v2548
      %2550 = vmatmul.bf16.gmra.mxu0 %v1436
      %v2551 = vpop.f32.mrf.mxu0
      %v2552 = vadd.f32 %v636, %v2551
      %v2553 = vpop.f32.mrf.mxu0
      %v2554 = vadd.f32 %v636, %v2553
      %2555 = vmatmul.bf16.gmra.mxu0 %v1439
      %v2556 = vpop.f32.mrf.mxu0
      %v2557 = vadd.f32 %v636, %v2556
      %v2558 = vpop.f32.mrf.mxu0
      %v2559 = vadd.f32 %v636, %v2558
      %2560 = vmatmul.bf16.gmra.mxu0 %v1442
      %v2561 = vpop.f32.mrf.mxu0
      %v2562 = vadd.f32 %v636, %v2561
      %v2563 = vpop.f32.mrf.mxu0
      %v2564 = vadd.f32 %v636, %v2563
      %2565 = vmatmul.bf16.gmra.mxu0 %v1445
      %v2566 = vpop.f32.mrf.mxu0
      %v2567 = vadd.f32 %v636, %v2566
      %v2568 = vpop.f32.mrf.mxu0
      %v2569 = vadd.f32 %v636, %v2568
      %2570 = vmatmul.bf16.gmra.mxu0 %v1448
      %v2571 = vpop.f32.mrf.mxu0
      %v2572 = vadd.f32 %v636, %v2571
      %v2573 = vpop.f32.mrf.mxu0
      %v2574 = vadd.f32 %v636, %v2573
      %2575 = vmatmul.bf16.gmra.mxu0 %v1451
      %v2576 = vpop.f32.mrf.mxu0
      %v2577 = vadd.f32 %v636, %v2576
      %v2578 = vpop.f32.mrf.mxu0
      %v2579 = vadd.f32 %v636, %v2578
      %2580 = vmatmul.bf16.gmra.mxu0 %v1454
      %v2581 = vpop.f32.mrf.mxu0
      %v2582 = vadd.f32 %v636, %v2581
      %v2583 = vpop.f32.mrf.mxu0
      %v2584 = vadd.f32 %v636, %v2583
      %2585 = vmatmul.bf16.gmra.mxu0 %v1457
      %v2586 = vpop.f32.mrf.mxu0
      %v2587 = vadd.f32 %v636, %v2586
      %v2588 = vpop.f32.mrf.mxu0
      %v2589 = vadd.f32 %v636, %v2588
      %2590 = vmatmul.bf16.gmra.mxu0 %v1460
      %v2591 = vpop.f32.mrf.mxu0
      %v2592 = vadd.f32 %v636, %v2591
      %v2593 = vpop.f32.mrf.mxu0
      %v2594 = vadd.f32 %v636, %v2593
      %2595 = vmatmul.bf16.gmra.mxu0 %v1463
      %v2596 = vpop.f32.mrf.mxu0
      %v2597 = vadd.f32 %v636, %v2596
      %v2598 = vpop.f32.mrf.mxu0
      %v2599 = vadd.f32 %v636, %v2598
      %2600 = vmatmul.bf16.gmra.mxu0 %v1466
      %v2601 = vpop.f32.mrf.mxu0
      %v2602 = vadd.f32 %v636, %v2601
      %v2603 = vpop.f32.mrf.mxu0
      %v2604 = vadd.f32 %v636, %v2603
      %2605 = vmatmul.bf16.gmra.mxu0 %v1469
      %v2606 = vpop.f32.mrf.mxu0
      %v2607 = vadd.f32 %v636, %v2606
      %v2608 = vpop.f32.mrf.mxu0
      %v2609 = vadd.f32 %v636, %v2608
      %2610 = vmatmul.bf16.gmra.mxu0 %v1472
      %v2611 = vpop.f32.mrf.mxu0
      %v2612 = vadd.f32 %v636, %v2611
      %v2613 = vpop.f32.mrf.mxu0
      %v2614 = vadd.f32 %v636, %v2613
      %2615 = vmatmul.bf16.gmra.mxu0 %v1475
      %v2616 = vpop.f32.mrf.mxu0
      %v2617 = vadd.f32 %v636, %v2616
      %v2618 = vpop.f32.mrf.mxu0
      %v2619 = vadd.f32 %v636, %v2618
      %2620 = vmatmul.bf16.gmra.mxu0 %v1478
      %v2621 = vpop.f32.mrf.mxu0
      %v2622 = vadd.f32 %v636, %v2621
      %v2623 = vpop.f32.mrf.mxu0
      %v2624 = vadd.f32 %v636, %v2623
      %2625 = vmatmul.bf16.gmra.mxu0 %v1481
      %v2626 = vpop.f32.mrf.mxu0
      %v2627 = vadd.f32 %v636, %v2626
      %v2628 = vpop.f32.mrf.mxu0
      %v2629 = vadd.f32 %v636, %v2628
      %2630 = vmatmul.bf16.gmra.mxu0 %v1484
      %v2631 = vpop.f32.mrf.mxu0
      %v2632 = vadd.f32 %v636, %v2631
      %v2633 = vpop.f32.mrf.mxu0
      %v2634 = vadd.f32 %v636, %v2633
      %2635 = vmatmul.bf16.gmra.mxu0 %v1487
      %v2636 = vpop.f32.mrf.mxu0
      %v2637 = vadd.f32 %v636, %v2636
      %v2638 = vpop.f32.mrf.mxu0
      %v2639 = vadd.f32 %v636, %v2638
      %2640 = vmatmul.bf16.gmra.mxu0 %v1490
      %v2641 = vpop.f32.mrf.mxu0
      %v2642 = vadd.f32 %v636, %v2641
      %v2643 = vpop.f32.mrf.mxu0
      %v2644 = vadd.f32 %v636, %v2643
      %2645 = vmatmul.bf16.gmra.mxu0 %v1493
      %v2646 = vpop.f32.mrf.mxu0
      %v2647 = vadd.f32 %v636, %v2646
      %v2648 = vpop.f32.mrf.mxu0
      %v2649 = vadd.f32 %v636, %v2648
      %2650 = vmatmul.bf16.gmra.mxu0 %v1496
      %v2651 = vpop.f32.mrf.mxu0
      %v2652 = vadd.f32 %v636, %v2651
      %v2653 = vpop.f32.mrf.mxu0
      %v2654 = vadd.f32 %v636, %v2653
      %2655 = vmatmul.bf16.gmra.mxu0 %v1499
      %v2656 = vpop.f32.mrf.mxu0
      %v2657 = vadd.f32 %v636, %v2656
      %v2658 = vpop.f32.mrf.mxu0
      %v2659 = vadd.f32 %v636, %v2658
      %2660 = vmatmul.bf16.gmra.mxu0 %v1502
      %v2661 = vpop.f32.mrf.mxu0
      %v2662 = vadd.f32 %v636, %v2661
      %v2663 = vpop.f32.mrf.mxu0
      %v2664 = vadd.f32 %v636, %v2663
      %2665 = vmatmul.bf16.gmra.mxu0 %v1505
      %v2666 = vpop.f32.mrf.mxu0
      %v2667 = vadd.f32 %v636, %v2666
      %v2668 = vpop.f32.mrf.mxu0
      %v2669 = vadd.f32 %v636, %v2668
      %2670 = vmatmul.bf16.gmra.mxu0 %v1508
      %v2671 = vpop.f32.mrf.mxu0
      %v2672 = vadd.f32 %v636, %v2671
      %v2673 = vpop.f32.mrf.mxu0
      %v2674 = vadd.f32 %v636, %v2673
      %2675 = vmatmul.bf16.gmra.mxu0 %v1511
      %v2676 = vpop.f32.mrf.mxu0
      %v2677 = vadd.f32 %v636, %v2676
      %v2678 = vpop.f32.mrf.mxu0
      %v2679 = vadd.f32 %v636, %v2678
      %2680 = vmatmul.bf16.gmra.mxu0 %v1514
      %v2681 = vpop.f32.mrf.mxu0
      %v2682 = vadd.f32 %v636, %v2681
      %v2683 = vpop.f32.mrf.mxu0
      %v2684 = vadd.f32 %v636, %v2683
      %2685 = vmatmul.bf16.gmra.mxu0 %v1517
      %v2686 = vpop.f32.mrf.mxu0
      %v2687 = vadd.f32 %v636, %v2686
      %v2688 = vpop.f32.mrf.mxu0
      %v2689 = vadd.f32 %v636, %v2688
      %2690 = vmatmul.bf16.gmra.mxu0 %v1520
      %v2691 = vpop.f32.mrf.mxu0
      %v2692 = vadd.f32 %v636, %v2691
      %v2693 = vpop.f32.mrf.mxu0
      %v2694 = vadd.f32 %v636, %v2693
      %2695 = vmatmul.bf16.gmra.mxu0 %v1523
      %v2696 = vpop.f32.mrf.mxu0
      %v2697 = vadd.f32 %v636, %v2696
      %v2698 = vpop.f32.mrf.mxu0
      %v2699 = vadd.f32 %v636, %v2698
      %2700 = vmatmul.bf16.gmra.mxu0 %v1526
      %v2701 = vpop.f32.mrf.mxu0
      %v2702 = vadd.f32 %v636, %v2701
      %v2703 = vpop.f32.mrf.mxu0
      %v2704 = vadd.f32 %v636, %v2703
      %2705 = vmatmul.bf16.gmra.mxu0 %v1529
      %v2706 = vpop.f32.mrf.mxu0
      %v2707 = vadd.f32 %v636, %v2706
      %v2708 = vpop.f32.mrf.mxu0
      %v2709 = vadd.f32 %v636, %v2708
      %2710 = vmatmul.bf16.gmra.mxu0 %v1532
      %v2711 = vpop.f32.mrf.mxu0
      %v2712 = vadd.f32 %v636, %v2711
      %v2713 = vpop.f32.mrf.mxu0
      %v2714 = vadd.f32 %v636, %v2713
      %2715 = vmatmul.bf16.gmra.mxu0 %v1535
      %v2716 = vpop.f32.mrf.mxu0
      %v2717 = vadd.f32 %v636, %v2716
      %v2718 = vpop.f32.mrf.mxu0
      %v2719 = vadd.f32 %v636, %v2718
      %2720 = vmatmul.bf16.gmra.mxu0 %v1538
      %v2721 = vpop.f32.mrf.mxu0
      %v2722 = vadd.f32 %v636, %v2721
      %v2723 = vpop.f32.mrf.mxu0
      %v2724 = vadd.f32 %v636, %v2723
      %2725 = vmatmul.bf16.gmra.mxu0 %v1541
      %v2726 = vpop.f32.mrf.mxu0
      %v2727 = vadd.f32 %v636, %v2726
      %v2728 = vpop.f32.mrf.mxu0
      %v2729 = vadd.f32 %v636, %v2728
      %2730 = vmatmul.bf16.gmra.mxu0 %v1544
      %v2731 = vpop.f32.mrf.mxu0
      %v2732 = vadd.f32 %v636, %v2731
      %v2733 = vpop.f32.mrf.mxu0
      %v2734 = vadd.f32 %v636, %v2733
      %2735 = vmatmul.bf16.gmra.mxu0 %v1547
      %v2736 = vpop.f32.mrf.mxu0
      %v2737 = vadd.f32 %v636, %v2736
      %v2738 = vpop.f32.mrf.mxu0
      %v2739 = vadd.f32 %v636, %v2738
      %2740 = vmatmul.bf16.gmra.mxu0 %v1550
      %v2741 = vpop.f32.mrf.mxu0
      %v2742 = vadd.f32 %v636, %v2741
      %v2743 = vpop.f32.mrf.mxu0
      %v2744 = vadd.f32 %v636, %v2743
      %2745 = vmatmul.bf16.gmra.mxu0 %v1553
      %v2746 = vpop.f32.mrf.mxu0
      %v2747 = vadd.f32 %v636, %v2746
      %v2748 = vpop.f32.mrf.mxu0
      %v2749 = vadd.f32 %v636, %v2748
      %2750 = vmatmul.bf16.gmra.mxu0 %v1556
      %v2751 = vpop.f32.mrf.mxu0
      %v2752 = vadd.f32 %v636, %v2751
      %v2753 = vpop.f32.mrf.mxu0
      %v2754 = vadd.f32 %v636, %v2753
      %2755 = vmatmul.bf16.gmra.mxu0 %v1559
      %v2756 = vpop.f32.mrf.mxu0
      %v2757 = vadd.f32 %v636, %v2756
      %v2758 = vpop.f32.mrf.mxu0
      %v2759 = vadd.f32 %v636, %v2758
      %2760 = vmatmul.bf16.gmra.mxu0 %v1562
      %v2761 = vpop.f32.mrf.mxu0
      %v2762 = vadd.f32 %v636, %v2761
      %v2763 = vpop.f32.mrf.mxu0
      %v2764 = vadd.f32 %v636, %v2763
      %2765 = vmatmul.bf16.gmra.mxu0 %v1565
      %v2766 = vpop.f32.mrf.mxu0
      %v2767 = vadd.f32 %v636, %v2766
      %v2768 = vpop.f32.mrf.mxu0
      %v2769 = vadd.f32 %v636, %v2768
      %2770 = vmatmul.bf16.gmra.mxu0 %v1568
      %v2771 = vpop.f32.mrf.mxu0
      %v2772 = vadd.f32 %v636, %v2771
      %v2773 = vpop.f32.mrf.mxu0
      %v2774 = vadd.f32 %v636, %v2773
      %2775 = vmatmul.bf16.gmra.mxu0 %v1571
      %v2776 = vpop.f32.mrf.mxu0
      %v2777 = vadd.f32 %v636, %v2776
      %v2778 = vpop.f32.mrf.mxu0
      %v2779 = vadd.f32 %v636, %v2778
      %2780 = vmatmul.bf16.gmra.mxu0 %v1574
      %v2781 = vpop.f32.mrf.mxu0
      %v2782 = vadd.f32 %v636, %v2781
      %v2783 = vpop.f32.mrf.mxu0
      %v2784 = vadd.f32 %v636, %v2783
      %2785 = vmatmul.bf16.gmra.mxu0 %v1577
      %v2786 = vpop.f32.mrf.mxu0
      %v2787 = vadd.f32 %v636, %v2786
      %v2788 = vpop.f32.mrf.mxu0
      %v2789 = vadd.f32 %v636, %v2788
      %2790 = vmatmul.bf16.gmra.mxu0 %v1580
      %v2791 = vpop.f32.mrf.mxu0
      %v2792 = vadd.f32 %v636, %v2791
      %v2793 = vpop.f32.mrf.mxu0
      %v2794 = vadd.f32 %v636, %v2793
      %2795 = vmatmul.bf16.gmra.mxu0 %v1583
      %v2796 = vpop.f32.mrf.mxu0
      %v2797 = vadd.f32 %v636, %v2796
      %v2798 = vpop.f32.mrf.mxu0
      %v2799 = vadd.f32 %v636, %v2798
      %2800 = vmatmul.bf16.gmra.mxu0 %v1586
      %v2801 = vpop.f32.mrf.mxu0
      %v2802 = vadd.f32 %v636, %v2801
      %v2803 = vpop.f32.mrf.mxu0
      %v2804 = vadd.f32 %v636, %v2803
      %2805 = vmatmul.bf16.gmra.mxu0 %v1589
      %v2806 = vpop.f32.mrf.mxu0
      %v2807 = vadd.f32 %v636, %v2806
      %v2808 = vpop.f32.mrf.mxu0
      %v2809 = vadd.f32 %v636, %v2808
      %2810 = vmatmul.bf16.gmra.mxu0 %v1592
      %v2811 = vpop.f32.mrf.mxu0
      %v2812 = vadd.f32 %v636, %v2811
      %v2813 = vpop.f32.mrf.mxu0
      %v2814 = vadd.f32 %v636, %v2813
      %2815 = vmatmul.bf16.gmra.mxu0 %v1595
      %v2816 = vpop.f32.mrf.mxu0
      %v2817 = vadd.f32 %v636, %v2816
      %v2818 = vpop.f32.mrf.mxu0
      %v2819 = vadd.f32 %v636, %v2818
      %2820 = vmatmul.bf16.gmra.mxu0 %v1598
      %v2821 = vpop.f32.mrf.mxu0
      %v2822 = vadd.f32 %v636, %v2821
      %v2823 = vpop.f32.mrf.mxu0
      %v2824 = vadd.f32 %v636, %v2823
      %2825 = vmatmul.bf16.gmra.mxu0 %v1601
      %v2826 = vpop.f32.mrf.mxu0
      %v2827 = vadd.f32 %v636, %v2826
      %v2828 = vpop.f32.mrf.mxu0
      %v2829 = vadd.f32 %v636, %v2828
      %2830 = vmatmul.bf16.gmra.mxu0 %v1604
      %v2831 = vpop.f32.mrf.mxu0
      %v2832 = vadd.f32 %v636, %v2831
      %v2833 = vpop.f32.mrf.mxu0
      %v2834 = vadd.f32 %v636, %v2833
      %2835 = vmatmul.bf16.gmra.mxu0 %v1607
      %v2836 = vpop.f32.mrf.mxu0
      %v2837 = vadd.f32 %v636, %v2836
      %v2838 = vpop.f32.mrf.mxu0
      %v2839 = vadd.f32 %v636, %v2838
      %2840 = vmatmul.bf16.gmra.mxu0 %v1610
      %v2841 = vpop.f32.mrf.mxu0
      %v2842 = vadd.f32 %v636, %v2841
      %v2843 = vpop.f32.mrf.mxu0
      %v2844 = vadd.f32 %v636, %v2843
      %2845 = vmatmul.bf16.gmra.mxu0 %v1613
      %v2846 = vpop.f32.mrf.mxu0
      %v2847 = vadd.f32 %v636, %v2846
      %v2848 = vpop.f32.mrf.mxu0
      %v2849 = vadd.f32 %v636, %v2848
      %2850 = vmatmul.bf16.gmra.mxu0 %v1616
      %v2851 = vpop.f32.mrf.mxu0
      %v2852 = vadd.f32 %v636, %v2851
      %v2853 = vpop.f32.mrf.mxu0
      %v2854 = vadd.f32 %v636, %v2853
      %2855 = vmatmul.bf16.gmra.mxu0 %v1619
      %v2856 = vpop.f32.mrf.mxu0
      %v2857 = vadd.f32 %v636, %v2856
      %v2858 = vpop.f32.mrf.mxu0
      %v2859 = vadd.f32 %v636, %v2858
      %2860 = vmatmul.bf16.gmra.mxu0 %v1622
      %v2861 = vpop.f32.mrf.mxu0
      %v2862 = vadd.f32 %v636, %v2861
      %v2863 = vpop.f32.mrf.mxu0
      %v2864 = vadd.f32 %v636, %v2863
      %2865 = vmatmul.bf16.gmra.mxu0 %v1625
      %v2866 = vpop.f32.mrf.mxu0
      %v2867 = vadd.f32 %v636, %v2866
      %v2868 = vpop.f32.mrf.mxu0
      %v2869 = vadd.f32 %v636, %v2868
      %2870 = vmatmul.bf16.gmra.mxu0 %v1628
      %v2871 = vpop.f32.mrf.mxu0
      %v2872 = vadd.f32 %v636, %v2871
      %v2873 = vpop.f32.mrf.mxu0
      %v2874 = vadd.f32 %v636, %v2873
      %2875 = vmatmul.bf16.gmra.mxu0 %v1631
      %v2876 = vpop.f32.mrf.mxu0
      %v2877 = vadd.f32 %v636, %v2876
      %v2878 = vpop.f32.mrf.mxu0
      %v2879 = vadd.f32 %v636, %v2878
      %2880 = vmatmul.bf16.gmra.mxu0 %v1634
      %v2881 = vpop.f32.mrf.mxu0
      %v2882 = vadd.f32 %v636, %v2881
      %v2883 = vpop.f32.mrf.mxu0
      %v2884 = vadd.f32 %v636, %v2883
      %2885 = vmatmul.bf16.gmra.mxu0 %v1637
      %v2886 = vpop.f32.mrf.mxu0
      %v2887 = vadd.f32 %v636, %v2886
      %v2888 = vpop.f32.mrf.mxu0
      %v2889 = vadd.f32 %v636, %v2888
      %2890 = vmatmul.bf16.gmra.mxu0 %v1640
      %v2891 = vpop.f32.mrf.mxu0
      %v2892 = vadd.f32 %v636, %v2891
      %v2893 = vpop.f32.mrf.mxu0
      %v2894 = vadd.f32 %v636, %v2893
      %2895 = vmatmul.bf16.gmra.mxu0 %v1643
      %v2896 = vpop.f32.mrf.mxu0
      %v2897 = vadd.f32 %v636, %v2896
      %v2898 = vpop.f32.mrf.mxu0
      %v2899 = vadd.f32 %v636, %v2898
      %2900 = vmatmul.bf16.gmra.mxu0 %v1646
      %v2901 = vpop.f32.mrf.mxu0
      %v2902 = vadd.f32 %v636, %v2901
      %v2903 = vpop.f32.mrf.mxu0
      %v2904 = vadd.f32 %v636, %v2903
      %2905 = vmatmul.bf16.gmra.mxu0 %v1649
      %v2906 = vpop.f32.mrf.mxu0
      %v2907 = vadd.f32 %v636, %v2906
      %v2908 = vpop.f32.mrf.mxu0
      %v2909 = vadd.f32 %v636, %v2908
      %2910 = vmatmul.bf16.gmra.mxu0 %v1652
      %v2911 = vpop.f32.mrf.mxu0
      %v2912 = vadd.f32 %v636, %v2911
      %v2913 = vpop.f32.mrf.mxu0
      %v2914 = vadd.f32 %v636, %v2913
      %2915 = vmatmul.bf16.gmra.mxu0 %v1655
      %v2916 = vpop.f32.mrf.mxu0
      %v2917 = vadd.f32 %v636, %v2916
      %v2918 = vpop.f32.mrf.mxu0
      %v2919 = vadd.f32 %v636, %v2918
      %2920 = vmatmul.bf16.gmra.mxu0 %v1658
      %v2921 = vpop.f32.mrf.mxu0
      %v2922 = vadd.f32 %v636, %v2921
      %v2923 = vpop.f32.mrf.mxu0
      %v2924 = vadd.f32 %v636, %v2923
      %2925 = vmatmul.bf16.gmra.mxu0 %v1661
      %v2926 = vpop.f32.mrf.mxu0
      %v2927 = vadd.f32 %v636, %v2926
      %v2928 = vpop.f32.mrf.mxu0
      %v2929 = vadd.f32 %v636, %v2928
      %2930 = vmatmul.bf16.gmra.mxu0 %v1664
      %v2931 = vpop.f32.mrf.mxu0
      %v2932 = vadd.f32 %v636, %v2931
      %v2933 = vpop.f32.mrf.mxu0
      %v2934 = vadd.f32 %v636, %v2933
      %2935 = vmatmul.bf16.gmra.mxu0 %v1667
      %v2936 = vpop.f32.mrf.mxu0
      %v2937 = vadd.f32 %v636, %v2936
      %v2938 = vpop.f32.mrf.mxu0
      %v2939 = vadd.f32 %v636, %v2938
      %2940 = vmatmul.bf16.gmra.mxu0 %v1670
      %v2941 = vpop.f32.mrf.mxu0
      %v2942 = vadd.f32 %v636, %v2941
      %v2943 = vpop.f32.mrf.mxu0
      %v2944 = vadd.f32 %v636, %v2943
      %2945 = vmatmul.bf16.gmra.mxu0 %v1673
      %v2946 = vpop.f32.mrf.mxu0
      %v2947 = vadd.f32 %v636, %v2946
      %v2948 = vpop.f32.mrf.mxu0
      %v2949 = vadd.f32 %v636, %v2948
      %2950 = vmatmul.bf16.gmra.mxu0 %v1676
      %v2951 = vpop.f32.mrf.mxu0
      %v2952 = vadd.f32 %v636, %v2951
      %v2953 = vpop.f32.mrf.mxu0
      %v2954 = vadd.f32 %v636, %v2953
      %2955 = vmatmul.bf16.gmra.mxu0 %v1679
      %v2956 = vpop.f32.mrf.mxu0
      %v2957 = vadd.f32 %v636, %v2956
      %v2958 = vpop.f32.mrf.mxu0
      %v2959 = vadd.f32 %v636, %v2958
      %2960 = vmatmul.bf16.gmra.mxu0 %v1682
      %v2961 = vpop.f32.mrf.mxu0
      %v2962 = vadd.f32 %v636, %v2961
      %v2963 = vpop.f32.mrf.mxu0
      %v2964 = vadd.f32 %v636, %v2963
      %2965 = vmatmul.bf16.gmra.mxu0 %v1685
      %v2966 = vpop.f32.mrf.mxu0
      %v2967 = vadd.f32 %v636, %v2966
      %v2968 = vpop.f32.mrf.mxu0
      %v2969 = vadd.f32 %v636, %v2968
      %2970 = vmatmul.bf16.gmra.mxu0 %v1688
      %v2971 = vpop.f32.mrf.mxu0
      %v2972 = vadd.f32 %v636, %v2971
      %v2973 = vpop.f32.mrf.mxu0
      %v2974 = vadd.f32 %v636, %v2973
      %2975 = vmatmul.bf16.gmra.mxu0 %v1691
      %v2976 = vpop.f32.mrf.mxu0
      %v2977 = vadd.f32 %v636, %v2976
      %v2978 = vpop.f32.mrf.mxu0
      %v2979 = vadd.f32 %v636, %v2978
      %2980 = vmatmul.bf16.gmra.mxu0 %v1694
      %v2981 = vpop.f32.mrf.mxu0
      %v2982 = vadd.f32 %v636, %v2981
      %v2983 = vpop.f32.mrf.mxu0
      %v2984 = vadd.f32 %v636, %v2983
      %2985 = vmatmul.bf16.gmra.mxu0 %v1697
      %v2986 = vpop.f32.mrf.mxu0
      %v2987 = vadd.f32 %v636, %v2986
      %v2988 = vpop.f32.mrf.mxu0
      %v2989 = vadd.f32 %v636, %v2988
      %2990 = vmatmul.bf16.gmra.mxu0 %v1700
      %v2991 = vpop.f32.mrf.mxu0
      %v2992 = vadd.f32 %v636, %v2991
      %v2993 = vpop.f32.mrf.mxu0
      %v2994 = vadd.f32 %v636, %v2993
      %2995 = vmatmul.bf16.gmra.mxu0 %v1703
      %v2996 = vpop.f32.mrf.mxu0
      %v2997 = vadd.f32 %v636, %v2996
      %v2998 = vpop.f32.mrf.mxu0
      %v2999 = vadd.f32 %v636, %v2998
      %3000 = vmatmul.bf16.gmra.mxu0 %v1706
      %v3001 = vpop.f32.mrf.mxu0
      %v3002 = vadd.f32 %v636, %v3001
      %v3003 = vpop.f32.mrf.mxu0
      %v3004 = vadd.f32 %v636, %v3003
      %3005 = vdwg.mxu0
      %3006 = vmatpush.bf16.msra.mxu0 0
      %3007 = vmatpush.bf16.msra.mxu0 0
      %3008 = vmatpush.bf16.msra.mxu0 0
      %3009 = vmatpush.bf16.msra.mxu0 0
      %3010 = vmatpush.bf16.msra.mxu0 0
      %3011 = vmatpush.bf16.msra.mxu0 0
      %3012 = vmatpush.bf16.msra.mxu0 %v1313
      %3013 = vmatpush.bf16.msra.mxu0 %v1309
      %3014 = vmatmul.bf16.gmra.mxu0 %v1325
      %v3015 = vpop.f32.mrf.mxu0
      %v3016 = vadd.f32 %v637, %v3015
      %v3017 = vpop.f32.mrf.mxu0
      %v3018 = vadd.f32 %v637, %v3017
      %3019 = vmatmul.bf16.gmra.mxu0 %v1328
      %v3020 = vpop.f32.mrf.mxu0
      %v3021 = vadd.f32 %v637, %v3020
      %v3022 = vpop.f32.mrf.mxu0
      %v3023 = vadd.f32 %v637, %v3022
      %3024 = vmatmul.bf16.gmra.mxu0 %v1331
      %v3025 = vpop.f32.mrf.mxu0
      %v3026 = vadd.f32 %v637, %v3025
      %v3027 = vpop.f32.mrf.mxu0
      %v3028 = vadd.f32 %v637, %v3027
      %3029 = vmatmul.bf16.gmra.mxu0 %v1334
      %v3030 = vpop.f32.mrf.mxu0
      %v3031 = vadd.f32 %v637, %v3030
      %v3032 = vpop.f32.mrf.mxu0
      %v3033 = vadd.f32 %v637, %v3032
      %3034 = vmatmul.bf16.gmra.mxu0 %v1337
      %v3035 = vpop.f32.mrf.mxu0
      %v3036 = vadd.f32 %v637, %v3035
      %v3037 = vpop.f32.mrf.mxu0
      %v3038 = vadd.f32 %v637, %v3037
      %3039 = vmatmul.bf16.gmra.mxu0 %v1340
      %v3040 = vpop.f32.mrf.mxu0
      %v3041 = vadd.f32 %v637, %v3040
      %v3042 = vpop.f32.mrf.mxu0
      %v3043 = vadd.f32 %v637, %v3042
      %3044 = vmatmul.bf16.gmra.mxu0 %v1343
      %v3045 = vpop.f32.mrf.mxu0
      %v3046 = vadd.f32 %v637, %v3045
      %v3047 = vpop.f32.mrf.mxu0
      %v3048 = vadd.f32 %v637, %v3047
      %3049 = vmatmul.bf16.gmra.mxu0 %v1346
      %v3050 = vpop.f32.mrf.mxu0
      %v3051 = vadd.f32 %v637, %v3050
      %v3052 = vpop.f32.mrf.mxu0
      %v3053 = vadd.f32 %v637, %v3052
      %3054 = vmatmul.bf16.gmra.mxu0 %v1349
      %v3055 = vpop.f32.mrf.mxu0
      %v3056 = vadd.f32 %v637, %v3055
      %v3057 = vpop.f32.mrf.mxu0
      %v3058 = vadd.f32 %v637, %v3057
      %3059 = vmatmul.bf16.gmra.mxu0 %v1352
      %v3060 = vpop.f32.mrf.mxu0
      %v3061 = vadd.f32 %v637, %v3060
      %v3062 = vpop.f32.mrf.mxu0
      %v3063 = vadd.f32 %v637, %v3062
      %3064 = vmatmul.bf16.gmra.mxu0 %v1355
      %v3065 = vpop.f32.mrf.mxu0
      %v3066 = vadd.f32 %v637, %v3065
      %v3067 = vpop.f32.mrf.mxu0
      %v3068 = vadd.f32 %v637, %v3067
      %3069 = vmatmul.bf16.gmra.mxu0 %v1358
      %v3070 = vpop.f32.mrf.mxu0
      %v3071 = vadd.f32 %v637, %v3070
      %v3072 = vpop.f32.mrf.mxu0
      %v3073 = vadd.f32 %v637, %v3072
      %3074 = vmatmul.bf16.gmra.mxu0 %v1361
      %v3075 = vpop.f32.mrf.mxu0
      %v3076 = vadd.f32 %v637, %v3075
      %v3077 = vpop.f32.mrf.mxu0
      %v3078 = vadd.f32 %v637, %v3077
      %3079 = vmatmul.bf16.gmra.mxu0 %v1364
      %v3080 = vpop.f32.mrf.mxu0
      %v3081 = vadd.f32 %v637, %v3080
      %v3082 = vpop.f32.mrf.mxu0
      %v3083 = vadd.f32 %v637, %v3082
      %3084 = vmatmul.bf16.gmra.mxu0 %v1367
      %v3085 = vpop.f32.mrf.mxu0
      %v3086 = vadd.f32 %v637, %v3085
      %v3087 = vpop.f32.mrf.mxu0
      %v3088 = vadd.f32 %v637, %v3087
      %3089 = vmatmul.bf16.gmra.mxu0 %v1370
      %v3090 = vpop.f32.mrf.mxu0
      %v3091 = vadd.f32 %v637, %v3090
      %v3092 = vpop.f32.mrf.mxu0
      %v3093 = vadd.f32 %v637, %v3092
      %3094 = vmatmul.bf16.gmra.mxu0 %v1373
      %v3095 = vpop.f32.mrf.mxu0
      %v3096 = vadd.f32 %v637, %v3095
      %v3097 = vpop.f32.mrf.mxu0
      %v3098 = vadd.f32 %v637, %v3097
      %3099 = vmatmul.bf16.gmra.mxu0 %v1376
      %v3100 = vpop.f32.mrf.mxu0
      %v3101 = vadd.f32 %v637, %v3100
      %v3102 = vpop.f32.mrf.mxu0
      %v3103 = vadd.f32 %v637, %v3102
      %3104 = vmatmul.bf16.gmra.mxu0 %v1379
      %v3105 = vpop.f32.mrf.mxu0
      %v3106 = vadd.f32 %v637, %v3105
      %v3107 = vpop.f32.mrf.mxu0
      %v3108 = vadd.f32 %v637, %v3107
      %3109 = vmatmul.bf16.gmra.mxu0 %v1382
      %v3110 = vpop.f32.mrf.mxu0
      %v3111 = vadd.f32 %v637, %v3110
      %v3112 = vpop.f32.mrf.mxu0
      %v3113 = vadd.f32 %v637, %v3112
      %3114 = vmatmul.bf16.gmra.mxu0 %v1385
      %v3115 = vpop.f32.mrf.mxu0
      %v3116 = vadd.f32 %v637, %v3115
      %v3117 = vpop.f32.mrf.mxu0
      %v3118 = vadd.f32 %v637, %v3117
      %3119 = vmatmul.bf16.gmra.mxu0 %v1388
      %v3120 = vpop.f32.mrf.mxu0
      %v3121 = vadd.f32 %v637, %v3120
      %v3122 = vpop.f32.mrf.mxu0
      %v3123 = vadd.f32 %v637, %v3122
      %3124 = vmatmul.bf16.gmra.mxu0 %v1391
      %v3125 = vpop.f32.mrf.mxu0
      %v3126 = vadd.f32 %v637, %v3125
      %v3127 = vpop.f32.mrf.mxu0
      %v3128 = vadd.f32 %v637, %v3127
      %3129 = vmatmul.bf16.gmra.mxu0 %v1394
      %v3130 = vpop.f32.mrf.mxu0
      %v3131 = vadd.f32 %v637, %v3130
      %v3132 = vpop.f32.mrf.mxu0
      %v3133 = vadd.f32 %v637, %v3132
      %3134 = vmatmul.bf16.gmra.mxu0 %v1397
      %v3135 = vpop.f32.mrf.mxu0
      %v3136 = vadd.f32 %v637, %v3135
      %v3137 = vpop.f32.mrf.mxu0
      %v3138 = vadd.f32 %v637, %v3137
      %3139 = vmatmul.bf16.gmra.mxu0 %v1400
      %v3140 = vpop.f32.mrf.mxu0
      %v3141 = vadd.f32 %v637, %v3140
      %v3142 = vpop.f32.mrf.mxu0
      %v3143 = vadd.f32 %v637, %v3142
      %3144 = vmatmul.bf16.gmra.mxu0 %v1403
      %v3145 = vpop.f32.mrf.mxu0
      %v3146 = vadd.f32 %v637, %v3145
      %v3147 = vpop.f32.mrf.mxu0
      %v3148 = vadd.f32 %v637, %v3147
      %3149 = vmatmul.bf16.gmra.mxu0 %v1406
      %v3150 = vpop.f32.mrf.mxu0
      %v3151 = vadd.f32 %v637, %v3150
      %v3152 = vpop.f32.mrf.mxu0
      %v3153 = vadd.f32 %v637, %v3152
      %3154 = vmatmul.bf16.gmra.mxu0 %v1409
      %v3155 = vpop.f32.mrf.mxu0
      %v3156 = vadd.f32 %v637, %v3155
      %v3157 = vpop.f32.mrf.mxu0
      %v3158 = vadd.f32 %v637, %v3157
      %3159 = vmatmul.bf16.gmra.mxu0 %v1412
      %v3160 = vpop.f32.mrf.mxu0
      %v3161 = vadd.f32 %v637, %v3160
      %v3162 = vpop.f32.mrf.mxu0
      %v3163 = vadd.f32 %v637, %v3162
      %3164 = vmatmul.bf16.gmra.mxu0 %v1415
      %v3165 = vpop.f32.mrf.mxu0
      %v3166 = vadd.f32 %v637, %v3165
      %v3167 = vpop.f32.mrf.mxu0
      %v3168 = vadd.f32 %v637, %v3167
      %3169 = vmatmul.bf16.gmra.mxu0 %v1418
      %v3170 = vpop.f32.mrf.mxu0
      %v3171 = vadd.f32 %v637, %v3170
      %v3172 = vpop.f32.mrf.mxu0
      %v3173 = vadd.f32 %v637, %v3172
      %3174 = vmatmul.bf16.gmra.mxu0 %v1421
      %v3175 = vpop.f32.mrf.mxu0
      %v3176 = vadd.f32 %v637, %v3175
      %v3177 = vpop.f32.mrf.mxu0
      %v3178 = vadd.f32 %v637, %v3177
      %3179 = vmatmul.bf16.gmra.mxu0 %v1424
      %v3180 = vpop.f32.mrf.mxu0
      %v3181 = vadd.f32 %v637, %v3180
      %v3182 = vpop.f32.mrf.mxu0
      %v3183 = vadd.f32 %v637, %v3182
      %3184 = vmatmul.bf16.gmra.mxu0 %v1427
      %v3185 = vpop.f32.mrf.mxu0
      %v3186 = vadd.f32 %v637, %v3185
      %v3187 = vpop.f32.mrf.mxu0
      %v3188 = vadd.f32 %v637, %v3187
      %3189 = vmatmul.bf16.gmra.mxu0 %v1430
      %v3190 = vpop.f32.mrf.mxu0
      %v3191 = vadd.f32 %v637, %v3190
      %v3192 = vpop.f32.mrf.mxu0
      %v3193 = vadd.f32 %v637, %v3192
      %3194 = vmatmul.bf16.gmra.mxu0 %v1433
      %v3195 = vpop.f32.mrf.mxu0
      %v3196 = vadd.f32 %v637, %v3195
      %v3197 = vpop.f32.mrf.mxu0
      %v3198 = vadd.f32 %v637, %v3197
      %3199 = vmatmul.bf16.gmra.mxu0 %v1436
      %v3200 = vpop.f32.mrf.mxu0
      %v3201 = vadd.f32 %v637, %v3200
      %v3202 = vpop.f32.mrf.mxu0
      %v3203 = vadd.f32 %v637, %v3202
      %3204 = vmatmul.bf16.gmra.mxu0 %v1439
      %v3205 = vpop.f32.mrf.mxu0
      %v3206 = vadd.f32 %v637, %v3205
      %v3207 = vpop.f32.mrf.mxu0
      %v3208 = vadd.f32 %v637, %v3207
      %3209 = vmatmul.bf16.gmra.mxu0 %v1442
      %v3210 = vpop.f32.mrf.mxu0
      %v3211 = vadd.f32 %v637, %v3210
      %v3212 = vpop.f32.mrf.mxu0
      %v3213 = vadd.f32 %v637, %v3212
      %3214 = vmatmul.bf16.gmra.mxu0 %v1445
      %v3215 = vpop.f32.mrf.mxu0
      %v3216 = vadd.f32 %v637, %v3215
      %v3217 = vpop.f32.mrf.mxu0
      %v3218 = vadd.f32 %v637, %v3217
      %3219 = vmatmul.bf16.gmra.mxu0 %v1448
      %v3220 = vpop.f32.mrf.mxu0
      %v3221 = vadd.f32 %v637, %v3220
      %v3222 = vpop.f32.mrf.mxu0
      %v3223 = vadd.f32 %v637, %v3222
      %3224 = vmatmul.bf16.gmra.mxu0 %v1451
      %v3225 = vpop.f32.mrf.mxu0
      %v3226 = vadd.f32 %v637, %v3225
      %v3227 = vpop.f32.mrf.mxu0
      %v3228 = vadd.f32 %v637, %v3227
      %3229 = vmatmul.bf16.gmra.mxu0 %v1454
      %v3230 = vpop.f32.mrf.mxu0
      %v3231 = vadd.f32 %v637, %v3230
      %v3232 = vpop.f32.mrf.mxu0
      %v3233 = vadd.f32 %v637, %v3232
      %3234 = vmatmul.bf16.gmra.mxu0 %v1457
      %v3235 = vpop.f32.mrf.mxu0
      %v3236 = vadd.f32 %v637, %v3235
      %v3237 = vpop.f32.mrf.mxu0
      %v3238 = vadd.f32 %v637, %v3237
      %3239 = vmatmul.bf16.gmra.mxu0 %v1460
      %v3240 = vpop.f32.mrf.mxu0
      %v3241 = vadd.f32 %v637, %v3240
      %v3242 = vpop.f32.mrf.mxu0
      %v3243 = vadd.f32 %v637, %v3242
      %3244 = vmatmul.bf16.gmra.mxu0 %v1463
      %v3245 = vpop.f32.mrf.mxu0
      %v3246 = vadd.f32 %v637, %v3245
      %v3247 = vpop.f32.mrf.mxu0
      %v3248 = vadd.f32 %v637, %v3247
      %3249 = vmatmul.bf16.gmra.mxu0 %v1466
      %v3250 = vpop.f32.mrf.mxu0
      %v3251 = vadd.f32 %v637, %v3250
      %v3252 = vpop.f32.mrf.mxu0
      %v3253 = vadd.f32 %v637, %v3252
      %3254 = vmatmul.bf16.gmra.mxu0 %v1469
      %v3255 = vpop.f32.mrf.mxu0
      %v3256 = vadd.f32 %v637, %v3255
      %v3257 = vpop.f32.mrf.mxu0
      %v3258 = vadd.f32 %v637, %v3257
      %3259 = vmatmul.bf16.gmra.mxu0 %v1472
      %v3260 = vpop.f32.mrf.mxu0
      %v3261 = vadd.f32 %v637, %v3260
      %v3262 = vpop.f32.mrf.mxu0
      %v3263 = vadd.f32 %v637, %v3262
      %3264 = vmatmul.bf16.gmra.mxu0 %v1475
      %v3265 = vpop.f32.mrf.mxu0
      %v3266 = vadd.f32 %v637, %v3265
      %v3267 = vpop.f32.mrf.mxu0
      %v3268 = vadd.f32 %v637, %v3267
      %3269 = vmatmul.bf16.gmra.mxu0 %v1478
      %v3270 = vpop.f32.mrf.mxu0
      %v3271 = vadd.f32 %v637, %v3270
      %v3272 = vpop.f32.mrf.mxu0
      %v3273 = vadd.f32 %v637, %v3272
      %3274 = vmatmul.bf16.gmra.mxu0 %v1481
      %v3275 = vpop.f32.mrf.mxu0
      %v3276 = vadd.f32 %v637, %v3275
      %v3277 = vpop.f32.mrf.mxu0
      %v3278 = vadd.f32 %v637, %v3277
      %3279 = vmatmul.bf16.gmra.mxu0 %v1484
      %v3280 = vpop.f32.mrf.mxu0
      %v3281 = vadd.f32 %v637, %v3280
      %v3282 = vpop.f32.mrf.mxu0
      %v3283 = vadd.f32 %v637, %v3282
      %3284 = vmatmul.bf16.gmra.mxu0 %v1487
      %v3285 = vpop.f32.mrf.mxu0
      %v3286 = vadd.f32 %v637, %v3285
      %v3287 = vpop.f32.mrf.mxu0
      %v3288 = vadd.f32 %v637, %v3287
      %3289 = vmatmul.bf16.gmra.mxu0 %v1490
      %v3290 = vpop.f32.mrf.mxu0
      %v3291 = vadd.f32 %v637, %v3290
      %v3292 = vpop.f32.mrf.mxu0
      %v3293 = vadd.f32 %v637, %v3292
      %3294 = vmatmul.bf16.gmra.mxu0 %v1493
      %v3295 = vpop.f32.mrf.mxu0
      %v3296 = vadd.f32 %v637, %v3295
      %v3297 = vpop.f32.mrf.mxu0
      %v3298 = vadd.f32 %v637, %v3297
      %3299 = vmatmul.bf16.gmra.mxu0 %v1496
      %v3300 = vpop.f32.mrf.mxu0
      %v3301 = vadd.f32 %v637, %v3300
      %v3302 = vpop.f32.mrf.mxu0
      %v3303 = vadd.f32 %v637, %v3302
      %3304 = vmatmul.bf16.gmra.mxu0 %v1499
      %v3305 = vpop.f32.mrf.mxu0
      %v3306 = vadd.f32 %v637, %v3305
      %v3307 = vpop.f32.mrf.mxu0
      %v3308 = vadd.f32 %v637, %v3307
      %3309 = vmatmul.bf16.gmra.mxu0 %v1502
      %v3310 = vpop.f32.mrf.mxu0
      %v3311 = vadd.f32 %v637, %v3310
      %v3312 = vpop.f32.mrf.mxu0
      %v3313 = vadd.f32 %v637, %v3312
      %3314 = vmatmul.bf16.gmra.mxu0 %v1505
      %v3315 = vpop.f32.mrf.mxu0
      %v3316 = vadd.f32 %v637, %v3315
      %v3317 = vpop.f32.mrf.mxu0
      %v3318 = vadd.f32 %v637, %v3317
      %3319 = vmatmul.bf16.gmra.mxu0 %v1508
      %v3320 = vpop.f32.mrf.mxu0
      %v3321 = vadd.f32 %v637, %v3320
      %v3322 = vpop.f32.mrf.mxu0
      %v3323 = vadd.f32 %v637, %v3322
      %3324 = vmatmul.bf16.gmra.mxu0 %v1511
      %v3325 = vpop.f32.mrf.mxu0
      %v3326 = vadd.f32 %v637, %v3325
      %v3327 = vpop.f32.mrf.mxu0
      %v3328 = vadd.f32 %v637, %v3327
      %3329 = vmatmul.bf16.gmra.mxu0 %v1514
      %v3330 = vpop.f32.mrf.mxu0
      %v3331 = vadd.f32 %v637, %v3330
      %v3332 = vpop.f32.mrf.mxu0
      %v3333 = vadd.f32 %v637, %v3332
      %3334 = vmatmul.bf16.gmra.mxu0 %v1517
      %v3335 = vpop.f32.mrf.mxu0
      %v3336 = vadd.f32 %v637, %v3335
      %v3337 = vpop.f32.mrf.mxu0
      %v3338 = vadd.f32 %v637, %v3337
      %3339 = vmatmul.bf16.gmra.mxu0 %v1520
      %v3340 = vpop.f32.mrf.mxu0
      %v3341 = vadd.f32 %v637, %v3340
      %v3342 = vpop.f32.mrf.mxu0
      %v3343 = vadd.f32 %v637, %v3342
      %3344 = vmatmul.bf16.gmra.mxu0 %v1523
      %v3345 = vpop.f32.mrf.mxu0
      %v3346 = vadd.f32 %v637, %v3345
      %v3347 = vpop.f32.mrf.mxu0
      %v3348 = vadd.f32 %v637, %v3347
      %3349 = vmatmul.bf16.gmra.mxu0 %v1526
      %v3350 = vpop.f32.mrf.mxu0
      %v3351 = vadd.f32 %v637, %v3350
      %v3352 = vpop.f32.mrf.mxu0
      %v3353 = vadd.f32 %v637, %v3352
      %3354 = vmatmul.bf16.gmra.mxu0 %v1529
      %v3355 = vpop.f32.mrf.mxu0
      %v3356 = vadd.f32 %v637, %v3355
      %v3357 = vpop.f32.mrf.mxu0
      %v3358 = vadd.f32 %v637, %v3357
      %3359 = vmatmul.bf16.gmra.mxu0 %v1532
      %v3360 = vpop.f32.mrf.mxu0
      %v3361 = vadd.f32 %v637, %v3360
      %v3362 = vpop.f32.mrf.mxu0
      %v3363 = vadd.f32 %v637, %v3362
      %3364 = vmatmul.bf16.gmra.mxu0 %v1535
      %v3365 = vpop.f32.mrf.mxu0
      %v3366 = vadd.f32 %v637, %v3365
      %v3367 = vpop.f32.mrf.mxu0
      %v3368 = vadd.f32 %v637, %v3367
      %3369 = vmatmul.bf16.gmra.mxu0 %v1538
      %v3370 = vpop.f32.mrf.mxu0
      %v3371 = vadd.f32 %v637, %v3370
      %v3372 = vpop.f32.mrf.mxu0
      %v3373 = vadd.f32 %v637, %v3372
      %3374 = vmatmul.bf16.gmra.mxu0 %v1541
      %v3375 = vpop.f32.mrf.mxu0
      %v3376 = vadd.f32 %v637, %v3375
      %v3377 = vpop.f32.mrf.mxu0
      %v3378 = vadd.f32 %v637, %v3377
      %3379 = vmatmul.bf16.gmra.mxu0 %v1544
      %v3380 = vpop.f32.mrf.mxu0
      %v3381 = vadd.f32 %v637, %v3380
      %v3382 = vpop.f32.mrf.mxu0
      %v3383 = vadd.f32 %v637, %v3382
      %3384 = vmatmul.bf16.gmra.mxu0 %v1547
      %v3385 = vpop.f32.mrf.mxu0
      %v3386 = vadd.f32 %v637, %v3385
      %v3387 = vpop.f32.mrf.mxu0
      %v3388 = vadd.f32 %v637, %v3387
      %3389 = vmatmul.bf16.gmra.mxu0 %v1550
      %v3390 = vpop.f32.mrf.mxu0
      %v3391 = vadd.f32 %v637, %v3390
      %v3392 = vpop.f32.mrf.mxu0
      %v3393 = vadd.f32 %v637, %v3392
      %3394 = vmatmul.bf16.gmra.mxu0 %v1553
      %v3395 = vpop.f32.mrf.mxu0
      %v3396 = vadd.f32 %v637, %v3395
      %v3397 = vpop.f32.mrf.mxu0
      %v3398 = vadd.f32 %v637, %v3397
      %3399 = vmatmul.bf16.gmra.mxu0 %v1556
      %v3400 = vpop.f32.mrf.mxu0
      %v3401 = vadd.f32 %v637, %v3400
      %v3402 = vpop.f32.mrf.mxu0
      %v3403 = vadd.f32 %v637, %v3402
      %3404 = vmatmul.bf16.gmra.mxu0 %v1559
      %v3405 = vpop.f32.mrf.mxu0
      %v3406 = vadd.f32 %v637, %v3405
      %v3407 = vpop.f32.mrf.mxu0
      %v3408 = vadd.f32 %v637, %v3407
      %3409 = vmatmul.bf16.gmra.mxu0 %v1562
      %v3410 = vpop.f32.mrf.mxu0
      %v3411 = vadd.f32 %v637, %v3410
      %v3412 = vpop.f32.mrf.mxu0
      %v3413 = vadd.f32 %v637, %v3412
      %3414 = vmatmul.bf16.gmra.mxu0 %v1565
      %v3415 = vpop.f32.mrf.mxu0
      %v3416 = vadd.f32 %v637, %v3415
      %v3417 = vpop.f32.mrf.mxu0
      %v3418 = vadd.f32 %v637, %v3417
      %3419 = vmatmul.bf16.gmra.mxu0 %v1568
      %v3420 = vpop.f32.mrf.mxu0
      %v3421 = vadd.f32 %v637, %v3420
      %v3422 = vpop.f32.mrf.mxu0
      %v3423 = vadd.f32 %v637, %v3422
      %3424 = vmatmul.bf16.gmra.mxu0 %v1571
      %v3425 = vpop.f32.mrf.mxu0
      %v3426 = vadd.f32 %v637, %v3425
      %v3427 = vpop.f32.mrf.mxu0
      %v3428 = vadd.f32 %v637, %v3427
      %3429 = vmatmul.bf16.gmra.mxu0 %v1574
      %v3430 = vpop.f32.mrf.mxu0
      %v3431 = vadd.f32 %v637, %v3430
      %v3432 = vpop.f32.mrf.mxu0
      %v3433 = vadd.f32 %v637, %v3432
      %3434 = vmatmul.bf16.gmra.mxu0 %v1577
      %v3435 = vpop.f32.mrf.mxu0
      %v3436 = vadd.f32 %v637, %v3435
      %v3437 = vpop.f32.mrf.mxu0
      %v3438 = vadd.f32 %v637, %v3437
      %3439 = vmatmul.bf16.gmra.mxu0 %v1580
      %v3440 = vpop.f32.mrf.mxu0
      %v3441 = vadd.f32 %v637, %v3440
      %v3442 = vpop.f32.mrf.mxu0
      %v3443 = vadd.f32 %v637, %v3442
      %3444 = vmatmul.bf16.gmra.mxu0 %v1583
      %v3445 = vpop.f32.mrf.mxu0
      %v3446 = vadd.f32 %v637, %v3445
      %v3447 = vpop.f32.mrf.mxu0
      %v3448 = vadd.f32 %v637, %v3447
      %3449 = vmatmul.bf16.gmra.mxu0 %v1586
      %v3450 = vpop.f32.mrf.mxu0
      %v3451 = vadd.f32 %v637, %v3450
      %v3452 = vpop.f32.mrf.mxu0
      %v3453 = vadd.f32 %v637, %v3452
      %3454 = vmatmul.bf16.gmra.mxu0 %v1589
      %v3455 = vpop.f32.mrf.mxu0
      %v3456 = vadd.f32 %v637, %v3455
      %v3457 = vpop.f32.mrf.mxu0
      %v3458 = vadd.f32 %v637, %v3457
      %3459 = vmatmul.bf16.gmra.mxu0 %v1592
      %v3460 = vpop.f32.mrf.mxu0
      %v3461 = vadd.f32 %v637, %v3460
      %v3462 = vpop.f32.mrf.mxu0
      %v3463 = vadd.f32 %v637, %v3462
      %3464 = vmatmul.bf16.gmra.mxu0 %v1595
      %v3465 = vpop.f32.mrf.mxu0
      %v3466 = vadd.f32 %v637, %v3465
      %v3467 = vpop.f32.mrf.mxu0
      %v3468 = vadd.f32 %v637, %v3467
      %3469 = vmatmul.bf16.gmra.mxu0 %v1598
      %v3470 = vpop.f32.mrf.mxu0
      %v3471 = vadd.f32 %v637, %v3470
      %v3472 = vpop.f32.mrf.mxu0
      %v3473 = vadd.f32 %v637, %v3472
      %3474 = vmatmul.bf16.gmra.mxu0 %v1601
      %v3475 = vpop.f32.mrf.mxu0
      %v3476 = vadd.f32 %v637, %v3475
      %v3477 = vpop.f32.mrf.mxu0
      %v3478 = vadd.f32 %v637, %v3477
      %3479 = vmatmul.bf16.gmra.mxu0 %v1604
      %v3480 = vpop.f32.mrf.mxu0
      %v3481 = vadd.f32 %v637, %v3480
      %v3482 = vpop.f32.mrf.mxu0
      %v3483 = vadd.f32 %v637, %v3482
      %3484 = vmatmul.bf16.gmra.mxu0 %v1607
      %v3485 = vpop.f32.mrf.mxu0
      %v3486 = vadd.f32 %v637, %v3485
      %v3487 = vpop.f32.mrf.mxu0
      %v3488 = vadd.f32 %v637, %v3487
      %3489 = vmatmul.bf16.gmra.mxu0 %v1610
      %v3490 = vpop.f32.mrf.mxu0
      %v3491 = vadd.f32 %v637, %v3490
      %v3492 = vpop.f32.mrf.mxu0
      %v3493 = vadd.f32 %v637, %v3492
      %3494 = vmatmul.bf16.gmra.mxu0 %v1613
      %v3495 = vpop.f32.mrf.mxu0
      %v3496 = vadd.f32 %v637, %v3495
      %v3497 = vpop.f32.mrf.mxu0
      %v3498 = vadd.f32 %v637, %v3497
      %3499 = vmatmul.bf16.gmra.mxu0 %v1616
      %v3500 = vpop.f32.mrf.mxu0
      %v3501 = vadd.f32 %v637, %v3500
      %v3502 = vpop.f32.mrf.mxu0
      %v3503 = vadd.f32 %v637, %v3502
      %3504 = vmatmul.bf16.gmra.mxu0 %v1619
      %v3505 = vpop.f32.mrf.mxu0
      %v3506 = vadd.f32 %v637, %v3505
      %v3507 = vpop.f32.mrf.mxu0
      %v3508 = vadd.f32 %v637, %v3507
      %3509 = vmatmul.bf16.gmra.mxu0 %v1622
      %v3510 = vpop.f32.mrf.mxu0
      %v3511 = vadd.f32 %v637, %v3510
      %v3512 = vpop.f32.mrf.mxu0
      %v3513 = vadd.f32 %v637, %v3512
      %3514 = vmatmul.bf16.gmra.mxu0 %v1625
      %v3515 = vpop.f32.mrf.mxu0
      %v3516 = vadd.f32 %v637, %v3515
      %v3517 = vpop.f32.mrf.mxu0
      %v3518 = vadd.f32 %v637, %v3517
      %3519 = vmatmul.bf16.gmra.mxu0 %v1628
      %v3520 = vpop.f32.mrf.mxu0
      %v3521 = vadd.f32 %v637, %v3520
      %v3522 = vpop.f32.mrf.mxu0
      %v3523 = vadd.f32 %v637, %v3522
      %3524 = vmatmul.bf16.gmra.mxu0 %v1631
      %v3525 = vpop.f32.mrf.mxu0
      %v3526 = vadd.f32 %v637, %v3525
      %v3527 = vpop.f32.mrf.mxu0
      %v3528 = vadd.f32 %v637, %v3527
      %3529 = vmatmul.bf16.gmra.mxu0 %v1634
      %v3530 = vpop.f32.mrf.mxu0
      %v3531 = vadd.f32 %v637, %v3530
      %v3532 = vpop.f32.mrf.mxu0
      %v3533 = vadd.f32 %v637, %v3532
      %3534 = vmatmul.bf16.gmra.mxu0 %v1637
      %v3535 = vpop.f32.mrf.mxu0
      %v3536 = vadd.f32 %v637, %v3535
      %v3537 = vpop.f32.mrf.mxu0
      %v3538 = vadd.f32 %v637, %v3537
      %3539 = vmatmul.bf16.gmra.mxu0 %v1640
      %v3540 = vpop.f32.mrf.mxu0
      %v3541 = vadd.f32 %v637, %v3540
      %v3542 = vpop.f32.mrf.mxu0
      %v3543 = vadd.f32 %v637, %v3542
      %3544 = vmatmul.bf16.gmra.mxu0 %v1643
      %v3545 = vpop.f32.mrf.mxu0
      %v3546 = vadd.f32 %v637, %v3545
      %v3547 = vpop.f32.mrf.mxu0
      %v3548 = vadd.f32 %v637, %v3547
      %3549 = vmatmul.bf16.gmra.mxu0 %v1646
      %v3550 = vpop.f32.mrf.mxu0
      %v3551 = vadd.f32 %v637, %v3550
      %v3552 = vpop.f32.mrf.mxu0
      %v3553 = vadd.f32 %v637, %v3552
      %3554 = vmatmul.bf16.gmra.mxu0 %v1649
      %v3555 = vpop.f32.mrf.mxu0
      %v3556 = vadd.f32 %v637, %v3555
      %v3557 = vpop.f32.mrf.mxu0
      %v3558 = vadd.f32 %v637, %v3557
      %3559 = vmatmul.bf16.gmra.mxu0 %v1652
      %v3560 = vpop.f32.mrf.mxu0
      %v3561 = vadd.f32 %v637, %v3560
      %v3562 = vpop.f32.mrf.mxu0
      %v3563 = vadd.f32 %v637, %v3562
      %3564 = vmatmul.bf16.gmra.mxu0 %v1655
      %v3565 = vpop.f32.mrf.mxu0
      %v3566 = vadd.f32 %v637, %v3565
      %v3567 = vpop.f32.mrf.mxu0
      %v3568 = vadd.f32 %v637, %v3567
      %3569 = vmatmul.bf16.gmra.mxu0 %v1658
      %v3570 = vpop.f32.mrf.mxu0
      %v3571 = vadd.f32 %v637, %v3570
      %v3572 = vpop.f32.mrf.mxu0
      %v3573 = vadd.f32 %v637, %v3572
      %3574 = vmatmul.bf16.gmra.mxu0 %v1661
      %v3575 = vpop.f32.mrf.mxu0
      %v3576 = vadd.f32 %v637, %v3575
      %v3577 = vpop.f32.mrf.mxu0
      %v3578 = vadd.f32 %v637, %v3577
      %3579 = vmatmul.bf16.gmra.mxu0 %v1664
      %v3580 = vpop.f32.mrf.mxu0
      %v3581 = vadd.f32 %v637, %v3580
      %v3582 = vpop.f32.mrf.mxu0
      %v3583 = vadd.f32 %v637, %v3582
      %3584 = vmatmul.bf16.gmra.mxu0 %v1667
      %v3585 = vpop.f32.mrf.mxu0
      %v3586 = vadd.f32 %v637, %v3585
      %v3587 = vpop.f32.mrf.mxu0
      %v3588 = vadd.f32 %v637, %v3587
      %3589 = vmatmul.bf16.gmra.mxu0 %v1670
      %v3590 = vpop.f32.mrf.mxu0
      %v3591 = vadd.f32 %v637, %v3590
      %v3592 = vpop.f32.mrf.mxu0
      %v3593 = vadd.f32 %v637, %v3592
      %3594 = vmatmul.bf16.gmra.mxu0 %v1673
      %v3595 = vpop.f32.mrf.mxu0
      %v3596 = vadd.f32 %v637, %v3595
      %v3597 = vpop.f32.mrf.mxu0
      %v3598 = vadd.f32 %v637, %v3597
      %3599 = vmatmul.bf16.gmra.mxu0 %v1676
      %v3600 = vpop.f32.mrf.mxu0
      %v3601 = vadd.f32 %v637, %v3600
      %v3602 = vpop.f32.mrf.mxu0
      %v3603 = vadd.f32 %v637, %v3602
      %3604 = vmatmul.bf16.gmra.mxu0 %v1679
      %v3605 = vpop.f32.mrf.mxu0
      %v3606 = vadd.f32 %v637, %v3605
      %v3607 = vpop.f32.mrf.mxu0
      %v3608 = vadd.f32 %v637, %v3607
      %3609 = vmatmul.bf16.gmra.mxu0 %v1682
      %v3610 = vpop.f32.mrf.mxu0
      %v3611 = vadd.f32 %v637, %v3610
      %v3612 = vpop.f32.mrf.mxu0
      %v3613 = vadd.f32 %v637, %v3612
      %3614 = vmatmul.bf16.gmra.mxu0 %v1685
      %v3615 = vpop.f32.mrf.mxu0
      %v3616 = vadd.f32 %v637, %v3615
      %v3617 = vpop.f32.mrf.mxu0
      %v3618 = vadd.f32 %v637, %v3617
      %3619 = vmatmul.bf16.gmra.mxu0 %v1688
      %v3620 = vpop.f32.mrf.mxu0
      %v3621 = vadd.f32 %v637, %v3620
      %v3622 = vpop.f32.mrf.mxu0
      %v3623 = vadd.f32 %v637, %v3622
      %3624 = vmatmul.bf16.gmra.mxu0 %v1691
      %v3625 = vpop.f32.mrf.mxu0
      %v3626 = vadd.f32 %v637, %v3625
      %v3627 = vpop.f32.mrf.mxu0
      %v3628 = vadd.f32 %v637, %v3627
      %3629 = vmatmul.bf16.gmra.mxu0 %v1694
      %v3630 = vpop.f32.mrf.mxu0
      %v3631 = vadd.f32 %v637, %v3630
      %v3632 = vpop.f32.mrf.mxu0
      %v3633 = vadd.f32 %v637, %v3632
      %3634 = vmatmul.bf16.gmra.mxu0 %v1697
      %v3635 = vpop.f32.mrf.mxu0
      %v3636 = vadd.f32 %v637, %v3635
      %v3637 = vpop.f32.mrf.mxu0
      %v3638 = vadd.f32 %v637, %v3637
      %3639 = vmatmul.bf16.gmra.mxu0 %v1700
      %v3640 = vpop.f32.mrf.mxu0
      %v3641 = vadd.f32 %v637, %v3640
      %v3642 = vpop.f32.mrf.mxu0
      %v3643 = vadd.f32 %v637, %v3642
      %3644 = vmatmul.bf16.gmra.mxu0 %v1703
      %v3645 = vpop.f32.mrf.mxu0
      %v3646 = vadd.f32 %v637, %v3645
      %v3647 = vpop.f32.mrf.mxu0
      %v3648 = vadd.f32 %v637, %v3647
      %3649 = vmatmul.bf16.gmra.mxu0 %v1706
      %v3650 = vpop.f32.mrf.mxu0
      %v3651 = vadd.f32 %v637, %v3650
      %v3652 = vpop.f32.mrf.mxu0
      %v3653 = vadd.f32 %v637, %v3652
      %3654 = vdwg.mxu0
      %3655 = vmatpush.bf16.msra.mxu0 0
      %3656 = vmatpush.bf16.msra.mxu0 0
      %3657 = vmatpush.bf16.msra.mxu0 0
      %3658 = vmatpush.bf16.msra.mxu0 0
      %3659 = vmatpush.bf16.msra.mxu0 0
      %3660 = vmatpush.bf16.msra.mxu0 0
      %3661 = vmatpush.bf16.msra.mxu0 %v1314
      %3662 = vmatpush.bf16.msra.mxu0 %v1310
      %3663 = vmatmul.bf16.gmra.mxu0 %v1325
      %v3664 = vpop.f32.mrf.mxu0
      %v3665 = vadd.f32 %v638, %v3664
      %v3666 = vpop.f32.mrf.mxu0
      %v3667 = vadd.f32 %v638, %v3666
      %3668 = vmatmul.bf16.gmra.mxu0 %v1328
      %v3669 = vpop.f32.mrf.mxu0
      %v3670 = vadd.f32 %v638, %v3669
      %v3671 = vpop.f32.mrf.mxu0
      %v3672 = vadd.f32 %v638, %v3671
      %3673 = vmatmul.bf16.gmra.mxu0 %v1331
      %v3674 = vpop.f32.mrf.mxu0
      %v3675 = vadd.f32 %v638, %v3674
      %v3676 = vpop.f32.mrf.mxu0
      %v3677 = vadd.f32 %v638, %v3676
      %3678 = vmatmul.bf16.gmra.mxu0 %v1334
      %v3679 = vpop.f32.mrf.mxu0
      %v3680 = vadd.f32 %v638, %v3679
      %v3681 = vpop.f32.mrf.mxu0
      %v3682 = vadd.f32 %v638, %v3681
      %3683 = vmatmul.bf16.gmra.mxu0 %v1337
      %v3684 = vpop.f32.mrf.mxu0
      %v3685 = vadd.f32 %v638, %v3684
      %v3686 = vpop.f32.mrf.mxu0
      %v3687 = vadd.f32 %v638, %v3686
      %3688 = vmatmul.bf16.gmra.mxu0 %v1340
      %v3689 = vpop.f32.mrf.mxu0
      %v3690 = vadd.f32 %v638, %v3689
      %v3691 = vpop.f32.mrf.mxu0
      %v3692 = vadd.f32 %v638, %v3691
      %3693 = vmatmul.bf16.gmra.mxu0 %v1343
      %v3694 = vpop.f32.mrf.mxu0
      %v3695 = vadd.f32 %v638, %v3694
      %v3696 = vpop.f32.mrf.mxu0
      %v3697 = vadd.f32 %v638, %v3696
      %3698 = vmatmul.bf16.gmra.mxu0 %v1346
      %v3699 = vpop.f32.mrf.mxu0
      %v3700 = vadd.f32 %v638, %v3699
      %v3701 = vpop.f32.mrf.mxu0
      %v3702 = vadd.f32 %v638, %v3701
      %3703 = vmatmul.bf16.gmra.mxu0 %v1349
      %v3704 = vpop.f32.mrf.mxu0
      %v3705 = vadd.f32 %v638, %v3704
      %v3706 = vpop.f32.mrf.mxu0
      %v3707 = vadd.f32 %v638, %v3706
      %3708 = vmatmul.bf16.gmra.mxu0 %v1352
      %v3709 = vpop.f32.mrf.mxu0
      %v3710 = vadd.f32 %v638, %v3709
      %v3711 = vpop.f32.mrf.mxu0
      %v3712 = vadd.f32 %v638, %v3711
      %3713 = vmatmul.bf16.gmra.mxu0 %v1355
      %v3714 = vpop.f32.mrf.mxu0
      %v3715 = vadd.f32 %v638, %v3714
      %v3716 = vpop.f32.mrf.mxu0
      %v3717 = vadd.f32 %v638, %v3716
      %3718 = vmatmul.bf16.gmra.mxu0 %v1358
      %v3719 = vpop.f32.mrf.mxu0
      %v3720 = vadd.f32 %v638, %v3719
      %v3721 = vpop.f32.mrf.mxu0
      %v3722 = vadd.f32 %v638, %v3721
      %3723 = vmatmul.bf16.gmra.mxu0 %v1361
      %v3724 = vpop.f32.mrf.mxu0
      %v3725 = vadd.f32 %v638, %v3724
      %v3726 = vpop.f32.mrf.mxu0
      %v3727 = vadd.f32 %v638, %v3726
      %3728 = vmatmul.bf16.gmra.mxu0 %v1364
      %v3729 = vpop.f32.mrf.mxu0
      %v3730 = vadd.f32 %v638, %v3729
      %v3731 = vpop.f32.mrf.mxu0
      %v3732 = vadd.f32 %v638, %v3731
      %3733 = vmatmul.bf16.gmra.mxu0 %v1367
      %v3734 = vpop.f32.mrf.mxu0
      %v3735 = vadd.f32 %v638, %v3734
      %v3736 = vpop.f32.mrf.mxu0
      %v3737 = vadd.f32 %v638, %v3736
      %3738 = vmatmul.bf16.gmra.mxu0 %v1370
      %v3739 = vpop.f32.mrf.mxu0
      %v3740 = vadd.f32 %v638, %v3739
      %v3741 = vpop.f32.mrf.mxu0
      %v3742 = vadd.f32 %v638, %v3741
      %3743 = vmatmul.bf16.gmra.mxu0 %v1373
      %v3744 = vpop.f32.mrf.mxu0
      %v3745 = vadd.f32 %v638, %v3744
      %v3746 = vpop.f32.mrf.mxu0
      %v3747 = vadd.f32 %v638, %v3746
      %3748 = vmatmul.bf16.gmra.mxu0 %v1376
      %v3749 = vpop.f32.mrf.mxu0
      %v3750 = vadd.f32 %v638, %v3749
      %v3751 = vpop.f32.mrf.mxu0
      %v3752 = vadd.f32 %v638, %v3751
      %3753 = vmatmul.bf16.gmra.mxu0 %v1379
      %v3754 = vpop.f32.mrf.mxu0
      %v3755 = vadd.f32 %v638, %v3754
      %v3756 = vpop.f32.mrf.mxu0
      %v3757 = vadd.f32 %v638, %v3756
      %3758 = vmatmul.bf16.gmra.mxu0 %v1382
      %v3759 = vpop.f32.mrf.mxu0
      %v3760 = vadd.f32 %v638, %v3759
      %v3761 = vpop.f32.mrf.mxu0
      %v3762 = vadd.f32 %v638, %v3761
      %3763 = vmatmul.bf16.gmra.mxu0 %v1385
      %v3764 = vpop.f32.mrf.mxu0
      %v3765 = vadd.f32 %v638, %v3764
      %v3766 = vpop.f32.mrf.mxu0
      %v3767 = vadd.f32 %v638, %v3766
      %3768 = vmatmul.bf16.gmra.mxu0 %v1388
      %v3769 = vpop.f32.mrf.mxu0
      %v3770 = vadd.f32 %v638, %v3769
      %v3771 = vpop.f32.mrf.mxu0
      %v3772 = vadd.f32 %v638, %v3771
      %3773 = vmatmul.bf16.gmra.mxu0 %v1391
      %v3774 = vpop.f32.mrf.mxu0
      %v3775 = vadd.f32 %v638, %v3774
      %v3776 = vpop.f32.mrf.mxu0
      %v3777 = vadd.f32 %v638, %v3776
      %3778 = vmatmul.bf16.gmra.mxu0 %v1394
      %v3779 = vpop.f32.mrf.mxu0
      %v3780 = vadd.f32 %v638, %v3779
      %v3781 = vpop.f32.mrf.mxu0
      %v3782 = vadd.f32 %v638, %v3781
      %3783 = vmatmul.bf16.gmra.mxu0 %v1397
      %v3784 = vpop.f32.mrf.mxu0
      %v3785 = vadd.f32 %v638, %v3784
      %v3786 = vpop.f32.mrf.mxu0
      %v3787 = vadd.f32 %v638, %v3786
      %3788 = vmatmul.bf16.gmra.mxu0 %v1400
      %v3789 = vpop.f32.mrf.mxu0
      %v3790 = vadd.f32 %v638, %v3789
      %v3791 = vpop.f32.mrf.mxu0
      %v3792 = vadd.f32 %v638, %v3791
      %3793 = vmatmul.bf16.gmra.mxu0 %v1403
      %v3794 = vpop.f32.mrf.mxu0
      %v3795 = vadd.f32 %v638, %v3794
      %v3796 = vpop.f32.mrf.mxu0
      %v3797 = vadd.f32 %v638, %v3796
      %3798 = vmatmul.bf16.gmra.mxu0 %v1406
      %v3799 = vpop.f32.mrf.mxu0
      %v3800 = vadd.f32 %v638, %v3799
      %v3801 = vpop.f32.mrf.mxu0
      %v3802 = vadd.f32 %v638, %v3801
      %3803 = vmatmul.bf16.gmra.mxu0 %v1409
      %v3804 = vpop.f32.mrf.mxu0
      %v3805 = vadd.f32 %v638, %v3804
      %v3806 = vpop.f32.mrf.mxu0
      %v3807 = vadd.f32 %v638, %v3806
      %3808 = vmatmul.bf16.gmra.mxu0 %v1412
      %v3809 = vpop.f32.mrf.mxu0
      %v3810 = vadd.f32 %v638, %v3809
      %v3811 = vpop.f32.mrf.mxu0
      %v3812 = vadd.f32 %v638, %v3811
      %3813 = vmatmul.bf16.gmra.mxu0 %v1415
      %v3814 = vpop.f32.mrf.mxu0
      %v3815 = vadd.f32 %v638, %v3814
      %v3816 = vpop.f32.mrf.mxu0
      %v3817 = vadd.f32 %v638, %v3816
      %3818 = vmatmul.bf16.gmra.mxu0 %v1418
      %v3819 = vpop.f32.mrf.mxu0
      %v3820 = vadd.f32 %v638, %v3819
      %v3821 = vpop.f32.mrf.mxu0
      %v3822 = vadd.f32 %v638, %v3821
      %3823 = vmatmul.bf16.gmra.mxu0 %v1421
      %v3824 = vpop.f32.mrf.mxu0
      %v3825 = vadd.f32 %v638, %v3824
      %v3826 = vpop.f32.mrf.mxu0
      %v3827 = vadd.f32 %v638, %v3826
      %3828 = vmatmul.bf16.gmra.mxu0 %v1424
      %v3829 = vpop.f32.mrf.mxu0
      %v3830 = vadd.f32 %v638, %v3829
      %v3831 = vpop.f32.mrf.mxu0
      %v3832 = vadd.f32 %v638, %v3831
      %3833 = vmatmul.bf16.gmra.mxu0 %v1427
      %v3834 = vpop.f32.mrf.mxu0
      %v3835 = vadd.f32 %v638, %v3834
      %v3836 = vpop.f32.mrf.mxu0
      %v3837 = vadd.f32 %v638, %v3836
      %3838 = vmatmul.bf16.gmra.mxu0 %v1430
      %v3839 = vpop.f32.mrf.mxu0
      %v3840 = vadd.f32 %v638, %v3839
      %v3841 = vpop.f32.mrf.mxu0
      %v3842 = vadd.f32 %v638, %v3841
      %3843 = vmatmul.bf16.gmra.mxu0 %v1433
      %v3844 = vpop.f32.mrf.mxu0
      %v3845 = vadd.f32 %v638, %v3844
      %v3846 = vpop.f32.mrf.mxu0
      %v3847 = vadd.f32 %v638, %v3846
      %3848 = vmatmul.bf16.gmra.mxu0 %v1436
      %v3849 = vpop.f32.mrf.mxu0
      %v3850 = vadd.f32 %v638, %v3849
      %v3851 = vpop.f32.mrf.mxu0
      %v3852 = vadd.f32 %v638, %v3851
      %3853 = vmatmul.bf16.gmra.mxu0 %v1439
      %v3854 = vpop.f32.mrf.mxu0
      %v3855 = vadd.f32 %v638, %v3854
      %v3856 = vpop.f32.mrf.mxu0
      %v3857 = vadd.f32 %v638, %v3856
      %3858 = vmatmul.bf16.gmra.mxu0 %v1442
      %v3859 = vpop.f32.mrf.mxu0
      %v3860 = vadd.f32 %v638, %v3859
      %v3861 = vpop.f32.mrf.mxu0
      %v3862 = vadd.f32 %v638, %v3861
      %3863 = vmatmul.bf16.gmra.mxu0 %v1445
      %v3864 = vpop.f32.mrf.mxu0
      %v3865 = vadd.f32 %v638, %v3864
      %v3866 = vpop.f32.mrf.mxu0
      %v3867 = vadd.f32 %v638, %v3866
      %3868 = vmatmul.bf16.gmra.mxu0 %v1448
      %v3869 = vpop.f32.mrf.mxu0
      %v3870 = vadd.f32 %v638, %v3869
      %v3871 = vpop.f32.mrf.mxu0
      %v3872 = vadd.f32 %v638, %v3871
      %3873 = vmatmul.bf16.gmra.mxu0 %v1451
      %v3874 = vpop.f32.mrf.mxu0
      %v3875 = vadd.f32 %v638, %v3874
      %v3876 = vpop.f32.mrf.mxu0
      %v3877 = vadd.f32 %v638, %v3876
      %3878 = vmatmul.bf16.gmra.mxu0 %v1454
      %v3879 = vpop.f32.mrf.mxu0
      %v3880 = vadd.f32 %v638, %v3879
      %v3881 = vpop.f32.mrf.mxu0
      %v3882 = vadd.f32 %v638, %v3881
      %3883 = vmatmul.bf16.gmra.mxu0 %v1457
      %v3884 = vpop.f32.mrf.mxu0
      %v3885 = vadd.f32 %v638, %v3884
      %v3886 = vpop.f32.mrf.mxu0
      %v3887 = vadd.f32 %v638, %v3886
      %3888 = vmatmul.bf16.gmra.mxu0 %v1460
      %v3889 = vpop.f32.mrf.mxu0
      %v3890 = vadd.f32 %v638, %v3889
      %v3891 = vpop.f32.mrf.mxu0
      %v3892 = vadd.f32 %v638, %v3891
      %3893 = vmatmul.bf16.gmra.mxu0 %v1463
      %v3894 = vpop.f32.mrf.mxu0
      %v3895 = vadd.f32 %v638, %v3894
      %v3896 = vpop.f32.mrf.mxu0
      %v3897 = vadd.f32 %v638, %v3896
      %3898 = vmatmul.bf16.gmra.mxu0 %v1466
      %v3899 = vpop.f32.mrf.mxu0
      %v3900 = vadd.f32 %v638, %v3899
      %v3901 = vpop.f32.mrf.mxu0
      %v3902 = vadd.f32 %v638, %v3901
      %3903 = vmatmul.bf16.gmra.mxu0 %v1469
      %v3904 = vpop.f32.mrf.mxu0
      %v3905 = vadd.f32 %v638, %v3904
      %v3906 = vpop.f32.mrf.mxu0
      %v3907 = vadd.f32 %v638, %v3906
      %3908 = vmatmul.bf16.gmra.mxu0 %v1472
      %v3909 = vpop.f32.mrf.mxu0
      %v3910 = vadd.f32 %v638, %v3909
      %v3911 = vpop.f32.mrf.mxu0
      %v3912 = vadd.f32 %v638, %v3911
      %3913 = vmatmul.bf16.gmra.mxu0 %v1475
      %v3914 = vpop.f32.mrf.mxu0
      %v3915 = vadd.f32 %v638, %v3914
      %v3916 = vpop.f32.mrf.mxu0
      %v3917 = vadd.f32 %v638, %v3916
      %3918 = vmatmul.bf16.gmra.mxu0 %v1478
      %v3919 = vpop.f32.mrf.mxu0
      %v3920 = vadd.f32 %v638, %v3919
      %v3921 = vpop.f32.mrf.mxu0
      %v3922 = vadd.f32 %v638, %v3921
      %3923 = vmatmul.bf16.gmra.mxu0 %v1481
      %v3924 = vpop.f32.mrf.mxu0
      %v3925 = vadd.f32 %v638, %v3924
      %v3926 = vpop.f32.mrf.mxu0
      %v3927 = vadd.f32 %v638, %v3926
      %3928 = vmatmul.bf16.gmra.mxu0 %v1484
      %v3929 = vpop.f32.mrf.mxu0
      %v3930 = vadd.f32 %v638, %v3929
      %v3931 = vpop.f32.mrf.mxu0
      %v3932 = vadd.f32 %v638, %v3931
      %3933 = vmatmul.bf16.gmra.mxu0 %v1487
      %v3934 = vpop.f32.mrf.mxu0
      %v3935 = vadd.f32 %v638, %v3934
      %v3936 = vpop.f32.mrf.mxu0
      %v3937 = vadd.f32 %v638, %v3936
      %3938 = vmatmul.bf16.gmra.mxu0 %v1490
      %v3939 = vpop.f32.mrf.mxu0
      %v3940 = vadd.f32 %v638, %v3939
      %v3941 = vpop.f32.mrf.mxu0
      %v3942 = vadd.f32 %v638, %v3941
      %3943 = vmatmul.bf16.gmra.mxu0 %v1493
      %v3944 = vpop.f32.mrf.mxu0
      %v3945 = vadd.f32 %v638, %v3944
      %v3946 = vpop.f32.mrf.mxu0
      %v3947 = vadd.f32 %v638, %v3946
      %3948 = vmatmul.bf16.gmra.mxu0 %v1496
      %v3949 = vpop.f32.mrf.mxu0
      %v3950 = vadd.f32 %v638, %v3949
      %v3951 = vpop.f32.mrf.mxu0
      %v3952 = vadd.f32 %v638, %v3951
      %3953 = vmatmul.bf16.gmra.mxu0 %v1499
      %v3954 = vpop.f32.mrf.mxu0
      %v3955 = vadd.f32 %v638, %v3954
      %v3956 = vpop.f32.mrf.mxu0
      %v3957 = vadd.f32 %v638, %v3956
      %3958 = vmatmul.bf16.gmra.mxu0 %v1502
      %v3959 = vpop.f32.mrf.mxu0
      %v3960 = vadd.f32 %v638, %v3959
      %v3961 = vpop.f32.mrf.mxu0
      %v3962 = vadd.f32 %v638, %v3961
      %3963 = vmatmul.bf16.gmra.mxu0 %v1505
      %v3964 = vpop.f32.mrf.mxu0
      %v3965 = vadd.f32 %v638, %v3964
      %v3966 = vpop.f32.mrf.mxu0
      %v3967 = vadd.f32 %v638, %v3966
      %3968 = vmatmul.bf16.gmra.mxu0 %v1508
      %v3969 = vpop.f32.mrf.mxu0
      %v3970 = vadd.f32 %v638, %v3969
      %v3971 = vpop.f32.mrf.mxu0
      %v3972 = vadd.f32 %v638, %v3971
      %3973 = vmatmul.bf16.gmra.mxu0 %v1511
      %v3974 = vpop.f32.mrf.mxu0
      %v3975 = vadd.f32 %v638, %v3974
      %v3976 = vpop.f32.mrf.mxu0
      %v3977 = vadd.f32 %v638, %v3976
      %3978 = vmatmul.bf16.gmra.mxu0 %v1514
      %v3979 = vpop.f32.mrf.mxu0
      %v3980 = vadd.f32 %v638, %v3979
      %v3981 = vpop.f32.mrf.mxu0
      %v3982 = vadd.f32 %v638, %v3981
      %3983 = vmatmul.bf16.gmra.mxu0 %v1517
      %v3984 = vpop.f32.mrf.mxu0
      %v3985 = vadd.f32 %v638, %v3984
      %v3986 = vpop.f32.mrf.mxu0
      %v3987 = vadd.f32 %v638, %v3986
      %3988 = vmatmul.bf16.gmra.mxu0 %v1520
      %v3989 = vpop.f32.mrf.mxu0
      %v3990 = vadd.f32 %v638, %v3989
      %v3991 = vpop.f32.mrf.mxu0
      %v3992 = vadd.f32 %v638, %v3991
      %3993 = vmatmul.bf16.gmra.mxu0 %v1523
      %v3994 = vpop.f32.mrf.mxu0
      %v3995 = vadd.f32 %v638, %v3994
      %v3996 = vpop.f32.mrf.mxu0
      %v3997 = vadd.f32 %v638, %v3996
      %3998 = vmatmul.bf16.gmra.mxu0 %v1526
      %v3999 = vpop.f32.mrf.mxu0
      %v4000 = vadd.f32 %v638, %v3999
      %v4001 = vpop.f32.mrf.mxu0
      %v4002 = vadd.f32 %v638, %v4001
      %4003 = vmatmul.bf16.gmra.mxu0 %v1529
      %v4004 = vpop.f32.mrf.mxu0
      %v4005 = vadd.f32 %v638, %v4004
      %v4006 = vpop.f32.mrf.mxu0
      %v4007 = vadd.f32 %v638, %v4006
      %4008 = vmatmul.bf16.gmra.mxu0 %v1532
      %v4009 = vpop.f32.mrf.mxu0
      %v4010 = vadd.f32 %v638, %v4009
      %v4011 = vpop.f32.mrf.mxu0
      %v4012 = vadd.f32 %v638, %v4011
      %4013 = vmatmul.bf16.gmra.mxu0 %v1535
      %v4014 = vpop.f32.mrf.mxu0
      %v4015 = vadd.f32 %v638, %v4014
      %v4016 = vpop.f32.mrf.mxu0
      %v4017 = vadd.f32 %v638, %v4016
      %4018 = vmatmul.bf16.gmra.mxu0 %v1538
      %v4019 = vpop.f32.mrf.mxu0
      %v4020 = vadd.f32 %v638, %v4019
      %v4021 = vpop.f32.mrf.mxu0
      %v4022 = vadd.f32 %v638, %v4021
      %4023 = vmatmul.bf16.gmra.mxu0 %v1541
      %v4024 = vpop.f32.mrf.mxu0
      %v4025 = vadd.f32 %v638, %v4024
      %v4026 = vpop.f32.mrf.mxu0
      %v4027 = vadd.f32 %v638, %v4026
      %4028 = vmatmul.bf16.gmra.mxu0 %v1544
      %v4029 = vpop.f32.mrf.mxu0
      %v4030 = vadd.f32 %v638, %v4029
      %v4031 = vpop.f32.mrf.mxu0
      %v4032 = vadd.f32 %v638, %v4031
      %4033 = vmatmul.bf16.gmra.mxu0 %v1547
      %v4034 = vpop.f32.mrf.mxu0
      %v4035 = vadd.f32 %v638, %v4034
      %v4036 = vpop.f32.mrf.mxu0
      %v4037 = vadd.f32 %v638, %v4036
      %4038 = vmatmul.bf16.gmra.mxu0 %v1550
      %v4039 = vpop.f32.mrf.mxu0
      %v4040 = vadd.f32 %v638, %v4039
      %v4041 = vpop.f32.mrf.mxu0
      %v4042 = vadd.f32 %v638, %v4041
      %4043 = vmatmul.bf16.gmra.mxu0 %v1553
      %v4044 = vpop.f32.mrf.mxu0
      %v4045 = vadd.f32 %v638, %v4044
      %v4046 = vpop.f32.mrf.mxu0
      %v4047 = vadd.f32 %v638, %v4046
      %4048 = vmatmul.bf16.gmra.mxu0 %v1556
      %v4049 = vpop.f32.mrf.mxu0
      %v4050 = vadd.f32 %v638, %v4049
      %v4051 = vpop.f32.mrf.mxu0
      %v4052 = vadd.f32 %v638, %v4051
      %4053 = vmatmul.bf16.gmra.mxu0 %v1559
      %v4054 = vpop.f32.mrf.mxu0
      %v4055 = vadd.f32 %v638, %v4054
      %v4056 = vpop.f32.mrf.mxu0
      %v4057 = vadd.f32 %v638, %v4056
      %4058 = vmatmul.bf16.gmra.mxu0 %v1562
      %v4059 = vpop.f32.mrf.mxu0
      %v4060 = vadd.f32 %v638, %v4059
      %v4061 = vpop.f32.mrf.mxu0
      %v4062 = vadd.f32 %v638, %v4061
      %4063 = vmatmul.bf16.gmra.mxu0 %v1565
      %v4064 = vpop.f32.mrf.mxu0
      %v4065 = vadd.f32 %v638, %v4064
      %v4066 = vpop.f32.mrf.mxu0
      %v4067 = vadd.f32 %v638, %v4066
      %4068 = vmatmul.bf16.gmra.mxu0 %v1568
      %v4069 = vpop.f32.mrf.mxu0
      %v4070 = vadd.f32 %v638, %v4069
      %v4071 = vpop.f32.mrf.mxu0
      %v4072 = vadd.f32 %v638, %v4071
      %4073 = vmatmul.bf16.gmra.mxu0 %v1571
      %v4074 = vpop.f32.mrf.mxu0
      %v4075 = vadd.f32 %v638, %v4074
      %v4076 = vpop.f32.mrf.mxu0
      %v4077 = vadd.f32 %v638, %v4076
      %4078 = vmatmul.bf16.gmra.mxu0 %v1574
      %v4079 = vpop.f32.mrf.mxu0
      %v4080 = vadd.f32 %v638, %v4079
      %v4081 = vpop.f32.mrf.mxu0
      %v4082 = vadd.f32 %v638, %v4081
      %4083 = vmatmul.bf16.gmra.mxu0 %v1577
      %v4084 = vpop.f32.mrf.mxu0
      %v4085 = vadd.f32 %v638, %v4084
      %v4086 = vpop.f32.mrf.mxu0
      %v4087 = vadd.f32 %v638, %v4086
      %4088 = vmatmul.bf16.gmra.mxu0 %v1580
      %v4089 = vpop.f32.mrf.mxu0
      %v4090 = vadd.f32 %v638, %v4089
      %v4091 = vpop.f32.mrf.mxu0
      %v4092 = vadd.f32 %v638, %v4091
      %4093 = vmatmul.bf16.gmra.mxu0 %v1583
      %v4094 = vpop.f32.mrf.mxu0
      %v4095 = vadd.f32 %v638, %v4094
      %v4096 = vpop.f32.mrf.mxu0
      %v4097 = vadd.f32 %v638, %v4096
      %4098 = vmatmul.bf16.gmra.mxu0 %v1586
      %v4099 = vpop.f32.mrf.mxu0
      %v4100 = vadd.f32 %v638, %v4099
      %v4101 = vpop.f32.mrf.mxu0
      %v4102 = vadd.f32 %v638, %v4101
      %4103 = vmatmul.bf16.gmra.mxu0 %v1589
      %v4104 = vpop.f32.mrf.mxu0
      %v4105 = vadd.f32 %v638, %v4104
      %v4106 = vpop.f32.mrf.mxu0
      %v4107 = vadd.f32 %v638, %v4106
      %4108 = vmatmul.bf16.gmra.mxu0 %v1592
      %v4109 = vpop.f32.mrf.mxu0
      %v4110 = vadd.f32 %v638, %v4109
      %v4111 = vpop.f32.mrf.mxu0
      %v4112 = vadd.f32 %v638, %v4111
      %4113 = vmatmul.bf16.gmra.mxu0 %v1595
      %v4114 = vpop.f32.mrf.mxu0
      %v4115 = vadd.f32 %v638, %v4114
      %v4116 = vpop.f32.mrf.mxu0
      %v4117 = vadd.f32 %v638, %v4116
      %4118 = vmatmul.bf16.gmra.mxu0 %v1598
      %v4119 = vpop.f32.mrf.mxu0
      %v4120 = vadd.f32 %v638, %v4119
      %v4121 = vpop.f32.mrf.mxu0
      %v4122 = vadd.f32 %v638, %v4121
      %4123 = vmatmul.bf16.gmra.mxu0 %v1601
      %v4124 = vpop.f32.mrf.mxu0
      %v4125 = vadd.f32 %v638, %v4124
      %v4126 = vpop.f32.mrf.mxu0
      %v4127 = vadd.f32 %v638, %v4126
      %4128 = vmatmul.bf16.gmra.mxu0 %v1604
      %v4129 = vpop.f32.mrf.mxu0
      %v4130 = vadd.f32 %v638, %v4129
      %v4131 = vpop.f32.mrf.mxu0
      %v4132 = vadd.f32 %v638, %v4131
      %4133 = vmatmul.bf16.gmra.mxu0 %v1607
      %v4134 = vpop.f32.mrf.mxu0
      %v4135 = vadd.f32 %v638, %v4134
      %v4136 = vpop.f32.mrf.mxu0
      %v4137 = vadd.f32 %v638, %v4136
      %4138 = vmatmul.bf16.gmra.mxu0 %v1610
      %v4139 = vpop.f32.mrf.mxu0
      %v4140 = vadd.f32 %v638, %v4139
      %v4141 = vpop.f32.mrf.mxu0
      %v4142 = vadd.f32 %v638, %v4141
      %4143 = vmatmul.bf16.gmra.mxu0 %v1613
      %v4144 = vpop.f32.mrf.mxu0
      %v4145 = vadd.f32 %v638, %v4144
      %v4146 = vpop.f32.mrf.mxu0
      %v4147 = vadd.f32 %v638, %v4146
      %4148 = vmatmul.bf16.gmra.mxu0 %v1616
      %v4149 = vpop.f32.mrf.mxu0
      %v4150 = vadd.f32 %v638, %v4149
      %v4151 = vpop.f32.mrf.mxu0
      %v4152 = vadd.f32 %v638, %v4151
      %4153 = vmatmul.bf16.gmra.mxu0 %v1619
      %v4154 = vpop.f32.mrf.mxu0
      %v4155 = vadd.f32 %v638, %v4154
      %v4156 = vpop.f32.mrf.mxu0
      %v4157 = vadd.f32 %v638, %v4156
      %4158 = vmatmul.bf16.gmra.mxu0 %v1622
      %v4159 = vpop.f32.mrf.mxu0
      %v4160 = vadd.f32 %v638, %v4159
      %v4161 = vpop.f32.mrf.mxu0
      %v4162 = vadd.f32 %v638, %v4161
      %4163 = vmatmul.bf16.gmra.mxu0 %v1625
      %v4164 = vpop.f32.mrf.mxu0
      %v4165 = vadd.f32 %v638, %v4164
      %v4166 = vpop.f32.mrf.mxu0
      %v4167 = vadd.f32 %v638, %v4166
      %4168 = vmatmul.bf16.gmra.mxu0 %v1628
      %v4169 = vpop.f32.mrf.mxu0
      %v4170 = vadd.f32 %v638, %v4169
      %v4171 = vpop.f32.mrf.mxu0
      %v4172 = vadd.f32 %v638, %v4171
      %4173 = vmatmul.bf16.gmra.mxu0 %v1631
      %v4174 = vpop.f32.mrf.mxu0
      %v4175 = vadd.f32 %v638, %v4174
      %v4176 = vpop.f32.mrf.mxu0
      %v4177 = vadd.f32 %v638, %v4176
      %4178 = vmatmul.bf16.gmra.mxu0 %v1634
      %v4179 = vpop.f32.mrf.mxu0
      %v4180 = vadd.f32 %v638, %v4179
      %v4181 = vpop.f32.mrf.mxu0
      %v4182 = vadd.f32 %v638, %v4181
      %4183 = vmatmul.bf16.gmra.mxu0 %v1637
      %v4184 = vpop.f32.mrf.mxu0
      %v4185 = vadd.f32 %v638, %v4184
      %v4186 = vpop.f32.mrf.mxu0
      %v4187 = vadd.f32 %v638, %v4186
      %4188 = vmatmul.bf16.gmra.mxu0 %v1640
      %v4189 = vpop.f32.mrf.mxu0
      %v4190 = vadd.f32 %v638, %v4189
      %v4191 = vpop.f32.mrf.mxu0
      %v4192 = vadd.f32 %v638, %v4191
      %4193 = vmatmul.bf16.gmra.mxu0 %v1643
      %v4194 = vpop.f32.mrf.mxu0
      %v4195 = vadd.f32 %v638, %v4194
      %v4196 = vpop.f32.mrf.mxu0
      %v4197 = vadd.f32 %v638, %v4196
      %4198 = vmatmul.bf16.gmra.mxu0 %v1646
      %v4199 = vpop.f32.mrf.mxu0
      %v4200 = vadd.f32 %v638, %v4199
      %v4201 = vpop.f32.mrf.mxu0
      %v4202 = vadd.f32 %v638, %v4201
      %4203 = vmatmul.bf16.gmra.mxu0 %v1649
      %v4204 = vpop.f32.mrf.mxu0
      %v4205 = vadd.f32 %v638, %v4204
      %v4206 = vpop.f32.mrf.mxu0
      %v4207 = vadd.f32 %v638, %v4206
      %4208 = vmatmul.bf16.gmra.mxu0 %v1652
      %v4209 = vpop.f32.mrf.mxu0
      %v4210 = vadd.f32 %v638, %v4209
      %v4211 = vpop.f32.mrf.mxu0
      %v4212 = vadd.f32 %v638, %v4211
      %4213 = vmatmul.bf16.gmra.mxu0 %v1655
      %v4214 = vpop.f32.mrf.mxu0
      %v4215 = vadd.f32 %v638, %v4214
      %v4216 = vpop.f32.mrf.mxu0
      %v4217 = vadd.f32 %v638, %v4216
      %4218 = vmatmul.bf16.gmra.mxu0 %v1658
      %v4219 = vpop.f32.mrf.mxu0
      %v4220 = vadd.f32 %v638, %v4219
      %v4221 = vpop.f32.mrf.mxu0
      %v4222 = vadd.f32 %v638, %v4221
      %4223 = vmatmul.bf16.gmra.mxu0 %v1661
      %v4224 = vpop.f32.mrf.mxu0
      %v4225 = vadd.f32 %v638, %v4224
      %v4226 = vpop.f32.mrf.mxu0
      %v4227 = vadd.f32 %v638, %v4226
      %4228 = vmatmul.bf16.gmra.mxu0 %v1664
      %v4229 = vpop.f32.mrf.mxu0
      %v4230 = vadd.f32 %v638, %v4229
      %v4231 = vpop.f32.mrf.mxu0
      %v4232 = vadd.f32 %v638, %v4231
      %4233 = vmatmul.bf16.gmra.mxu0 %v1667
      %v4234 = vpop.f32.mrf.mxu0
      %v4235 = vadd.f32 %v638, %v4234
      %v4236 = vpop.f32.mrf.mxu0
      %v4237 = vadd.f32 %v638, %v4236
      %4238 = vmatmul.bf16.gmra.mxu0 %v1670
      %v4239 = vpop.f32.mrf.mxu0
      %v4240 = vadd.f32 %v638, %v4239
      %v4241 = vpop.f32.mrf.mxu0
      %v4242 = vadd.f32 %v638, %v4241
      %4243 = vmatmul.bf16.gmra.mxu0 %v1673
      %v4244 = vpop.f32.mrf.mxu0
      %v4245 = vadd.f32 %v638, %v4244
      %v4246 = vpop.f32.mrf.mxu0
      %v4247 = vadd.f32 %v638, %v4246
      %4248 = vmatmul.bf16.gmra.mxu0 %v1676
      %v4249 = vpop.f32.mrf.mxu0
      %v4250 = vadd.f32 %v638, %v4249
      %v4251 = vpop.f32.mrf.mxu0
      %v4252 = vadd.f32 %v638, %v4251
      %4253 = vmatmul.bf16.gmra.mxu0 %v1679
      %v4254 = vpop.f32.mrf.mxu0
      %v4255 = vadd.f32 %v638, %v4254
      %v4256 = vpop.f32.mrf.mxu0
      %v4257 = vadd.f32 %v638, %v4256
      %4258 = vmatmul.bf16.gmra.mxu0 %v1682
      %v4259 = vpop.f32.mrf.mxu0
      %v4260 = vadd.f32 %v638, %v4259
      %v4261 = vpop.f32.mrf.mxu0
      %v4262 = vadd.f32 %v638, %v4261
      %4263 = vmatmul.bf16.gmra.mxu0 %v1685
      %v4264 = vpop.f32.mrf.mxu0
      %v4265 = vadd.f32 %v638, %v4264
      %v4266 = vpop.f32.mrf.mxu0
      %v4267 = vadd.f32 %v638, %v4266
      %4268 = vmatmul.bf16.gmra.mxu0 %v1688
      %v4269 = vpop.f32.mrf.mxu0
      %v4270 = vadd.f32 %v638, %v4269
      %v4271 = vpop.f32.mrf.mxu0
      %v4272 = vadd.f32 %v638, %v4271
      %4273 = vmatmul.bf16.gmra.mxu0 %v1691
      %v4274 = vpop.f32.mrf.mxu0
      %v4275 = vadd.f32 %v638, %v4274
      %v4276 = vpop.f32.mrf.mxu0
      %v4277 = vadd.f32 %v638, %v4276
      %4278 = vmatmul.bf16.gmra.mxu0 %v1694
      %v4279 = vpop.f32.mrf.mxu0
      %v4280 = vadd.f32 %v638, %v4279
      %v4281 = vpop.f32.mrf.mxu0
      %v4282 = vadd.f32 %v638, %v4281
      %4283 = vmatmul.bf16.gmra.mxu0 %v1697
      %v4284 = vpop.f32.mrf.mxu0
      %v4285 = vadd.f32 %v638, %v4284
      %v4286 = vpop.f32.mrf.mxu0
      %v4287 = vadd.f32 %v638, %v4286
      %4288 = vmatmul.bf16.gmra.mxu0 %v1700
      %v4289 = vpop.f32.mrf.mxu0
      %v4290 = vadd.f32 %v638, %v4289
      %v4291 = vpop.f32.mrf.mxu0
      %v4292 = vadd.f32 %v638, %v4291
      %4293 = vmatmul.bf16.gmra.mxu0 %v1703
      %v4294 = vpop.f32.mrf.mxu0
      %v4295 = vadd.f32 %v638, %v4294
      %v4296 = vpop.f32.mrf.mxu0
      %v4297 = vadd.f32 %v638, %v4296
      %4298 = vmatmul.bf16.gmra.mxu0 %v1706
      %v4299 = vpop.f32.mrf.mxu0
      %v4300 = vadd.f32 %v638, %v4299
      %v4301 = vpop.f32.mrf.mxu0
      %v4302 = vadd.f32 %v638, %v4301
      %4303 = vdwg.mxu0
      %v4304 = vmax.f32 %v1718, 0.0
      %v4305 = vmax.f32 %v2367, 0.0
      %v4306 = vmax.f32 %v3016, 0.0
      %v4307 = vmax.f32 %v3665, 0.0
      %v4308 = vmax.f32 %v1720, 0.0
      %v4309 = vmax.f32 %v2369, 0.0
      %v4310 = vmax.f32 %v3018, 0.0
      %v4311 = vmax.f32 %v3667, 0.0
      %v4312 = vmax.f32 %v1723, 0.0
      %v4313 = vmax.f32 %v2372, 0.0
      %v4314 = vmax.f32 %v3021, 0.0
      %v4315 = vmax.f32 %v3670, 0.0
      %v4316 = vmax.f32 %v1725, 0.0
      %v4317 = vmax.f32 %v2374, 0.0
      %v4318 = vmax.f32 %v3023, 0.0
      %v4319 = vmax.f32 %v3672, 0.0
      %v4320 = vmax.f32 %v1728, 0.0
      %v4321 = vmax.f32 %v2377, 0.0
      %v4322 = vmax.f32 %v3026, 0.0
      %v4323 = vmax.f32 %v3675, 0.0
      %v4324 = vmax.f32 %v1730, 0.0
      %v4325 = vmax.f32 %v2379, 0.0
      %v4326 = vmax.f32 %v3028, 0.0
      %v4327 = vmax.f32 %v3677, 0.0
      %v4328 = vmax.f32 %v1733, 0.0
      %v4329 = vmax.f32 %v2382, 0.0
      %v4330 = vmax.f32 %v3031, 0.0
      %v4331 = vmax.f32 %v3680, 0.0
      %v4332 = vmax.f32 %v1735, 0.0
      %v4333 = vmax.f32 %v2384, 0.0
      %v4334 = vmax.f32 %v3033, 0.0
      %v4335 = vmax.f32 %v3682, 0.0
      %v4336 = vmax.f32 %v1738, 0.0
      %v4337 = vmax.f32 %v2387, 0.0
      %v4338 = vmax.f32 %v3036, 0.0
      %v4339 = vmax.f32 %v3685, 0.0
      %v4340 = vmax.f32 %v1740, 0.0
      %v4341 = vmax.f32 %v2389, 0.0
      %v4342 = vmax.f32 %v3038, 0.0
      %v4343 = vmax.f32 %v3687, 0.0
      %v4344 = vmax.f32 %v1743, 0.0
      %v4345 = vmax.f32 %v2392, 0.0
      %v4346 = vmax.f32 %v3041, 0.0
      %v4347 = vmax.f32 %v3690, 0.0
      %v4348 = vmax.f32 %v1745, 0.0
      %v4349 = vmax.f32 %v2394, 0.0
      %v4350 = vmax.f32 %v3043, 0.0
      %v4351 = vmax.f32 %v3692, 0.0
      %v4352 = vmax.f32 %v1748, 0.0
      %v4353 = vmax.f32 %v2397, 0.0
      %v4354 = vmax.f32 %v3046, 0.0
      %v4355 = vmax.f32 %v3695, 0.0
      %v4356 = vmax.f32 %v1750, 0.0
      %v4357 = vmax.f32 %v2399, 0.0
      %v4358 = vmax.f32 %v3048, 0.0
      %v4359 = vmax.f32 %v3697, 0.0
      %v4360 = vmax.f32 %v1753, 0.0
      %v4361 = vmax.f32 %v2402, 0.0
      %v4362 = vmax.f32 %v3051, 0.0
      %v4363 = vmax.f32 %v3700, 0.0
      %v4364 = vmax.f32 %v1755, 0.0
      %v4365 = vmax.f32 %v2404, 0.0
      %v4366 = vmax.f32 %v3053, 0.0
      %v4367 = vmax.f32 %v3702, 0.0
      %v4368 = vmax.f32 %v1758, 0.0
      %v4369 = vmax.f32 %v2407, 0.0
      %v4370 = vmax.f32 %v3056, 0.0
      %v4371 = vmax.f32 %v3705, 0.0
      %v4372 = vmax.f32 %v1760, 0.0
      %v4373 = vmax.f32 %v2409, 0.0
      %v4374 = vmax.f32 %v3058, 0.0
      %v4375 = vmax.f32 %v3707, 0.0
      %v4376 = vmax.f32 %v1763, 0.0
      %v4377 = vmax.f32 %v2412, 0.0
      %v4378 = vmax.f32 %v3061, 0.0
      %v4379 = vmax.f32 %v3710, 0.0
      %v4380 = vmax.f32 %v1765, 0.0
      %v4381 = vmax.f32 %v2414, 0.0
      %v4382 = vmax.f32 %v3063, 0.0
      %v4383 = vmax.f32 %v3712, 0.0
      %v4384 = vmax.f32 %v1768, 0.0
      %v4385 = vmax.f32 %v2417, 0.0
      %v4386 = vmax.f32 %v3066, 0.0
      %v4387 = vmax.f32 %v3715, 0.0
      %v4388 = vmax.f32 %v1770, 0.0
      %v4389 = vmax.f32 %v2419, 0.0
      %v4390 = vmax.f32 %v3068, 0.0
      %v4391 = vmax.f32 %v3717, 0.0
      %v4392 = vmax.f32 %v1773, 0.0
      %v4393 = vmax.f32 %v2422, 0.0
      %v4394 = vmax.f32 %v3071, 0.0
      %v4395 = vmax.f32 %v3720, 0.0
      %v4396 = vmax.f32 %v1775, 0.0
      %v4397 = vmax.f32 %v2424, 0.0
      %v4398 = vmax.f32 %v3073, 0.0
      %v4399 = vmax.f32 %v3722, 0.0
      %v4400 = vmax.f32 %v1778, 0.0
      %v4401 = vmax.f32 %v2427, 0.0
      %v4402 = vmax.f32 %v3076, 0.0
      %v4403 = vmax.f32 %v3725, 0.0
      %v4404 = vmax.f32 %v1780, 0.0
      %v4405 = vmax.f32 %v2429, 0.0
      %v4406 = vmax.f32 %v3078, 0.0
      %v4407 = vmax.f32 %v3727, 0.0
      %v4408 = vmax.f32 %v1783, 0.0
      %v4409 = vmax.f32 %v2432, 0.0
      %v4410 = vmax.f32 %v3081, 0.0
      %v4411 = vmax.f32 %v3730, 0.0
      %v4412 = vmax.f32 %v1785, 0.0
      %v4413 = vmax.f32 %v2434, 0.0
      %v4414 = vmax.f32 %v3083, 0.0
      %v4415 = vmax.f32 %v3732, 0.0
      %v4416 = vmax.f32 %v1788, 0.0
      %v4417 = vmax.f32 %v2437, 0.0
      %v4418 = vmax.f32 %v3086, 0.0
      %v4419 = vmax.f32 %v3735, 0.0
      %v4420 = vmax.f32 %v1790, 0.0
      %v4421 = vmax.f32 %v2439, 0.0
      %v4422 = vmax.f32 %v3088, 0.0
      %v4423 = vmax.f32 %v3737, 0.0
      %v4424 = vmax.f32 %v1793, 0.0
      %v4425 = vmax.f32 %v2442, 0.0
      %v4426 = vmax.f32 %v3091, 0.0
      %v4427 = vmax.f32 %v3740, 0.0
      %v4428 = vmax.f32 %v1795, 0.0
      %v4429 = vmax.f32 %v2444, 0.0
      %v4430 = vmax.f32 %v3093, 0.0
      %v4431 = vmax.f32 %v3742, 0.0
      %v4432 = vmax.f32 %v1798, 0.0
      %v4433 = vmax.f32 %v2447, 0.0
      %v4434 = vmax.f32 %v3096, 0.0
      %v4435 = vmax.f32 %v3745, 0.0
      %v4436 = vmax.f32 %v1800, 0.0
      %v4437 = vmax.f32 %v2449, 0.0
      %v4438 = vmax.f32 %v3098, 0.0
      %v4439 = vmax.f32 %v3747, 0.0
      %v4440 = vmax.f32 %v1803, 0.0
      %v4441 = vmax.f32 %v2452, 0.0
      %v4442 = vmax.f32 %v3101, 0.0
      %v4443 = vmax.f32 %v3750, 0.0
      %v4444 = vmax.f32 %v1805, 0.0
      %v4445 = vmax.f32 %v2454, 0.0
      %v4446 = vmax.f32 %v3103, 0.0
      %v4447 = vmax.f32 %v3752, 0.0
      %v4448 = vmax.f32 %v1808, 0.0
      %v4449 = vmax.f32 %v2457, 0.0
      %v4450 = vmax.f32 %v3106, 0.0
      %v4451 = vmax.f32 %v3755, 0.0
      %v4452 = vmax.f32 %v1810, 0.0
      %v4453 = vmax.f32 %v2459, 0.0
      %v4454 = vmax.f32 %v3108, 0.0
      %v4455 = vmax.f32 %v3757, 0.0
      %v4456 = vmax.f32 %v1813, 0.0
      %v4457 = vmax.f32 %v2462, 0.0
      %v4458 = vmax.f32 %v3111, 0.0
      %v4459 = vmax.f32 %v3760, 0.0
      %v4460 = vmax.f32 %v1815, 0.0
      %v4461 = vmax.f32 %v2464, 0.0
      %v4462 = vmax.f32 %v3113, 0.0
      %v4463 = vmax.f32 %v3762, 0.0
      %v4464 = vmax.f32 %v1818, 0.0
      %v4465 = vmax.f32 %v2467, 0.0
      %v4466 = vmax.f32 %v3116, 0.0
      %v4467 = vmax.f32 %v3765, 0.0
      %v4468 = vmax.f32 %v1820, 0.0
      %v4469 = vmax.f32 %v2469, 0.0
      %v4470 = vmax.f32 %v3118, 0.0
      %v4471 = vmax.f32 %v3767, 0.0
      %v4472 = vmax.f32 %v1823, 0.0
      %v4473 = vmax.f32 %v2472, 0.0
      %v4474 = vmax.f32 %v3121, 0.0
      %v4475 = vmax.f32 %v3770, 0.0
      %v4476 = vmax.f32 %v1825, 0.0
      %v4477 = vmax.f32 %v2474, 0.0
      %v4478 = vmax.f32 %v3123, 0.0
      %v4479 = vmax.f32 %v3772, 0.0
      %v4480 = vmax.f32 %v1828, 0.0
      %v4481 = vmax.f32 %v2477, 0.0
      %v4482 = vmax.f32 %v3126, 0.0
      %v4483 = vmax.f32 %v3775, 0.0
      %v4484 = vmax.f32 %v1830, 0.0
      %v4485 = vmax.f32 %v2479, 0.0
      %v4486 = vmax.f32 %v3128, 0.0
      %v4487 = vmax.f32 %v3777, 0.0
      %v4488 = vmax.f32 %v1833, 0.0
      %v4489 = vmax.f32 %v2482, 0.0
      %v4490 = vmax.f32 %v3131, 0.0
      %v4491 = vmax.f32 %v3780, 0.0
      %v4492 = vmax.f32 %v1835, 0.0
      %v4493 = vmax.f32 %v2484, 0.0
      %v4494 = vmax.f32 %v3133, 0.0
      %v4495 = vmax.f32 %v3782, 0.0
      %v4496 = vmax.f32 %v1838, 0.0
      %v4497 = vmax.f32 %v2487, 0.0
      %v4498 = vmax.f32 %v3136, 0.0
      %v4499 = vmax.f32 %v3785, 0.0
      %v4500 = vmax.f32 %v1840, 0.0
      %v4501 = vmax.f32 %v2489, 0.0
      %v4502 = vmax.f32 %v3138, 0.0
      %v4503 = vmax.f32 %v3787, 0.0
      %v4504 = vmax.f32 %v1843, 0.0
      %v4505 = vmax.f32 %v2492, 0.0
      %v4506 = vmax.f32 %v3141, 0.0
      %v4507 = vmax.f32 %v3790, 0.0
      %v4508 = vmax.f32 %v1845, 0.0
      %v4509 = vmax.f32 %v2494, 0.0
      %v4510 = vmax.f32 %v3143, 0.0
      %v4511 = vmax.f32 %v3792, 0.0
      %v4512 = vmax.f32 %v1848, 0.0
      %v4513 = vmax.f32 %v2497, 0.0
      %v4514 = vmax.f32 %v3146, 0.0
      %v4515 = vmax.f32 %v3795, 0.0
      %v4516 = vmax.f32 %v1850, 0.0
      %v4517 = vmax.f32 %v2499, 0.0
      %v4518 = vmax.f32 %v3148, 0.0
      %v4519 = vmax.f32 %v3797, 0.0
      %v4520 = vmax.f32 %v1853, 0.0
      %v4521 = vmax.f32 %v2502, 0.0
      %v4522 = vmax.f32 %v3151, 0.0
      %v4523 = vmax.f32 %v3800, 0.0
      %v4524 = vmax.f32 %v1855, 0.0
      %v4525 = vmax.f32 %v2504, 0.0
      %v4526 = vmax.f32 %v3153, 0.0
      %v4527 = vmax.f32 %v3802, 0.0
      %v4528 = vmax.f32 %v1858, 0.0
      %v4529 = vmax.f32 %v2507, 0.0
      %v4530 = vmax.f32 %v3156, 0.0
      %v4531 = vmax.f32 %v3805, 0.0
      %v4532 = vmax.f32 %v1860, 0.0
      %v4533 = vmax.f32 %v2509, 0.0
      %v4534 = vmax.f32 %v3158, 0.0
      %v4535 = vmax.f32 %v3807, 0.0
      %v4536 = vmax.f32 %v1863, 0.0
      %v4537 = vmax.f32 %v2512, 0.0
      %v4538 = vmax.f32 %v3161, 0.0
      %v4539 = vmax.f32 %v3810, 0.0
      %v4540 = vmax.f32 %v1865, 0.0
      %v4541 = vmax.f32 %v2514, 0.0
      %v4542 = vmax.f32 %v3163, 0.0
      %v4543 = vmax.f32 %v3812, 0.0
      %v4544 = vmax.f32 %v1868, 0.0
      %v4545 = vmax.f32 %v2517, 0.0
      %v4546 = vmax.f32 %v3166, 0.0
      %v4547 = vmax.f32 %v3815, 0.0
      %v4548 = vmax.f32 %v1870, 0.0
      %v4549 = vmax.f32 %v2519, 0.0
      %v4550 = vmax.f32 %v3168, 0.0
      %v4551 = vmax.f32 %v3817, 0.0
      %v4552 = vmax.f32 %v1873, 0.0
      %v4553 = vmax.f32 %v2522, 0.0
      %v4554 = vmax.f32 %v3171, 0.0
      %v4555 = vmax.f32 %v3820, 0.0
      %v4556 = vmax.f32 %v1875, 0.0
      %v4557 = vmax.f32 %v2524, 0.0
      %v4558 = vmax.f32 %v3173, 0.0
      %v4559 = vmax.f32 %v3822, 0.0
      %v4560 = vmax.f32 %v1878, 0.0
      %v4561 = vmax.f32 %v2527, 0.0
      %v4562 = vmax.f32 %v3176, 0.0
      %v4563 = vmax.f32 %v3825, 0.0
      %v4564 = vmax.f32 %v1880, 0.0
      %v4565 = vmax.f32 %v2529, 0.0
      %v4566 = vmax.f32 %v3178, 0.0
      %v4567 = vmax.f32 %v3827, 0.0
      %v4568 = vmax.f32 %v1883, 0.0
      %v4569 = vmax.f32 %v2532, 0.0
      %v4570 = vmax.f32 %v3181, 0.0
      %v4571 = vmax.f32 %v3830, 0.0
      %v4572 = vmax.f32 %v1885, 0.0
      %v4573 = vmax.f32 %v2534, 0.0
      %v4574 = vmax.f32 %v3183, 0.0
      %v4575 = vmax.f32 %v3832, 0.0
      %v4576 = vmax.f32 %v1888, 0.0
      %v4577 = vmax.f32 %v2537, 0.0
      %v4578 = vmax.f32 %v3186, 0.0
      %v4579 = vmax.f32 %v3835, 0.0
      %v4580 = vmax.f32 %v1890, 0.0
      %v4581 = vmax.f32 %v2539, 0.0
      %v4582 = vmax.f32 %v3188, 0.0
      %v4583 = vmax.f32 %v3837, 0.0
      %v4584 = vmax.f32 %v1893, 0.0
      %v4585 = vmax.f32 %v2542, 0.0
      %v4586 = vmax.f32 %v3191, 0.0
      %v4587 = vmax.f32 %v3840, 0.0
      %v4588 = vmax.f32 %v1895, 0.0
      %v4589 = vmax.f32 %v2544, 0.0
      %v4590 = vmax.f32 %v3193, 0.0
      %v4591 = vmax.f32 %v3842, 0.0
      %v4592 = vmax.f32 %v1898, 0.0
      %v4593 = vmax.f32 %v2547, 0.0
      %v4594 = vmax.f32 %v3196, 0.0
      %v4595 = vmax.f32 %v3845, 0.0
      %v4596 = vmax.f32 %v1900, 0.0
      %v4597 = vmax.f32 %v2549, 0.0
      %v4598 = vmax.f32 %v3198, 0.0
      %v4599 = vmax.f32 %v3847, 0.0
      %v4600 = vmax.f32 %v1903, 0.0
      %v4601 = vmax.f32 %v2552, 0.0
      %v4602 = vmax.f32 %v3201, 0.0
      %v4603 = vmax.f32 %v3850, 0.0
      %v4604 = vmax.f32 %v1905, 0.0
      %v4605 = vmax.f32 %v2554, 0.0
      %v4606 = vmax.f32 %v3203, 0.0
      %v4607 = vmax.f32 %v3852, 0.0
      %v4608 = vmax.f32 %v1908, 0.0
      %v4609 = vmax.f32 %v2557, 0.0
      %v4610 = vmax.f32 %v3206, 0.0
      %v4611 = vmax.f32 %v3855, 0.0
      %v4612 = vmax.f32 %v1910, 0.0
      %v4613 = vmax.f32 %v2559, 0.0
      %v4614 = vmax.f32 %v3208, 0.0
      %v4615 = vmax.f32 %v3857, 0.0
      %v4616 = vmax.f32 %v1913, 0.0
      %v4617 = vmax.f32 %v2562, 0.0
      %v4618 = vmax.f32 %v3211, 0.0
      %v4619 = vmax.f32 %v3860, 0.0
      %v4620 = vmax.f32 %v1915, 0.0
      %v4621 = vmax.f32 %v2564, 0.0
      %v4622 = vmax.f32 %v3213, 0.0
      %v4623 = vmax.f32 %v3862, 0.0
      %v4624 = vmax.f32 %v1918, 0.0
      %v4625 = vmax.f32 %v2567, 0.0
      %v4626 = vmax.f32 %v3216, 0.0
      %v4627 = vmax.f32 %v3865, 0.0
      %v4628 = vmax.f32 %v1920, 0.0
      %v4629 = vmax.f32 %v2569, 0.0
      %v4630 = vmax.f32 %v3218, 0.0
      %v4631 = vmax.f32 %v3867, 0.0
      %v4632 = vmax.f32 %v1923, 0.0
      %v4633 = vmax.f32 %v2572, 0.0
      %v4634 = vmax.f32 %v3221, 0.0
      %v4635 = vmax.f32 %v3870, 0.0
      %v4636 = vmax.f32 %v1925, 0.0
      %v4637 = vmax.f32 %v2574, 0.0
      %v4638 = vmax.f32 %v3223, 0.0
      %v4639 = vmax.f32 %v3872, 0.0
      %v4640 = vmax.f32 %v1928, 0.0
      %v4641 = vmax.f32 %v2577, 0.0
      %v4642 = vmax.f32 %v3226, 0.0
      %v4643 = vmax.f32 %v3875, 0.0
      %v4644 = vmax.f32 %v1930, 0.0
      %v4645 = vmax.f32 %v2579, 0.0
      %v4646 = vmax.f32 %v3228, 0.0
      %v4647 = vmax.f32 %v3877, 0.0
      %v4648 = vmax.f32 %v1933, 0.0
      %v4649 = vmax.f32 %v2582, 0.0
      %v4650 = vmax.f32 %v3231, 0.0
      %v4651 = vmax.f32 %v3880, 0.0
      %v4652 = vmax.f32 %v1935, 0.0
      %v4653 = vmax.f32 %v2584, 0.0
      %v4654 = vmax.f32 %v3233, 0.0
      %v4655 = vmax.f32 %v3882, 0.0
      %v4656 = vmax.f32 %v1938, 0.0
      %v4657 = vmax.f32 %v2587, 0.0
      %v4658 = vmax.f32 %v3236, 0.0
      %v4659 = vmax.f32 %v3885, 0.0
      %v4660 = vmax.f32 %v1940, 0.0
      %v4661 = vmax.f32 %v2589, 0.0
      %v4662 = vmax.f32 %v3238, 0.0
      %v4663 = vmax.f32 %v3887, 0.0
      %v4664 = vmax.f32 %v1943, 0.0
      %v4665 = vmax.f32 %v2592, 0.0
      %v4666 = vmax.f32 %v3241, 0.0
      %v4667 = vmax.f32 %v3890, 0.0
      %v4668 = vmax.f32 %v1945, 0.0
      %v4669 = vmax.f32 %v2594, 0.0
      %v4670 = vmax.f32 %v3243, 0.0
      %v4671 = vmax.f32 %v3892, 0.0
      %v4672 = vmax.f32 %v1948, 0.0
      %v4673 = vmax.f32 %v2597, 0.0
      %v4674 = vmax.f32 %v3246, 0.0
      %v4675 = vmax.f32 %v3895, 0.0
      %v4676 = vmax.f32 %v1950, 0.0
      %v4677 = vmax.f32 %v2599, 0.0
      %v4678 = vmax.f32 %v3248, 0.0
      %v4679 = vmax.f32 %v3897, 0.0
      %v4680 = vmax.f32 %v1953, 0.0
      %v4681 = vmax.f32 %v2602, 0.0
      %v4682 = vmax.f32 %v3251, 0.0
      %v4683 = vmax.f32 %v3900, 0.0
      %v4684 = vmax.f32 %v1955, 0.0
      %v4685 = vmax.f32 %v2604, 0.0
      %v4686 = vmax.f32 %v3253, 0.0
      %v4687 = vmax.f32 %v3902, 0.0
      %v4688 = vmax.f32 %v1958, 0.0
      %v4689 = vmax.f32 %v2607, 0.0
      %v4690 = vmax.f32 %v3256, 0.0
      %v4691 = vmax.f32 %v3905, 0.0
      %v4692 = vmax.f32 %v1960, 0.0
      %v4693 = vmax.f32 %v2609, 0.0
      %v4694 = vmax.f32 %v3258, 0.0
      %v4695 = vmax.f32 %v3907, 0.0
      %v4696 = vmax.f32 %v1963, 0.0
      %v4697 = vmax.f32 %v2612, 0.0
      %v4698 = vmax.f32 %v3261, 0.0
      %v4699 = vmax.f32 %v3910, 0.0
      %v4700 = vmax.f32 %v1965, 0.0
      %v4701 = vmax.f32 %v2614, 0.0
      %v4702 = vmax.f32 %v3263, 0.0
      %v4703 = vmax.f32 %v3912, 0.0
      %v4704 = vmax.f32 %v1968, 0.0
      %v4705 = vmax.f32 %v2617, 0.0
      %v4706 = vmax.f32 %v3266, 0.0
      %v4707 = vmax.f32 %v3915, 0.0
      %v4708 = vmax.f32 %v1970, 0.0
      %v4709 = vmax.f32 %v2619, 0.0
      %v4710 = vmax.f32 %v3268, 0.0
      %v4711 = vmax.f32 %v3917, 0.0
      %v4712 = vmax.f32 %v1973, 0.0
      %v4713 = vmax.f32 %v2622, 0.0
      %v4714 = vmax.f32 %v3271, 0.0
      %v4715 = vmax.f32 %v3920, 0.0
      %v4716 = vmax.f32 %v1975, 0.0
      %v4717 = vmax.f32 %v2624, 0.0
      %v4718 = vmax.f32 %v3273, 0.0
      %v4719 = vmax.f32 %v3922, 0.0
      %v4720 = vmax.f32 %v1978, 0.0
      %v4721 = vmax.f32 %v2627, 0.0
      %v4722 = vmax.f32 %v3276, 0.0
      %v4723 = vmax.f32 %v3925, 0.0
      %v4724 = vmax.f32 %v1980, 0.0
      %v4725 = vmax.f32 %v2629, 0.0
      %v4726 = vmax.f32 %v3278, 0.0
      %v4727 = vmax.f32 %v3927, 0.0
      %v4728 = vmax.f32 %v1983, 0.0
      %v4729 = vmax.f32 %v2632, 0.0
      %v4730 = vmax.f32 %v3281, 0.0
      %v4731 = vmax.f32 %v3930, 0.0
      %v4732 = vmax.f32 %v1985, 0.0
      %v4733 = vmax.f32 %v2634, 0.0
      %v4734 = vmax.f32 %v3283, 0.0
      %v4735 = vmax.f32 %v3932, 0.0
      %v4736 = vmax.f32 %v1988, 0.0
      %v4737 = vmax.f32 %v2637, 0.0
      %v4738 = vmax.f32 %v3286, 0.0
      %v4739 = vmax.f32 %v3935, 0.0
      %v4740 = vmax.f32 %v1990, 0.0
      %v4741 = vmax.f32 %v2639, 0.0
      %v4742 = vmax.f32 %v3288, 0.0
      %v4743 = vmax.f32 %v3937, 0.0
      %v4744 = vmax.f32 %v1993, 0.0
      %v4745 = vmax.f32 %v2642, 0.0
      %v4746 = vmax.f32 %v3291, 0.0
      %v4747 = vmax.f32 %v3940, 0.0
      %v4748 = vmax.f32 %v1995, 0.0
      %v4749 = vmax.f32 %v2644, 0.0
      %v4750 = vmax.f32 %v3293, 0.0
      %v4751 = vmax.f32 %v3942, 0.0
      %v4752 = vmax.f32 %v1998, 0.0
      %v4753 = vmax.f32 %v2647, 0.0
      %v4754 = vmax.f32 %v3296, 0.0
      %v4755 = vmax.f32 %v3945, 0.0
      %v4756 = vmax.f32 %v2000, 0.0
      %v4757 = vmax.f32 %v2649, 0.0
      %v4758 = vmax.f32 %v3298, 0.0
      %v4759 = vmax.f32 %v3947, 0.0
      %v4760 = vmax.f32 %v2003, 0.0
      %v4761 = vmax.f32 %v2652, 0.0
      %v4762 = vmax.f32 %v3301, 0.0
      %v4763 = vmax.f32 %v3950, 0.0
      %v4764 = vmax.f32 %v2005, 0.0
      %v4765 = vmax.f32 %v2654, 0.0
      %v4766 = vmax.f32 %v3303, 0.0
      %v4767 = vmax.f32 %v3952, 0.0
      %v4768 = vmax.f32 %v2008, 0.0
      %v4769 = vmax.f32 %v2657, 0.0
      %v4770 = vmax.f32 %v3306, 0.0
      %v4771 = vmax.f32 %v3955, 0.0
      %v4772 = vmax.f32 %v2010, 0.0
      %v4773 = vmax.f32 %v2659, 0.0
      %v4774 = vmax.f32 %v3308, 0.0
      %v4775 = vmax.f32 %v3957, 0.0
      %v4776 = vmax.f32 %v2013, 0.0
      %v4777 = vmax.f32 %v2662, 0.0
      %v4778 = vmax.f32 %v3311, 0.0
      %v4779 = vmax.f32 %v3960, 0.0
      %v4780 = vmax.f32 %v2015, 0.0
      %v4781 = vmax.f32 %v2664, 0.0
      %v4782 = vmax.f32 %v3313, 0.0
      %v4783 = vmax.f32 %v3962, 0.0
      %v4784 = vmax.f32 %v2018, 0.0
      %v4785 = vmax.f32 %v2667, 0.0
      %v4786 = vmax.f32 %v3316, 0.0
      %v4787 = vmax.f32 %v3965, 0.0
      %v4788 = vmax.f32 %v2020, 0.0
      %v4789 = vmax.f32 %v2669, 0.0
      %v4790 = vmax.f32 %v3318, 0.0
      %v4791 = vmax.f32 %v3967, 0.0
      %v4792 = vmax.f32 %v2023, 0.0
      %v4793 = vmax.f32 %v2672, 0.0
      %v4794 = vmax.f32 %v3321, 0.0
      %v4795 = vmax.f32 %v3970, 0.0
      %v4796 = vmax.f32 %v2025, 0.0
      %v4797 = vmax.f32 %v2674, 0.0
      %v4798 = vmax.f32 %v3323, 0.0
      %v4799 = vmax.f32 %v3972, 0.0
      %v4800 = vmax.f32 %v2028, 0.0
      %v4801 = vmax.f32 %v2677, 0.0
      %v4802 = vmax.f32 %v3326, 0.0
      %v4803 = vmax.f32 %v3975, 0.0
      %v4804 = vmax.f32 %v2030, 0.0
      %v4805 = vmax.f32 %v2679, 0.0
      %v4806 = vmax.f32 %v3328, 0.0
      %v4807 = vmax.f32 %v3977, 0.0
      %v4808 = vmax.f32 %v2033, 0.0
      %v4809 = vmax.f32 %v2682, 0.0
      %v4810 = vmax.f32 %v3331, 0.0
      %v4811 = vmax.f32 %v3980, 0.0
      %v4812 = vmax.f32 %v2035, 0.0
      %v4813 = vmax.f32 %v2684, 0.0
      %v4814 = vmax.f32 %v3333, 0.0
      %v4815 = vmax.f32 %v3982, 0.0
      %v4816 = vmax.f32 %v2038, 0.0
      %v4817 = vmax.f32 %v2687, 0.0
      %v4818 = vmax.f32 %v3336, 0.0
      %v4819 = vmax.f32 %v3985, 0.0
      %v4820 = vmax.f32 %v2040, 0.0
      %v4821 = vmax.f32 %v2689, 0.0
      %v4822 = vmax.f32 %v3338, 0.0
      %v4823 = vmax.f32 %v3987, 0.0
      %v4824 = vmax.f32 %v2043, 0.0
      %v4825 = vmax.f32 %v2692, 0.0
      %v4826 = vmax.f32 %v3341, 0.0
      %v4827 = vmax.f32 %v3990, 0.0
      %v4828 = vmax.f32 %v2045, 0.0
      %v4829 = vmax.f32 %v2694, 0.0
      %v4830 = vmax.f32 %v3343, 0.0
      %v4831 = vmax.f32 %v3992, 0.0
      %v4832 = vmax.f32 %v2048, 0.0
      %v4833 = vmax.f32 %v2697, 0.0
      %v4834 = vmax.f32 %v3346, 0.0
      %v4835 = vmax.f32 %v3995, 0.0
      %v4836 = vmax.f32 %v2050, 0.0
      %v4837 = vmax.f32 %v2699, 0.0
      %v4838 = vmax.f32 %v3348, 0.0
      %v4839 = vmax.f32 %v3997, 0.0
      %v4840 = vmax.f32 %v2053, 0.0
      %v4841 = vmax.f32 %v2702, 0.0
      %v4842 = vmax.f32 %v3351, 0.0
      %v4843 = vmax.f32 %v4000, 0.0
      %v4844 = vmax.f32 %v2055, 0.0
      %v4845 = vmax.f32 %v2704, 0.0
      %v4846 = vmax.f32 %v3353, 0.0
      %v4847 = vmax.f32 %v4002, 0.0
      %v4848 = vmax.f32 %v2058, 0.0
      %v4849 = vmax.f32 %v2707, 0.0
      %v4850 = vmax.f32 %v3356, 0.0
      %v4851 = vmax.f32 %v4005, 0.0
      %v4852 = vmax.f32 %v2060, 0.0
      %v4853 = vmax.f32 %v2709, 0.0
      %v4854 = vmax.f32 %v3358, 0.0
      %v4855 = vmax.f32 %v4007, 0.0
      %v4856 = vmax.f32 %v2063, 0.0
      %v4857 = vmax.f32 %v2712, 0.0
      %v4858 = vmax.f32 %v3361, 0.0
      %v4859 = vmax.f32 %v4010, 0.0
      %v4860 = vmax.f32 %v2065, 0.0
      %v4861 = vmax.f32 %v2714, 0.0
      %v4862 = vmax.f32 %v3363, 0.0
      %v4863 = vmax.f32 %v4012, 0.0
      %v4864 = vmax.f32 %v2068, 0.0
      %v4865 = vmax.f32 %v2717, 0.0
      %v4866 = vmax.f32 %v3366, 0.0
      %v4867 = vmax.f32 %v4015, 0.0
      %v4868 = vmax.f32 %v2070, 0.0
      %v4869 = vmax.f32 %v2719, 0.0
      %v4870 = vmax.f32 %v3368, 0.0
      %v4871 = vmax.f32 %v4017, 0.0
      %v4872 = vmax.f32 %v2073, 0.0
      %v4873 = vmax.f32 %v2722, 0.0
      %v4874 = vmax.f32 %v3371, 0.0
      %v4875 = vmax.f32 %v4020, 0.0
      %v4876 = vmax.f32 %v2075, 0.0
      %v4877 = vmax.f32 %v2724, 0.0
      %v4878 = vmax.f32 %v3373, 0.0
      %v4879 = vmax.f32 %v4022, 0.0
      %v4880 = vmax.f32 %v2078, 0.0
      %v4881 = vmax.f32 %v2727, 0.0
      %v4882 = vmax.f32 %v3376, 0.0
      %v4883 = vmax.f32 %v4025, 0.0
      %v4884 = vmax.f32 %v2080, 0.0
      %v4885 = vmax.f32 %v2729, 0.0
      %v4886 = vmax.f32 %v3378, 0.0
      %v4887 = vmax.f32 %v4027, 0.0
      %v4888 = vmax.f32 %v2083, 0.0
      %v4889 = vmax.f32 %v2732, 0.0
      %v4890 = vmax.f32 %v3381, 0.0
      %v4891 = vmax.f32 %v4030, 0.0
      %v4892 = vmax.f32 %v2085, 0.0
      %v4893 = vmax.f32 %v2734, 0.0
      %v4894 = vmax.f32 %v3383, 0.0
      %v4895 = vmax.f32 %v4032, 0.0
      %v4896 = vmax.f32 %v2088, 0.0
      %v4897 = vmax.f32 %v2737, 0.0
      %v4898 = vmax.f32 %v3386, 0.0
      %v4899 = vmax.f32 %v4035, 0.0
      %v4900 = vmax.f32 %v2090, 0.0
      %v4901 = vmax.f32 %v2739, 0.0
      %v4902 = vmax.f32 %v3388, 0.0
      %v4903 = vmax.f32 %v4037, 0.0
      %v4904 = vmax.f32 %v2093, 0.0
      %v4905 = vmax.f32 %v2742, 0.0
      %v4906 = vmax.f32 %v3391, 0.0
      %v4907 = vmax.f32 %v4040, 0.0
      %v4908 = vmax.f32 %v2095, 0.0
      %v4909 = vmax.f32 %v2744, 0.0
      %v4910 = vmax.f32 %v3393, 0.0
      %v4911 = vmax.f32 %v4042, 0.0
      %v4912 = vmax.f32 %v2098, 0.0
      %v4913 = vmax.f32 %v2747, 0.0
      %v4914 = vmax.f32 %v3396, 0.0
      %v4915 = vmax.f32 %v4045, 0.0
      %v4916 = vmax.f32 %v2100, 0.0
      %v4917 = vmax.f32 %v2749, 0.0
      %v4918 = vmax.f32 %v3398, 0.0
      %v4919 = vmax.f32 %v4047, 0.0
      %v4920 = vmax.f32 %v2103, 0.0
      %v4921 = vmax.f32 %v2752, 0.0
      %v4922 = vmax.f32 %v3401, 0.0
      %v4923 = vmax.f32 %v4050, 0.0
      %v4924 = vmax.f32 %v2105, 0.0
      %v4925 = vmax.f32 %v2754, 0.0
      %v4926 = vmax.f32 %v3403, 0.0
      %v4927 = vmax.f32 %v4052, 0.0
      %v4928 = vmax.f32 %v2108, 0.0
      %v4929 = vmax.f32 %v2757, 0.0
      %v4930 = vmax.f32 %v3406, 0.0
      %v4931 = vmax.f32 %v4055, 0.0
      %v4932 = vmax.f32 %v2110, 0.0
      %v4933 = vmax.f32 %v2759, 0.0
      %v4934 = vmax.f32 %v3408, 0.0
      %v4935 = vmax.f32 %v4057, 0.0
      %v4936 = vmax.f32 %v2113, 0.0
      %v4937 = vmax.f32 %v2762, 0.0
      %v4938 = vmax.f32 %v3411, 0.0
      %v4939 = vmax.f32 %v4060, 0.0
      %v4940 = vmax.f32 %v2115, 0.0
      %v4941 = vmax.f32 %v2764, 0.0
      %v4942 = vmax.f32 %v3413, 0.0
      %v4943 = vmax.f32 %v4062, 0.0
      %v4944 = vmax.f32 %v2118, 0.0
      %v4945 = vmax.f32 %v2767, 0.0
      %v4946 = vmax.f32 %v3416, 0.0
      %v4947 = vmax.f32 %v4065, 0.0
      %v4948 = vmax.f32 %v2120, 0.0
      %v4949 = vmax.f32 %v2769, 0.0
      %v4950 = vmax.f32 %v3418, 0.0
      %v4951 = vmax.f32 %v4067, 0.0
      %v4952 = vmax.f32 %v2123, 0.0
      %v4953 = vmax.f32 %v2772, 0.0
      %v4954 = vmax.f32 %v3421, 0.0
      %v4955 = vmax.f32 %v4070, 0.0
      %v4956 = vmax.f32 %v2125, 0.0
      %v4957 = vmax.f32 %v2774, 0.0
      %v4958 = vmax.f32 %v3423, 0.0
      %v4959 = vmax.f32 %v4072, 0.0
      %v4960 = vmax.f32 %v2128, 0.0
      %v4961 = vmax.f32 %v2777, 0.0
      %v4962 = vmax.f32 %v3426, 0.0
      %v4963 = vmax.f32 %v4075, 0.0
      %v4964 = vmax.f32 %v2130, 0.0
      %v4965 = vmax.f32 %v2779, 0.0
      %v4966 = vmax.f32 %v3428, 0.0
      %v4967 = vmax.f32 %v4077, 0.0
      %v4968 = vmax.f32 %v2133, 0.0
      %v4969 = vmax.f32 %v2782, 0.0
      %v4970 = vmax.f32 %v3431, 0.0
      %v4971 = vmax.f32 %v4080, 0.0
      %v4972 = vmax.f32 %v2135, 0.0
      %v4973 = vmax.f32 %v2784, 0.0
      %v4974 = vmax.f32 %v3433, 0.0
      %v4975 = vmax.f32 %v4082, 0.0
      %v4976 = vmax.f32 %v2138, 0.0
      %v4977 = vmax.f32 %v2787, 0.0
      %v4978 = vmax.f32 %v3436, 0.0
      %v4979 = vmax.f32 %v4085, 0.0
      %v4980 = vmax.f32 %v2140, 0.0
      %v4981 = vmax.f32 %v2789, 0.0
      %v4982 = vmax.f32 %v3438, 0.0
      %v4983 = vmax.f32 %v4087, 0.0
      %v4984 = vmax.f32 %v2143, 0.0
      %v4985 = vmax.f32 %v2792, 0.0
      %v4986 = vmax.f32 %v3441, 0.0
      %v4987 = vmax.f32 %v4090, 0.0
      %v4988 = vmax.f32 %v2145, 0.0
      %v4989 = vmax.f32 %v2794, 0.0
      %v4990 = vmax.f32 %v3443, 0.0
      %v4991 = vmax.f32 %v4092, 0.0
      %v4992 = vmax.f32 %v2148, 0.0
      %v4993 = vmax.f32 %v2797, 0.0
      %v4994 = vmax.f32 %v3446, 0.0
      %v4995 = vmax.f32 %v4095, 0.0
      %v4996 = vmax.f32 %v2150, 0.0
      %v4997 = vmax.f32 %v2799, 0.0
      %v4998 = vmax.f32 %v3448, 0.0
      %v4999 = vmax.f32 %v4097, 0.0
      %v5000 = vmax.f32 %v2153, 0.0
      %v5001 = vmax.f32 %v2802, 0.0
      %v5002 = vmax.f32 %v3451, 0.0
      %v5003 = vmax.f32 %v4100, 0.0
      %v5004 = vmax.f32 %v2155, 0.0
      %v5005 = vmax.f32 %v2804, 0.0
      %v5006 = vmax.f32 %v3453, 0.0
      %v5007 = vmax.f32 %v4102, 0.0
      %v5008 = vmax.f32 %v2158, 0.0
      %v5009 = vmax.f32 %v2807, 0.0
      %v5010 = vmax.f32 %v3456, 0.0
      %v5011 = vmax.f32 %v4105, 0.0
      %v5012 = vmax.f32 %v2160, 0.0
      %v5013 = vmax.f32 %v2809, 0.0
      %v5014 = vmax.f32 %v3458, 0.0
      %v5015 = vmax.f32 %v4107, 0.0
      %v5016 = vmax.f32 %v2163, 0.0
      %v5017 = vmax.f32 %v2812, 0.0
      %v5018 = vmax.f32 %v3461, 0.0
      %v5019 = vmax.f32 %v4110, 0.0
      %v5020 = vmax.f32 %v2165, 0.0
      %v5021 = vmax.f32 %v2814, 0.0
      %v5022 = vmax.f32 %v3463, 0.0
      %v5023 = vmax.f32 %v4112, 0.0
      %v5024 = vmax.f32 %v2168, 0.0
      %v5025 = vmax.f32 %v2817, 0.0
      %v5026 = vmax.f32 %v3466, 0.0
      %v5027 = vmax.f32 %v4115, 0.0
      %v5028 = vmax.f32 %v2170, 0.0
      %v5029 = vmax.f32 %v2819, 0.0
      %v5030 = vmax.f32 %v3468, 0.0
      %v5031 = vmax.f32 %v4117, 0.0
      %v5032 = vmax.f32 %v2173, 0.0
      %v5033 = vmax.f32 %v2822, 0.0
      %v5034 = vmax.f32 %v3471, 0.0
      %v5035 = vmax.f32 %v4120, 0.0
      %v5036 = vmax.f32 %v2175, 0.0
      %v5037 = vmax.f32 %v2824, 0.0
      %v5038 = vmax.f32 %v3473, 0.0
      %v5039 = vmax.f32 %v4122, 0.0
      %v5040 = vmax.f32 %v2178, 0.0
      %v5041 = vmax.f32 %v2827, 0.0
      %v5042 = vmax.f32 %v3476, 0.0
      %v5043 = vmax.f32 %v4125, 0.0
      %v5044 = vmax.f32 %v2180, 0.0
      %v5045 = vmax.f32 %v2829, 0.0
      %v5046 = vmax.f32 %v3478, 0.0
      %v5047 = vmax.f32 %v4127, 0.0
      %v5048 = vmax.f32 %v2183, 0.0
      %v5049 = vmax.f32 %v2832, 0.0
      %v5050 = vmax.f32 %v3481, 0.0
      %v5051 = vmax.f32 %v4130, 0.0
      %v5052 = vmax.f32 %v2185, 0.0
      %v5053 = vmax.f32 %v2834, 0.0
      %v5054 = vmax.f32 %v3483, 0.0
      %v5055 = vmax.f32 %v4132, 0.0
      %v5056 = vmax.f32 %v2188, 0.0
      %v5057 = vmax.f32 %v2837, 0.0
      %v5058 = vmax.f32 %v3486, 0.0
      %v5059 = vmax.f32 %v4135, 0.0
      %v5060 = vmax.f32 %v2190, 0.0
      %v5061 = vmax.f32 %v2839, 0.0
      %v5062 = vmax.f32 %v3488, 0.0
      %v5063 = vmax.f32 %v4137, 0.0
      %v5064 = vmax.f32 %v2193, 0.0
      %v5065 = vmax.f32 %v2842, 0.0
      %v5066 = vmax.f32 %v3491, 0.0
      %v5067 = vmax.f32 %v4140, 0.0
      %v5068 = vmax.f32 %v2195, 0.0
      %v5069 = vmax.f32 %v2844, 0.0
      %v5070 = vmax.f32 %v3493, 0.0
      %v5071 = vmax.f32 %v4142, 0.0
      %v5072 = vmax.f32 %v2198, 0.0
      %v5073 = vmax.f32 %v2847, 0.0
      %v5074 = vmax.f32 %v3496, 0.0
      %v5075 = vmax.f32 %v4145, 0.0
      %v5076 = vmax.f32 %v2200, 0.0
      %v5077 = vmax.f32 %v2849, 0.0
      %v5078 = vmax.f32 %v3498, 0.0
      %v5079 = vmax.f32 %v4147, 0.0
      %v5080 = vmax.f32 %v2203, 0.0
      %v5081 = vmax.f32 %v2852, 0.0
      %v5082 = vmax.f32 %v3501, 0.0
      %v5083 = vmax.f32 %v4150, 0.0
      %v5084 = vmax.f32 %v2205, 0.0
      %v5085 = vmax.f32 %v2854, 0.0
      %v5086 = vmax.f32 %v3503, 0.0
      %v5087 = vmax.f32 %v4152, 0.0
      %v5088 = vmax.f32 %v2208, 0.0
      %v5089 = vmax.f32 %v2857, 0.0
      %v5090 = vmax.f32 %v3506, 0.0
      %v5091 = vmax.f32 %v4155, 0.0
      %v5092 = vmax.f32 %v2210, 0.0
      %v5093 = vmax.f32 %v2859, 0.0
      %v5094 = vmax.f32 %v3508, 0.0
      %v5095 = vmax.f32 %v4157, 0.0
      %v5096 = vmax.f32 %v2213, 0.0
      %v5097 = vmax.f32 %v2862, 0.0
      %v5098 = vmax.f32 %v3511, 0.0
      %v5099 = vmax.f32 %v4160, 0.0
      %v5100 = vmax.f32 %v2215, 0.0
      %v5101 = vmax.f32 %v2864, 0.0
      %v5102 = vmax.f32 %v3513, 0.0
      %v5103 = vmax.f32 %v4162, 0.0
      %v5104 = vmax.f32 %v2218, 0.0
      %v5105 = vmax.f32 %v2867, 0.0
      %v5106 = vmax.f32 %v3516, 0.0
      %v5107 = vmax.f32 %v4165, 0.0
      %v5108 = vmax.f32 %v2220, 0.0
      %v5109 = vmax.f32 %v2869, 0.0
      %v5110 = vmax.f32 %v3518, 0.0
      %v5111 = vmax.f32 %v4167, 0.0
      %v5112 = vmax.f32 %v2223, 0.0
      %v5113 = vmax.f32 %v2872, 0.0
      %v5114 = vmax.f32 %v3521, 0.0
      %v5115 = vmax.f32 %v4170, 0.0
      %v5116 = vmax.f32 %v2225, 0.0
      %v5117 = vmax.f32 %v2874, 0.0
      %v5118 = vmax.f32 %v3523, 0.0
      %v5119 = vmax.f32 %v4172, 0.0
      %v5120 = vmax.f32 %v2228, 0.0
      %v5121 = vmax.f32 %v2877, 0.0
      %v5122 = vmax.f32 %v3526, 0.0
      %v5123 = vmax.f32 %v4175, 0.0
      %v5124 = vmax.f32 %v2230, 0.0
      %v5125 = vmax.f32 %v2879, 0.0
      %v5126 = vmax.f32 %v3528, 0.0
      %v5127 = vmax.f32 %v4177, 0.0
      %v5128 = vmax.f32 %v2233, 0.0
      %v5129 = vmax.f32 %v2882, 0.0
      %v5130 = vmax.f32 %v3531, 0.0
      %v5131 = vmax.f32 %v4180, 0.0
      %v5132 = vmax.f32 %v2235, 0.0
      %v5133 = vmax.f32 %v2884, 0.0
      %v5134 = vmax.f32 %v3533, 0.0
      %v5135 = vmax.f32 %v4182, 0.0
      %v5136 = vmax.f32 %v2238, 0.0
      %v5137 = vmax.f32 %v2887, 0.0
      %v5138 = vmax.f32 %v3536, 0.0
      %v5139 = vmax.f32 %v4185, 0.0
      %v5140 = vmax.f32 %v2240, 0.0
      %v5141 = vmax.f32 %v2889, 0.0
      %v5142 = vmax.f32 %v3538, 0.0
      %v5143 = vmax.f32 %v4187, 0.0
      %v5144 = vmax.f32 %v2243, 0.0
      %v5145 = vmax.f32 %v2892, 0.0
      %v5146 = vmax.f32 %v3541, 0.0
      %v5147 = vmax.f32 %v4190, 0.0
      %v5148 = vmax.f32 %v2245, 0.0
      %v5149 = vmax.f32 %v2894, 0.0
      %v5150 = vmax.f32 %v3543, 0.0
      %v5151 = vmax.f32 %v4192, 0.0
      %v5152 = vmax.f32 %v2248, 0.0
      %v5153 = vmax.f32 %v2897, 0.0
      %v5154 = vmax.f32 %v3546, 0.0
      %v5155 = vmax.f32 %v4195, 0.0
      %v5156 = vmax.f32 %v2250, 0.0
      %v5157 = vmax.f32 %v2899, 0.0
      %v5158 = vmax.f32 %v3548, 0.0
      %v5159 = vmax.f32 %v4197, 0.0
      %v5160 = vmax.f32 %v2253, 0.0
      %v5161 = vmax.f32 %v2902, 0.0
      %v5162 = vmax.f32 %v3551, 0.0
      %v5163 = vmax.f32 %v4200, 0.0
      %v5164 = vmax.f32 %v2255, 0.0
      %v5165 = vmax.f32 %v2904, 0.0
      %v5166 = vmax.f32 %v3553, 0.0
      %v5167 = vmax.f32 %v4202, 0.0
      %v5168 = vmax.f32 %v2258, 0.0
      %v5169 = vmax.f32 %v2907, 0.0
      %v5170 = vmax.f32 %v3556, 0.0
      %v5171 = vmax.f32 %v4205, 0.0
      %v5172 = vmax.f32 %v2260, 0.0
      %v5173 = vmax.f32 %v2909, 0.0
      %v5174 = vmax.f32 %v3558, 0.0
      %v5175 = vmax.f32 %v4207, 0.0
      %v5176 = vmax.f32 %v2263, 0.0
      %v5177 = vmax.f32 %v2912, 0.0
      %v5178 = vmax.f32 %v3561, 0.0
      %v5179 = vmax.f32 %v4210, 0.0
      %v5180 = vmax.f32 %v2265, 0.0
      %v5181 = vmax.f32 %v2914, 0.0
      %v5182 = vmax.f32 %v3563, 0.0
      %v5183 = vmax.f32 %v4212, 0.0
      %v5184 = vmax.f32 %v2268, 0.0
      %v5185 = vmax.f32 %v2917, 0.0
      %v5186 = vmax.f32 %v3566, 0.0
      %v5187 = vmax.f32 %v4215, 0.0
      %v5188 = vmax.f32 %v2270, 0.0
      %v5189 = vmax.f32 %v2919, 0.0
      %v5190 = vmax.f32 %v3568, 0.0
      %v5191 = vmax.f32 %v4217, 0.0
      %v5192 = vmax.f32 %v2273, 0.0
      %v5193 = vmax.f32 %v2922, 0.0
      %v5194 = vmax.f32 %v3571, 0.0
      %v5195 = vmax.f32 %v4220, 0.0
      %v5196 = vmax.f32 %v2275, 0.0
      %v5197 = vmax.f32 %v2924, 0.0
      %v5198 = vmax.f32 %v3573, 0.0
      %v5199 = vmax.f32 %v4222, 0.0
      %v5200 = vmax.f32 %v2278, 0.0
      %v5201 = vmax.f32 %v2927, 0.0
      %v5202 = vmax.f32 %v3576, 0.0
      %v5203 = vmax.f32 %v4225, 0.0
      %v5204 = vmax.f32 %v2280, 0.0
      %v5205 = vmax.f32 %v2929, 0.0
      %v5206 = vmax.f32 %v3578, 0.0
      %v5207 = vmax.f32 %v4227, 0.0
      %v5208 = vmax.f32 %v2283, 0.0
      %v5209 = vmax.f32 %v2932, 0.0
      %v5210 = vmax.f32 %v3581, 0.0
      %v5211 = vmax.f32 %v4230, 0.0
      %v5212 = vmax.f32 %v2285, 0.0
      %v5213 = vmax.f32 %v2934, 0.0
      %v5214 = vmax.f32 %v3583, 0.0
      %v5215 = vmax.f32 %v4232, 0.0
      %v5216 = vmax.f32 %v2288, 0.0
      %v5217 = vmax.f32 %v2937, 0.0
      %v5218 = vmax.f32 %v3586, 0.0
      %v5219 = vmax.f32 %v4235, 0.0
      %v5220 = vmax.f32 %v2290, 0.0
      %v5221 = vmax.f32 %v2939, 0.0
      %v5222 = vmax.f32 %v3588, 0.0
      %v5223 = vmax.f32 %v4237, 0.0
      %v5224 = vmax.f32 %v2293, 0.0
      %v5225 = vmax.f32 %v2942, 0.0
      %v5226 = vmax.f32 %v3591, 0.0
      %v5227 = vmax.f32 %v4240, 0.0
      %v5228 = vmax.f32 %v2295, 0.0
      %v5229 = vmax.f32 %v2944, 0.0
      %v5230 = vmax.f32 %v3593, 0.0
      %v5231 = vmax.f32 %v4242, 0.0
      %v5232 = vmax.f32 %v2298, 0.0
      %v5233 = vmax.f32 %v2947, 0.0
      %v5234 = vmax.f32 %v3596, 0.0
      %v5235 = vmax.f32 %v4245, 0.0
      %v5236 = vmax.f32 %v2300, 0.0
      %v5237 = vmax.f32 %v2949, 0.0
      %v5238 = vmax.f32 %v3598, 0.0
      %v5239 = vmax.f32 %v4247, 0.0
      %v5240 = vmax.f32 %v2303, 0.0
      %v5241 = vmax.f32 %v2952, 0.0
      %v5242 = vmax.f32 %v3601, 0.0
      %v5243 = vmax.f32 %v4250, 0.0
      %v5244 = vmax.f32 %v2305, 0.0
      %v5245 = vmax.f32 %v2954, 0.0
      %v5246 = vmax.f32 %v3603, 0.0
      %v5247 = vmax.f32 %v4252, 0.0
      %v5248 = vmax.f32 %v2308, 0.0
      %v5249 = vmax.f32 %v2957, 0.0
      %v5250 = vmax.f32 %v3606, 0.0
      %v5251 = vmax.f32 %v4255, 0.0
      %v5252 = vmax.f32 %v2310, 0.0
      %v5253 = vmax.f32 %v2959, 0.0
      %v5254 = vmax.f32 %v3608, 0.0
      %v5255 = vmax.f32 %v4257, 0.0
      %v5256 = vmax.f32 %v2313, 0.0
      %v5257 = vmax.f32 %v2962, 0.0
      %v5258 = vmax.f32 %v3611, 0.0
      %v5259 = vmax.f32 %v4260, 0.0
      %v5260 = vmax.f32 %v2315, 0.0
      %v5261 = vmax.f32 %v2964, 0.0
      %v5262 = vmax.f32 %v3613, 0.0
      %v5263 = vmax.f32 %v4262, 0.0
      %v5264 = vmax.f32 %v2318, 0.0
      %v5265 = vmax.f32 %v2967, 0.0
      %v5266 = vmax.f32 %v3616, 0.0
      %v5267 = vmax.f32 %v4265, 0.0
      %v5268 = vmax.f32 %v2320, 0.0
      %v5269 = vmax.f32 %v2969, 0.0
      %v5270 = vmax.f32 %v3618, 0.0
      %v5271 = vmax.f32 %v4267, 0.0
      %v5272 = vmax.f32 %v2323, 0.0
      %v5273 = vmax.f32 %v2972, 0.0
      %v5274 = vmax.f32 %v3621, 0.0
      %v5275 = vmax.f32 %v4270, 0.0
      %v5276 = vmax.f32 %v2325, 0.0
      %v5277 = vmax.f32 %v2974, 0.0
      %v5278 = vmax.f32 %v3623, 0.0
      %v5279 = vmax.f32 %v4272, 0.0
      %v5280 = vmax.f32 %v2328, 0.0
      %v5281 = vmax.f32 %v2977, 0.0
      %v5282 = vmax.f32 %v3626, 0.0
      %v5283 = vmax.f32 %v4275, 0.0
      %v5284 = vmax.f32 %v2330, 0.0
      %v5285 = vmax.f32 %v2979, 0.0
      %v5286 = vmax.f32 %v3628, 0.0
      %v5287 = vmax.f32 %v4277, 0.0
      %v5288 = vmax.f32 %v2333, 0.0
      %v5289 = vmax.f32 %v2982, 0.0
      %v5290 = vmax.f32 %v3631, 0.0
      %v5291 = vmax.f32 %v4280, 0.0
      %v5292 = vmax.f32 %v2335, 0.0
      %v5293 = vmax.f32 %v2984, 0.0
      %v5294 = vmax.f32 %v3633, 0.0
      %v5295 = vmax.f32 %v4282, 0.0
      %v5296 = vmax.f32 %v2338, 0.0
      %v5297 = vmax.f32 %v2987, 0.0
      %v5298 = vmax.f32 %v3636, 0.0
      %v5299 = vmax.f32 %v4285, 0.0
      %v5300 = vmax.f32 %v2340, 0.0
      %v5301 = vmax.f32 %v2989, 0.0
      %v5302 = vmax.f32 %v3638, 0.0
      %v5303 = vmax.f32 %v4287, 0.0
      %v5304 = vmax.f32 %v2343, 0.0
      %v5305 = vmax.f32 %v2992, 0.0
      %v5306 = vmax.f32 %v3641, 0.0
      %v5307 = vmax.f32 %v4290, 0.0
      %v5308 = vmax.f32 %v2345, 0.0
      %v5309 = vmax.f32 %v2994, 0.0
      %v5310 = vmax.f32 %v3643, 0.0
      %v5311 = vmax.f32 %v4292, 0.0
      %v5312 = vmax.f32 %v2348, 0.0
      %v5313 = vmax.f32 %v2997, 0.0
      %v5314 = vmax.f32 %v3646, 0.0
      %v5315 = vmax.f32 %v4295, 0.0
      %v5316 = vmax.f32 %v2350, 0.0
      %v5317 = vmax.f32 %v2999, 0.0
      %v5318 = vmax.f32 %v3648, 0.0
      %v5319 = vmax.f32 %v4297, 0.0
      %v5320 = vmax.f32 %v2353, 0.0
      %v5321 = vmax.f32 %v3002, 0.0
      %v5322 = vmax.f32 %v3651, 0.0
      %v5323 = vmax.f32 %v4300, 0.0
      %v5324 = vmax.f32 %v2355, 0.0
      %v5325 = vmax.f32 %v3004, 0.0
      %v5326 = vmax.f32 %v3653, 0.0
      %v5327 = vmax.f32 %v4302, 0.0
      %v5328 = vld [vmem:[#allocation2] sm:$0xff]
      %v5329 = vld [vmem:[#allocation2 + $0x8] sm:$0xff]
      %v5330 = vld [vmem:[#allocation2 + $0x10] sm:$0xff]
      %v5331 = vld [vmem:[#allocation2 + $0x18] sm:$0xff]
      %v5332 = vld [vmem:[#allocation2 + $0x20] sm:$0xff]
      %v5333 = vld [vmem:[#allocation2 + $0x28] sm:$0xff]
      %v5334 = vld [vmem:[#allocation2 + $0x30] sm:$0xff]
      %v5335 = vld [vmem:[#allocation2 + $0x38] sm:$0xff]
      %v5336 = vadd.f32 %v4304, %v4312
      %v5337 = vadd.f32 %v5336, %v4320
      %v5338 = vadd.f32 %v5337, %v4328
      %v5339 = vadd.f32 %v5338, %v4336
      %v5340 = vadd.f32 %v5339, %v4344
      %v5341 = vadd.f32 %v5340, %v4352
      %v5342 = vadd.f32 %v5341, %v4360
      %v5343 = vadd.f32 %v5342, %v4368
      %v5344 = vadd.f32 %v5343, %v4376
      %v5345 = vadd.f32 %v5344, %v4384
      %v5346 = vadd.f32 %v5345, %v4392
      %v5347 = vadd.f32 %v5346, %v4400
      %v5348 = vadd.f32 %v5347, %v4408
      %v5349 = vadd.f32 %v5348, %v4416
      %v5350 = vadd.f32 %v5349, %v4424
      %v5351 = vadd.f32 %v5350, %v4432
      %v5352 = vadd.f32 %v5351, %v4440
      %v5353 = vadd.f32 %v5352, %v4448
      %v5354 = vadd.f32 %v5353, %v4456
      %v5355 = vadd.f32 %v5354, %v4464
      %v5356 = vadd.f32 %v5355, %v4472
      %v5357 = vadd.f32 %v5356, %v4480
      %v5358 = vadd.f32 %v5357, %v4488
      %v5359 = vadd.f32 %v5358, %v4496
      %v5360 = vadd.f32 %v5359, %v4504
      %v5361 = vadd.f32 %v5360, %v4512
      %v5362 = vadd.f32 %v5361, %v4520
      %v5363 = vadd.f32 %v5362, %v4528
      %v5364 = vadd.f32 %v5363, %v4536
      %v5365 = vadd.f32 %v5364, %v4544
      %v5366 = vadd.f32 %v5365, %v4552
      %v5367 = vadd.f32 %v5366, %v4560
      %v5368 = vadd.f32 %v5367, %v4568
      %v5369 = vadd.f32 %v5368, %v4576
      %v5370 = vadd.f32 %v5369, %v4584
      %v5371 = vadd.f32 %v5370, %v4592
      %v5372 = vadd.f32 %v5371, %v4600
      %v5373 = vadd.f32 %v5372, %v4608
      %v5374 = vadd.f32 %v5373, %v4616
      %v5375 = vadd.f32 %v5374, %v4624
      %v5376 = vadd.f32 %v5375, %v4632
      %v5377 = vadd.f32 %v5376, %v4640
      %v5378 = vadd.f32 %v5377, %v4648
      %v5379 = vadd.f32 %v5378, %v4656
      %v5380 = vadd.f32 %v5379, %v4664
      %v5381 = vadd.f32 %v5380, %v4672
      %v5382 = vadd.f32 %v5381, %v4680
      %v5383 = vadd.f32 %v5382, %v4688
      %v5384 = vadd.f32 %v5383, %v4696
      %v5385 = vadd.f32 %v5384, %v4704
      %v5386 = vadd.f32 %v5385, %v4712
      %v5387 = vadd.f32 %v5386, %v4720
      %v5388 = vadd.f32 %v5387, %v4728
      %v5389 = vadd.f32 %v5388, %v4736
      %v5390 = vadd.f32 %v5389, %v4744
      %v5391 = vadd.f32 %v5390, %v4752
      %v5392 = vadd.f32 %v5391, %v4760
      %v5393 = vadd.f32 %v5392, %v4768
      %v5394 = vadd.f32 %v5393, %v4776
      %v5395 = vadd.f32 %v5394, %v4784
      %v5396 = vadd.f32 %v5395, %v4792
      %v5397 = vadd.f32 %v5396, %v4800
      %v5398 = vadd.f32 %v5397, %v4808
      %v5399 = vadd.f32 %v5398, %v4816
      %v5400 = vadd.f32 %v5399, %v4824
      %v5401 = vadd.f32 %v5400, %v4832
      %v5402 = vadd.f32 %v5401, %v4840
      %v5403 = vadd.f32 %v5402, %v4848
      %v5404 = vadd.f32 %v5403, %v4856
      %v5405 = vadd.f32 %v5404, %v4864
      %v5406 = vadd.f32 %v5405, %v4872
      %v5407 = vadd.f32 %v5406, %v4880
      %v5408 = vadd.f32 %v5407, %v4888
      %v5409 = vadd.f32 %v5408, %v4896
      %v5410 = vadd.f32 %v5409, %v4904
      %v5411 = vadd.f32 %v5410, %v4912
      %v5412 = vadd.f32 %v5411, %v4920
      %v5413 = vadd.f32 %v5412, %v4928
      %v5414 = vadd.f32 %v5413, %v4936
      %v5415 = vadd.f32 %v5414, %v4944
      %v5416 = vadd.f32 %v5415, %v4952
      %v5417 = vadd.f32 %v5416, %v4960
      %v5418 = vadd.f32 %v5417, %v4968
      %v5419 = vadd.f32 %v5418, %v4976
      %v5420 = vadd.f32 %v5419, %v4984
      %v5421 = vadd.f32 %v5420, %v4992
      %v5422 = vadd.f32 %v5421, %v5000
      %v5423 = vadd.f32 %v5422, %v5008
      %v5424 = vadd.f32 %v5423, %v5016
      %v5425 = vadd.f32 %v5424, %v5024
      %v5426 = vadd.f32 %v5425, %v5032
      %v5427 = vadd.f32 %v5426, %v5040
      %v5428 = vadd.f32 %v5427, %v5048
      %v5429 = vadd.f32 %v5428, %v5056
      %v5430 = vadd.f32 %v5429, %v5064
      %v5431 = vadd.f32 %v5430, %v5072
      %v5432 = vadd.f32 %v5431, %v5080
      %v5433 = vadd.f32 %v5432, %v5088
      %v5434 = vadd.f32 %v5433, %v5096
      %v5435 = vadd.f32 %v5434, %v5104
      %v5436 = vadd.f32 %v5435, %v5112
      %v5437 = vadd.f32 %v5436, %v5120
      %v5438 = vadd.f32 %v5437, %v5128
      %v5439 = vadd.f32 %v5438, %v5136
      %v5440 = vadd.f32 %v5439, %v5144
      %v5441 = vadd.f32 %v5440, %v5152
      %v5442 = vadd.f32 %v5441, %v5160
      %v5443 = vadd.f32 %v5442, %v5168
      %v5444 = vadd.f32 %v5443, %v5176
      %v5445 = vadd.f32 %v5444, %v5184
      %v5446 = vadd.f32 %v5445, %v5192
      %v5447 = vadd.f32 %v5446, %v5200
      %v5448 = vadd.f32 %v5447, %v5208
      %v5449 = vadd.f32 %v5448, %v5216
      %v5450 = vadd.f32 %v5449, %v5224
      %v5451 = vadd.f32 %v5450, %v5232
      %v5452 = vadd.f32 %v5451, %v5240
      %v5453 = vadd.f32 %v5452, %v5248
      %v5454 = vadd.f32 %v5453, %v5256
      %v5455 = vadd.f32 %v5454, %v5264
      %v5456 = vadd.f32 %v5455, %v5272
      %v5457 = vadd.f32 %v5456, %v5280
      %v5458 = vadd.f32 %v5457, %v5288
      %v5459 = vadd.f32 %v5458, %v5296
      %v5460 = vadd.f32 %v5459, %v5304
      %v5461 = vadd.f32 %v5460, %v5312
      %v5462 = vadd.f32 %v5461, %v5320
      %v5463 = vadd.f32 %v4305, %v4313
      %v5464 = vadd.f32 %v5463, %v4321
      %v5465 = vadd.f32 %v5464, %v4329
      %v5466 = vadd.f32 %v5465, %v4337
      %v5467 = vadd.f32 %v5466, %v4345
      %v5468 = vadd.f32 %v5467, %v4353
      %v5469 = vadd.f32 %v5468, %v4361
      %v5470 = vadd.f32 %v5469, %v4369
      %v5471 = vadd.f32 %v5470, %v4377
      %v5472 = vadd.f32 %v5471, %v4385
      %v5473 = vadd.f32 %v5472, %v4393
      %v5474 = vadd.f32 %v5473, %v4401
      %v5475 = vadd.f32 %v5474, %v4409
      %v5476 = vadd.f32 %v5475, %v4417
      %v5477 = vadd.f32 %v5476, %v4425
      %v5478 = vadd.f32 %v5477, %v4433
      %v5479 = vadd.f32 %v5478, %v4441
      %v5480 = vadd.f32 %v5479, %v4449
      %v5481 = vadd.f32 %v5480, %v4457
      %v5482 = vadd.f32 %v5481, %v4465
      %v5483 = vadd.f32 %v5482, %v4473
      %v5484 = vadd.f32 %v5483, %v4481
      %v5485 = vadd.f32 %v5484, %v4489
      %v5486 = vadd.f32 %v5485, %v4497
      %v5487 = vadd.f32 %v5486, %v4505
      %v5488 = vadd.f32 %v5487, %v4513
      %v5489 = vadd.f32 %v5488, %v4521
      %v5490 = vadd.f32 %v5489, %v4529
      %v5491 = vadd.f32 %v5490, %v4537
      %v5492 = vadd.f32 %v5491, %v4545
      %v5493 = vadd.f32 %v5492, %v4553
      %v5494 = vadd.f32 %v5493, %v4561
      %v5495 = vadd.f32 %v5494, %v4569
      %v5496 = vadd.f32 %v5495, %v4577
      %v5497 = vadd.f32 %v5496, %v4585
      %v5498 = vadd.f32 %v5497, %v4593
      %v5499 = vadd.f32 %v5498, %v4601
      %v5500 = vadd.f32 %v5499, %v4609
      %v5501 = vadd.f32 %v5500, %v4617
      %v5502 = vadd.f32 %v5501, %v4625
      %v5503 = vadd.f32 %v5502, %v4633
      %v5504 = vadd.f32 %v5503, %v4641
      %v5505 = vadd.f32 %v5504, %v4649
      %v5506 = vadd.f32 %v5505, %v4657
      %v5507 = vadd.f32 %v5506, %v4665
      %v5508 = vadd.f32 %v5507, %v4673
      %v5509 = vadd.f32 %v5508, %v4681
      %v5510 = vadd.f32 %v5509, %v4689
      %v5511 = vadd.f32 %v5510, %v4697
      %v5512 = vadd.f32 %v5511, %v4705
      %v5513 = vadd.f32 %v5512, %v4713
      %v5514 = vadd.f32 %v5513, %v4721
      %v5515 = vadd.f32 %v5514, %v4729
      %v5516 = vadd.f32 %v5515, %v4737
      %v5517 = vadd.f32 %v5516, %v4745
      %v5518 = vadd.f32 %v5517, %v4753
      %v5519 = vadd.f32 %v5518, %v4761
      %v5520 = vadd.f32 %v5519, %v4769
      %v5521 = vadd.f32 %v5520, %v4777
      %v5522 = vadd.f32 %v5521, %v4785
      %v5523 = vadd.f32 %v5522, %v4793
      %v5524 = vadd.f32 %v5523, %v4801
      %v5525 = vadd.f32 %v5524, %v4809
      %v5526 = vadd.f32 %v5525, %v4817
      %v5527 = vadd.f32 %v5526, %v4825
      %v5528 = vadd.f32 %v5527, %v4833
      %v5529 = vadd.f32 %v5528, %v4841
      %v5530 = vadd.f32 %v5529, %v4849
      %v5531 = vadd.f32 %v5530, %v4857
      %v5532 = vadd.f32 %v5531, %v4865
      %v5533 = vadd.f32 %v5532, %v4873
      %v5534 = vadd.f32 %v5533, %v4881
      %v5535 = vadd.f32 %v5534, %v4889
      %v5536 = vadd.f32 %v5535, %v4897
      %v5537 = vadd.f32 %v5536, %v4905
      %v5538 = vadd.f32 %v5537, %v4913
      %v5539 = vadd.f32 %v5538, %v4921
      %v5540 = vadd.f32 %v5539, %v4929
      %v5541 = vadd.f32 %v5540, %v4937
      %v5542 = vadd.f32 %v5541, %v4945
      %v5543 = vadd.f32 %v5542, %v4953
      %v5544 = vadd.f32 %v5543, %v4961
      %v5545 = vadd.f32 %v5544, %v4969
      %v5546 = vadd.f32 %v5545, %v4977
      %v5547 = vadd.f32 %v5546, %v4985
      %v5548 = vadd.f32 %v5547, %v4993
      %v5549 = vadd.f32 %v5548, %v5001
      %v5550 = vadd.f32 %v5549, %v5009
      %v5551 = vadd.f32 %v5550, %v5017
      %v5552 = vadd.f32 %v5551, %v5025
      %v5553 = vadd.f32 %v5552, %v5033
      %v5554 = vadd.f32 %v5553, %v5041
      %v5555 = vadd.f32 %v5554, %v5049
      %v5556 = vadd.f32 %v5555, %v5057
      %v5557 = vadd.f32 %v5556, %v5065
      %v5558 = vadd.f32 %v5557, %v5073
      %v5559 = vadd.f32 %v5558, %v5081
      %v5560 = vadd.f32 %v5559, %v5089
      %v5561 = vadd.f32 %v5560, %v5097
      %v5562 = vadd.f32 %v5561, %v5105
      %v5563 = vadd.f32 %v5562, %v5113
      %v5564 = vadd.f32 %v5563, %v5121
      %v5565 = vadd.f32 %v5564, %v5129
      %v5566 = vadd.f32 %v5565, %v5137
      %v5567 = vadd.f32 %v5566, %v5145
      %v5568 = vadd.f32 %v5567, %v5153
      %v5569 = vadd.f32 %v5568, %v5161
      %v5570 = vadd.f32 %v5569, %v5169
      %v5571 = vadd.f32 %v5570, %v5177
      %v5572 = vadd.f32 %v5571, %v5185
      %v5573 = vadd.f32 %v5572, %v5193
      %v5574 = vadd.f32 %v5573, %v5201
      %v5575 = vadd.f32 %v5574, %v5209
      %v5576 = vadd.f32 %v5575, %v5217
      %v5577 = vadd.f32 %v5576, %v5225
      %v5578 = vadd.f32 %v5577, %v5233
      %v5579 = vadd.f32 %v5578, %v5241
      %v5580 = vadd.f32 %v5579, %v5249
      %v5581 = vadd.f32 %v5580, %v5257
      %v5582 = vadd.f32 %v5581, %v5265
      %v5583 = vadd.f32 %v5582, %v5273
      %v5584 = vadd.f32 %v5583, %v5281
      %v5585 = vadd.f32 %v5584, %v5289
      %v5586 = vadd.f32 %v5585, %v5297
      %v5587 = vadd.f32 %v5586, %v5305
      %v5588 = vadd.f32 %v5587, %v5313
      %v5589 = vadd.f32 %v5588, %v5321
      %v5590 = vadd.f32 %v4306, %v4314
      %v5591 = vadd.f32 %v5590, %v4322
      %v5592 = vadd.f32 %v5591, %v4330
      %v5593 = vadd.f32 %v5592, %v4338
      %v5594 = vadd.f32 %v5593, %v4346
      %v5595 = vadd.f32 %v5594, %v4354
      %v5596 = vadd.f32 %v5595, %v4362
      %v5597 = vadd.f32 %v5596, %v4370
      %v5598 = vadd.f32 %v5597, %v4378
      %v5599 = vadd.f32 %v5598, %v4386
      %v5600 = vadd.f32 %v5599, %v4394
      %v5601 = vadd.f32 %v5600, %v4402
      %v5602 = vadd.f32 %v5601, %v4410
      %v5603 = vadd.f32 %v5602, %v4418
      %v5604 = vadd.f32 %v5603, %v4426
      %v5605 = vadd.f32 %v5604, %v4434
      %v5606 = vadd.f32 %v5605, %v4442
      %v5607 = vadd.f32 %v5606, %v4450
      %v5608 = vadd.f32 %v5607, %v4458
      %v5609 = vadd.f32 %v5608, %v4466
      %v5610 = vadd.f32 %v5609, %v4474
      %v5611 = vadd.f32 %v5610, %v4482
      %v5612 = vadd.f32 %v5611, %v4490
      %v5613 = vadd.f32 %v5612, %v4498
      %v5614 = vadd.f32 %v5613, %v4506
      %v5615 = vadd.f32 %v5614, %v4514
      %v5616 = vadd.f32 %v5615, %v4522
      %v5617 = vadd.f32 %v5616, %v4530
      %v5618 = vadd.f32 %v5617, %v4538
      %v5619 = vadd.f32 %v5618, %v4546
      %v5620 = vadd.f32 %v5619, %v4554
      %v5621 = vadd.f32 %v5620, %v4562
      %v5622 = vadd.f32 %v5621, %v4570
      %v5623 = vadd.f32 %v5622, %v4578
      %v5624 = vadd.f32 %v5623, %v4586
      %v5625 = vadd.f32 %v5624, %v4594
      %v5626 = vadd.f32 %v5625, %v4602
      %v5627 = vadd.f32 %v5626, %v4610
      %v5628 = vadd.f32 %v5627, %v4618
      %v5629 = vadd.f32 %v5628, %v4626
      %v5630 = vadd.f32 %v5629, %v4634
      %v5631 = vadd.f32 %v5630, %v4642
      %v5632 = vadd.f32 %v5631, %v4650
      %v5633 = vadd.f32 %v5632, %v4658
      %v5634 = vadd.f32 %v5633, %v4666
      %v5635 = vadd.f32 %v5634, %v4674
      %v5636 = vadd.f32 %v5635, %v4682
      %v5637 = vadd.f32 %v5636, %v4690
      %v5638 = vadd.f32 %v5637, %v4698
      %v5639 = vadd.f32 %v5638, %v4706
      %v5640 = vadd.f32 %v5639, %v4714
      %v5641 = vadd.f32 %v5640, %v4722
      %v5642 = vadd.f32 %v5641, %v4730
      %v5643 = vadd.f32 %v5642, %v4738
      %v5644 = vadd.f32 %v5643, %v4746
      %v5645 = vadd.f32 %v5644, %v4754
      %v5646 = vadd.f32 %v5645, %v4762
      %v5647 = vadd.f32 %v5646, %v4770
      %v5648 = vadd.f32 %v5647, %v4778
      %v5649 = vadd.f32 %v5648, %v4786
      %v5650 = vadd.f32 %v5649, %v4794
      %v5651 = vadd.f32 %v5650, %v4802
      %v5652 = vadd.f32 %v5651, %v4810
      %v5653 = vadd.f32 %v5652, %v4818
      %v5654 = vadd.f32 %v5653, %v4826
      %v5655 = vadd.f32 %v5654, %v4834
      %v5656 = vadd.f32 %v5655, %v4842
      %v5657 = vadd.f32 %v5656, %v4850
      %v5658 = vadd.f32 %v5657, %v4858
      %v5659 = vadd.f32 %v5658, %v4866
      %v5660 = vadd.f32 %v5659, %v4874
      %v5661 = vadd.f32 %v5660, %v4882
      %v5662 = vadd.f32 %v5661, %v4890
      %v5663 = vadd.f32 %v5662, %v4898
      %v5664 = vadd.f32 %v5663, %v4906
      %v5665 = vadd.f32 %v5664, %v4914
      %v5666 = vadd.f32 %v5665, %v4922
      %v5667 = vadd.f32 %v5666, %v4930
      %v5668 = vadd.f32 %v5667, %v4938
      %v5669 = vadd.f32 %v5668, %v4946
      %v5670 = vadd.f32 %v5669, %v4954
      %v5671 = vadd.f32 %v5670, %v4962
      %v5672 = vadd.f32 %v5671, %v4970
      %v5673 = vadd.f32 %v5672, %v4978
      %v5674 = vadd.f32 %v5673, %v4986
      %v5675 = vadd.f32 %v5674, %v4994
      %v5676 = vadd.f32 %v5675, %v5002
      %v5677 = vadd.f32 %v5676, %v5010
      %v5678 = vadd.f32 %v5677, %v5018
      %v5679 = vadd.f32 %v5678, %v5026
      %v5680 = vadd.f32 %v5679, %v5034
      %v5681 = vadd.f32 %v5680, %v5042
      %v5682 = vadd.f32 %v5681, %v5050
      %v5683 = vadd.f32 %v5682, %v5058
      %v5684 = vadd.f32 %v5683, %v5066
      %v5685 = vadd.f32 %v5684, %v5074
      %v5686 = vadd.f32 %v5685, %v5082
      %v5687 = vadd.f32 %v5686, %v5090
      %v5688 = vadd.f32 %v5687, %v5098
      %v5689 = vadd.f32 %v5688, %v5106
      %v5690 = vadd.f32 %v5689, %v5114
      %v5691 = vadd.f32 %v5690, %v5122
      %v5692 = vadd.f32 %v5691, %v5130
      %v5693 = vadd.f32 %v5692, %v5138
      %v5694 = vadd.f32 %v5693, %v5146
      %v5695 = vadd.f32 %v5694, %v5154
      %v5696 = vadd.f32 %v5695, %v5162
      %v5697 = vadd.f32 %v5696, %v5170
      %v5698 = vadd.f32 %v5697, %v5178
      %v5699 = vadd.f32 %v5698, %v5186
      %v5700 = vadd.f32 %v5699, %v5194
      %v5701 = vadd.f32 %v5700, %v5202
      %v5702 = vadd.f32 %v5701, %v5210
      %v5703 = vadd.f32 %v5702, %v5218
      %v5704 = vadd.f32 %v5703, %v5226
      %v5705 = vadd.f32 %v5704, %v5234
      %v5706 = vadd.f32 %v5705, %v5242
      %v5707 = vadd.f32 %v5706, %v5250
      %v5708 = vadd.f32 %v5707, %v5258
      %v5709 = vadd.f32 %v5708, %v5266
      %v5710 = vadd.f32 %v5709, %v5274
      %v5711 = vadd.f32 %v5710, %v5282
      %v5712 = vadd.f32 %v5711, %v5290
      %v5713 = vadd.f32 %v5712, %v5298
      %v5714 = vadd.f32 %v5713, %v5306
      %v5715 = vadd.f32 %v5714, %v5314
      %v5716 = vadd.f32 %v5715, %v5322
      %v5717 = vadd.f32 %v4307, %v4315
      %v5718 = vadd.f32 %v5717, %v4323
      %v5719 = vadd.f32 %v5718, %v4331
      %v5720 = vadd.f32 %v5719, %v4339
      %v5721 = vadd.f32 %v5720, %v4347
      %v5722 = vadd.f32 %v5721, %v4355
      %v5723 = vadd.f32 %v5722, %v4363
      %v5724 = vadd.f32 %v5723, %v4371
      %v5725 = vadd.f32 %v5724, %v4379
      %v5726 = vadd.f32 %v5725, %v4387
      %v5727 = vadd.f32 %v5726, %v4395
      %v5728 = vadd.f32 %v5727, %v4403
      %v5729 = vadd.f32 %v5728, %v4411
      %v5730 = vadd.f32 %v5729, %v4419
      %v5731 = vadd.f32 %v5730, %v4427
      %v5732 = vadd.f32 %v5731, %v4435
      %v5733 = vadd.f32 %v5732, %v4443
      %v5734 = vadd.f32 %v5733, %v4451
      %v5735 = vadd.f32 %v5734, %v4459
      %v5736 = vadd.f32 %v5735, %v4467
      %v5737 = vadd.f32 %v5736, %v4475
      %v5738 = vadd.f32 %v5737, %v4483
      %v5739 = vadd.f32 %v5738, %v4491
      %v5740 = vadd.f32 %v5739, %v4499
      %v5741 = vadd.f32 %v5740, %v4507
      %v5742 = vadd.f32 %v5741, %v4515
      %v5743 = vadd.f32 %v5742, %v4523
      %v5744 = vadd.f32 %v5743, %v4531
      %v5745 = vadd.f32 %v5744, %v4539
      %v5746 = vadd.f32 %v5745, %v4547
      %v5747 = vadd.f32 %v5746, %v4555
      %v5748 = vadd.f32 %v5747, %v4563
      %v5749 = vadd.f32 %v5748, %v4571
      %v5750 = vadd.f32 %v5749, %v4579
      %v5751 = vadd.f32 %v5750, %v4587
      %v5752 = vadd.f32 %v5751, %v4595
      %v5753 = vadd.f32 %v5752, %v4603
      %v5754 = vadd.f32 %v5753, %v4611
      %v5755 = vadd.f32 %v5754, %v4619
      %v5756 = vadd.f32 %v5755, %v4627
      %v5757 = vadd.f32 %v5756, %v4635
      %v5758 = vadd.f32 %v5757, %v4643
      %v5759 = vadd.f32 %v5758, %v4651
      %v5760 = vadd.f32 %v5759, %v4659
      %v5761 = vadd.f32 %v5760, %v4667
      %v5762 = vadd.f32 %v5761, %v4675
      %v5763 = vadd.f32 %v5762, %v4683
      %v5764 = vadd.f32 %v5763, %v4691
      %v5765 = vadd.f32 %v5764, %v4699
      %v5766 = vadd.f32 %v5765, %v4707
      %v5767 = vadd.f32 %v5766, %v4715
      %v5768 = vadd.f32 %v5767, %v4723
      %v5769 = vadd.f32 %v5768, %v4731
      %v5770 = vadd.f32 %v5769, %v4739
      %v5771 = vadd.f32 %v5770, %v4747
      %v5772 = vadd.f32 %v5771, %v4755
      %v5773 = vadd.f32 %v5772, %v4763
      %v5774 = vadd.f32 %v5773, %v4771
      %v5775 = vadd.f32 %v5774, %v4779
      %v5776 = vadd.f32 %v5775, %v4787
      %v5777 = vadd.f32 %v5776, %v4795
      %v5778 = vadd.f32 %v5777, %v4803
      %v5779 = vadd.f32 %v5778, %v4811
      %v5780 = vadd.f32 %v5779, %v4819
      %v5781 = vadd.f32 %v5780, %v4827
      %v5782 = vadd.f32 %v5781, %v4835
      %v5783 = vadd.f32 %v5782, %v4843
      %v5784 = vadd.f32 %v5783, %v4851
      %v5785 = vadd.f32 %v5784, %v4859
      %v5786 = vadd.f32 %v5785, %v4867
      %v5787 = vadd.f32 %v5786, %v4875
      %v5788 = vadd.f32 %v5787, %v4883
      %v5789 = vadd.f32 %v5788, %v4891
      %v5790 = vadd.f32 %v5789, %v4899
      %v5791 = vadd.f32 %v5790, %v4907
      %v5792 = vadd.f32 %v5791, %v4915
      %v5793 = vadd.f32 %v5792, %v4923
      %v5794 = vadd.f32 %v5793, %v4931
      %v5795 = vadd.f32 %v5794, %v4939
      %v5796 = vadd.f32 %v5795, %v4947
      %v5797 = vadd.f32 %v5796, %v4955
      %v5798 = vadd.f32 %v5797, %v4963
      %v5799 = vadd.f32 %v5798, %v4971
      %v5800 = vadd.f32 %v5799, %v4979
      %v5801 = vadd.f32 %v5800, %v4987
      %v5802 = vadd.f32 %v5801, %v4995
      %v5803 = vadd.f32 %v5802, %v5003
      %v5804 = vadd.f32 %v5803, %v5011
      %v5805 = vadd.f32 %v5804, %v5019
      %v5806 = vadd.f32 %v5805, %v5027
      %v5807 = vadd.f32 %v5806, %v5035
      %v5808 = vadd.f32 %v5807, %v5043
      %v5809 = vadd.f32 %v5808, %v5051
      %v5810 = vadd.f32 %v5809, %v5059
      %v5811 = vadd.f32 %v5810, %v5067
      %v5812 = vadd.f32 %v5811, %v5075
      %v5813 = vadd.f32 %v5812, %v5083
      %v5814 = vadd.f32 %v5813, %v5091
      %v5815 = vadd.f32 %v5814, %v5099
      %v5816 = vadd.f32 %v5815, %v5107
      %v5817 = vadd.f32 %v5816, %v5115
      %v5818 = vadd.f32 %v5817, %v5123
      %v5819 = vadd.f32 %v5818, %v5131
      %v5820 = vadd.f32 %v5819, %v5139
      %v5821 = vadd.f32 %v5820, %v5147
      %v5822 = vadd.f32 %v5821, %v5155
      %v5823 = vadd.f32 %v5822, %v5163
      %v5824 = vadd.f32 %v5823, %v5171
      %v5825 = vadd.f32 %v5824, %v5179
      %v5826 = vadd.f32 %v5825, %v5187
      %v5827 = vadd.f32 %v5826, %v5195
      %v5828 = vadd.f32 %v5827, %v5203
      %v5829 = vadd.f32 %v5828, %v5211
      %v5830 = vadd.f32 %v5829, %v5219
      %v5831 = vadd.f32 %v5830, %v5227
      %v5832 = vadd.f32 %v5831, %v5235
      %v5833 = vadd.f32 %v5832, %v5243
      %v5834 = vadd.f32 %v5833, %v5251
      %v5835 = vadd.f32 %v5834, %v5259
      %v5836 = vadd.f32 %v5835, %v5267
      %v5837 = vadd.f32 %v5836, %v5275
      %v5838 = vadd.f32 %v5837, %v5283
      %v5839 = vadd.f32 %v5838, %v5291
      %v5840 = vadd.f32 %v5839, %v5299
      %v5841 = vadd.f32 %v5840, %v5307
      %v5842 = vadd.f32 %v5841, %v5315
      %v5843 = vadd.f32 %v5842, %v5323
      %v5844 = vadd.f32 %v4308, %v4316
      %v5845 = vadd.f32 %v5844, %v4324
      %v5846 = vadd.f32 %v5845, %v4332
      %v5847 = vadd.f32 %v5846, %v4340
      %v5848 = vadd.f32 %v5847, %v4348
      %v5849 = vadd.f32 %v5848, %v4356
      %v5850 = vadd.f32 %v5849, %v4364
      %v5851 = vadd.f32 %v5850, %v4372
      %v5852 = vadd.f32 %v5851, %v4380
      %v5853 = vadd.f32 %v5852, %v4388
      %v5854 = vadd.f32 %v5853, %v4396
      %v5855 = vadd.f32 %v5854, %v4404
      %v5856 = vadd.f32 %v5855, %v4412
      %v5857 = vadd.f32 %v5856, %v4420
      %v5858 = vadd.f32 %v5857, %v4428
      %v5859 = vadd.f32 %v5858, %v4436
      %v5860 = vadd.f32 %v5859, %v4444
      %v5861 = vadd.f32 %v5860, %v4452
      %v5862 = vadd.f32 %v5861, %v4460
      %v5863 = vadd.f32 %v5862, %v4468
      %v5864 = vadd.f32 %v5863, %v4476
      %v5865 = vadd.f32 %v5864, %v4484
      %v5866 = vadd.f32 %v5865, %v4492
      %v5867 = vadd.f32 %v5866, %v4500
      %v5868 = vadd.f32 %v5867, %v4508
      %v5869 = vadd.f32 %v5868, %v4516
      %v5870 = vadd.f32 %v5869, %v4524
      %v5871 = vadd.f32 %v5870, %v4532
      %v5872 = vadd.f32 %v5871, %v4540
      %v5873 = vadd.f32 %v5872, %v4548
      %v5874 = vadd.f32 %v5873, %v4556
      %v5875 = vadd.f32 %v5874, %v4564
      %v5876 = vadd.f32 %v5875, %v4572
      %v5877 = vadd.f32 %v5876, %v4580
      %v5878 = vadd.f32 %v5877, %v4588
      %v5879 = vadd.f32 %v5878, %v4596
      %v5880 = vadd.f32 %v5879, %v4604
      %v5881 = vadd.f32 %v5880, %v4612
      %v5882 = vadd.f32 %v5881, %v4620
      %v5883 = vadd.f32 %v5882, %v4628
      %v5884 = vadd.f32 %v5883, %v4636
      %v5885 = vadd.f32 %v5884, %v4644
      %v5886 = vadd.f32 %v5885, %v4652
      %v5887 = vadd.f32 %v5886, %v4660
      %v5888 = vadd.f32 %v5887, %v4668
      %v5889 = vadd.f32 %v5888, %v4676
      %v5890 = vadd.f32 %v5889, %v4684
      %v5891 = vadd.f32 %v5890, %v4692
      %v5892 = vadd.f32 %v5891, %v4700
      %v5893 = vadd.f32 %v5892, %v4708
      %v5894 = vadd.f32 %v5893, %v4716
      %v5895 = vadd.f32 %v5894, %v4724
      %v5896 = vadd.f32 %v5895, %v4732
      %v5897 = vadd.f32 %v5896, %v4740
      %v5898 = vadd.f32 %v5897, %v4748
      %v5899 = vadd.f32 %v5898, %v4756
      %v5900 = vadd.f32 %v5899, %v4764
      %v5901 = vadd.f32 %v5900, %v4772
      %v5902 = vadd.f32 %v5901, %v4780
      %v5903 = vadd.f32 %v5902, %v4788
      %v5904 = vadd.f32 %v5903, %v4796
      %v5905 = vadd.f32 %v5904, %v4804
      %v5906 = vadd.f32 %v5905, %v4812
      %v5907 = vadd.f32 %v5906, %v4820
      %v5908 = vadd.f32 %v5907, %v4828
      %v5909 = vadd.f32 %v5908, %v4836
      %v5910 = vadd.f32 %v5909, %v4844
      %v5911 = vadd.f32 %v5910, %v4852
      %v5912 = vadd.f32 %v5911, %v4860
      %v5913 = vadd.f32 %v5912, %v4868
      %v5914 = vadd.f32 %v5913, %v4876
      %v5915 = vadd.f32 %v5914, %v4884
      %v5916 = vadd.f32 %v5915, %v4892
      %v5917 = vadd.f32 %v5916, %v4900
      %v5918 = vadd.f32 %v5917, %v4908
      %v5919 = vadd.f32 %v5918, %v4916
      %v5920 = vadd.f32 %v5919, %v4924
      %v5921 = vadd.f32 %v5920, %v4932
      %v5922 = vadd.f32 %v5921, %v4940
      %v5923 = vadd.f32 %v5922, %v4948
      %v5924 = vadd.f32 %v5923, %v4956
      %v5925 = vadd.f32 %v5924, %v4964
      %v5926 = vadd.f32 %v5925, %v4972
      %v5927 = vadd.f32 %v5926, %v4980
      %v5928 = vadd.f32 %v5927, %v4988
      %v5929 = vadd.f32 %v5928, %v4996
      %v5930 = vadd.f32 %v5929, %v5004
      %v5931 = vadd.f32 %v5930, %v5012
      %v5932 = vadd.f32 %v5931, %v5020
      %v5933 = vadd.f32 %v5932, %v5028
      %v5934 = vadd.f32 %v5933, %v5036
      %v5935 = vadd.f32 %v5934, %v5044
      %v5936 = vadd.f32 %v5935, %v5052
      %v5937 = vadd.f32 %v5936, %v5060
      %v5938 = vadd.f32 %v5937, %v5068
      %v5939 = vadd.f32 %v5938, %v5076
      %v5940 = vadd.f32 %v5939, %v5084
      %v5941 = vadd.f32 %v5940, %v5092
      %v5942 = vadd.f32 %v5941, %v5100
      %v5943 = vadd.f32 %v5942, %v5108
      %v5944 = vadd.f32 %v5943, %v5116
      %v5945 = vadd.f32 %v5944, %v5124
      %v5946 = vadd.f32 %v5945, %v5132
      %v5947 = vadd.f32 %v5946, %v5140
      %v5948 = vadd.f32 %v5947, %v5148
      %v5949 = vadd.f32 %v5948, %v5156
      %v5950 = vadd.f32 %v5949, %v5164
      %v5951 = vadd.f32 %v5950, %v5172
      %v5952 = vadd.f32 %v5951, %v5180
      %v5953 = vadd.f32 %v5952, %v5188
      %v5954 = vadd.f32 %v5953, %v5196
      %v5955 = vadd.f32 %v5954, %v5204
      %v5956 = vadd.f32 %v5955, %v5212
      %v5957 = vadd.f32 %v5956, %v5220
      %v5958 = vadd.f32 %v5957, %v5228
      %v5959 = vadd.f32 %v5958, %v5236
      %v5960 = vadd.f32 %v5959, %v5244
      %v5961 = vadd.f32 %v5960, %v5252
      %v5962 = vadd.f32 %v5961, %v5260
      %v5963 = vadd.f32 %v5962, %v5268
      %v5964 = vadd.f32 %v5963, %v5276
      %v5965 = vadd.f32 %v5964, %v5284
      %v5966 = vadd.f32 %v5965, %v5292
      %v5967 = vadd.f32 %v5966, %v5300
      %v5968 = vadd.f32 %v5967, %v5308
      %v5969 = vadd.f32 %v5968, %v5316
      %v5970 = vadd.f32 %v5969, %v5324
      %v5971 = vadd.f32 %v4309, %v4317
      %v5972 = vadd.f32 %v5971, %v4325
      %v5973 = vadd.f32 %v5972, %v4333
      %v5974 = vadd.f32 %v5973, %v4341
      %v5975 = vadd.f32 %v5974, %v4349
      %v5976 = vadd.f32 %v5975, %v4357
      %v5977 = vadd.f32 %v5976, %v4365
      %v5978 = vadd.f32 %v5977, %v4373
      %v5979 = vadd.f32 %v5978, %v4381
      %v5980 = vadd.f32 %v5979, %v4389
      %v5981 = vadd.f32 %v5980, %v4397
      %v5982 = vadd.f32 %v5981, %v4405
      %v5983 = vadd.f32 %v5982, %v4413
      %v5984 = vadd.f32 %v5983, %v4421
      %v5985 = vadd.f32 %v5984, %v4429
      %v5986 = vadd.f32 %v5985, %v4437
      %v5987 = vadd.f32 %v5986, %v4445
      %v5988 = vadd.f32 %v5987, %v4453
      %v5989 = vadd.f32 %v5988, %v4461
      %v5990 = vadd.f32 %v5989, %v4469
      %v5991 = vadd.f32 %v5990, %v4477
      %v5992 = vadd.f32 %v5991, %v4485
      %v5993 = vadd.f32 %v5992, %v4493
      %v5994 = vadd.f32 %v5993, %v4501
      %v5995 = vadd.f32 %v5994, %v4509
      %v5996 = vadd.f32 %v5995, %v4517
      %v5997 = vadd.f32 %v5996, %v4525
      %v5998 = vadd.f32 %v5997, %v4533
      %v5999 = vadd.f32 %v5998, %v4541
      %v6000 = vadd.f32 %v5999, %v4549
      %v6001 = vadd.f32 %v6000, %v4557
      %v6002 = vadd.f32 %v6001, %v4565
      %v6003 = vadd.f32 %v6002, %v4573
      %v6004 = vadd.f32 %v6003, %v4581
      %v6005 = vadd.f32 %v6004, %v4589
      %v6006 = vadd.f32 %v6005, %v4597
      %v6007 = vadd.f32 %v6006, %v4605
      %v6008 = vadd.f32 %v6007, %v4613
      %v6009 = vadd.f32 %v6008, %v4621
      %v6010 = vadd.f32 %v6009, %v4629
      %v6011 = vadd.f32 %v6010, %v4637
      %v6012 = vadd.f32 %v6011, %v4645
      %v6013 = vadd.f32 %v6012, %v4653
      %v6014 = vadd.f32 %v6013, %v4661
      %v6015 = vadd.f32 %v6014, %v4669
      %v6016 = vadd.f32 %v6015, %v4677
      %v6017 = vadd.f32 %v6016, %v4685
      %v6018 = vadd.f32 %v6017, %v4693
      %v6019 = vadd.f32 %v6018, %v4701
      %v6020 = vadd.f32 %v6019, %v4709
      %v6021 = vadd.f32 %v6020, %v4717
      %v6022 = vadd.f32 %v6021, %v4725
      %v6023 = vadd.f32 %v6022, %v4733
      %v6024 = vadd.f32 %v6023, %v4741
      %v6025 = vadd.f32 %v6024, %v4749
      %v6026 = vadd.f32 %v6025, %v4757
      %v6027 = vadd.f32 %v6026, %v4765
      %v6028 = vadd.f32 %v6027, %v4773
      %v6029 = vadd.f32 %v6028, %v4781
      %v6030 = vadd.f32 %v6029, %v4789
      %v6031 = vadd.f32 %v6030, %v4797
      %v6032 = vadd.f32 %v6031, %v4805
      %v6033 = vadd.f32 %v6032, %v4813
      %v6034 = vadd.f32 %v6033, %v4821
      %v6035 = vadd.f32 %v6034, %v4829
      %v6036 = vadd.f32 %v6035, %v4837
      %v6037 = vadd.f32 %v6036, %v4845
      %v6038 = vadd.f32 %v6037, %v4853
      %v6039 = vadd.f32 %v6038, %v4861
      %v6040 = vadd.f32 %v6039, %v4869
      %v6041 = vadd.f32 %v6040, %v4877
      %v6042 = vadd.f32 %v6041, %v4885
      %v6043 = vadd.f32 %v6042, %v4893
      %v6044 = vadd.f32 %v6043, %v4901
      %v6045 = vadd.f32 %v6044, %v4909
      %v6046 = vadd.f32 %v6045, %v4917
      %v6047 = vadd.f32 %v6046, %v4925
      %v6048 = vadd.f32 %v6047, %v4933
      %v6049 = vadd.f32 %v6048, %v4941
      %v6050 = vadd.f32 %v6049, %v4949
      %v6051 = vadd.f32 %v6050, %v4957
      %v6052 = vadd.f32 %v6051, %v4965
      %v6053 = vadd.f32 %v6052, %v4973
      %v6054 = vadd.f32 %v6053, %v4981
      %v6055 = vadd.f32 %v6054, %v4989
      %v6056 = vadd.f32 %v6055, %v4997
      %v6057 = vadd.f32 %v6056, %v5005
      %v6058 = vadd.f32 %v6057, %v5013
      %v6059 = vadd.f32 %v6058, %v5021
      %v6060 = vadd.f32 %v6059, %v5029
      %v6061 = vadd.f32 %v6060, %v5037
      %v6062 = vadd.f32 %v6061, %v5045
      %v6063 = vadd.f32 %v6062, %v5053
      %v6064 = vadd.f32 %v6063, %v5061
      %v6065 = vadd.f32 %v6064, %v5069
      %v6066 = vadd.f32 %v6065, %v5077
      %v6067 = vadd.f32 %v6066, %v5085
      %v6068 = vadd.f32 %v6067, %v5093
      %v6069 = vadd.f32 %v6068, %v5101
      %v6070 = vadd.f32 %v6069, %v5109
      %v6071 = vadd.f32 %v6070, %v5117
      %v6072 = vadd.f32 %v6071, %v5125
      %v6073 = vadd.f32 %v6072, %v5133
      %v6074 = vadd.f32 %v6073, %v5141
      %v6075 = vadd.f32 %v6074, %v5149
      %v6076 = vadd.f32 %v6075, %v5157
      %v6077 = vadd.f32 %v6076, %v5165
      %v6078 = vadd.f32 %v6077, %v5173
      %v6079 = vadd.f32 %v6078, %v5181
      %v6080 = vadd.f32 %v6079, %v5189
      %v6081 = vadd.f32 %v6080, %v5197
      %v6082 = vadd.f32 %v6081, %v5205
      %v6083 = vadd.f32 %v6082, %v5213
      %v6084 = vadd.f32 %v6083, %v5221
      %v6085 = vadd.f32 %v6084, %v5229
      %v6086 = vadd.f32 %v6085, %v5237
      %v6087 = vadd.f32 %v6086, %v5245
      %v6088 = vadd.f32 %v6087, %v5253
      %v6089 = vadd.f32 %v6088, %v5261
      %v6090 = vadd.f32 %v6089, %v5269
      %v6091 = vadd.f32 %v6090, %v5277
      %v6092 = vadd.f32 %v6091, %v5285
      %v6093 = vadd.f32 %v6092, %v5293
      %v6094 = vadd.f32 %v6093, %v5301
      %v6095 = vadd.f32 %v6094, %v5309
      %v6096 = vadd.f32 %v6095, %v5317
      %v6097 = vadd.f32 %v6096, %v5325
      %v6098 = vadd.f32 %v4310, %v4318
      %v6099 = vadd.f32 %v6098, %v4326
      %v6100 = vadd.f32 %v6099, %v4334
      %v6101 = vadd.f32 %v6100, %v4342
      %v6102 = vadd.f32 %v6101, %v4350
      %v6103 = vadd.f32 %v6102, %v4358
      %v6104 = vadd.f32 %v6103, %v4366
      %v6105 = vadd.f32 %v6104, %v4374
      %v6106 = vadd.f32 %v6105, %v4382
      %v6107 = vadd.f32 %v6106, %v4390
      %v6108 = vadd.f32 %v6107, %v4398
      %v6109 = vadd.f32 %v6108, %v4406
      %v6110 = vadd.f32 %v6109, %v4414
      %v6111 = vadd.f32 %v6110, %v4422
      %v6112 = vadd.f32 %v6111, %v4430
      %v6113 = vadd.f32 %v6112, %v4438
      %v6114 = vadd.f32 %v6113, %v4446
      %v6115 = vadd.f32 %v6114, %v4454
      %v6116 = vadd.f32 %v6115, %v4462
      %v6117 = vadd.f32 %v6116, %v4470
      %v6118 = vadd.f32 %v6117, %v4478
      %v6119 = vadd.f32 %v6118, %v4486
      %v6120 = vadd.f32 %v6119, %v4494
      %v6121 = vadd.f32 %v6120, %v4502
      %v6122 = vadd.f32 %v6121, %v4510
      %v6123 = vadd.f32 %v6122, %v4518
      %v6124 = vadd.f32 %v6123, %v4526
      %v6125 = vadd.f32 %v6124, %v4534
      %v6126 = vadd.f32 %v6125, %v4542
      %v6127 = vadd.f32 %v6126, %v4550
      %v6128 = vadd.f32 %v6127, %v4558
      %v6129 = vadd.f32 %v6128, %v4566
      %v6130 = vadd.f32 %v6129, %v4574
      %v6131 = vadd.f32 %v6130, %v4582
      %v6132 = vadd.f32 %v6131, %v4590
      %v6133 = vadd.f32 %v6132, %v4598
      %v6134 = vadd.f32 %v6133, %v4606
      %v6135 = vadd.f32 %v6134, %v4614
      %v6136 = vadd.f32 %v6135, %v4622
      %v6137 = vadd.f32 %v6136, %v4630
      %v6138 = vadd.f32 %v6137, %v4638
      %v6139 = vadd.f32 %v6138, %v4646
      %v6140 = vadd.f32 %v6139, %v4654
      %v6141 = vadd.f32 %v6140, %v4662
      %v6142 = vadd.f32 %v6141, %v4670
      %v6143 = vadd.f32 %v6142, %v4678
      %v6144 = vadd.f32 %v6143, %v4686
      %v6145 = vadd.f32 %v6144, %v4694
      %v6146 = vadd.f32 %v6145, %v4702
      %v6147 = vadd.f32 %v6146, %v4710
      %v6148 = vadd.f32 %v6147, %v4718
      %v6149 = vadd.f32 %v6148, %v4726
      %v6150 = vadd.f32 %v6149, %v4734
      %v6151 = vadd.f32 %v6150, %v4742
      %v6152 = vadd.f32 %v6151, %v4750
      %v6153 = vadd.f32 %v6152, %v4758
      %v6154 = vadd.f32 %v6153, %v4766
      %v6155 = vadd.f32 %v6154, %v4774
      %v6156 = vadd.f32 %v6155, %v4782
      %v6157 = vadd.f32 %v6156, %v4790
      %v6158 = vadd.f32 %v6157, %v4798
      %v6159 = vadd.f32 %v6158, %v4806
      %v6160 = vadd.f32 %v6159, %v4814
      %v6161 = vadd.f32 %v6160, %v4822
      %v6162 = vadd.f32 %v6161, %v4830
      %v6163 = vadd.f32 %v6162, %v4838
      %v6164 = vadd.f32 %v6163, %v4846
      %v6165 = vadd.f32 %v6164, %v4854
      %v6166 = vadd.f32 %v6165, %v4862
      %v6167 = vadd.f32 %v6166, %v4870
      %v6168 = vadd.f32 %v6167, %v4878
      %v6169 = vadd.f32 %v6168, %v4886
      %v6170 = vadd.f32 %v6169, %v4894
      %v6171 = vadd.f32 %v6170, %v4902
      %v6172 = vadd.f32 %v6171, %v4910
      %v6173 = vadd.f32 %v6172, %v4918
      %v6174 = vadd.f32 %v6173, %v4926
      %v6175 = vadd.f32 %v6174, %v4934
      %v6176 = vadd.f32 %v6175, %v4942
      %v6177 = vadd.f32 %v6176, %v4950
      %v6178 = vadd.f32 %v6177, %v4958
      %v6179 = vadd.f32 %v6178, %v4966
      %v6180 = vadd.f32 %v6179, %v4974
      %v6181 = vadd.f32 %v6180, %v4982
      %v6182 = vadd.f32 %v6181, %v4990
      %v6183 = vadd.f32 %v6182, %v4998
      %v6184 = vadd.f32 %v6183, %v5006
      %v6185 = vadd.f32 %v6184, %v5014
      %v6186 = vadd.f32 %v6185, %v5022
      %v6187 = vadd.f32 %v6186, %v5030
      %v6188 = vadd.f32 %v6187, %v5038
      %v6189 = vadd.f32 %v6188, %v5046
      %v6190 = vadd.f32 %v6189, %v5054
      %v6191 = vadd.f32 %v6190, %v5062
      %v6192 = vadd.f32 %v6191, %v5070
      %v6193 = vadd.f32 %v6192, %v5078
      %v6194 = vadd.f32 %v6193, %v5086
      %v6195 = vadd.f32 %v6194, %v5094
      %v6196 = vadd.f32 %v6195, %v5102
      %v6197 = vadd.f32 %v6196, %v5110
      %v6198 = vadd.f32 %v6197, %v5118
      %v6199 = vadd.f32 %v6198, %v5126
      %v6200 = vadd.f32 %v6199, %v5134
      %v6201 = vadd.f32 %v6200, %v5142
      %v6202 = vadd.f32 %v6201, %v5150
      %v6203 = vadd.f32 %v6202, %v5158
      %v6204 = vadd.f32 %v6203, %v5166
      %v6205 = vadd.f32 %v6204, %v5174
      %v6206 = vadd.f32 %v6205, %v5182
      %v6207 = vadd.f32 %v6206, %v5190
      %v6208 = vadd.f32 %v6207, %v5198
      %v6209 = vadd.f32 %v6208, %v5206
      %v6210 = vadd.f32 %v6209, %v5214
      %v6211 = vadd.f32 %v6210, %v5222
      %v6212 = vadd.f32 %v6211, %v5230
      %v6213 = vadd.f32 %v6212, %v5238
      %v6214 = vadd.f32 %v6213, %v5246
      %v6215 = vadd.f32 %v6214, %v5254
      %v6216 = vadd.f32 %v6215, %v5262
      %v6217 = vadd.f32 %v6216, %v5270
      %v6218 = vadd.f32 %v6217, %v5278
      %v6219 = vadd.f32 %v6218, %v5286
      %v6220 = vadd.f32 %v6219, %v5294
      %v6221 = vadd.f32 %v6220, %v5302
      %v6222 = vadd.f32 %v6221, %v5310
      %v6223 = vadd.f32 %v6222, %v5318
      %v6224 = vadd.f32 %v6223, %v5326
      %v6225 = vadd.f32 %v4311, %v4319
      %v6226 = vadd.f32 %v6225, %v4327
      %v6227 = vadd.f32 %v6226, %v4335
      %v6228 = vadd.f32 %v6227, %v4343
      %v6229 = vadd.f32 %v6228, %v4351
      %v6230 = vadd.f32 %v6229, %v4359
      %v6231 = vadd.f32 %v6230, %v4367
      %v6232 = vadd.f32 %v6231, %v4375
      %v6233 = vadd.f32 %v6232, %v4383
      %v6234 = vadd.f32 %v6233, %v4391
      %v6235 = vadd.f32 %v6234, %v4399
      %v6236 = vadd.f32 %v6235, %v4407
      %v6237 = vadd.f32 %v6236, %v4415
      %v6238 = vadd.f32 %v6237, %v4423
      %v6239 = vadd.f32 %v6238, %v4431
      %v6240 = vadd.f32 %v6239, %v4439
      %v6241 = vadd.f32 %v6240, %v4447
      %v6242 = vadd.f32 %v6241, %v4455
      %v6243 = vadd.f32 %v6242, %v4463
      %v6244 = vadd.f32 %v6243, %v4471
      %v6245 = vadd.f32 %v6244, %v4479
      %v6246 = vadd.f32 %v6245, %v4487
      %v6247 = vadd.f32 %v6246, %v4495
      %v6248 = vadd.f32 %v6247, %v4503
      %v6249 = vadd.f32 %v6248, %v4511
      %v6250 = vadd.f32 %v6249, %v4519
      %v6251 = vadd.f32 %v6250, %v4527
      %v6252 = vadd.f32 %v6251, %v4535
      %v6253 = vadd.f32 %v6252, %v4543
      %v6254 = vadd.f32 %v6253, %v4551
      %v6255 = vadd.f32 %v6254, %v4559
      %v6256 = vadd.f32 %v6255, %v4567
      %v6257 = vadd.f32 %v6256, %v4575
      %v6258 = vadd.f32 %v6257, %v4583
      %v6259 = vadd.f32 %v6258, %v4591
      %v6260 = vadd.f32 %v6259, %v4599
      %v6261 = vadd.f32 %v6260, %v4607
      %v6262 = vadd.f32 %v6261, %v4615
      %v6263 = vadd.f32 %v6262, %v4623
      %v6264 = vadd.f32 %v6263, %v4631
      %v6265 = vadd.f32 %v6264, %v4639
      %v6266 = vadd.f32 %v6265, %v4647
      %v6267 = vadd.f32 %v6266, %v4655
      %v6268 = vadd.f32 %v6267, %v4663
      %v6269 = vadd.f32 %v6268, %v4671
      %v6270 = vadd.f32 %v6269, %v4679
      %v6271 = vadd.f32 %v6270, %v4687
      %v6272 = vadd.f32 %v6271, %v4695
      %v6273 = vadd.f32 %v6272, %v4703
      %v6274 = vadd.f32 %v6273, %v4711
      %v6275 = vadd.f32 %v6274, %v4719
      %v6276 = vadd.f32 %v6275, %v4727
      %v6277 = vadd.f32 %v6276, %v4735
      %v6278 = vadd.f32 %v6277, %v4743
      %v6279 = vadd.f32 %v6278, %v4751
      %v6280 = vadd.f32 %v6279, %v4759
      %v6281 = vadd.f32 %v6280, %v4767
      %v6282 = vadd.f32 %v6281, %v4775
      %v6283 = vadd.f32 %v6282, %v4783
      %v6284 = vadd.f32 %v6283, %v4791
      %v6285 = vadd.f32 %v6284, %v4799
      %v6286 = vadd.f32 %v6285, %v4807
      %v6287 = vadd.f32 %v6286, %v4815
      %v6288 = vadd.f32 %v6287, %v4823
      %v6289 = vadd.f32 %v6288, %v4831
      %v6290 = vadd.f32 %v6289, %v4839
      %v6291 = vadd.f32 %v6290, %v4847
      %v6292 = vadd.f32 %v6291, %v4855
      %v6293 = vadd.f32 %v6292, %v4863
      %v6294 = vadd.f32 %v6293, %v4871
      %v6295 = vadd.f32 %v6294, %v4879
      %v6296 = vadd.f32 %v6295, %v4887
      %v6297 = vadd.f32 %v6296, %v4895
      %v6298 = vadd.f32 %v6297, %v4903
      %v6299 = vadd.f32 %v6298, %v4911
      %v6300 = vadd.f32 %v6299, %v4919
      %v6301 = vadd.f32 %v6300, %v4927
      %v6302 = vadd.f32 %v6301, %v4935
      %v6303 = vadd.f32 %v6302, %v4943
      %v6304 = vadd.f32 %v6303, %v4951
      %v6305 = vadd.f32 %v6304, %v4959
      %v6306 = vadd.f32 %v6305, %v4967
      %v6307 = vadd.f32 %v6306, %v4975
      %v6308 = vadd.f32 %v6307, %v4983
      %v6309 = vadd.f32 %v6308, %v4991
      %v6310 = vadd.f32 %v6309, %v4999
      %v6311 = vadd.f32 %v6310, %v5007
      %v6312 = vadd.f32 %v6311, %v5015
      %v6313 = vadd.f32 %v6312, %v5023
      %v6314 = vadd.f32 %v6313, %v5031
      %v6315 = vadd.f32 %v6314, %v5039
      %v6316 = vadd.f32 %v6315, %v5047
      %v6317 = vadd.f32 %v6316, %v5055
      %v6318 = vadd.f32 %v6317, %v5063
      %v6319 = vadd.f32 %v6318, %v5071
      %v6320 = vadd.f32 %v6319, %v5079
      %v6321 = vadd.f32 %v6320, %v5087
      %v6322 = vadd.f32 %v6321, %v5095
      %v6323 = vadd.f32 %v6322, %v5103
      %v6324 = vadd.f32 %v6323, %v5111
      %v6325 = vadd.f32 %v6324, %v5119
      %v6326 = vadd.f32 %v6325, %v5127
      %v6327 = vadd.f32 %v6326, %v5135
      %v6328 = vadd.f32 %v6327, %v5143
      %v6329 = vadd.f32 %v6328, %v5151
      %v6330 = vadd.f32 %v6329, %v5159
      %v6331 = vadd.f32 %v6330, %v5167
      %v6332 = vadd.f32 %v6331, %v5175
      %v6333 = vadd.f32 %v6332, %v5183
      %v6334 = vadd.f32 %v6333, %v5191
      %v6335 = vadd.f32 %v6334, %v5199
      %v6336 = vadd.f32 %v6335, %v5207
      %v6337 = vadd.f32 %v6336, %v5215
      %v6338 = vadd.f32 %v6337, %v5223
      %v6339 = vadd.f32 %v6338, %v5231
      %v6340 = vadd.f32 %v6339, %v5239
      %v6341 = vadd.f32 %v6340, %v5247
      %v6342 = vadd.f32 %v6341, %v5255
      %v6343 = vadd.f32 %v6342, %v5263
      %v6344 = vadd.f32 %v6343, %v5271
      %v6345 = vadd.f32 %v6344, %v5279
      %v6346 = vadd.f32 %v6345, %v5287
      %v6347 = vadd.f32 %v6346, %v5295
      %v6348 = vadd.f32 %v6347, %v5303
      %v6349 = vadd.f32 %v6348, %v5311
      %v6350 = vadd.f32 %v6349, %v5319
      %v6351 = vadd.f32 %v6350, %v5327
      %v6352 = vadd.f32 %v5328, %v5462
      %v6353 = vadd.f32 %v5329, %v5589
      %v6354 = vadd.f32 %v5330, %v5716
      %v6355 = vadd.f32 %v5331, %v5843
      %v6356 = vadd.f32 %v5332, %v5970
      %v6357 = vadd.f32 %v5333, %v6097
      %v6358 = vadd.f32 %v5334, %v6224
      %v6359 = vadd.f32 %v5335, %v6351
      %6360 = vst [vmem:[#allocation2] sm:$0xff] %v6352
      %6361 = vst [vmem:[#allocation2 + $0x8] sm:$0xff] %v6353
      %6362 = vst [vmem:[#allocation2 + $0x10] sm:$0xff] %v6354
      %6363 = vst [vmem:[#allocation2 + $0x18] sm:$0xff] %v6355
      %6364 = vst [vmem:[#allocation2 + $0x20] sm:$0xff] %v6356
      %6365 = vst [vmem:[#allocation2 + $0x28] sm:$0xff] %v6357
      %6366 = vst [vmem:[#allocation2 + $0x30] sm:$0xff] %v6358
      %6367 = vst [vmem:[#allocation2 + $0x38] sm:$0xff] %v6359
      %p6368 = scmp.eq.s32.totalorder %s25, 1
      // Predicated region
      $region53: #{simclr_forward.1} parent=47 // pred_check
        %p6369 = pneg %p6368
      $region54: #{simclr_forward.1} parent=47 // pred_check_branch
        %6371 = sbr.rel (%p6369) target = $region56
      $region55: #{simclr_forward.1} parent=47 // pred_region
        %v6372 = vld [vmem:[#allocation2] sm:$0xff]
        %v6373 = vld [vmem:[#allocation2 + $0x8] sm:$0xff]
        %v6374 = vld [vmem:[#allocation2 + $0x10] sm:$0xff]
        %v6375 = vld [vmem:[#allocation2 + $0x18] sm:$0xff]
        %v6376 = vld [vmem:[#allocation2 + $0x20] sm:$0xff]
        %v6377 = vld [vmem:[#allocation2 + $0x28] sm:$0xff]
        %v6378 = vld [vmem:[#allocation2 + $0x30] sm:$0xff]
        %v6379 = vld [vmem:[#allocation2 + $0x38] sm:$0xff]
        %v6380 = vmul.f32 %v6372, 0.00390625
        %v6381 = vmul.f32 %v6373, 0.00390625
        %v6382 = vmul.f32 %v6374, 0.00390625
        %v6383 = vmul.f32 %v6375, 0.00390625
        %v6384 = vmul.f32 %v6376, 0.00390625
        %v6385 = vmul.f32 %v6377, 0.00390625
        %v6386 = vmul.f32 %v6378, 0.00390625
        %v6387 = vmul.f32 %v6379, 0.00390625
        %v6388 = vpack.c.bf16 %v6384, %v6380
        %v6389 = vpack.c.bf16 %v6385, %v6381
        %v6390 = vpack.c.bf16 %v6386, %v6382
        %v6391 = vpack.c.bf16 %v6387, %v6383
        %v6392 = vld [vmem:[%s3] sm:$0xff]
        %v6393 = vld [vmem:[%s3 + $0x8] sm:$0xff]
        %v6394 = vld [vmem:[%s3 + $0x10] sm:$0xff]
        %v6395 = vld [vmem:[%s3 + $0x18] sm:$0xff]
        %v6396 = vld [vmem:[%s3 + $0x20] sm:$0xff]
        %v6397 = vld [vmem:[%s3 + $0x28] sm:$0xff]
        %v6398 = vld [vmem:[%s3 + $0x30] sm:$0xff]
        %v6399 = vld [vmem:[%s3 + $0x38] sm:$0xff]
        %v6400 = vld [vmem:[%s3 + $0x40] sm:$0xff]
        %v6401 = vld [vmem:[%s3 + $0x48] sm:$0xff]
        %v6402 = vld [vmem:[%s3 + $0x50] sm:$0xff]
        %v6403 = vld [vmem:[%s3 + $0x58] sm:$0xff]
        %v6404 = vld [vmem:[%s3 + $0x60] sm:$0xff]
        %v6405 = vld [vmem:[%s3 + $0x68] sm:$0xff]
        %v6406 = vld [vmem:[%s3 + $0x70] sm:$0xff]
        %v6407 = vld [vmem:[%s3 + $0x78] sm:$0xff]
        %v6408 = vld [vmem:[%s3 + $0x80] sm:$0xff]
        %v6409 = vld [vmem:[%s3 + $0x88] sm:$0xff]
        %v6410 = vld [vmem:[%s3 + $0x90] sm:$0xff]
        %v6411 = vld [vmem:[%s3 + $0x98] sm:$0xff]
        %v6412 = vld [vmem:[%s3 + $0xa0] sm:$0xff]
        %v6413 = vld [vmem:[%s3 + $0xa8] sm:$0xff]
        %v6414 = vld [vmem:[%s3 + $0xb0] sm:$0xff]
        %v6415 = vld [vmem:[%s3 + $0xb8] sm:$0xff]
        %v6416 = vld [vmem:[%s3 + $0xc0] sm:$0xff]
        %v6417 = vld [vmem:[%s3 + $0xc8] sm:$0xff]
        %v6418 = vld [vmem:[%s3 + $0xd0] sm:$0xff]
        %v6419 = vld [vmem:[%s3 + $0xd8] sm:$0xff]
        %v6420 = vld [vmem:[%s3 + $0xe0] sm:$0xff]
        %v6421 = vld [vmem:[%s3 + $0xe8] sm:$0xff]
        %v6422 = vld [vmem:[%s3 + $0xf0] sm:$0xff]
        %v6423 = vld [vmem:[%s3 + $0xf8] sm:$0xff]
        %v6424 = vld [vmem:[%s3 + $0x100] sm:$0xff]
        %v6425 = vld [vmem:[%s3 + $0x108] sm:$0xff]
        %v6426 = vld [vmem:[%s3 + $0x110] sm:$0xff]
        %v6427 = vld [vmem:[%s3 + $0x118] sm:$0xff]
        %v6428 = vld [vmem:[%s3 + $0x120] sm:$0xff]
        %v6429 = vld [vmem:[%s3 + $0x128] sm:$0xff]
        %v6430 = vld [vmem:[%s3 + $0x130] sm:$0xff]
        %v6431 = vld [vmem:[%s3 + $0x138] sm:$0xff]
        %v6432 = vld [vmem:[%s3 + $0x140] sm:$0xff]
        %v6433 = vld [vmem:[%s3 + $0x148] sm:$0xff]
        %v6434 = vld [vmem:[%s3 + $0x150] sm:$0xff]
        %v6435 = vld [vmem:[%s3 + $0x158] sm:$0xff]
        %v6436 = vld [vmem:[%s3 + $0x160] sm:$0xff]
        %v6437 = vld [vmem:[%s3 + $0x168] sm:$0xff]
        %v6438 = vld [vmem:[%s3 + $0x170] sm:$0xff]
        %v6439 = vld [vmem:[%s3 + $0x178] sm:$0xff]
        %v6440 = vld [vmem:[%s3 + $0x180] sm:$0xff]
        %v6441 = vld [vmem:[%s3 + $0x188] sm:$0xff]
        %v6442 = vld [vmem:[%s3 + $0x190] sm:$0xff]
        %v6443 = vld [vmem:[%s3 + $0x198] sm:$0xff]
        %v6444 = vld [vmem:[%s3 + $0x1a0] sm:$0xff]
        %v6445 = vld [vmem:[%s3 + $0x1a8] sm:$0xff]
        %v6446 = vld [vmem:[%s3 + $0x1b0] sm:$0xff]
        %v6447 = vld [vmem:[%s3 + $0x1b8] sm:$0xff]
        %v6448 = vld [vmem:[%s3 + $0x1c0] sm:$0xff]
        %v6449 = vld [vmem:[%s3 + $0x1c8] sm:$0xff]
        %v6450 = vld [vmem:[%s3 + $0x1d0] sm:$0xff]
        %v6451 = vld [vmem:[%s3 + $0x1d8] sm:$0xff]
        %v6452 = vld [vmem:[%s3 + $0x1e0] sm:$0xff]
        %v6453 = vld [vmem:[%s3 + $0x1e8] sm:$0xff]
        %v6454 = vld [vmem:[%s3 + $0x1f0] sm:$0xff]
        %v6455 = vld [vmem:[%s3 + $0x1f8] sm:$0xff]
        %v6456 = vld [vmem:[%s3 + $0x200] sm:$0xff]
        %v6457 = vld [vmem:[%s3 + $0x208] sm:$0xff]
        %v6458 = vld [vmem:[%s3 + $0x210] sm:$0xff]
        %v6459 = vld [vmem:[%s3 + $0x218] sm:$0xff]
        %v6460 = vld [vmem:[%s3 + $0x220] sm:$0xff]
        %v6461 = vld [vmem:[%s3 + $0x228] sm:$0xff]
        %v6462 = vld [vmem:[%s3 + $0x230] sm:$0xff]
        %v6463 = vld [vmem:[%s3 + $0x238] sm:$0xff]
        %v6464 = vld [vmem:[%s3 + $0x240] sm:$0xff]
        %v6465 = vld [vmem:[%s3 + $0x248] sm:$0xff]
        %v6466 = vld [vmem:[%s3 + $0x250] sm:$0xff]
        %v6467 = vld [vmem:[%s3 + $0x258] sm:$0xff]
        %v6468 = vld [vmem:[%s3 + $0x260] sm:$0xff]
        %v6469 = vld [vmem:[%s3 + $0x268] sm:$0xff]
        %v6470 = vld [vmem:[%s3 + $0x270] sm:$0xff]
        %v6471 = vld [vmem:[%s3 + $0x278] sm:$0xff]
        %v6472 = vld [vmem:[%s3 + $0x280] sm:$0xff]
        %v6473 = vld [vmem:[%s3 + $0x288] sm:$0xff]
        %v6474 = vld [vmem:[%s3 + $0x290] sm:$0xff]
        %v6475 = vld [vmem:[%s3 + $0x298] sm:$0xff]
        %v6476 = vld [vmem:[%s3 + $0x2a0] sm:$0xff]
        %v6477 = vld [vmem:[%s3 + $0x2a8] sm:$0xff]
        %v6478 = vld [vmem:[%s3 + $0x2b0] sm:$0xff]
        %v6479 = vld [vmem:[%s3 + $0x2b8] sm:$0xff]
        %v6480 = vld [vmem:[%s3 + $0x2c0] sm:$0xff]
        %v6481 = vld [vmem:[%s3 + $0x2c8] sm:$0xff]
        %v6482 = vld [vmem:[%s3 + $0x2d0] sm:$0xff]
        %v6483 = vld [vmem:[%s3 + $0x2d8] sm:$0xff]
        %v6484 = vld [vmem:[%s3 + $0x2e0] sm:$0xff]
        %v6485 = vld [vmem:[%s3 + $0x2e8] sm:$0xff]
        %v6486 = vld [vmem:[%s3 + $0x2f0] sm:$0xff]
        %v6487 = vld [vmem:[%s3 + $0x2f8] sm:$0xff]
        %v6488 = vld [vmem:[%s3 + $0x300] sm:$0xff]
        %v6489 = vld [vmem:[%s3 + $0x308] sm:$0xff]
        %v6490 = vld [vmem:[%s3 + $0x310] sm:$0xff]
        %v6491 = vld [vmem:[%s3 + $0x318] sm:$0xff]
        %v6492 = vld [vmem:[%s3 + $0x320] sm:$0xff]
        %v6493 = vld [vmem:[%s3 + $0x328] sm:$0xff]
        %v6494 = vld [vmem:[%s3 + $0x330] sm:$0xff]
        %v6495 = vld [vmem:[%s3 + $0x338] sm:$0xff]
        %v6496 = vld [vmem:[%s3 + $0x340] sm:$0xff]
        %v6497 = vld [vmem:[%s3 + $0x348] sm:$0xff]
        %v6498 = vld [vmem:[%s3 + $0x350] sm:$0xff]
        %v6499 = vld [vmem:[%s3 + $0x358] sm:$0xff]
        %v6500 = vld [vmem:[%s3 + $0x360] sm:$0xff]
        %v6501 = vld [vmem:[%s3 + $0x368] sm:$0xff]
        %v6502 = vld [vmem:[%s3 + $0x370] sm:$0xff]
        %v6503 = vld [vmem:[%s3 + $0x378] sm:$0xff]
        %v6504 = vld [vmem:[%s3 + $0x380] sm:$0xff]
        %v6505 = vld [vmem:[%s3 + $0x388] sm:$0xff]
        %v6506 = vld [vmem:[%s3 + $0x390] sm:$0xff]
        %v6507 = vld [vmem:[%s3 + $0x398] sm:$0xff]
        %v6508 = vld [vmem:[%s3 + $0x3a0] sm:$0xff]
        %v6509 = vld [vmem:[%s3 + $0x3a8] sm:$0xff]
        %v6510 = vld [vmem:[%s3 + $0x3b0] sm:$0xff]
        %v6511 = vld [vmem:[%s3 + $0x3b8] sm:$0xff]
        %v6512 = vld [vmem:[%s3 + $0x3c0] sm:$0xff]
        %v6513 = vld [vmem:[%s3 + $0x3c8] sm:$0xff]
        %v6514 = vld [vmem:[%s3 + $0x3d0] sm:$0xff]
        %v6515 = vld [vmem:[%s3 + $0x3d8] sm:$0xff]
        %v6516 = vld [vmem:[%s3 + $0x3e0] sm:$0xff]
        %v6517 = vld [vmem:[%s3 + $0x3e8] sm:$0xff]
        %v6518 = vld [vmem:[%s3 + $0x3f0] sm:$0xff]
        %v6519 = vld [vmem:[%s3 + $0x3f8] sm:$0xff]
        %v6520 = vld [vmem:[%s4] sm:$0xf]
        %v6522 = vperm.slane %v6520, 0
        %v6523 = vperm.slane %v6520, 1
        %v6524 = vperm.slane %v6520, 2
        %v6525 = vperm.slane %v6520, 3
        %v6658 = vunpack.c.l.b16 %v6392
        %v6659 = vunpack.c.h.b16 %v6392
        %v6660 = vunpack.c.l.b16 %v6393
        %v6661 = vunpack.c.h.b16 %v6393
        %v6662 = vunpack.c.l.b16 %v6394
        %v6663 = vunpack.c.h.b16 %v6394
        %v6664 = vunpack.c.l.b16 %v6395
        %v6665 = vunpack.c.h.b16 %v6395
        %v6666 = vunpack.c.l.b16 %v6396
        %v6667 = vunpack.c.h.b16 %v6396
        %v6668 = vunpack.c.l.b16 %v6397
        %v6669 = vunpack.c.h.b16 %v6397
        %v6670 = vunpack.c.l.b16 %v6398
        %v6671 = vunpack.c.h.b16 %v6398
        %v6672 = vunpack.c.l.b16 %v6399
        %v6673 = vunpack.c.h.b16 %v6399
        %v6674 = vunpack.c.l.b16 %v6400
        %v6675 = vunpack.c.h.b16 %v6400
        %v6676 = vunpack.c.l.b16 %v6401
        %v6677 = vunpack.c.h.b16 %v6401
        %v6678 = vunpack.c.l.b16 %v6402
        %v6679 = vunpack.c.h.b16 %v6402
        %v6680 = vunpack.c.l.b16 %v6403
        %v6681 = vunpack.c.h.b16 %v6403
        %v6682 = vunpack.c.l.b16 %v6404
        %v6683 = vunpack.c.h.b16 %v6404
        %v6684 = vunpack.c.l.b16 %v6405
        %v6685 = vunpack.c.h.b16 %v6405
        %v6686 = vunpack.c.l.b16 %v6406
        %v6687 = vunpack.c.h.b16 %v6406
        %v6688 = vunpack.c.l.b16 %v6407
        %v6689 = vunpack.c.h.b16 %v6407
        %v6690 = vunpack.c.l.b16 %v6408
        %v6691 = vunpack.c.h.b16 %v6408
        %v6692 = vunpack.c.l.b16 %v6409
        %v6693 = vunpack.c.h.b16 %v6409
        %v6694 = vunpack.c.l.b16 %v6410
        %v6695 = vunpack.c.h.b16 %v6410
        %v6696 = vunpack.c.l.b16 %v6411
        %v6697 = vunpack.c.h.b16 %v6411
        %v6698 = vunpack.c.l.b16 %v6412
        %v6699 = vunpack.c.h.b16 %v6412
        %v6700 = vunpack.c.l.b16 %v6413
        %v6701 = vunpack.c.h.b16 %v6413
        %v6702 = vunpack.c.l.b16 %v6414
        %v6703 = vunpack.c.h.b16 %v6414
        %v6704 = vunpack.c.l.b16 %v6415
        %v6705 = vunpack.c.h.b16 %v6415
        %v6706 = vunpack.c.l.b16 %v6416
        %v6707 = vunpack.c.h.b16 %v6416
        %v6708 = vunpack.c.l.b16 %v6417
        %v6709 = vunpack.c.h.b16 %v6417
        %v6710 = vunpack.c.l.b16 %v6418
        %v6711 = vunpack.c.h.b16 %v6418
        %v6712 = vunpack.c.l.b16 %v6419
        %v6713 = vunpack.c.h.b16 %v6419
        %v6714 = vunpack.c.l.b16 %v6420
        %v6715 = vunpack.c.h.b16 %v6420
        %v6716 = vunpack.c.l.b16 %v6421
        %v6717 = vunpack.c.h.b16 %v6421
        %v6718 = vunpack.c.l.b16 %v6422
        %v6719 = vunpack.c.h.b16 %v6422
        %v6720 = vunpack.c.l.b16 %v6423
        %v6721 = vunpack.c.h.b16 %v6423
        %v6722 = vunpack.c.l.b16 %v6424
        %v6723 = vunpack.c.h.b16 %v6424
        %v6724 = vunpack.c.l.b16 %v6425
        %v6725 = vunpack.c.h.b16 %v6425
        %v6726 = vunpack.c.l.b16 %v6426
        %v6727 = vunpack.c.h.b16 %v6426
        %v6728 = vunpack.c.l.b16 %v6427
        %v6729 = vunpack.c.h.b16 %v6427
        %v6730 = vunpack.c.l.b16 %v6428
        %v6731 = vunpack.c.h.b16 %v6428
        %v6732 = vunpack.c.l.b16 %v6429
        %v6733 = vunpack.c.h.b16 %v6429
        %v6734 = vunpack.c.l.b16 %v6430
        %v6735 = vunpack.c.h.b16 %v6430
        %v6736 = vunpack.c.l.b16 %v6431
        %v6737 = vunpack.c.h.b16 %v6431
        %v6738 = vunpack.c.l.b16 %v6432
        %v6739 = vunpack.c.h.b16 %v6432
        %v6740 = vunpack.c.l.b16 %v6433
        %v6741 = vunpack.c.h.b16 %v6433
        %v6742 = vunpack.c.l.b16 %v6434
        %v6743 = vunpack.c.h.b16 %v6434
        %v6744 = vunpack.c.l.b16 %v6435
        %v6745 = vunpack.c.h.b16 %v6435
        %v6746 = vunpack.c.l.b16 %v6436
        %v6747 = vunpack.c.h.b16 %v6436
        %v6748 = vunpack.c.l.b16 %v6437
        %v6749 = vunpack.c.h.b16 %v6437
        %v6750 = vunpack.c.l.b16 %v6438
        %v6751 = vunpack.c.h.b16 %v6438
        %v6752 = vunpack.c.l.b16 %v6439
        %v6753 = vunpack.c.h.b16 %v6439
        %v6754 = vunpack.c.l.b16 %v6440
        %v6755 = vunpack.c.h.b16 %v6440
        %v6756 = vunpack.c.l.b16 %v6441
        %v6757 = vunpack.c.h.b16 %v6441
        %v6758 = vunpack.c.l.b16 %v6442
        %v6759 = vunpack.c.h.b16 %v6442
        %v6760 = vunpack.c.l.b16 %v6443
        %v6761 = vunpack.c.h.b16 %v6443
        %v6762 = vunpack.c.l.b16 %v6444
        %v6763 = vunpack.c.h.b16 %v6444
        %v6764 = vunpack.c.l.b16 %v6445
        %v6765 = vunpack.c.h.b16 %v6445
        %v6766 = vunpack.c.l.b16 %v6446
        %v6767 = vunpack.c.h.b16 %v6446
        %v6768 = vunpack.c.l.b16 %v6447
        %v6769 = vunpack.c.h.b16 %v6447
        %v6770 = vunpack.c.l.b16 %v6448
        %v6771 = vunpack.c.h.b16 %v6448
        %v6772 = vunpack.c.l.b16 %v6449
        %v6773 = vunpack.c.h.b16 %v6449
        %v6774 = vunpack.c.l.b16 %v6450
        %v6775 = vunpack.c.h.b16 %v6450
        %v6776 = vunpack.c.l.b16 %v6451
        %v6777 = vunpack.c.h.b16 %v6451
        %v6778 = vunpack.c.l.b16 %v6452
        %v6779 = vunpack.c.h.b16 %v6452
        %v6780 = vunpack.c.l.b16 %v6453
        %v6781 = vunpack.c.h.b16 %v6453
        %v6782 = vunpack.c.l.b16 %v6454
        %v6783 = vunpack.c.h.b16 %v6454
        %v6784 = vunpack.c.l.b16 %v6455
        %v6785 = vunpack.c.h.b16 %v6455
        %v6786 = vunpack.c.l.b16 %v6456
        %v6787 = vunpack.c.h.b16 %v6456
        %v6788 = vunpack.c.l.b16 %v6457
        %v6789 = vunpack.c.h.b16 %v6457
        %v6790 = vunpack.c.l.b16 %v6458
        %v6791 = vunpack.c.h.b16 %v6458
        %v6792 = vunpack.c.l.b16 %v6459
        %v6793 = vunpack.c.h.b16 %v6459
        %v6794 = vunpack.c.l.b16 %v6460
        %v6795 = vunpack.c.h.b16 %v6460
        %v6796 = vunpack.c.l.b16 %v6461
        %v6797 = vunpack.c.h.b16 %v6461
        %v6798 = vunpack.c.l.b16 %v6462
        %v6799 = vunpack.c.h.b16 %v6462
        %v6800 = vunpack.c.l.b16 %v6463
        %v6801 = vunpack.c.h.b16 %v6463
        %v6802 = vunpack.c.l.b16 %v6464
        %v6803 = vunpack.c.h.b16 %v6464
        %v6804 = vunpack.c.l.b16 %v6465
        %v6805 = vunpack.c.h.b16 %v6465
        %v6806 = vunpack.c.l.b16 %v6466
        %v6807 = vunpack.c.h.b16 %v6466
        %v6808 = vunpack.c.l.b16 %v6467
        %v6809 = vunpack.c.h.b16 %v6467
        %v6810 = vunpack.c.l.b16 %v6468
        %v6811 = vunpack.c.h.b16 %v6468
        %v6812 = vunpack.c.l.b16 %v6469
        %v6813 = vunpack.c.h.b16 %v6469
        %v6814 = vunpack.c.l.b16 %v6470
        %v6815 = vunpack.c.h.b16 %v6470
        %v6816 = vunpack.c.l.b16 %v6471
        %v6817 = vunpack.c.h.b16 %v6471
        %v6818 = vunpack.c.l.b16 %v6472
        %v6819 = vunpack.c.h.b16 %v6472
        %v6820 = vunpack.c.l.b16 %v6473
        %v6821 = vunpack.c.h.b16 %v6473
        %v6822 = vunpack.c.l.b16 %v6474
        %v6823 = vunpack.c.h.b16 %v6474
        %v6824 = vunpack.c.l.b16 %v6475
        %v6825 = vunpack.c.h.b16 %v6475
        %v6826 = vunpack.c.l.b16 %v6476
        %v6827 = vunpack.c.h.b16 %v6476
        %v6828 = vunpack.c.l.b16 %v6477
        %v6829 = vunpack.c.h.b16 %v6477
        %v6830 = vunpack.c.l.b16 %v6478
        %v6831 = vunpack.c.h.b16 %v6478
        %v6832 = vunpack.c.l.b16 %v6479
        %v6833 = vunpack.c.h.b16 %v6479
        %v6834 = vunpack.c.l.b16 %v6480
        %v6835 = vunpack.c.h.b16 %v6480
        %v6836 = vunpack.c.l.b16 %v6481
        %v6837 = vunpack.c.h.b16 %v6481
        %v6838 = vunpack.c.l.b16 %v6482
        %v6839 = vunpack.c.h.b16 %v6482
        %v6840 = vunpack.c.l.b16 %v6483
        %v6841 = vunpack.c.h.b16 %v6483
        %v6842 = vunpack.c.l.b16 %v6484
        %v6843 = vunpack.c.h.b16 %v6484
        %v6844 = vunpack.c.l.b16 %v6485
        %v6845 = vunpack.c.h.b16 %v6485
        %v6846 = vunpack.c.l.b16 %v6486
        %v6847 = vunpack.c.h.b16 %v6486
        %v6848 = vunpack.c.l.b16 %v6487
        %v6849 = vunpack.c.h.b16 %v6487
        %v6850 = vunpack.c.l.b16 %v6488
        %v6851 = vunpack.c.h.b16 %v6488
        %v6852 = vunpack.c.l.b16 %v6489
        %v6853 = vunpack.c.h.b16 %v6489
        %v6854 = vunpack.c.l.b16 %v6490
        %v6855 = vunpack.c.h.b16 %v6490
        %v6856 = vunpack.c.l.b16 %v6491
        %v6857 = vunpack.c.h.b16 %v6491
        %v6858 = vunpack.c.l.b16 %v6492
        %v6859 = vunpack.c.h.b16 %v6492
        %v6860 = vunpack.c.l.b16 %v6493
        %v6861 = vunpack.c.h.b16 %v6493
        %v6862 = vunpack.c.l.b16 %v6494
        %v6863 = vunpack.c.h.b16 %v6494
        %v6864 = vunpack.c.l.b16 %v6495
        %v6865 = vunpack.c.h.b16 %v6495
        %v6866 = vunpack.c.l.b16 %v6496
        %v6867 = vunpack.c.h.b16 %v6496
        %v6868 = vunpack.c.l.b16 %v6497
        %v6869 = vunpack.c.h.b16 %v6497
        %v6870 = vunpack.c.l.b16 %v6498
        %v6871 = vunpack.c.h.b16 %v6498
        %v6872 = vunpack.c.l.b16 %v6499
        %v6873 = vunpack.c.h.b16 %v6499
        %v6874 = vunpack.c.l.b16 %v6500
        %v6875 = vunpack.c.h.b16 %v6500
        %v6876 = vunpack.c.l.b16 %v6501
        %v6877 = vunpack.c.h.b16 %v6501
        %v6878 = vunpack.c.l.b16 %v6502
        %v6879 = vunpack.c.h.b16 %v6502
        %v6880 = vunpack.c.l.b16 %v6503
        %v6881 = vunpack.c.h.b16 %v6503
        %v6882 = vunpack.c.l.b16 %v6504
        %v6883 = vunpack.c.h.b16 %v6504
        %v6884 = vunpack.c.l.b16 %v6505
        %v6885 = vunpack.c.h.b16 %v6505
        %v6886 = vunpack.c.l.b16 %v6506
        %v6887 = vunpack.c.h.b16 %v6506
        %v6888 = vunpack.c.l.b16 %v6507
        %v6889 = vunpack.c.h.b16 %v6507
        %v6890 = vunpack.c.l.b16 %v6508
        %v6891 = vunpack.c.h.b16 %v6508
        %v6892 = vunpack.c.l.b16 %v6509
        %v6893 = vunpack.c.h.b16 %v6509
        %v6894 = vunpack.c.l.b16 %v6510
        %v6895 = vunpack.c.h.b16 %v6510
        %v6896 = vunpack.c.l.b16 %v6511
        %v6897 = vunpack.c.h.b16 %v6511
        %v6898 = vunpack.c.l.b16 %v6512
        %v6899 = vunpack.c.h.b16 %v6512
        %v6900 = vunpack.c.l.b16 %v6513
        %v6901 = vunpack.c.h.b16 %v6513
        %v6902 = vunpack.c.l.b16 %v6514
        %v6903 = vunpack.c.h.b16 %v6514
        %v6904 = vunpack.c.l.b16 %v6515
        %v6905 = vunpack.c.h.b16 %v6515
        %v6906 = vunpack.c.l.b16 %v6516
        %v6907 = vunpack.c.h.b16 %v6516
        %v6908 = vunpack.c.l.b16 %v6517
        %v6909 = vunpack.c.h.b16 %v6517
        %v6910 = vunpack.c.l.b16 %v6518
        %v6911 = vunpack.c.h.b16 %v6518
        %v6912 = vunpack.c.l.b16 %v6519
        %v6913 = vunpack.c.h.b16 %v6519
        %v6914 = vpack.c.b16 %v6662, %v6658
        %v6915 = vpack.c.b16 %v6663, %v6659
        %v6916 = vpack.c.b16 %v6664, %v6660
        %v6917 = vpack.c.b16 %v6665, %v6661
        %v6918 = vpack.c.b16 %v6670, %v6666
        %v6919 = vpack.c.b16 %v6671, %v6667
        %v6920 = vpack.c.b16 %v6672, %v6668
        %v6921 = vpack.c.b16 %v6673, %v6669
        %v6922 = vpack.c.b16 %v6678, %v6674
        %v6923 = vpack.c.b16 %v6679, %v6675
        %v6924 = vpack.c.b16 %v6680, %v6676
        %v6925 = vpack.c.b16 %v6681, %v6677
        %v6926 = vpack.c.b16 %v6686, %v6682
        %v6927 = vpack.c.b16 %v6687, %v6683
        %v6928 = vpack.c.b16 %v6688, %v6684
        %v6929 = vpack.c.b16 %v6689, %v6685
        %v6930 = vpack.c.b16 %v6694, %v6690
        %v6931 = vpack.c.b16 %v6695, %v6691
        %v6932 = vpack.c.b16 %v6696, %v6692
        %v6933 = vpack.c.b16 %v6697, %v6693
        %v6934 = vpack.c.b16 %v6702, %v6698
        %v6935 = vpack.c.b16 %v6703, %v6699
        %v6936 = vpack.c.b16 %v6704, %v6700
        %v6937 = vpack.c.b16 %v6705, %v6701
        %v6938 = vpack.c.b16 %v6710, %v6706
        %v6939 = vpack.c.b16 %v6711, %v6707
        %v6940 = vpack.c.b16 %v6712, %v6708
        %v6941 = vpack.c.b16 %v6713, %v6709
        %v6942 = vpack.c.b16 %v6718, %v6714
        %v6943 = vpack.c.b16 %v6719, %v6715
        %v6944 = vpack.c.b16 %v6720, %v6716
        %v6945 = vpack.c.b16 %v6721, %v6717
        %v6946 = vpack.c.b16 %v6726, %v6722
        %v6947 = vpack.c.b16 %v6727, %v6723
        %v6948 = vpack.c.b16 %v6728, %v6724
        %v6949 = vpack.c.b16 %v6729, %v6725
        %v6950 = vpack.c.b16 %v6734, %v6730
        %v6951 = vpack.c.b16 %v6735, %v6731
        %v6952 = vpack.c.b16 %v6736, %v6732
        %v6953 = vpack.c.b16 %v6737, %v6733
        %v6954 = vpack.c.b16 %v6742, %v6738
        %v6955 = vpack.c.b16 %v6743, %v6739
        %v6956 = vpack.c.b16 %v6744, %v6740
        %v6957 = vpack.c.b16 %v6745, %v6741
        %v6958 = vpack.c.b16 %v6750, %v6746
        %v6959 = vpack.c.b16 %v6751, %v6747
        %v6960 = vpack.c.b16 %v6752, %v6748
        %v6961 = vpack.c.b16 %v6753, %v6749
        %v6962 = vpack.c.b16 %v6758, %v6754
        %v6963 = vpack.c.b16 %v6759, %v6755
        %v6964 = vpack.c.b16 %v6760, %v6756
        %v6965 = vpack.c.b16 %v6761, %v6757
        %v6966 = vpack.c.b16 %v6766, %v6762
        %v6967 = vpack.c.b16 %v6767, %v6763
        %v6968 = vpack.c.b16 %v6768, %v6764
        %v6969 = vpack.c.b16 %v6769, %v6765
        %v6970 = vpack.c.b16 %v6774, %v6770
        %v6971 = vpack.c.b16 %v6775, %v6771
        %v6972 = vpack.c.b16 %v6776, %v6772
        %v6973 = vpack.c.b16 %v6777, %v6773
        %v6974 = vpack.c.b16 %v6782, %v6778
        %v6975 = vpack.c.b16 %v6783, %v6779
        %v6976 = vpack.c.b16 %v6784, %v6780
        %v6977 = vpack.c.b16 %v6785, %v6781
        %v6978 = vpack.c.b16 %v6790, %v6786
        %v6979 = vpack.c.b16 %v6791, %v6787
        %v6980 = vpack.c.b16 %v6792, %v6788
        %v6981 = vpack.c.b16 %v6793, %v6789
        %v6982 = vpack.c.b16 %v6798, %v6794
        %v6983 = vpack.c.b16 %v6799, %v6795
        %v6984 = vpack.c.b16 %v6800, %v6796
        %v6985 = vpack.c.b16 %v6801, %v6797
        %v6986 = vpack.c.b16 %v6806, %v6802
        %v6987 = vpack.c.b16 %v6807, %v6803
        %v6988 = vpack.c.b16 %v6808, %v6804
        %v6989 = vpack.c.b16 %v6809, %v6805
        %v6990 = vpack.c.b16 %v6814, %v6810
        %v6991 = vpack.c.b16 %v6815, %v6811
        %v6992 = vpack.c.b16 %v6816, %v6812
        %v6993 = vpack.c.b16 %v6817, %v6813
        %v6994 = vpack.c.b16 %v6822, %v6818
        %v6995 = vpack.c.b16 %v6823, %v6819
        %v6996 = vpack.c.b16 %v6824, %v6820
        %v6997 = vpack.c.b16 %v6825, %v6821
        %v6998 = vpack.c.b16 %v6830, %v6826
        %v6999 = vpack.c.b16 %v6831, %v6827
        %v7000 = vpack.c.b16 %v6832, %v6828
        %v7001 = vpack.c.b16 %v6833, %v6829
        %v7002 = vpack.c.b16 %v6838, %v6834
        %v7003 = vpack.c.b16 %v6839, %v6835
        %v7004 = vpack.c.b16 %v6840, %v6836
        %v7005 = vpack.c.b16 %v6841, %v6837
        %v7006 = vpack.c.b16 %v6846, %v6842
        %v7007 = vpack.c.b16 %v6847, %v6843
        %v7008 = vpack.c.b16 %v6848, %v6844
        %v7009 = vpack.c.b16 %v6849, %v6845
        %v7010 = vpack.c.b16 %v6854, %v6850
        %v7011 = vpack.c.b16 %v6855, %v6851
        %v7012 = vpack.c.b16 %v6856, %v6852
        %v7013 = vpack.c.b16 %v6857, %v6853
        %v7014 = vpack.c.b16 %v6862, %v6858
        %v7015 = vpack.c.b16 %v6863, %v6859
        %v7016 = vpack.c.b16 %v6864, %v6860
        %v7017 = vpack.c.b16 %v6865, %v6861
        %v7018 = vpack.c.b16 %v6870, %v6866
        %v7019 = vpack.c.b16 %v6871, %v6867
        %v7020 = vpack.c.b16 %v6872, %v6868
        %v7021 = vpack.c.b16 %v6873, %v6869
        %v7022 = vpack.c.b16 %v6878, %v6874
        %v7023 = vpack.c.b16 %v6879, %v6875
        %v7024 = vpack.c.b16 %v6880, %v6876
        %v7025 = vpack.c.b16 %v6881, %v6877
        %v7026 = vpack.c.b16 %v6886, %v6882
        %v7027 = vpack.c.b16 %v6887, %v6883
        %v7028 = vpack.c.b16 %v6888, %v6884
        %v7029 = vpack.c.b16 %v6889, %v6885
        %v7030 = vpack.c.b16 %v6894, %v6890
        %v7031 = vpack.c.b16 %v6895, %v6891
        %v7032 = vpack.c.b16 %v6896, %v6892
        %v7033 = vpack.c.b16 %v6897, %v6893
        %v7034 = vpack.c.b16 %v6902, %v6898
        %v7035 = vpack.c.b16 %v6903, %v6899
        %v7036 = vpack.c.b16 %v6904, %v6900
        %v7037 = vpack.c.b16 %v6905, %v6901
        %v7038 = vpack.c.b16 %v6910, %v6906
        %v7039 = vpack.c.b16 %v6911, %v6907
        %v7040 = vpack.c.b16 %v6912, %v6908
        %v7041 = vpack.c.b16 %v6913, %v6909
        %7170 = vmatpush.bf16.msra.mxu0 %v6942
        %7171 = vmatpush.bf16.msra.mxu0 %v6938
        %7172 = vmatpush.bf16.msra.mxu0 %v6934
        %7173 = vmatpush.bf16.msra.mxu0 %v6930
        %7174 = vmatpush.bf16.msra.mxu0 %v6926
        %7175 = vmatpush.bf16.msra.mxu0 %v6922
        %7176 = vmatpush.bf16.msra.mxu0 %v6918
        %7177 = vmatpush.bf16.msra.mxu0 %v6914
        %7178 = vmatmul.bf16.gmra.mxu0 %v6388
        %v7179 = vpop.f32.mrf.mxu0
        %v7180 = vadd.f32 %v6522, %v7179
        %v7181 = vpop.f32.mrf.mxu0
        %v7182 = vadd.f32 %v6522, %v7181
        %7183 = vdwg.mxu0
        %7184 = vmatpush.bf16.msra.mxu0 %v6974
        %7185 = vmatpush.bf16.msra.mxu0 %v6970
        %7186 = vmatpush.bf16.msra.mxu0 %v6966
        %7187 = vmatpush.bf16.msra.mxu0 %v6962
        %7188 = vmatpush.bf16.msra.mxu0 %v6958
        %7189 = vmatpush.bf16.msra.mxu0 %v6954
        %7190 = vmatpush.bf16.msra.mxu0 %v6950
        %7191 = vmatpush.bf16.msra.mxu0 %v6946
        %7192 = vmatmul.bf16.gmra.mxu0 %v6389
        %v7193 = vpop.f32.mrf.mxu0
        %v7194 = vadd.f32 %v7180, %v7193
        %v7195 = vpop.f32.mrf.mxu0
        %v7196 = vadd.f32 %v7182, %v7195
        %7197 = vdwg.mxu0
        %7198 = vmatpush.bf16.msra.mxu0 %v7006
        %7199 = vmatpush.bf16.msra.mxu0 %v7002
        %7200 = vmatpush.bf16.msra.mxu0 %v6998
        %7201 = vmatpush.bf16.msra.mxu0 %v6994
        %7202 = vmatpush.bf16.msra.mxu0 %v6990
        %7203 = vmatpush.bf16.msra.mxu0 %v6986
        %7204 = vmatpush.bf16.msra.mxu0 %v6982
        %7205 = vmatpush.bf16.msra.mxu0 %v6978
        %7206 = vmatmul.bf16.gmra.mxu0 %v6390
        %v7207 = vpop.f32.mrf.mxu0
        %v7208 = vadd.f32 %v7194, %v7207
        %v7209 = vpop.f32.mrf.mxu0
        %v7210 = vadd.f32 %v7196, %v7209
        %7211 = vdwg.mxu0
        %7212 = vmatpush.bf16.msra.mxu0 %v7038
        %7213 = vmatpush.bf16.msra.mxu0 %v7034
        %7214 = vmatpush.bf16.msra.mxu0 %v7030
        %7215 = vmatpush.bf16.msra.mxu0 %v7026
        %7216 = vmatpush.bf16.msra.mxu0 %v7022
        %7217 = vmatpush.bf16.msra.mxu0 %v7018
        %7218 = vmatpush.bf16.msra.mxu0 %v7014
        %7219 = vmatpush.bf16.msra.mxu0 %v7010
        %7220 = vmatmul.bf16.gmra.mxu0 %v6391
        %v7221 = vpop.f32.mrf.mxu0
        %v7222 = vadd.f32 %v7208, %v7221
        %v7223 = vpop.f32.mrf.mxu0
        %v7224 = vadd.f32 %v7210, %v7223
        %7225 = vdwg.mxu0
        %7226 = vmatpush.bf16.msra.mxu0 %v6943
        %7227 = vmatpush.bf16.msra.mxu0 %v6939
        %7228 = vmatpush.bf16.msra.mxu0 %v6935
        %7229 = vmatpush.bf16.msra.mxu0 %v6931
        %7230 = vmatpush.bf16.msra.mxu0 %v6927
        %7231 = vmatpush.bf16.msra.mxu0 %v6923
        %7232 = vmatpush.bf16.msra.mxu0 %v6919
        %7233 = vmatpush.bf16.msra.mxu0 %v6915
        %7234 = vmatmul.bf16.gmra.mxu0 %v6388
        %v7235 = vpop.f32.mrf.mxu0
        %v7236 = vadd.f32 %v6523, %v7235
        %v7237 = vpop.f32.mrf.mxu0
        %v7238 = vadd.f32 %v6523, %v7237
        %7239 = vdwg.mxu0
        %7240 = vmatpush.bf16.msra.mxu0 %v6975
        %7241 = vmatpush.bf16.msra.mxu0 %v6971
        %7242 = vmatpush.bf16.msra.mxu0 %v6967
        %7243 = vmatpush.bf16.msra.mxu0 %v6963
        %7244 = vmatpush.bf16.msra.mxu0 %v6959
        %7245 = vmatpush.bf16.msra.mxu0 %v6955
        %7246 = vmatpush.bf16.msra.mxu0 %v6951
        %7247 = vmatpush.bf16.msra.mxu0 %v6947
        %7248 = vmatmul.bf16.gmra.mxu0 %v6389
        %v7249 = vpop.f32.mrf.mxu0
        %v7250 = vadd.f32 %v7236, %v7249
        %v7251 = vpop.f32.mrf.mxu0
        %v7252 = vadd.f32 %v7238, %v7251
        %7253 = vdwg.mxu0
        %7254 = vmatpush.bf16.msra.mxu0 %v7007
        %7255 = vmatpush.bf16.msra.mxu0 %v7003
        %7256 = vmatpush.bf16.msra.mxu0 %v6999
        %7257 = vmatpush.bf16.msra.mxu0 %v6995
        %7258 = vmatpush.bf16.msra.mxu0 %v6991
        %7259 = vmatpush.bf16.msra.mxu0 %v6987
        %7260 = vmatpush.bf16.msra.mxu0 %v6983
        %7261 = vmatpush.bf16.msra.mxu0 %v6979
        %7262 = vmatmul.bf16.gmra.mxu0 %v6390
        %v7263 = vpop.f32.mrf.mxu0
        %v7264 = vadd.f32 %v7250, %v7263
        %v7265 = vpop.f32.mrf.mxu0
        %v7266 = vadd.f32 %v7252, %v7265
        %7267 = vdwg.mxu0
        %7268 = vmatpush.bf16.msra.mxu0 %v7039
        %7269 = vmatpush.bf16.msra.mxu0 %v7035
        %7270 = vmatpush.bf16.msra.mxu0 %v7031
        %7271 = vmatpush.bf16.msra.mxu0 %v7027
        %7272 = vmatpush.bf16.msra.mxu0 %v7023
        %7273 = vmatpush.bf16.msra.mxu0 %v7019
        %7274 = vmatpush.bf16.msra.mxu0 %v7015
        %7275 = vmatpush.bf16.msra.mxu0 %v7011
        %7276 = vmatmul.bf16.gmra.mxu0 %v6391
        %v7277 = vpop.f32.mrf.mxu0
        %v7278 = vadd.f32 %v7264, %v7277
        %v7279 = vpop.f32.mrf.mxu0
        %v7280 = vadd.f32 %v7266, %v7279
        %7281 = vdwg.mxu0
        %7282 = vmatpush.bf16.msra.mxu0 %v6944
        %7283 = vmatpush.bf16.msra.mxu0 %v6940
        %7284 = vmatpush.bf16.msra.mxu0 %v6936
        %7285 = vmatpush.bf16.msra.mxu0 %v6932
        %7286 = vmatpush.bf16.msra.mxu0 %v6928
        %7287 = vmatpush.bf16.msra.mxu0 %v6924
        %7288 = vmatpush.bf16.msra.mxu0 %v6920
        %7289 = vmatpush.bf16.msra.mxu0 %v6916
        %7290 = vmatmul.bf16.gmra.mxu0 %v6388
        %v7291 = vpop.f32.mrf.mxu0
        %v7292 = vadd.f32 %v6524, %v7291
        %v7293 = vpop.f32.mrf.mxu0
        %v7294 = vadd.f32 %v6524, %v7293
        %7295 = vdwg.mxu0
        %7296 = vmatpush.bf16.msra.mxu0 %v6976
        %7297 = vmatpush.bf16.msra.mxu0 %v6972
        %7298 = vmatpush.bf16.msra.mxu0 %v6968
        %7299 = vmatpush.bf16.msra.mxu0 %v6964
        %7300 = vmatpush.bf16.msra.mxu0 %v6960
        %7301 = vmatpush.bf16.msra.mxu0 %v6956
        %7302 = vmatpush.bf16.msra.mxu0 %v6952
        %7303 = vmatpush.bf16.msra.mxu0 %v6948
        %7304 = vmatmul.bf16.gmra.mxu0 %v6389
        %v7305 = vpop.f32.mrf.mxu0
        %v7306 = vadd.f32 %v7292, %v7305
        %v7307 = vpop.f32.mrf.mxu0
        %v7308 = vadd.f32 %v7294, %v7307
        %7309 = vdwg.mxu0
        %7310 = vmatpush.bf16.msra.mxu0 %v7008
        %7311 = vmatpush.bf16.msra.mxu0 %v7004
        %7312 = vmatpush.bf16.msra.mxu0 %v7000
        %7313 = vmatpush.bf16.msra.mxu0 %v6996
        %7314 = vmatpush.bf16.msra.mxu0 %v6992
        %7315 = vmatpush.bf16.msra.mxu0 %v6988
        %7316 = vmatpush.bf16.msra.mxu0 %v6984
        %7317 = vmatpush.bf16.msra.mxu0 %v6980
        %7318 = vmatmul.bf16.gmra.mxu0 %v6390
        %v7319 = vpop.f32.mrf.mxu0
        %v7320 = vadd.f32 %v7306, %v7319
        %v7321 = vpop.f32.mrf.mxu0
        %v7322 = vadd.f32 %v7308, %v7321
        %7323 = vdwg.mxu0
        %7324 = vmatpush.bf16.msra.mxu0 %v7040
        %7325 = vmatpush.bf16.msra.mxu0 %v7036
        %7326 = vmatpush.bf16.msra.mxu0 %v7032
        %7327 = vmatpush.bf16.msra.mxu0 %v7028
        %7328 = vmatpush.bf16.msra.mxu0 %v7024
        %7329 = vmatpush.bf16.msra.mxu0 %v7020
        %7330 = vmatpush.bf16.msra.mxu0 %v7016
        %7331 = vmatpush.bf16.msra.mxu0 %v7012
        %7332 = vmatmul.bf16.gmra.mxu0 %v6391
        %v7333 = vpop.f32.mrf.mxu0
        %v7334 = vadd.f32 %v7320, %v7333
        %v7335 = vpop.f32.mrf.mxu0
        %v7336 = vadd.f32 %v7322, %v7335
        %7337 = vdwg.mxu0
        %7338 = vmatpush.bf16.msra.mxu0 %v6945
        %7339 = vmatpush.bf16.msra.mxu0 %v6941
        %7340 = vmatpush.bf16.msra.mxu0 %v6937
        %7341 = vmatpush.bf16.msra.mxu0 %v6933
        %7342 = vmatpush.bf16.msra.mxu0 %v6929
        %7343 = vmatpush.bf16.msra.mxu0 %v6925
        %7344 = vmatpush.bf16.msra.mxu0 %v6921
        %7345 = vmatpush.bf16.msra.mxu0 %v6917
        %7346 = vmatmul.bf16.gmra.mxu0 %v6388
        %v7347 = vpop.f32.mrf.mxu0
        %v7348 = vadd.f32 %v6525, %v7347
        %v7349 = vpop.f32.mrf.mxu0
        %v7350 = vadd.f32 %v6525, %v7349
        %7351 = vdwg.mxu0
        %7352 = vmatpush.bf16.msra.mxu0 %v6977
        %7353 = vmatpush.bf16.msra.mxu0 %v6973
        %7354 = vmatpush.bf16.msra.mxu0 %v6969
        %7355 = vmatpush.bf16.msra.mxu0 %v6965
        %7356 = vmatpush.bf16.msra.mxu0 %v6961
        %7357 = vmatpush.bf16.msra.mxu0 %v6957
        %7358 = vmatpush.bf16.msra.mxu0 %v6953
        %7359 = vmatpush.bf16.msra.mxu0 %v6949
        %7360 = vmatmul.bf16.gmra.mxu0 %v6389
        %v7361 = vpop.f32.mrf.mxu0
        %v7362 = vadd.f32 %v7348, %v7361
        %v7363 = vpop.f32.mrf.mxu0
        %v7364 = vadd.f32 %v7350, %v7363
        %7365 = vdwg.mxu0
        %7366 = vmatpush.bf16.msra.mxu0 %v7009
        %7367 = vmatpush.bf16.msra.mxu0 %v7005
        %7368 = vmatpush.bf16.msra.mxu0 %v7001
        %7369 = vmatpush.bf16.msra.mxu0 %v6997
        %7370 = vmatpush.bf16.msra.mxu0 %v6993
        %7371 = vmatpush.bf16.msra.mxu0 %v6989
        %7372 = vmatpush.bf16.msra.mxu0 %v6985
        %7373 = vmatpush.bf16.msra.mxu0 %v6981
        %7374 = vmatmul.bf16.gmra.mxu0 %v6390
        %v7375 = vpop.f32.mrf.mxu0
        %v7376 = vadd.f32 %v7362, %v7375
        %v7377 = vpop.f32.mrf.mxu0
        %v7378 = vadd.f32 %v7364, %v7377
        %7379 = vdwg.mxu0
        %7380 = vmatpush.bf16.msra.mxu0 %v7041
        %7381 = vmatpush.bf16.msra.mxu0 %v7037
        %7382 = vmatpush.bf16.msra.mxu0 %v7033
        %7383 = vmatpush.bf16.msra.mxu0 %v7029
        %7384 = vmatpush.bf16.msra.mxu0 %v7025
        %7385 = vmatpush.bf16.msra.mxu0 %v7021
        %7386 = vmatpush.bf16.msra.mxu0 %v7017
        %7387 = vmatpush.bf16.msra.mxu0 %v7013
        %7388 = vmatmul.bf16.gmra.mxu0 %v6391
        %v7389 = vpop.f32.mrf.mxu0
        %v7390 = vadd.f32 %v7376, %v7389
        %v7391 = vpop.f32.mrf.mxu0
        %v7392 = vadd.f32 %v7378, %v7391
        %7393 = vdwg.mxu0
        %v7394 = vmax.f32 %v7222, 0.0
        %v7395 = vmax.f32 %v7278, 0.0
        %v7396 = vmax.f32 %v7334, 0.0
        %v7397 = vmax.f32 %v7390, 0.0
        %v7398 = vmax.f32 %v7224, 0.0
        %v7399 = vmax.f32 %v7280, 0.0
        %v7400 = vmax.f32 %v7336, 0.0
        %v7401 = vmax.f32 %v7392, 0.0
        %v7402 = vpack.c.bf16 %v7398, %v7394
        %v7403 = vpack.c.bf16 %v7399, %v7395
        %v7404 = vpack.c.bf16 %v7400, %v7396
        %v7405 = vpack.c.bf16 %v7401, %v7397
        %v7406 = vld [vmem:[%s5] sm:$0xf]
        %v7407 = vld [vmem:[%s5 + $0x4] sm:$0xf]
        %v7408 = vld [vmem:[%s5 + $0x8] sm:$0xf]
        %v7409 = vld [vmem:[%s5 + $0xc] sm:$0xf]
        %v7410 = vld [vmem:[%s5 + $0x10] sm:$0xf]
        %v7411 = vld [vmem:[%s5 + $0x14] sm:$0xf]
        %v7412 = vld [vmem:[%s5 + $0x18] sm:$0xf]
        %v7413 = vld [vmem:[%s5 + $0x1c] sm:$0xf]
        %v7414 = vld [vmem:[%s5 + $0x20] sm:$0xf]
        %v7415 = vld [vmem:[%s5 + $0x24] sm:$0xf]
        %v7416 = vld [vmem:[%s5 + $0x28] sm:$0xf]
        %v7417 = vld [vmem:[%s5 + $0x2c] sm:$0xf]
        %v7418 = vld [vmem:[%s5 + $0x30] sm:$0xf]
        %v7419 = vld [vmem:[%s5 + $0x34] sm:$0xf]
        %v7420 = vld [vmem:[%s5 + $0x38] sm:$0xf]
        %v7421 = vld [vmem:[%s5 + $0x3c] sm:$0xf]
        %v7422 = vld [vmem:[%s5 + $0x40] sm:$0xf]
        %v7423 = vld [vmem:[%s5 + $0x44] sm:$0xf]
        %v7424 = vld [vmem:[%s5 + $0x48] sm:$0xf]
        %v7425 = vld [vmem:[%s5 + $0x4c] sm:$0xf]
        %v7426 = vld [vmem:[%s5 + $0x50] sm:$0xf]
        %v7427 = vld [vmem:[%s5 + $0x54] sm:$0xf]
        %v7428 = vld [vmem:[%s5 + $0x58] sm:$0xf]
        %v7429 = vld [vmem:[%s5 + $0x5c] sm:$0xf]
        %v7430 = vld [vmem:[%s5 + $0x60] sm:$0xf]
        %v7431 = vld [vmem:[%s5 + $0x64] sm:$0xf]
        %v7432 = vld [vmem:[%s5 + $0x68] sm:$0xf]
        %v7433 = vld [vmem:[%s5 + $0x6c] sm:$0xf]
        %v7434 = vld [vmem:[%s5 + $0x70] sm:$0xf]
        %v7435 = vld [vmem:[%s5 + $0x74] sm:$0xf]
        %v7436 = vld [vmem:[%s5 + $0x78] sm:$0xf]
        %v7437 = vld [vmem:[%s5 + $0x7c] sm:$0xf]
        %v7438 = vld [vmem:[%s5 + $0x80] sm:$0xf]
        %v7439 = vld [vmem:[%s5 + $0x84] sm:$0xf]
        %v7440 = vld [vmem:[%s5 + $0x88] sm:$0xf]
        %v7441 = vld [vmem:[%s5 + $0x8c] sm:$0xf]
        %v7442 = vld [vmem:[%s5 + $0x90] sm:$0xf]
        %v7443 = vld [vmem:[%s5 + $0x94] sm:$0xf]
        %v7444 = vld [vmem:[%s5 + $0x98] sm:$0xf]
        %v7445 = vld [vmem:[%s5 + $0x9c] sm:$0xf]
        %v7446 = vld [vmem:[%s5 + $0xa0] sm:$0xf]
        %v7447 = vld [vmem:[%s5 + $0xa4] sm:$0xf]
        %v7448 = vld [vmem:[%s5 + $0xa8] sm:$0xf]
        %v7449 = vld [vmem:[%s5 + $0xac] sm:$0xf]
        %v7450 = vld [vmem:[%s5 + $0xb0] sm:$0xf]
        %v7451 = vld [vmem:[%s5 + $0xb4] sm:$0xf]
        %v7452 = vld [vmem:[%s5 + $0xb8] sm:$0xf]
        %v7453 = vld [vmem:[%s5 + $0xbc] sm:$0xf]
        %v7454 = vld [vmem:[%s5 + $0xc0] sm:$0xf]
        %v7455 = vld [vmem:[%s5 + $0xc4] sm:$0xf]
        %v7456 = vld [vmem:[%s5 + $0xc8] sm:$0xf]
        %v7457 = vld [vmem:[%s5 + $0xcc] sm:$0xf]
        %v7458 = vld [vmem:[%s5 + $0xd0] sm:$0xf]
        %v7459 = vld [vmem:[%s5 + $0xd4] sm:$0xf]
        %v7460 = vld [vmem:[%s5 + $0xd8] sm:$0xf]
        %v7461 = vld [vmem:[%s5 + $0xdc] sm:$0xf]
        %v7462 = vld [vmem:[%s5 + $0xe0] sm:$0xf]
        %v7463 = vld [vmem:[%s5 + $0xe4] sm:$0xf]
        %v7464 = vld [vmem:[%s5 + $0xe8] sm:$0xf]
        %v7465 = vld [vmem:[%s5 + $0xec] sm:$0xf]
        %v7466 = vld [vmem:[%s5 + $0xf0] sm:$0xf]
        %v7467 = vld [vmem:[%s5 + $0xf4] sm:$0xf]
        %v7468 = vld [vmem:[%s5 + $0xf8] sm:$0xf]
        %v7469 = vld [vmem:[%s5 + $0xfc] sm:$0xf]
        %v7470 = vld [vmem:[%s6] sm:$0x1]
        %v7472 = vperm.slane %v7470, 0
        %v7538 = vunpack.c.l.b16 %v7406
        %v7539 = vunpack.c.l.b16 %v7407
        %v7540 = vunpack.c.l.b16 %v7408
        %v7541 = vunpack.c.l.b16 %v7409
        %v7542 = vunpack.c.l.b16 %v7410
        %v7543 = vunpack.c.l.b16 %v7411
        %v7544 = vunpack.c.l.b16 %v7412
        %v7545 = vunpack.c.l.b16 %v7413
        %v7546 = vunpack.c.l.b16 %v7414
        %v7547 = vunpack.c.l.b16 %v7415
        %v7548 = vunpack.c.l.b16 %v7416
        %v7549 = vunpack.c.l.b16 %v7417
        %v7550 = vunpack.c.l.b16 %v7418
        %v7551 = vunpack.c.l.b16 %v7419
        %v7552 = vunpack.c.l.b16 %v7420
        %v7553 = vunpack.c.l.b16 %v7421
        %v7554 = vunpack.c.l.b16 %v7422
        %v7555 = vunpack.c.l.b16 %v7423
        %v7556 = vunpack.c.l.b16 %v7424
        %v7557 = vunpack.c.l.b16 %v7425
        %v7558 = vunpack.c.l.b16 %v7426
        %v7559 = vunpack.c.l.b16 %v7427
        %v7560 = vunpack.c.l.b16 %v7428
        %v7561 = vunpack.c.l.b16 %v7429
        %v7562 = vunpack.c.l.b16 %v7430
        %v7563 = vunpack.c.l.b16 %v7431
        %v7564 = vunpack.c.l.b16 %v7432
        %v7565 = vunpack.c.l.b16 %v7433
        %v7566 = vunpack.c.l.b16 %v7434
        %v7567 = vunpack.c.l.b16 %v7435
        %v7568 = vunpack.c.l.b16 %v7436
        %v7569 = vunpack.c.l.b16 %v7437
        %v7570 = vunpack.c.l.b16 %v7438
        %v7571 = vunpack.c.l.b16 %v7439
        %v7572 = vunpack.c.l.b16 %v7440
        %v7573 = vunpack.c.l.b16 %v7441
        %v7574 = vunpack.c.l.b16 %v7442
        %v7575 = vunpack.c.l.b16 %v7443
        %v7576 = vunpack.c.l.b16 %v7444
        %v7577 = vunpack.c.l.b16 %v7445
        %v7578 = vunpack.c.l.b16 %v7446
        %v7579 = vunpack.c.l.b16 %v7447
        %v7580 = vunpack.c.l.b16 %v7448
        %v7581 = vunpack.c.l.b16 %v7449
        %v7582 = vunpack.c.l.b16 %v7450
        %v7583 = vunpack.c.l.b16 %v7451
        %v7584 = vunpack.c.l.b16 %v7452
        %v7585 = vunpack.c.l.b16 %v7453
        %v7586 = vunpack.c.l.b16 %v7454
        %v7587 = vunpack.c.l.b16 %v7455
        %v7588 = vunpack.c.l.b16 %v7456
        %v7589 = vunpack.c.l.b16 %v7457
        %v7590 = vunpack.c.l.b16 %v7458
        %v7591 = vunpack.c.l.b16 %v7459
        %v7592 = vunpack.c.l.b16 %v7460
        %v7593 = vunpack.c.l.b16 %v7461
        %v7594 = vunpack.c.l.b16 %v7462
        %v7595 = vunpack.c.l.b16 %v7463
        %v7596 = vunpack.c.l.b16 %v7464
        %v7597 = vunpack.c.l.b16 %v7465
        %v7598 = vunpack.c.l.b16 %v7466
        %v7599 = vunpack.c.l.b16 %v7467
        %v7600 = vunpack.c.l.b16 %v7468
        %v7601 = vunpack.c.l.b16 %v7469
        %v7602 = vpack.c.b16 %v7539, %v7538
        %v7603 = vpack.c.b16 %v7541, %v7540
        %v7604 = vpack.c.b16 %v7543, %v7542
        %v7605 = vpack.c.b16 %v7545, %v7544
        %v7606 = vpack.c.b16 %v7547, %v7546
        %v7607 = vpack.c.b16 %v7549, %v7548
        %v7608 = vpack.c.b16 %v7551, %v7550
        %v7609 = vpack.c.b16 %v7553, %v7552
        %v7610 = vpack.c.b16 %v7555, %v7554
        %v7611 = vpack.c.b16 %v7557, %v7556
        %v7612 = vpack.c.b16 %v7559, %v7558
        %v7613 = vpack.c.b16 %v7561, %v7560
        %v7614 = vpack.c.b16 %v7563, %v7562
        %v7615 = vpack.c.b16 %v7565, %v7564
        %v7616 = vpack.c.b16 %v7567, %v7566
        %v7617 = vpack.c.b16 %v7569, %v7568
        %v7618 = vpack.c.b16 %v7571, %v7570
        %v7619 = vpack.c.b16 %v7573, %v7572
        %v7620 = vpack.c.b16 %v7575, %v7574
        %v7621 = vpack.c.b16 %v7577, %v7576
        %v7622 = vpack.c.b16 %v7579, %v7578
        %v7623 = vpack.c.b16 %v7581, %v7580
        %v7624 = vpack.c.b16 %v7583, %v7582
        %v7625 = vpack.c.b16 %v7585, %v7584
        %v7626 = vpack.c.b16 %v7587, %v7586
        %v7627 = vpack.c.b16 %v7589, %v7588
        %v7628 = vpack.c.b16 %v7591, %v7590
        %v7629 = vpack.c.b16 %v7593, %v7592
        %v7630 = vpack.c.b16 %v7595, %v7594
        %v7631 = vpack.c.b16 %v7597, %v7596
        %v7632 = vpack.c.b16 %v7599, %v7598
        %v7633 = vpack.c.b16 %v7601, %v7600
        %7666 = vmatpush.bf16.msra.mxu0 %v7609
        %7667 = vmatpush.bf16.msra.mxu0 %v7608
        %7668 = vmatpush.bf16.msra.mxu0 %v7607
        %7669 = vmatpush.bf16.msra.mxu0 %v7606
        %7670 = vmatpush.bf16.msra.mxu0 %v7605
        %7671 = vmatpush.bf16.msra.mxu0 %v7604
        %7672 = vmatpush.bf16.msra.mxu0 %v7603
        %7673 = vmatpush.bf16.msra.mxu0 %v7602
        %7674 = vmatmul.bf16.gmra.mxu0 %v7402
        %v7675 = vpop.f32.mrf.mxu0
        %v7676 = vadd.f32 %v7472, %v7675
        %v7677 = vpop.f32.mrf.mxu0
        %v7678 = vadd.f32 %v7472, %v7677
        %7679 = vdwg.mxu0
        %7680 = vmatpush.bf16.msra.mxu0 %v7617
        %7681 = vmatpush.bf16.msra.mxu0 %v7616
        %7682 = vmatpush.bf16.msra.mxu0 %v7615
        %7683 = vmatpush.bf16.msra.mxu0 %v7614
        %7684 = vmatpush.bf16.msra.mxu0 %v7613
        %7685 = vmatpush.bf16.msra.mxu0 %v7612
        %7686 = vmatpush.bf16.msra.mxu0 %v7611
        %7687 = vmatpush.bf16.msra.mxu0 %v7610
        %7688 = vmatmul.bf16.gmra.mxu0 %v7403
        %v7689 = vpop.f32.mrf.mxu0
        %v7690 = vadd.f32 %v7676, %v7689
        %v7691 = vpop.f32.mrf.mxu0
        %v7692 = vadd.f32 %v7678, %v7691
        %7693 = vdwg.mxu0
        %7694 = vmatpush.bf16.msra.mxu0 %v7625
        %7695 = vmatpush.bf16.msra.mxu0 %v7624
        %7696 = vmatpush.bf16.msra.mxu0 %v7623
        %7697 = vmatpush.bf16.msra.mxu0 %v7622
        %7698 = vmatpush.bf16.msra.mxu0 %v7621
        %7699 = vmatpush.bf16.msra.mxu0 %v7620
        %7700 = vmatpush.bf16.msra.mxu0 %v7619
        %7701 = vmatpush.bf16.msra.mxu0 %v7618
        %7702 = vmatmul.bf16.gmra.mxu0 %v7404
        %v7703 = vpop.f32.mrf.mxu0
        %v7704 = vadd.f32 %v7690, %v7703
        %v7705 = vpop.f32.mrf.mxu0
        %v7706 = vadd.f32 %v7692, %v7705
        %7707 = vdwg.mxu0
        %7708 = vmatpush.bf16.msra.mxu0 %v7633
        %7709 = vmatpush.bf16.msra.mxu0 %v7632
        %7710 = vmatpush.bf16.msra.mxu0 %v7631
        %7711 = vmatpush.bf16.msra.mxu0 %v7630
        %7712 = vmatpush.bf16.msra.mxu0 %v7629
        %7713 = vmatpush.bf16.msra.mxu0 %v7628
        %7714 = vmatpush.bf16.msra.mxu0 %v7627
        %7715 = vmatpush.bf16.msra.mxu0 %v7626
        %7716 = vmatmul.bf16.gmra.mxu0 %v7405
        %v7717 = vpop.f32.mrf.mxu0
        %v7718 = vadd.f32 %v7704, %v7717
        %v7719 = vpop.f32.mrf.mxu0
        %v7720 = vadd.f32 %v7706, %v7719
        %7721 = vdwg.mxu0
        %v7722 = vmul.f32 %v6380, %v6380
        %v7723 = vmul.f32 %v6381, %v6381
        %v7724 = vmul.f32 %v6382, %v6382
        %v7725 = vmul.f32 %v6383, %v6383
        %v7726 = vmul.f32 %v6384, %v6384
        %v7727 = vmul.f32 %v6385, %v6385
        %v7728 = vmul.f32 %v6386, %v6386
        %v7729 = vmul.f32 %v6387, %v6387
        %v7730 = vadd.f32 %v7722, %v7723
        %v7731 = vadd.f32 %v7730, %v7724
        %v7732 = vadd.f32 %v7731, %v7725
        %7733 = vadd.xlane.f32.xlu0 %v7732
        %v7734 = vpop.xlane.xlu0 %7733
        %v7735 = vadd.f32 %v7726, %v7727
        %v7736 = vadd.f32 %v7735, %v7728
        %v7737 = vadd.f32 %v7736, %v7729
        %7738 = vadd.xlane.f32.xlu0 %v7737
        %v7739 = vpop.xlane.xlu0 %7738
        %v7740 = vmul.f32 %v7718, %v7718
        %v7741 = vmul.f32 %v7720, %v7720
        %7742 = vadd.xlane.f32.xlu0 %v7740
        %v7743 = vpop.xlane.xlu0 %7742
        %7744 = vadd.xlane.f32.xlu0 %v7741
        %v7745 = vpop.xlane.xlu0 %7744
        %v7746 = vmax.f32 %v7734, 1e-24
        %v7747 = vmax.f32 %v7739, 1e-24
        %v7748 = vrsqrt.pop %v7746
        %v7749 = vmul.f32 %v7748, %v7746
        %v7750 = vmul.f32 %v7749, %v7748
        %v7751 = vmul.f32 0.5, %v7750
        %v7752 = vsub.f32 1.5, %v7751
        %v7753 = vmul.f32 %v7748, %v7752
        %vm7754 = vweird.f32 %v7746
        %vm7755 = vweird.f32 %v7748
        %vm7756 = vmor %vm7754, %vm7755
        %v7757 = vsel %vm7756, %v7748, %v7753
        %v7758 = vrsqrt.pop %v7747
        %v7759 = vmul.f32 %v7758, %v7747
        %v7760 = vmul.f32 %v7759, %v7758
        %v7761 = vmul.f32 0.5, %v7760
        %v7762 = vsub.f32 1.5, %v7761
        %v7763 = vmul.f32 %v7758, %v7762
        %vm7764 = vweird.f32 %v7747
        %vm7765 = vweird.f32 %v7758
        %vm7766 = vmor %vm7764, %vm7765
        %v7767 = vsel %vm7766, %v7758, %v7763
        %v7768 = vmul.f32 %v6380, %v7757
        %v7769 = vmul.f32 %v6381, %v7757
        %v7770 = vmul.f32 %v6382, %v7757
        %v7771 = vmul.f32 %v6383, %v7757
        %v7772 = vmul.f32 %v6384, %v7767
        %v7773 = vmul.f32 %v6385, %v7767
        %v7774 = vmul.f32 %v6386, %v7767
        %v7775 = vmul.f32 %v6387, %v7767
        %7776 = vst [vmem:[%s348] sm:$0xff] %v7768
        %7777 = vst [vmem:[%s348 + $0x8] sm:$0xff] %v7769
        %7778 = vst [vmem:[%s348 + $0x10] sm:$0xff] %v7770
        %7779 = vst [vmem:[%s348 + $0x18] sm:$0xff] %v7771
        %7780 = vst [vmem:[%s348 + $0x20] sm:$0xff] %v7772
        %7781 = vst [vmem:[%s348 + $0x28] sm:$0xff] %v7773
        %7782 = vst [vmem:[%s348 + $0x30] sm:$0xff] %v7774
        %7783 = vst [vmem:[%s348 + $0x38] sm:$0xff] %v7775
        %v7784 = vmax.f32 %v7743, 1e-24
        %v7785 = vmax.f32 %v7745, 1e-24
        %v7786 = vrsqrt.pop %v7784
        %v7787 = vmul.f32 %v7786, %v7784
        %v7788 = vmul.f32 %v7787, %v7786
        %v7789 = vmul.f32 0.5, %v7788
        %v7790 = vsub.f32 1.5, %v7789
        %v7791 = vmul.f32 %v7786, %v7790
        %vm7792 = vweird.f32 %v7784
        %vm7793 = vweird.f32 %v7786
        %vm7794 = vmor %vm7792, %vm7793
        %v7795 = vsel %vm7794, %v7786, %v7791
        %v7796 = vrsqrt.pop %v7785
        %v7797 = vmul.f32 %v7796, %v7785
        %v7798 = vmul.f32 %v7797, %v7796
        %v7799 = vmul.f32 0.5, %v7798
        %v7800 = vsub.f32 1.5, %v7799
        %v7801 = vmul.f32 %v7796, %v7800
        %vm7802 = vweird.f32 %v7785
        %vm7803 = vweird.f32 %v7796
        %vm7804 = vmor %vm7802, %vm7803
        %v7805 = vsel %vm7804, %v7796, %v7801
        %v7806 = vmul.f32 %v7718, %v7795
        %v7807 = vmul.f32 %v7720, %v7805
        %7808 = vst [vmem:[%s354] sm:$0xff] %v7806
        %7809 = vst [vmem:[%s354 + $0x8] sm:$0xff] %v7807
      $region56: #{simclr_forward.1} parent=47 // pred_fallthru
        _
      %s7810 = smul.u32 2, %s24
      %p7811 = scmp.lt.s32.totalorder %s7810, 1
      %s7812 = scalar_select %p7811, %s7810, 1
      %s7813 = smul.addr %s7812, 4
      %s7814 = smul.addr %s7813, 8
      %s7815 = scalar_lea.vmem %s7, %s7814
      %s7816 = smul.u32 2, %s24
      %p7817 = scmp.lt.s32.totalorder %s7816, 1
      %s7818 = scalar_select %p7817, %s7816, 1
      %s7819 = smul.addr %s7818, 8
      %s7820 = scalar_lea.vmem %s8, %s7819
      // Predicated region
      $region57: #{simclr_forward.1} parent=47 // pred_check
        %p7821 = pneg %p204
      $region58: #{simclr_forward.1} parent=47 // pred_check_branch
        %7823 = sbr.rel (%p7821) target = $region60
      $region59: #{simclr_forward.1} parent=47 // pred_region
        %s7824 = smul.u32 2, %s24
      $region60: #{simclr_forward.1} parent=47 // pred_fallthru
        _
      // Predicated region
      $region61: #{simclr_forward.1} parent=47 // pred_check
        %p7825 = pneg %p230
      $region62: #{simclr_forward.1} parent=47 // pred_check_branch
        %7827 = sbr.rel (%p7825) target = $region64
      $region63: #{simclr_forward.1} parent=47 // pred_region
        %s7828 = smul.u32 2, %s24
      $region64: #{simclr_forward.1} parent=47 // pred_fallthru
        _
      // Predicated region
      $region65: #{simclr_forward.1} parent=47 // pred_check
        %p7829 = pneg %p204
      $region66: #{simclr_forward.1} parent=47 // pred_check_branch
        %7831 = sbr.rel (%p7829) target = $region68
      $region67: #{simclr_forward.1} parent=47 // pred_region
        %s7832 = smul.u32 2, %s24
        %p7833 = scmp.lt.s32.totalorder %s7832, 1
        %s7834 = scalar_select %p7833, %s7832, 1
        %s7835 = smul.addr %s7834, 4
        %s7836 = smul.addr %s7835, 8
        %s7837 = scalar_lea.vmem %s7, %s7836
      $region68: #{simclr_forward.1} parent=47 // pred_fallthru
        _
      // Predicated region
      $region69: #{simclr_forward.1} parent=47 // pred_check
        %p7838 = pneg %p230
      $region70: #{simclr_forward.1} parent=47 // pred_check_branch
        %7840 = sbr.rel (%p7838) target = $region72
      $region71: #{simclr_forward.1} parent=47 // pred_region
        %s7841 = smul.u32 2, %s24
        %p7842 = scmp.lt.s32.totalorder %s7841, 1
        %s7843 = scalar_select %p7842, %s7841, 1
        %s7844 = smul.addr %s7843, 8
        %s7845 = scalar_lea.vmem %s8, %s7844
      $region72: #{simclr_forward.1} parent=47 // pred_fallthru
        _
    $region48: #{simclr_forward.1} parent=5 // pred_fallthru
      _
    %p7846 = scmp.le.s32.totalorder 2, %s15
    // Predicated region
    $region73: #{simclr_forward.1} parent=5 // pred_check
      %p7847 = pneg %p7846
    $region74: #{simclr_forward.1} parent=5 // pred_check_branch
      %7849 = sbr.rel (%p7847) target = $region76
    $region75: #{simclr_forward.1} parent=5 // pred_region
      %s7850 = ssub.s32 %s15, 2
    $region76: #{simclr_forward.1} parent=5 // pred_fallthru
      _
  $region6: #{simclr_forward.1} parent=0 // loop_footer
    %s19 = sadd.s32 1, %s15
  $region7: #{simclr_forward.1} parent=0 // loop_footer_branch
    %14 = sbr.rel target = $region3
  $region8: #{simclr_forward.1} parent=0 // loop_exit
    _

</llo_original>
